<compile_context>
chip_gen: v7x
topology: tpu7x:2x2x1
jax: 0.10.0
libtpu: 0.0.40
codegen_flags: <defaults>
</compile_context>

<pallas_src>
import functools
import math

import jax
import jax.numpy as jnp
from jax.experimental import pallas as pl
from jax.experimental.pallas import tpu as pltpu


# ------------------------------ fused kernel --------------------------------

def _fused_bert_kernel(
    x_ref, bias_ref,
    wqkv_ref, bqkv_ref, wo_ref, bo_ref,
    ln1g_ref, ln1b_ref,
    w1_ref, b1_ref, w2_ref, b2_ref,
    ln2g_ref, ln2b_ref,
    embg_ref, embb_ref,
    poolw_ref, poolb_ref,
    headw_ref, headb_ref,
    o_ref,
    *, nb, num_layers, num_heads, head_dim, eps,
):
    """One grid step = full BERT forward for `nb` batch items ((nb, S, H))."""
    f32 = jnp.float32
    scale = 1.0 / math.sqrt(head_dim)

    def layer_norm(y, g, b):
        mu = jnp.mean(y, axis=-1, keepdims=True)
        yc = y - mu
        var = jnp.mean(yc * yc, axis=-1, keepdims=True)
        return yc * jax.lax.rsqrt(var + eps) * g + b

    def gelu(y):
        # TODO(synk): HF BERT uses erf-based GELU; tanh approximation kept for
        # robust Mosaic lowering (~1e-3 max divergence).
        c = math.sqrt(2.0 / math.pi)
        return 0.5 * y * (1.0 + jnp.tanh(c * (y + 0.044715 * y * y * y)))

    x_all = x_ref[...].astype(f32)        # (nb, S, H) summed embeddings
    bias_all = bias_ref[...]              # (nb, S)   additive key-mask bias

    lane = jax.lax.broadcasted_iota(jnp.int32, (1, 128), 1)
    out_row = jnp.zeros((1, 128), f32)    # lane-dense per-step output

    for b in range(nb):                   # static unroll (nb is tiny)
        x = x_all[b]                      # (S, H)
        bias = bias_all[b:b + 1, :]       # (1, S)

        # Embedding LayerNorm.
        x = layer_norm(x, embg_ref[...], embb_ref[...])

        for l in range(num_layers):       # unrolled (L is tiny)
            # ----- multi-head self-attention (true per-head contraction) ----
            attn = jnp.zeros_like(x)      # (S, H)
            for h in range(num_heads):    # unrolled (nH is tiny)
                qi = (l * 3 + 0) * num_heads + h
                ki = (l * 3 + 1) * num_heads + h
                vi = (l * 3 + 2) * num_heads + h
                qh = jnp.dot(x, wqkv_ref[qi],
                             preferred_element_type=f32) + bqkv_ref[qi]   # (S,dH)
                kh = jnp.dot(x, wqkv_ref[ki],
                             preferred_element_type=f32) + bqkv_ref[ki]   # (S,dH)
                vh = jnp.dot(x, wqkv_ref[vi],
                             preferred_element_type=f32) + bqkv_ref[vi]   # (S,dH)

                s = jax.lax.dot_general(                 # q @ k^T over dH only
                    qh, kh, (((1,), (1,)), ((), ())),
                    preferred_element_type=f32) * scale                    # (S,S)
                s = s + bias                             # key-axis mask bias
                s = s - jnp.max(s, axis=-1, keepdims=True)
                p = jnp.exp(s)
                # Exact reciprocal for parity with the PyTorch reference.
                p = p / jnp.sum(p, axis=-1, keepdims=True)

                ctx_h = jnp.dot(p, vh, preferred_element_type=f32)         # (S,dH)
                # Head merge folded into the output projection.
                attn = attn + jnp.dot(ctx_h, wo_ref[l * num_heads + h],
                                      preferred_element_type=f32)          # (S,H)

            attn = attn + bo_ref[l]
            x = layer_norm(attn + x, ln1g_ref[l], ln1b_ref[l])

            # ----- feed-forward -----
            inter = gelu(jnp.dot(x, w1_ref[l], preferred_element_type=f32)
                         + b1_ref[l])
            ffn = jnp.dot(inter, w2_ref[l], preferred_element_type=f32) + b2_ref[l]
            x = layer_norm(ffn + x, ln2g_ref[l], ln2b_ref[l])

        # ----- pooler + regression head on the CLS row ONLY -----
        # (dropout output is discarded in the original forward; eval-mode
        #  dropout is identity anyway)
        cls = x[0:1, :]                                                    # (1,H)
        pooled = jnp.tanh(jnp.dot(cls, poolw_ref[...],
                                  preferred_element_type=f32) + poolb_ref[...])
        y = jnp.sum(pooled * headw_ref[...], axis=-1, keepdims=True) \
            + headb_ref[...]                                               # (1,1)
        out_row = jnp.where(lane == b, y, out_row)

    o_ref[...] = out_row.astype(o_ref.dtype)


# ------------------------------ model wrapper --------------------------------

class Config:
    vocab = 100
    max_pos = 8
    type_vocab = 2
    hidden = 32
    heads = 4
    layers = 2
    intermediate = 64


def init_params(key, cfg):
    def nrm(k, shape):
        return jax.random.normal(k, shape, jnp.float32) * 0.02

    ks = iter(jax.random.split(key, 8 + cfg.layers * 16))
    p = {
        "word_emb": nrm(next(ks), (cfg.vocab, cfg.hidden)),
        "pos_emb": nrm(next(ks), (cfg.max_pos, cfg.hidden)),
        "type_emb": nrm(next(ks), (cfg.type_vocab, cfg.hidden)),
        "emb_ln_g": jnp.ones((cfg.hidden,), jnp.float32),
        "emb_ln_b": jnp.zeros((cfg.hidden,), jnp.float32),
        "pooler_w": nrm(next(ks), (cfg.hidden, cfg.hidden)),
        "pooler_b": jnp.zeros((cfg.hidden,), jnp.float32),
        "head_w": nrm(next(ks), (cfg.hidden, 1)),
        "head_b": jnp.zeros((1,), jnp.float32),
        "layers": [],
    }
    for _ in range(cfg.layers):
        layer = {
            "wq": nrm(next(ks), (cfg.hidden, cfg.hidden)),
            "bq": jnp.zeros((cfg.hidden,), jnp.float32),
            "wk": nrm(next(ks), (cfg.hidden, cfg.hidden)),
            "bk": jnp.zeros((cfg.hidden,), jnp.float32),
            "wv": nrm(next(ks), (cfg.hidden, cfg.hidden)),
            "bv": jnp.zeros((cfg.hidden,), jnp.float32),
            "wo": nrm(next(ks), (cfg.hidden, cfg.hidden)),
            "bo": jnp.zeros((cfg.hidden,), jnp.float32),
            "attn_ln_g": jnp.ones((cfg.hidden,), jnp.float32),
            "attn_ln_b": jnp.zeros((cfg.hidden,), jnp.float32),
            "w1": nrm(next(ks), (cfg.hidden, cfg.intermediate)),
            "b1": jnp.zeros((cfg.intermediate,), jnp.float32),
            "w2": nrm(next(ks), (cfg.intermediate, cfg.hidden)),
            "b2": jnp.zeros((cfg.hidden,), jnp.float32),
            "out_ln_g": jnp.ones((cfg.hidden,), jnp.float32),
            "out_ln_b": jnp.zeros((cfg.hidden,), jnp.float32),
        }
        p["layers"].append(layer)
    return p


def legal_bert_regression(params, input_ids, attention_mask, cfg,
                          items_per_step=None):
    """Forward pass of LegalBertRegression (eval mode)."""
    B, S = input_ids.shape
    H, nH, L, I = cfg.hidden, cfg.heads, cfg.layers, cfg.intermediate
    dH = H // nH

    # --- embeddings (gather is plain-JAX glue) ---
    # TODO(synk): token_type_ids hard-coded to 0 and positions to 0..S-1,
    # matching this usage of the original module.
    word = jnp.take(params["word_emb"], input_ids, axis=0)          # (B,S,H)
    pos = params["pos_emb"][:S][None, :, :]                         # (1,S,H)
    typ = params["type_emb"][0][None, None, :]                      # (1,1,H)
    # TODO(synk): cast to bf16 at real size to halve the HBM->VMEM DMA.
    emb = (word + pos + typ).astype(jnp.float32)                    # (B,S,H)

    # Additive key-mask bias, computed once (HF-style -10000), long axis last.
    mask_bias = (1.0 - attention_mask.astype(jnp.float32)) * -10000.0   # (B,S)

    # --- grid shape: single step on single-TC chips (v5e/v6e), split the
    #     batch across a "parallel" axis only on 2-TC chips (v7x). ---
    if items_per_step is None:
        kind = jax.devices()[0].device_kind.lower()
        n_tc = 2 if "v7" in kind else 1
        items_per_step = B if (n_tc == 1 or B % n_tc != 0) else B // n_tc
    nb = int(items_per_step)
    num_steps = B // nb
    assert num_steps * nb == B

    # --- pack weights into per-head / per-layer slabs (VMEM-resident) ---
    Ls = params["layers"]
    stack = lambda name: jnp.stack([l[name] for l in Ls])

    def per_head_w(w):        # (H, H) -> (nH, H, dH): head h = w[:, h*dH:(h+1)*dH]
        return jnp.transpose(w.reshape(H, nH, dH), (1, 0, 2))

    def per_head_b(b):        # (H,) -> (nH, 1, dH)
        return b.reshape(nH, dH)[:, None, :]

    # QKV per-head slabs, flat index = (l*3 + {q,k,v})*nH + h.
    wqkv = jnp.concatenate(
        [jnp.stack([per_head_w(l["wq"]), per_head_w(l["wk"]), per_head_w(l["wv"])]
                   ).reshape(3 * nH, H, dH) for l in Ls], axis=0)    # (L*3*nH,H,dH)
    bqkv = jnp.concatenate(
        [jnp.stack([per_head_b(l["bq"]), per_head_b(l["bk"]), per_head_b(l["bv"])]
                   ).reshape(3 * nH, 1, dH) for l in Ls], axis=0)    # (L*3*nH,1,dH)
    # Output projection per head, flat index = l*nH + h.
    wo = jnp.concatenate([l["wo"].reshape(nH, dH, H) for l in Ls],
                         axis=0)                                     # (L*nH,dH,H)
    bo = stack("bo")[:, None, :]                                     # (L,1,H)
    ln1g = stack("attn_ln_g")[:, None, :]
    ln1b = stack("attn_ln_b")[:, None, :]
    w1 = stack("w1")                                                 # (L,H,I)
    b1 = stack("b1")[:, None, :]                                     # (L,1,I)
    w2 = stack("w2")                                                 # (L,I,H)
    b2 = stack("b2")[:, None, :]
    ln2g = stack("out_ln_g")[:, None, :]
    ln2b = stack("out_ln_b")[:, None, :]
    embg = params["emb_ln_g"][None, :]
    embb = params["emb_ln_b"][None, :]
    poolw = params["pooler_w"]                                       # (H,H)
    poolb = params["pooler_b"][None, :]                              # (1,H)
    headw = params["head_w"].T                                       # (1,H)
    headb = params["head_b"][None, :]                                # (1,1)

    weights = (wqkv, bqkv, wo, bo, ln1g, ln1b, w1, b1, w2, b2, ln2g, ln2b,
               embg, embb, poolw, poolb, headw, headb)

    def full_spec(a):
        # TODO(synk): single-buffer (pl.Buffered(1)) these constant-index
        # weight specs once weights are streamed per layer at real size.
        return pl.BlockSpec(a.shape, lambda s, _nd=a.ndim: (0,) * _nd)

    kernel = functools.partial(_fused_bert_kernel, nb=nb, num_layers=L,
                               num_heads=nH, head_dim=dH, eps=1e-12)

    # Advisory cost estimate for XLA scheduling around the custom call.
    flops_layer = (3 * 2 * S * H * H          # QKV projections
                   + nH * 2 * S * S * dH      # QK^T
                   + nH * 2 * S * S * dH      # P @ V
                   + 2 * S * H * H            # output projection
                   + 2 * S * H * I            # FFN up
                   + 2 * S * I * H)           # FFN down
    flops = B * (L * flops_layer + 2 * H * H + 2 * H)
    transcendentals = B * (L * (nH * S * S + S * I) + H)
    bytes_accessed = int(sum(4 * a.size for a in (emb, mask_bias) + weights)
                         + 4 * num_steps * 128)

    out = pl.pallas_call(
        kernel,
        out_shape=jax.ShapeDtypeStruct((num_steps, 128), jnp.float32),
        grid=(num_steps,),
        in_specs=[pl.BlockSpec((nb, S, H), lambda s: (s, 0, 0)),   # tokens
                  pl.BlockSpec((nb, S), lambda s: (s, 0))]         # mask bias
                 + [full_spec(w) for w in weights],
        out_specs=pl.BlockSpec((1, 128), lambda s: (s, 0)),        # lane-dense
        compiler_params=pltpu.CompilerParams(
            dimension_semantics=("parallel",)),
        cost_estimate=pl.CostEstimate(flops=int(flops),
                                      transcendentals=int(transcendentals),
                                      bytes_accessed=bytes_accessed),
    )(emb, mask_bias, *weights)

    return out[:, :nb].reshape(B, 1)


# --------------------------------- main --------------------------------------

if __name__ == "__main__":
    cfg = Config()
    key = jax.random.PRNGKey(0)
    k_param, k_ids = jax.random.split(key)

    params = init_params(k_param, cfg)

    B, S = 2, 8
    input_ids = jax.random.randint(k_ids, (B, S), 0, cfg.vocab, dtype=jnp.int32)
    attention_mask = jnp.ones((B, S), dtype=jnp.int32).at[1, 6:].set(0)

    fwd = jax.jit(functools.partial(legal_bert_regression, cfg=cfg))
    out = jax.block_until_ready(fwd(params, input_ids, attention_mask))

    assert out.shape == (B, 1), out.shape
    assert bool(jnp.all(jnp.isfinite(out)))
    print("KERNEL_OK")
</pallas_src>

<mosaic_0001>
module attributes {stable_mosaic.version = 11 : i64} {
  func.func @_fused_bert_kernel(%arg0: i32, %arg1: memref<2x8x32xf32, #tpu.memory_space<vmem>>, %arg2: memref<2x8xf32, #tpu.memory_space<vmem>>, %arg3: memref<24x32x8xf32, #tpu.memory_space<vmem>>, %arg4: memref<24x1x8xf32, #tpu.memory_space<vmem>>, %arg5: memref<8x8x32xf32, #tpu.memory_space<vmem>>, %arg6: memref<2x1x32xf32, #tpu.memory_space<vmem>>, %arg7: memref<2x1x32xf32, #tpu.memory_space<vmem>>, %arg8: memref<2x1x32xf32, #tpu.memory_space<vmem>>, %arg9: memref<2x32x64xf32, #tpu.memory_space<vmem>>, %arg10: memref<2x1x64xf32, #tpu.memory_space<vmem>>, %arg11: memref<2x64x32xf32, #tpu.memory_space<vmem>>, %arg12: memref<2x1x32xf32, #tpu.memory_space<vmem>>, %arg13: memref<2x1x32xf32, #tpu.memory_space<vmem>>, %arg14: memref<2x1x32xf32, #tpu.memory_space<vmem>>, %arg15: memref<1x32xf32, #tpu.memory_space<vmem>>, %arg16: memref<1x32xf32, #tpu.memory_space<vmem>>, %arg17: memref<32x32xf32, #tpu.memory_space<vmem>>, %arg18: memref<1x32xf32, #tpu.memory_space<vmem>>, %arg19: memref<1x32xf32, #tpu.memory_space<vmem>>, %arg20: memref<1x1xf32, #tpu.memory_space<vmem>>, %arg21: memref<1x128xf32, #tpu.memory_space<vmem>>) attributes {dimension_semantics = [#tpu.dimension_semantics<parallel>], iteration_bounds = array<i64: 1>, scalar_prefetch = 0 : i64, scratch_operands = 0 : i64, tpu.core_type = #tpu.core_type<tc>, window_params = [{transform_indices = @transform_0, window_bounds = array<i64: 2, 8, 32>}, {transform_indices = @transform_1, window_bounds = array<i64: 2, 8>}, {pipeline_mode = #tpu.pipeline_mode<synchronous>, transform_indices = @transform_2, window_bounds = array<i64: 24, 32, 8>}, {pipeline_mode = #tpu.pipeline_mode<synchronous>, transform_indices = @transform_3, window_bounds = array<i64: 24, 1, 8>}, {pipeline_mode = #tpu.pipeline_mode<synchronous>, transform_indices = @transform_4, window_bounds = array<i64: 8, 8, 32>}, {pipeline_mode = #tpu.pipeline_mode<synchronous>, transform_indices = @transform_5, window_bounds = array<i64: 2, 1, 32>}, {pipeline_mode = #tpu.pipeline_mode<synchronous>, transform_indices = @transform_6, window_bounds = array<i64: 2, 1, 32>}, {pipeline_mode = #tpu.pipeline_mode<synchronous>, transform_indices = @transform_7, window_bounds = array<i64: 2, 1, 32>}, {pipeline_mode = #tpu.pipeline_mode<synchronous>, transform_indices = @transform_8, window_bounds = array<i64: 2, 32, 64>}, {pipeline_mode = #tpu.pipeline_mode<synchronous>, transform_indices = @transform_9, window_bounds = array<i64: 2, 1, 64>}, {pipeline_mode = #tpu.pipeline_mode<synchronous>, transform_indices = @transform_10, window_bounds = array<i64: 2, 64, 32>}, {pipeline_mode = #tpu.pipeline_mode<synchronous>, transform_indices = @transform_11, window_bounds = array<i64: 2, 1, 32>}, {pipeline_mode = #tpu.pipeline_mode<synchronous>, transform_indices = @transform_12, window_bounds = array<i64: 2, 1, 32>}, {pipeline_mode = #tpu.pipeline_mode<synchronous>, transform_indices = @transform_13, window_bounds = array<i64: 2, 1, 32>}, {pipeline_mode = #tpu.pipeline_mode<synchronous>, transform_indices = @transform_14, window_bounds = array<i64: 1, 32>}, {pipeline_mode = #tpu.pipeline_mode<synchronous>, transform_indices = @transform_15, window_bounds = array<i64: 1, 32>}, {pipeline_mode = #tpu.pipeline_mode<synchronous>, transform_indices = @transform_16, window_bounds = array<i64: 32, 32>}, {pipeline_mode = #tpu.pipeline_mode<synchronous>, transform_indices = @transform_17, window_bounds = array<i64: 1, 32>}, {pipeline_mode = #tpu.pipeline_mode<synchronous>, transform_indices = @transform_18, window_bounds = array<i64: 1, 32>}, {pipeline_mode = #tpu.pipeline_mode<synchronous>, transform_indices = @transform_19, window_bounds = array<i64: 1, 1>}, {transform_indices = @transform_20, window_bounds = array<i64: 1, 128>}]} {
    %c0 = arith.constant 0 : index
    %c0_0 = arith.constant 0 : index
    %c0_1 = arith.constant 0 : index
    %0 = vector.load %arg1[%c0, %c0_0, %c0_1] : memref<2x8x32xf32, #tpu.memory_space<vmem>>, vector<2x8x32xf32>
    %c0_2 = arith.constant 0 : index
    %c0_3 = arith.constant 0 : index
    %1 = vector.load %arg2[%c0_2, %c0_3] : memref<2x8xf32, #tpu.memory_space<vmem>>, vector<2x8xf32>
    %2 = tpu.iota {dimensions = array<i32: 1>} : vector<1x128xi32>
    %cst = arith.constant 0.000000e+00 : f32
    %3 = vector.broadcast %cst : f32 to vector<1x128xf32>
    %4 = vector.extract_strided_slice %0 {offsets = [0, 0, 0], sizes = [1, 8, 32], strides = [1, 1, 1]} : vector<2x8x32xf32> to vector<1x8x32xf32>
    %5 = vector.shape_cast %4 : vector<1x8x32xf32> to vector<8x32xf32>
    %6 = vector.extract_strided_slice %1 {offsets = [0, 0], sizes = [1, 8], strides = [1, 1]} : vector<2x8xf32> to vector<1x8xf32>
    %c0_4 = arith.constant 0 : index
    %c0_5 = arith.constant 0 : index
    %7 = vector.load %arg15[%c0_4, %c0_5] : memref<1x32xf32, #tpu.memory_space<vmem>>, vector<1x32xf32>
    %c0_6 = arith.constant 0 : index
    %c0_7 = arith.constant 0 : index
    %8 = vector.load %arg16[%c0_6, %c0_7] : memref<1x32xf32, #tpu.memory_space<vmem>>, vector<1x32xf32>
    %cst_8 = arith.constant dense<0.000000e+00> : vector<8xf32>
    %9 = vector.multi_reduction <add>, %5, %cst_8 [1] : vector<8x32xf32> to vector<8xf32>
    %10 = vector.shape_cast %9 : vector<8xf32> to vector<8x1xf32>
    %cst_9 = arith.constant 3.200000e+01 : f32
    %11 = vector.broadcast %cst_9 : f32 to vector<8x1xf32>
    %12 = arith.divf %10, %11 : vector<8x1xf32>
    %13 = vector.broadcast %12 : vector<8x1xf32> to vector<8x32xf32>
    %14 = arith.subf %5, %13 : vector<8x32xf32>
    %15 = arith.mulf %14, %14 : vector<8x32xf32>
    %cst_10 = arith.constant dense<0.000000e+00> : vector<8xf32>
    %16 = vector.multi_reduction <add>, %15, %cst_10 [1] : vector<8x32xf32> to vector<8xf32>
    %17 = vector.shape_cast %16 : vector<8xf32> to vector<8x1xf32>
    %cst_11 = arith.constant 3.200000e+01 : f32
    %18 = vector.broadcast %cst_11 : f32 to vector<8x1xf32>
    %19 = arith.divf %17, %18 : vector<8x1xf32>
    %cst_12 = arith.constant 9.99999996E-13 : f32
    %20 = vector.broadcast %cst_12 : f32 to vector<8x1xf32>
    %21 = arith.addf %19, %20 : vector<8x1xf32>
    %22 = math.rsqrt %21 : vector<8x1xf32>
    %23 = vector.broadcast %22 : vector<8x1xf32> to vector<8x32xf32>
    %24 = arith.mulf %14, %23 : vector<8x32xf32>
    %25 = vector.broadcast %7 : vector<1x32xf32> to vector<8x32xf32>
    %26 = arith.mulf %24, %25 : vector<8x32xf32>
    %27 = vector.broadcast %8 : vector<1x32xf32> to vector<8x32xf32>
    %28 = arith.addf %26, %27 : vector<8x32xf32>
    %cst_13 = arith.constant 0.000000e+00 : f32
    %29 = vector.broadcast %cst_13 : f32 to vector<8x32xf32>
    %c0_14 = arith.constant 0 : index
    %c0_15 = arith.constant 0 : index
    %c0_16 = arith.constant 0 : index
    %30 = vector.load %arg3[%c0_14, %c0_15, %c0_16] : memref<24x32x8xf32, #tpu.memory_space<vmem>>, vector<1x32x8xf32>
    %31 = vector.shape_cast %30 : vector<1x32x8xf32> to vector<32x8xf32>
    %cst_17 = arith.constant dense<0.000000e+00> : vector<8x8xf32>
    %32 = tpu.matmul %28, %31, %cst_17 {dimension_numbers = #tpu.dot_dimension_numbers<[1], [0], [0], [1], [0, 0, 1, 1], [], []>} : vector<8x32xf32>, vector<32x8xf32>, vector<8x8xf32> -> vector<8x8xf32>
    %c0_18 = arith.constant 0 : index
    %c0_19 = arith.constant 0 : index
    %c0_20 = arith.constant 0 : index
    %33 = vector.load %arg4[%c0_18, %c0_19, %c0_20] : memref<24x1x8xf32, #tpu.memory_space<vmem>>, vector<1x1x8xf32>
    %34 = vector.shape_cast %33 : vector<1x1x8xf32> to vector<1x8xf32>
    %35 = vector.broadcast %34 : vector<1x8xf32> to vector<8x8xf32>
    %36 = arith.addf %32, %35 : vector<8x8xf32>
    %c4 = arith.constant 4 : index
    %c0_21 = arith.constant 0 : index
    %c0_22 = arith.constant 0 : index
    %37 = vector.load %arg3[%c4, %c0_21, %c0_22] : memref<24x32x8xf32, #tpu.memory_space<vmem>>, vector<1x32x8xf32>
    %38 = vector.shape_cast %37 : vector<1x32x8xf32> to vector<32x8xf32>
    %cst_23 = arith.constant dense<0.000000e+00> : vector<8x8xf32>
    %39 = tpu.matmul %28, %38, %cst_23 {dimension_numbers = #tpu.dot_dimension_numbers<[1], [0], [0], [1], [0, 0, 1, 1], [], []>} : vector<8x32xf32>, vector<32x8xf32>, vector<8x8xf32> -> vector<8x8xf32>
    %c4_24 = arith.constant 4 : index
    %c0_25 = arith.constant 0 : index
    %c0_26 = arith.constant 0 : index
    %40 = vector.load %arg4[%c4_24, %c0_25, %c0_26] : memref<24x1x8xf32, #tpu.memory_space<vmem>>, vector<1x1x8xf32>
    %41 = vector.shape_cast %40 : vector<1x1x8xf32> to vector<1x8xf32>
    %42 = vector.broadcast %41 : vector<1x8xf32> to vector<8x8xf32>
    %43 = arith.addf %39, %42 : vector<8x8xf32>
    %c8 = arith.constant 8 : index
    %c0_27 = arith.constant 0 : index
    %c0_28 = arith.constant 0 : index
    %44 = vector.load %arg3[%c8, %c0_27, %c0_28] : memref<24x32x8xf32, #tpu.memory_space<vmem>>, vector<1x32x8xf32>
    %45 = vector.shape_cast %44 : vector<1x32x8xf32> to vector<32x8xf32>
    %cst_29 = arith.constant dense<0.000000e+00> : vector<8x8xf32>
    %46 = tpu.matmul %28, %45, %cst_29 {dimension_numbers = #tpu.dot_dimension_numbers<[1], [0], [0], [1], [0, 0, 1, 1], [], []>} : vector<8x32xf32>, vector<32x8xf32>, vector<8x8xf32> -> vector<8x8xf32>
    %c8_30 = arith.constant 8 : index
    %c0_31 = arith.constant 0 : index
    %c0_32 = arith.constant 0 : index
    %47 = vector.load %arg4[%c8_30, %c0_31, %c0_32] : memref<24x1x8xf32, #tpu.memory_space<vmem>>, vector<1x1x8xf32>
    %48 = vector.shape_cast %47 : vector<1x1x8xf32> to vector<1x8xf32>
    %49 = vector.broadcast %48 : vector<1x8xf32> to vector<8x8xf32>
    %50 = arith.addf %46, %49 : vector<8x8xf32>
    %cst_33 = arith.constant dense<0.000000e+00> : vector<8x8xf32>
    %51 = tpu.matmul %36, %43, %cst_33 {dimension_numbers = #tpu.dot_dimension_numbers<[1], [1], [0], [0], [0, 0, 1, 0], [], []>} : vector<8x8xf32>, vector<8x8xf32>, vector<8x8xf32> -> vector<8x8xf32>
    %cst_34 = arith.constant 0.353553385 : f32
    %52 = vector.broadcast %cst_34 : f32 to vector<8x8xf32>
    %53 = arith.mulf %51, %52 : vector<8x8xf32>
    %54 = vector.broadcast %6 : vector<1x8xf32> to vector<8x8xf32>
    %55 = arith.addf %53, %54 : vector<8x8xf32>
    %cst_35 = arith.constant dense<0xFF800000> : vector<8xf32>
    %56 = vector.multi_reduction <maximumf>, %55, %cst_35 [1] : vector<8x8xf32> to vector<8xf32>
    %57 = vector.shape_cast %56 : vector<8xf32> to vector<8x1xf32>
    %58 = vector.broadcast %57 : vector<8x1xf32> to vector<8x8xf32>
    %59 = arith.subf %55, %58 : vector<8x8xf32>
    %60 = math.exp %59 : vector<8x8xf32>
    %cst_36 = arith.constant dense<0.000000e+00> : vector<8xf32>
    %61 = vector.multi_reduction <add>, %60, %cst_36 [1] : vector<8x8xf32> to vector<8xf32>
    %62 = vector.shape_cast %61 : vector<8xf32> to vector<8x1xf32>
    %63 = vector.broadcast %62 : vector<8x1xf32> to vector<8x8xf32>
    %64 = arith.divf %60, %63 : vector<8x8xf32>
    %cst_37 = arith.constant dense<0.000000e+00> : vector<8x8xf32>
    %65 = tpu.matmul %64, %50, %cst_37 {dimension_numbers = #tpu.dot_dimension_numbers<[1], [0], [0], [1], [0, 0, 1, 1], [], []>} : vector<8x8xf32>, vector<8x8xf32>, vector<8x8xf32> -> vector<8x8xf32>
    %c0_38 = arith.constant 0 : index
    %c0_39 = arith.constant 0 : index
    %c0_40 = arith.constant 0 : index
    %66 = vector.load %arg5[%c0_38, %c0_39, %c0_40] : memref<8x8x32xf32, #tpu.memory_space<vmem>>, vector<1x8x32xf32>
    %67 = vector.shape_cast %66 : vector<1x8x32xf32> to vector<8x32xf32>
    %cst_41 = arith.constant dense<0.000000e+00> : vector<8x32xf32>
    %68 = tpu.matmul %65, %67, %cst_41 {dimension_numbers = #tpu.dot_dimension_numbers<[1], [0], [0], [1], [0, 0, 1, 1], [], []>} : vector<8x8xf32>, vector<8x32xf32>, vector<8x32xf32> -> vector<8x32xf32>
    %69 = arith.addf %29, %68 : vector<8x32xf32>
    %c1 = arith.constant 1 : index
    %c0_42 = arith.constant 0 : index
    %c0_43 = arith.constant 0 : index
    %70 = vector.load %arg3[%c1, %c0_42, %c0_43] : memref<24x32x8xf32, #tpu.memory_space<vmem>>, vector<1x32x8xf32>
    %71 = vector.shape_cast %70 : vector<1x32x8xf32> to vector<32x8xf32>
    %cst_44 = arith.constant dense<0.000000e+00> : vector<8x8xf32>
    %72 = tpu.matmul %28, %71, %cst_44 {dimension_numbers = #tpu.dot_dimension_numbers<[1], [0], [0], [1], [0, 0, 1, 1], [], []>} : vector<8x32xf32>, vector<32x8xf32>, vector<8x8xf32> -> vector<8x8xf32>
    %c1_45 = arith.constant 1 : index
    %c0_46 = arith.constant 0 : index
    %c0_47 = arith.constant 0 : index
    %73 = vector.load %arg4[%c1_45, %c0_46, %c0_47] : memref<24x1x8xf32, #tpu.memory_space<vmem>>, vector<1x1x8xf32>
    %74 = vector.shape_cast %73 : vector<1x1x8xf32> to vector<1x8xf32>
    %75 = vector.broadcast %74 : vector<1x8xf32> to vector<8x8xf32>
    %76 = arith.addf %72, %75 : vector<8x8xf32>
    %c5 = arith.constant 5 : index
    %c0_48 = arith.constant 0 : index
    %c0_49 = arith.constant 0 : index
    %77 = vector.load %arg3[%c5, %c0_48, %c0_49] : memref<24x32x8xf32, #tpu.memory_space<vmem>>, vector<1x32x8xf32>
    %78 = vector.shape_cast %77 : vector<1x32x8xf32> to vector<32x8xf32>
    %cst_50 = arith.constant dense<0.000000e+00> : vector<8x8xf32>
    %79 = tpu.matmul %28, %78, %cst_50 {dimension_numbers = #tpu.dot_dimension_numbers<[1], [0], [0], [1], [0, 0, 1, 1], [], []>} : vector<8x32xf32>, vector<32x8xf32>, vector<8x8xf32> -> vector<8x8xf32>
    %c5_51 = arith.constant 5 : index
    %c0_52 = arith.constant 0 : index
    %c0_53 = arith.constant 0 : index
    %80 = vector.load %arg4[%c5_51, %c0_52, %c0_53] : memref<24x1x8xf32, #tpu.memory_space<vmem>>, vector<1x1x8xf32>
    %81 = vector.shape_cast %80 : vector<1x1x8xf32> to vector<1x8xf32>
    %82 = vector.broadcast %81 : vector<1x8xf32> to vector<8x8xf32>
    %83 = arith.addf %79, %82 : vector<8x8xf32>
    %c9 = arith.constant 9 : index
    %c0_54 = arith.constant 0 : index
    %c0_55 = arith.constant 0 : index
    %84 = vector.load %arg3[%c9, %c0_54, %c0_55] : memref<24x32x8xf32, #tpu.memory_space<vmem>>, vector<1x32x8xf32>
    %85 = vector.shape_cast %84 : vector<1x32x8xf32> to vector<32x8xf32>
    %cst_56 = arith.constant dense<0.000000e+00> : vector<8x8xf32>
    %86 = tpu.matmul %28, %85, %cst_56 {dimension_numbers = #tpu.dot_dimension_numbers<[1], [0], [0], [1], [0, 0, 1, 1], [], []>} : vector<8x32xf32>, vector<32x8xf32>, vector<8x8xf32> -> vector<8x8xf32>
    %c9_57 = arith.constant 9 : index
    %c0_58 = arith.constant 0 : index
    %c0_59 = arith.constant 0 : index
    %87 = vector.load %arg4[%c9_57, %c0_58, %c0_59] : memref<24x1x8xf32, #tpu.memory_space<vmem>>, vector<1x1x8xf32>
    %88 = vector.shape_cast %87 : vector<1x1x8xf32> to vector<1x8xf32>
    %89 = vector.broadcast %88 : vector<1x8xf32> to vector<8x8xf32>
    %90 = arith.addf %86, %89 : vector<8x8xf32>
    %cst_60 = arith.constant dense<0.000000e+00> : vector<8x8xf32>
    %91 = tpu.matmul %76, %83, %cst_60 {dimension_numbers = #tpu.dot_dimension_numbers<[1], [1], [0], [0], [0, 0, 1, 0], [], []>} : vector<8x8xf32>, vector<8x8xf32>, vector<8x8xf32> -> vector<8x8xf32>
    %cst_61 = arith.constant 0.353553385 : f32
    %92 = vector.broadcast %cst_61 : f32 to vector<8x8xf32>
    %93 = arith.mulf %91, %92 : vector<8x8xf32>
    %94 = vector.broadcast %6 : vector<1x8xf32> to vector<8x8xf32>
    %95 = arith.addf %93, %94 : vector<8x8xf32>
    %cst_62 = arith.constant dense<0xFF800000> : vector<8xf32>
    %96 = vector.multi_reduction <maximumf>, %95, %cst_62 [1] : vector<8x8xf32> to vector<8xf32>
    %97 = vector.shape_cast %96 : vector<8xf32> to vector<8x1xf32>
    %98 = vector.broadcast %97 : vector<8x1xf32> to vector<8x8xf32>
    %99 = arith.subf %95, %98 : vector<8x8xf32>
    %100 = math.exp %99 : vector<8x8xf32>
    %cst_63 = arith.constant dense<0.000000e+00> : vector<8xf32>
    %101 = vector.multi_reduction <add>, %100, %cst_63 [1] : vector<8x8xf32> to vector<8xf32>
    %102 = vector.shape_cast %101 : vector<8xf32> to vector<8x1xf32>
    %103 = vector.broadcast %102 : vector<8x1xf32> to vector<8x8xf32>
    %104 = arith.divf %100, %103 : vector<8x8xf32>
    %cst_64 = arith.constant dense<0.000000e+00> : vector<8x8xf32>
    %105 = tpu.matmul %104, %90, %cst_64 {dimension_numbers = #tpu.dot_dimension_numbers<[1], [0], [0], [1], [0, 0, 1, 1], [], []>} : vector<8x8xf32>, vector<8x8xf32>, vector<8x8xf32> -> vector<8x8xf32>
    %c1_65 = arith.constant 1 : index
    %c0_66 = arith.constant 0 : index
    %c0_67 = arith.constant 0 : index
    %106 = vector.load %arg5[%c1_65, %c0_66, %c0_67] : memref<8x8x32xf32, #tpu.memory_space<vmem>>, vector<1x8x32xf32>
    %107 = vector.shape_cast %106 : vector<1x8x32xf32> to vector<8x32xf32>
    %cst_68 = arith.constant dense<0.000000e+00> : vector<8x32xf32>
    %108 = tpu.matmul %105, %107, %cst_68 {dimension_numbers = #tpu.dot_dimension_numbers<[1], [0], [0], [1], [0, 0, 1, 1], [], []>} : vector<8x8xf32>, vector<8x32xf32>, vector<8x32xf32> -> vector<8x32xf32>
    %109 = arith.addf %69, %108 : vector<8x32xf32>
    %c2 = arith.constant 2 : index
    %c0_69 = arith.constant 0 : index
    %c0_70 = arith.constant 0 : index
    %110 = vector.load %arg3[%c2, %c0_69, %c0_70] : memref<24x32x8xf32, #tpu.memory_space<vmem>>, vector<1x32x8xf32>
    %111 = vector.shape_cast %110 : vector<1x32x8xf32> to vector<32x8xf32>
    %cst_71 = arith.constant dense<0.000000e+00> : vector<8x8xf32>
    %112 = tpu.matmul %28, %111, %cst_71 {dimension_numbers = #tpu.dot_dimension_numbers<[1], [0], [0], [1], [0, 0, 1, 1], [], []>} : vector<8x32xf32>, vector<32x8xf32>, vector<8x8xf32> -> vector<8x8xf32>
    %c2_72 = arith.constant 2 : index
    %c0_73 = arith.constant 0 : index
    %c0_74 = arith.constant 0 : index
    %113 = vector.load %arg4[%c2_72, %c0_73, %c0_74] : memref<24x1x8xf32, #tpu.memory_space<vmem>>, vector<1x1x8xf32>
    %114 = vector.shape_cast %113 : vector<1x1x8xf32> to vector<1x8xf32>
    %115 = vector.broadcast %114 : vector<1x8xf32> to vector<8x8xf32>
    %116 = arith.addf %112, %115 : vector<8x8xf32>
    %c6 = arith.constant 6 : index
    %c0_75 = arith.constant 0 : index
    %c0_76 = arith.constant 0 : index
    %117 = vector.load %arg3[%c6, %c0_75, %c0_76] : memref<24x32x8xf32, #tpu.memory_space<vmem>>, vector<1x32x8xf32>
    %118 = vector.shape_cast %117 : vector<1x32x8xf32> to vector<32x8xf32>
    %cst_77 = arith.constant dense<0.000000e+00> : vector<8x8xf32>
    %119 = tpu.matmul %28, %118, %cst_77 {dimension_numbers = #tpu.dot_dimension_numbers<[1], [0], [0], [1], [0, 0, 1, 1], [], []>} : vector<8x32xf32>, vector<32x8xf32>, vector<8x8xf32> -> vector<8x8xf32>
    %c6_78 = arith.constant 6 : index
    %c0_79 = arith.constant 0 : index
    %c0_80 = arith.constant 0 : index
    %120 = vector.load %arg4[%c6_78, %c0_79, %c0_80] : memref<24x1x8xf32, #tpu.memory_space<vmem>>, vector<1x1x8xf32>
    %121 = vector.shape_cast %120 : vector<1x1x8xf32> to vector<1x8xf32>
    %122 = vector.broadcast %121 : vector<1x8xf32> to vector<8x8xf32>
    %123 = arith.addf %119, %122 : vector<8x8xf32>
    %c10 = arith.constant 10 : index
    %c0_81 = arith.constant 0 : index
    %c0_82 = arith.constant 0 : index
    %124 = vector.load %arg3[%c10, %c0_81, %c0_82] : memref<24x32x8xf32, #tpu.memory_space<vmem>>, vector<1x32x8xf32>
    %125 = vector.shape_cast %124 : vector<1x32x8xf32> to vector<32x8xf32>
    %cst_83 = arith.constant dense<0.000000e+00> : vector<8x8xf32>
    %126 = tpu.matmul %28, %125, %cst_83 {dimension_numbers = #tpu.dot_dimension_numbers<[1], [0], [0], [1], [0, 0, 1, 1], [], []>} : vector<8x32xf32>, vector<32x8xf32>, vector<8x8xf32> -> vector<8x8xf32>
    %c10_84 = arith.constant 10 : index
    %c0_85 = arith.constant 0 : index
    %c0_86 = arith.constant 0 : index
    %127 = vector.load %arg4[%c10_84, %c0_85, %c0_86] : memref<24x1x8xf32, #tpu.memory_space<vmem>>, vector<1x1x8xf32>
    %128 = vector.shape_cast %127 : vector<1x1x8xf32> to vector<1x8xf32>
    %129 = vector.broadcast %128 : vector<1x8xf32> to vector<8x8xf32>
    %130 = arith.addf %126, %129 : vector<8x8xf32>
    %cst_87 = arith.constant dense<0.000000e+00> : vector<8x8xf32>
    %131 = tpu.matmul %116, %123, %cst_87 {dimension_numbers = #tpu.dot_dimension_numbers<[1], [1], [0], [0], [0, 0, 1, 0], [], []>} : vector<8x8xf32>, vector<8x8xf32>, vector<8x8xf32> -> vector<8x8xf32>
    %cst_88 = arith.constant 0.353553385 : f32
    %132 = vector.broadcast %cst_88 : f32 to vector<8x8xf32>
    %133 = arith.mulf %131, %132 : vector<8x8xf32>
    %134 = vector.broadcast %6 : vector<1x8xf32> to vector<8x8xf32>
    %135 = arith.addf %133, %134 : vector<8x8xf32>
    %cst_89 = arith.constant dense<0xFF800000> : vector<8xf32>
    %136 = vector.multi_reduction <maximumf>, %135, %cst_89 [1] : vector<8x8xf32> to vector<8xf32>
    %137 = vector.shape_cast %136 : vector<8xf32> to vector<8x1xf32>
    %138 = vector.broadcast %137 : vector<8x1xf32> to vector<8x8xf32>
    %139 = arith.subf %135, %138 : vector<8x8xf32>
    %140 = math.exp %139 : vector<8x8xf32>
    %cst_90 = arith.constant dense<0.000000e+00> : vector<8xf32>
    %141 = vector.multi_reduction <add>, %140, %cst_90 [1] : vector<8x8xf32> to vector<8xf32>
    %142 = vector.shape_cast %141 : vector<8xf32> to vector<8x1xf32>
    %143 = vector.broadcast %142 : vector<8x1xf32> to vector<8x8xf32>
    %144 = arith.divf %140, %143 : vector<8x8xf32>
    %cst_91 = arith.constant dense<0.000000e+00> : vector<8x8xf32>
    %145 = tpu.matmul %144, %130, %cst_91 {dimension_numbers = #tpu.dot_dimension_numbers<[1], [0], [0], [1], [0, 0, 1, 1], [], []>} : vector<8x8xf32>, vector<8x8xf32>, vector<8x8xf32> -> vector<8x8xf32>
    %c2_92 = arith.constant 2 : index
    %c0_93 = arith.constant 0 : index
    %c0_94 = arith.constant 0 : index
    %146 = vector.load %arg5[%c2_92, %c0_93, %c0_94] : memref<8x8x32xf32, #tpu.memory_space<vmem>>, vector<1x8x32xf32>
    %147 = vector.shape_cast %146 : vector<1x8x32xf32> to vector<8x32xf32>
    %cst_95 = arith.constant dense<0.000000e+00> : vector<8x32xf32>
    %148 = tpu.matmul %145, %147, %cst_95 {dimension_numbers = #tpu.dot_dimension_numbers<[1], [0], [0], [1], [0, 0, 1, 1], [], []>} : vector<8x8xf32>, vector<8x32xf32>, vector<8x32xf32> -> vector<8x32xf32>
    %149 = arith.addf %109, %148 : vector<8x32xf32>
    %c3 = arith.constant 3 : index
    %c0_96 = arith.constant 0 : index
    %c0_97 = arith.constant 0 : index
    %150 = vector.load %arg3[%c3, %c0_96, %c0_97] : memref<24x32x8xf32, #tpu.memory_space<vmem>>, vector<1x32x8xf32>
    %151 = vector.shape_cast %150 : vector<1x32x8xf32> to vector<32x8xf32>
    %cst_98 = arith.constant dense<0.000000e+00> : vector<8x8xf32>
    %152 = tpu.matmul %28, %151, %cst_98 {dimension_numbers = #tpu.dot_dimension_numbers<[1], [0], [0], [1], [0, 0, 1, 1], [], []>} : vector<8x32xf32>, vector<32x8xf32>, vector<8x8xf32> -> vector<8x8xf32>
    %c3_99 = arith.constant 3 : index
    %c0_100 = arith.constant 0 : index
    %c0_101 = arith.constant 0 : index
    %153 = vector.load %arg4[%c3_99, %c0_100, %c0_101] : memref<24x1x8xf32, #tpu.memory_space<vmem>>, vector<1x1x8xf32>
    %154 = vector.shape_cast %153 : vector<1x1x8xf32> to vector<1x8xf32>
    %155 = vector.broadcast %154 : vector<1x8xf32> to vector<8x8xf32>
    %156 = arith.addf %152, %155 : vector<8x8xf32>
    %c7 = arith.constant 7 : index
    %c0_102 = arith.constant 0 : index
    %c0_103 = arith.constant 0 : index
    %157 = vector.load %arg3[%c7, %c0_102, %c0_103] : memref<24x32x8xf32, #tpu.memory_space<vmem>>, vector<1x32x8xf32>
    %158 = vector.shape_cast %157 : vector<1x32x8xf32> to vector<32x8xf32>
    %cst_104 = arith.constant dense<0.000000e+00> : vector<8x8xf32>
    %159 = tpu.matmul %28, %158, %cst_104 {dimension_numbers = #tpu.dot_dimension_numbers<[1], [0], [0], [1], [0, 0, 1, 1], [], []>} : vector<8x32xf32>, vector<32x8xf32>, vector<8x8xf32> -> vector<8x8xf32>
    %c7_105 = arith.constant 7 : index
    %c0_106 = arith.constant 0 : index
    %c0_107 = arith.constant 0 : index
    %160 = vector.load %arg4[%c7_105, %c0_106, %c0_107] : memref<24x1x8xf32, #tpu.memory_space<vmem>>, vector<1x1x8xf32>
    %161 = vector.shape_cast %160 : vector<1x1x8xf32> to vector<1x8xf32>
    %162 = vector.broadcast %161 : vector<1x8xf32> to vector<8x8xf32>
    %163 = arith.addf %159, %162 : vector<8x8xf32>
    %c11 = arith.constant 11 : index
    %c0_108 = arith.constant 0 : index
    %c0_109 = arith.constant 0 : index
    %164 = vector.load %arg3[%c11, %c0_108, %c0_109] : memref<24x32x8xf32, #tpu.memory_space<vmem>>, vector<1x32x8xf32>
    %165 = vector.shape_cast %164 : vector<1x32x8xf32> to vector<32x8xf32>
    %cst_110 = arith.constant dense<0.000000e+00> : vector<8x8xf32>
    %166 = tpu.matmul %28, %165, %cst_110 {dimension_numbers = #tpu.dot_dimension_numbers<[1], [0], [0], [1], [0, 0, 1, 1], [], []>} : vector<8x32xf32>, vector<32x8xf32>, vector<8x8xf32> -> vector<8x8xf32>
    %c11_111 = arith.constant 11 : index
    %c0_112 = arith.constant 0 : index
    %c0_113 = arith.constant 0 : index
    %167 = vector.load %arg4[%c11_111, %c0_112, %c0_113] : memref<24x1x8xf32, #tpu.memory_space<vmem>>, vector<1x1x8xf32>
    %168 = vector.shape_cast %167 : vector<1x1x8xf32> to vector<1x8xf32>
    %169 = vector.broadcast %168 : vector<1x8xf32> to vector<8x8xf32>
    %170 = arith.addf %166, %169 : vector<8x8xf32>
    %cst_114 = arith.constant dense<0.000000e+00> : vector<8x8xf32>
    %171 = tpu.matmul %156, %163, %cst_114 {dimension_numbers = #tpu.dot_dimension_numbers<[1], [1], [0], [0], [0, 0, 1, 0], [], []>} : vector<8x8xf32>, vector<8x8xf32>, vector<8x8xf32> -> vector<8x8xf32>
    %cst_115 = arith.constant 0.353553385 : f32
    %172 = vector.broadcast %cst_115 : f32 to vector<8x8xf32>
    %173 = arith.mulf %171, %172 : vector<8x8xf32>
    %174 = vector.broadcast %6 : vector<1x8xf32> to vector<8x8xf32>
    %175 = arith.addf %173, %174 : vector<8x8xf32>
    %cst_116 = arith.constant dense<0xFF800000> : vector<8xf32>
    %176 = vector.multi_reduction <maximumf>, %175, %cst_116 [1] : vector<8x8xf32> to vector<8xf32>
    %177 = vector.shape_cast %176 : vector<8xf32> to vector<8x1xf32>
    %178 = vector.broadcast %177 : vector<8x1xf32> to vector<8x8xf32>
    %179 = arith.subf %175, %178 : vector<8x8xf32>
    %180 = math.exp %179 : vector<8x8xf32>
    %cst_117 = arith.constant dense<0.000000e+00> : vector<8xf32>
    %181 = vector.multi_reduction <add>, %180, %cst_117 [1] : vector<8x8xf32> to vector<8xf32>
    %182 = vector.shape_cast %181 : vector<8xf32> to vector<8x1xf32>
    %183 = vector.broadcast %182 : vector<8x1xf32> to vector<8x8xf32>
    %184 = arith.divf %180, %183 : vector<8x8xf32>
    %cst_118 = arith.constant dense<0.000000e+00> : vector<8x8xf32>
    %185 = tpu.matmul %184, %170, %cst_118 {dimension_numbers = #tpu.dot_dimension_numbers<[1], [0], [0], [1], [0, 0, 1, 1], [], []>} : vector<8x8xf32>, vector<8x8xf32>, vector<8x8xf32> -> vector<8x8xf32>
    %c3_119 = arith.constant 3 : index
    %c0_120 = arith.constant 0 : index
    %c0_121 = arith.constant 0 : index
    %186 = vector.load %arg5[%c3_119, %c0_120, %c0_121] : memref<8x8x32xf32, #tpu.memory_space<vmem>>, vector<1x8x32xf32>
    %187 = vector.shape_cast %186 : vector<1x8x32xf32> to vector<8x32xf32>
    %cst_122 = arith.constant dense<0.000000e+00> : vector<8x32xf32>
    %188 = tpu.matmul %185, %187, %cst_122 {dimension_numbers = #tpu.dot_dimension_numbers<[1], [0], [0], [1], [0, 0, 1, 1], [], []>} : vector<8x8xf32>, vector<8x32xf32>, vector<8x32xf32> -> vector<8x32xf32>
    %189 = arith.addf %149, %188 : vector<8x32xf32>
    %c0_123 = arith.constant 0 : index
    %c0_124 = arith.constant 0 : index
    %c0_125 = arith.constant 0 : index
    %190 = vector.load %arg6[%c0_123, %c0_124, %c0_125] : memref<2x1x32xf32, #tpu.memory_space<vmem>>, vector<1x1x32xf32>
    %191 = vector.shape_cast %190 : vector<1x1x32xf32> to vector<1x32xf32>
    %192 = vector.broadcast %191 : vector<1x32xf32> to vector<8x32xf32>
    %193 = arith.addf %189, %192 : vector<8x32xf32>
    %194 = arith.addf %193, %28 : vector<8x32xf32>
    %c0_126 = arith.constant 0 : index
    %c0_127 = arith.constant 0 : index
    %c0_128 = arith.constant 0 : index
    %195 = vector.load %arg7[%c0_126, %c0_127, %c0_128] : memref<2x1x32xf32, #tpu.memory_space<vmem>>, vector<1x1x32xf32>
    %196 = vector.shape_cast %195 : vector<1x1x32xf32> to vector<1x32xf32>
    %c0_129 = arith.constant 0 : index
    %c0_130 = arith.constant 0 : index
    %c0_131 = arith.constant 0 : index
    %197 = vector.load %arg8[%c0_129, %c0_130, %c0_131] : memref<2x1x32xf32, #tpu.memory_space<vmem>>, vector<1x1x32xf32>
    %198 = vector.shape_cast %197 : vector<1x1x32xf32> to vector<1x32xf32>
    %cst_132 = arith.constant dense<0.000000e+00> : vector<8xf32>
    %199 = vector.multi_reduction <add>, %194, %cst_132 [1] : vector<8x32xf32> to vector<8xf32>
    %200 = vector.shape_cast %199 : vector<8xf32> to vector<8x1xf32>
    %cst_133 = arith.constant 3.200000e+01 : f32
    %201 = vector.broadcast %cst_133 : f32 to vector<8x1xf32>
    %202 = arith.divf %200, %201 : vector<8x1xf32>
    %203 = vector.broadcast %202 : vector<8x1xf32> to vector<8x32xf32>
    %204 = arith.subf %194, %203 : vector<8x32xf32>
    %205 = arith.mulf %204, %204 : vector<8x32xf32>
    %cst_134 = arith.constant dense<0.000000e+00> : vector<8xf32>
    %206 = vector.multi_reduction <add>, %205, %cst_134 [1] : vector<8x32xf32> to vector<8xf32>
    %207 = vector.shape_cast %206 : vector<8xf32> to vector<8x1xf32>
    %cst_135 = arith.constant 3.200000e+01 : f32
    %208 = vector.broadcast %cst_135 : f32 to vector<8x1xf32>
    %209 = arith.divf %207, %208 : vector<8x1xf32>
    %cst_136 = arith.constant 9.99999996E-13 : f32
    %210 = vector.broadcast %cst_136 : f32 to vector<8x1xf32>
    %211 = arith.addf %209, %210 : vector<8x1xf32>
    %212 = math.rsqrt %211 : vector<8x1xf32>
    %213 = vector.broadcast %212 : vector<8x1xf32> to vector<8x32xf32>
    %214 = arith.mulf %204, %213 : vector<8x32xf32>
    %215 = vector.broadcast %196 : vector<1x32xf32> to vector<8x32xf32>
    %216 = arith.mulf %214, %215 : vector<8x32xf32>
    %217 = vector.broadcast %198 : vector<1x32xf32> to vector<8x32xf32>
    %218 = arith.addf %216, %217 : vector<8x32xf32>
    %c0_137 = arith.constant 0 : index
    %c0_138 = arith.constant 0 : index
    %c0_139 = arith.constant 0 : index
    %219 = vector.load %arg9[%c0_137, %c0_138, %c0_139] : memref<2x32x64xf32, #tpu.memory_space<vmem>>, vector<1x32x64xf32>
    %220 = vector.shape_cast %219 : vector<1x32x64xf32> to vector<32x64xf32>
    %cst_140 = arith.constant dense<0.000000e+00> : vector<8x64xf32>
    %221 = tpu.matmul %218, %220, %cst_140 {dimension_numbers = #tpu.dot_dimension_numbers<[1], [0], [0], [1], [0, 0, 1, 1], [], []>} : vector<8x32xf32>, vector<32x64xf32>, vector<8x64xf32> -> vector<8x64xf32>
    %c0_141 = arith.constant 0 : index
    %c0_142 = arith.constant 0 : index
    %c0_143 = arith.constant 0 : index
    %222 = vector.load %arg10[%c0_141, %c0_142, %c0_143] : memref<2x1x64xf32, #tpu.memory_space<vmem>>, vector<1x1x64xf32>
    %223 = vector.shape_cast %222 : vector<1x1x64xf32> to vector<1x64xf32>
    %224 = vector.broadcast %223 : vector<1x64xf32> to vector<8x64xf32>
    %225 = arith.addf %221, %224 : vector<8x64xf32>
    %cst_144 = arith.constant 5.000000e-01 : f32
    %226 = vector.broadcast %cst_144 : f32 to vector<8x64xf32>
    %227 = arith.mulf %226, %225 : vector<8x64xf32>
    %cst_145 = arith.constant 4.471500e-02 : f32
    %228 = vector.broadcast %cst_145 : f32 to vector<8x64xf32>
    %229 = arith.mulf %228, %225 : vector<8x64xf32>
    %230 = arith.mulf %229, %225 : vector<8x64xf32>
    %231 = arith.mulf %230, %225 : vector<8x64xf32>
    %232 = arith.addf %225, %231 : vector<8x64xf32>
    %cst_146 = arith.constant 0.797884583 : f32
    %233 = vector.broadcast %cst_146 : f32 to vector<8x64xf32>
    %234 = arith.mulf %233, %232 : vector<8x64xf32>
    %235 = math.tanh %234 : vector<8x64xf32>
    %cst_147 = arith.constant 1.000000e+00 : f32
    %236 = vector.broadcast %cst_147 : f32 to vector<8x64xf32>
    %237 = arith.addf %236, %235 : vector<8x64xf32>
    %238 = arith.mulf %227, %237 : vector<8x64xf32>
    %c0_148 = arith.constant 0 : index
    %c0_149 = arith.constant 0 : index
    %c0_150 = arith.constant 0 : index
    %239 = vector.load %arg11[%c0_148, %c0_149, %c0_150] : memref<2x64x32xf32, #tpu.memory_space<vmem>>, vector<1x64x32xf32>
    %240 = vector.shape_cast %239 : vector<1x64x32xf32> to vector<64x32xf32>
    %cst_151 = arith.constant dense<0.000000e+00> : vector<8x32xf32>
    %241 = tpu.matmul %238, %240, %cst_151 {dimension_numbers = #tpu.dot_dimension_numbers<[1], [0], [0], [1], [0, 0, 1, 1], [], []>} : vector<8x64xf32>, vector<64x32xf32>, vector<8x32xf32> -> vector<8x32xf32>
    %c0_152 = arith.constant 0 : index
    %c0_153 = arith.constant 0 : index
    %c0_154 = arith.constant 0 : index
    %242 = vector.load %arg12[%c0_152, %c0_153, %c0_154] : memref<2x1x32xf32, #tpu.memory_space<vmem>>, vector<1x1x32xf32>
    %243 = vector.shape_cast %242 : vector<1x1x32xf32> to vector<1x32xf32>
    %244 = vector.broadcast %243 : vector<1x32xf32> to vector<8x32xf32>
    %245 = arith.addf %241, %244 : vector<8x32xf32>
    %246 = arith.addf %245, %218 : vector<8x32xf32>
    %c0_155 = arith.constant 0 : index
    %c0_156 = arith.constant 0 : index
    %c0_157 = arith.constant 0 : index
    %247 = vector.load %arg13[%c0_155, %c0_156, %c0_157] : memref<2x1x32xf32, #tpu.memory_space<vmem>>, vector<1x1x32xf32>
    %248 = vector.shape_cast %247 : vector<1x1x32xf32> to vector<1x32xf32>
    %c0_158 = arith.constant 0 : index
    %c0_159 = arith.constant 0 : index
    %c0_160 = arith.constant 0 : index
    %249 = vector.load %arg14[%c0_158, %c0_159, %c0_160] : memref<2x1x32xf32, #tpu.memory_space<vmem>>, vector<1x1x32xf32>
    %250 = vector.shape_cast %249 : vector<1x1x32xf32> to vector<1x32xf32>
    %cst_161 = arith.constant dense<0.000000e+00> : vector<8xf32>
    %251 = vector.multi_reduction <add>, %246, %cst_161 [1] : vector<8x32xf32> to vector<8xf32>
    %252 = vector.shape_cast %251 : vector<8xf32> to vector<8x1xf32>
    %cst_162 = arith.constant 3.200000e+01 : f32
    %253 = vector.broadcast %cst_162 : f32 to vector<8x1xf32>
    %254 = arith.divf %252, %253 : vector<8x1xf32>
    %255 = vector.broadcast %254 : vector<8x1xf32> to vector<8x32xf32>
    %256 = arith.subf %246, %255 : vector<8x32xf32>
    %257 = arith.mulf %256, %256 : vector<8x32xf32>
    %cst_163 = arith.constant dense<0.000000e+00> : vector<8xf32>
    %258 = vector.multi_reduction <add>, %257, %cst_163 [1] : vector<8x32xf32> to vector<8xf32>
    %259 = vector.shape_cast %258 : vector<8xf32> to vector<8x1xf32>
    %cst_164 = arith.constant 3.200000e+01 : f32
    %260 = vector.broadcast %cst_164 : f32 to vector<8x1xf32>
    %261 = arith.divf %259, %260 : vector<8x1xf32>
    %cst_165 = arith.constant 9.99999996E-13 : f32
    %262 = vector.broadcast %cst_165 : f32 to vector<8x1xf32>
    %263 = arith.addf %261, %262 : vector<8x1xf32>
    %264 = math.rsqrt %263 : vector<8x1xf32>
    %265 = vector.broadcast %264 : vector<8x1xf32> to vector<8x32xf32>
    %266 = arith.mulf %256, %265 : vector<8x32xf32>
    %267 = vector.broadcast %248 : vector<1x32xf32> to vector<8x32xf32>
    %268 = arith.mulf %266, %267 : vector<8x32xf32>
    %269 = vector.broadcast %250 : vector<1x32xf32> to vector<8x32xf32>
    %270 = arith.addf %268, %269 : vector<8x32xf32>
    %cst_166 = arith.constant 0.000000e+00 : f32
    %271 = vector.broadcast %cst_166 : f32 to vector<8x32xf32>
    %c12 = arith.constant 12 : index
    %c0_167 = arith.constant 0 : index
    %c0_168 = arith.constant 0 : index
    %272 = vector.load %arg3[%c12, %c0_167, %c0_168] : memref<24x32x8xf32, #tpu.memory_space<vmem>>, vector<1x32x8xf32>
    %273 = vector.shape_cast %272 : vector<1x32x8xf32> to vector<32x8xf32>
    %cst_169 = arith.constant dense<0.000000e+00> : vector<8x8xf32>
    %274 = tpu.matmul %270, %273, %cst_169 {dimension_numbers = #tpu.dot_dimension_numbers<[1], [0], [0], [1], [0, 0, 1, 1], [], []>} : vector<8x32xf32>, vector<32x8xf32>, vector<8x8xf32> -> vector<8x8xf32>
    %c12_170 = arith.constant 12 : index
    %c0_171 = arith.constant 0 : index
    %c0_172 = arith.constant 0 : index
    %275 = vector.load %arg4[%c12_170, %c0_171, %c0_172] : memref<24x1x8xf32, #tpu.memory_space<vmem>>, vector<1x1x8xf32>
    %276 = vector.shape_cast %275 : vector<1x1x8xf32> to vector<1x8xf32>
    %277 = vector.broadcast %276 : vector<1x8xf32> to vector<8x8xf32>
    %278 = arith.addf %274, %277 : vector<8x8xf32>
    %c16 = arith.constant 16 : index
    %c0_173 = arith.constant 0 : index
    %c0_174 = arith.constant 0 : index
    %279 = vector.load %arg3[%c16, %c0_173, %c0_174] : memref<24x32x8xf32, #tpu.memory_space<vmem>>, vector<1x32x8xf32>
    %280 = vector.shape_cast %279 : vector<1x32x8xf32> to vector<32x8xf32>
    %cst_175 = arith.constant dense<0.000000e+00> : vector<8x8xf32>
    %281 = tpu.matmul %270, %280, %cst_175 {dimension_numbers = #tpu.dot_dimension_numbers<[1], [0], [0], [1], [0, 0, 1, 1], [], []>} : vector<8x32xf32>, vector<32x8xf32>, vector<8x8xf32> -> vector<8x8xf32>
    %c16_176 = arith.constant 16 : index
    %c0_177 = arith.constant 0 : index
    %c0_178 = arith.constant 0 : index
    %282 = vector.load %arg4[%c16_176, %c0_177, %c0_178] : memref<24x1x8xf32, #tpu.memory_space<vmem>>, vector<1x1x8xf32>
    %283 = vector.shape_cast %282 : vector<1x1x8xf32> to vector<1x8xf32>
    %284 = vector.broadcast %283 : vector<1x8xf32> to vector<8x8xf32>
    %285 = arith.addf %281, %284 : vector<8x8xf32>
    %c20 = arith.constant 20 : index
    %c0_179 = arith.constant 0 : index
    %c0_180 = arith.constant 0 : index
    %286 = vector.load %arg3[%c20, %c0_179, %c0_180] : memref<24x32x8xf32, #tpu.memory_space<vmem>>, vector<1x32x8xf32>
    %287 = vector.shape_cast %286 : vector<1x32x8xf32> to vector<32x8xf32>
    %cst_181 = arith.constant dense<0.000000e+00> : vector<8x8xf32>
    %288 = tpu.matmul %270, %287, %cst_181 {dimension_numbers = #tpu.dot_dimension_numbers<[1], [0], [0], [1], [0, 0, 1, 1], [], []>} : vector<8x32xf32>, vector<32x8xf32>, vector<8x8xf32> -> vector<8x8xf32>
    %c20_182 = arith.constant 20 : index
    %c0_183 = arith.constant 0 : index
    %c0_184 = arith.constant 0 : index
    %289 = vector.load %arg4[%c20_182, %c0_183, %c0_184] : memref<24x1x8xf32, #tpu.memory_space<vmem>>, vector<1x1x8xf32>
    %290 = vector.shape_cast %289 : vector<1x1x8xf32> to vector<1x8xf32>
    %291 = vector.broadcast %290 : vector<1x8xf32> to vector<8x8xf32>
    %292 = arith.addf %288, %291 : vector<8x8xf32>
    %cst_185 = arith.constant dense<0.000000e+00> : vector<8x8xf32>
    %293 = tpu.matmul %278, %285, %cst_185 {dimension_numbers = #tpu.dot_dimension_numbers<[1], [1], [0], [0], [0, 0, 1, 0], [], []>} : vector<8x8xf32>, vector<8x8xf32>, vector<8x8xf32> -> vector<8x8xf32>
    %cst_186 = arith.constant 0.353553385 : f32
    %294 = vector.broadcast %cst_186 : f32 to vector<8x8xf32>
    %295 = arith.mulf %293, %294 : vector<8x8xf32>
    %296 = vector.broadcast %6 : vector<1x8xf32> to vector<8x8xf32>
    %297 = arith.addf %295, %296 : vector<8x8xf32>
    %cst_187 = arith.constant dense<0xFF800000> : vector<8xf32>
    %298 = vector.multi_reduction <maximumf>, %297, %cst_187 [1] : vector<8x8xf32> to vector<8xf32>
    %299 = vector.shape_cast %298 : vector<8xf32> to vector<8x1xf32>
    %300 = vector.broadcast %299 : vector<8x1xf32> to vector<8x8xf32>
    %301 = arith.subf %297, %300 : vector<8x8xf32>
    %302 = math.exp %301 : vector<8x8xf32>
    %cst_188 = arith.constant dense<0.000000e+00> : vector<8xf32>
    %303 = vector.multi_reduction <add>, %302, %cst_188 [1] : vector<8x8xf32> to vector<8xf32>
    %304 = vector.shape_cast %303 : vector<8xf32> to vector<8x1xf32>
    %305 = vector.broadcast %304 : vector<8x1xf32> to vector<8x8xf32>
    %306 = arith.divf %302, %305 : vector<8x8xf32>
    %cst_189 = arith.constant dense<0.000000e+00> : vector<8x8xf32>
    %307 = tpu.matmul %306, %292, %cst_189 {dimension_numbers = #tpu.dot_dimension_numbers<[1], [0], [0], [1], [0, 0, 1, 1], [], []>} : vector<8x8xf32>, vector<8x8xf32>, vector<8x8xf32> -> vector<8x8xf32>
    %c4_190 = arith.constant 4 : index
    %c0_191 = arith.constant 0 : index
    %c0_192 = arith.constant 0 : index
    %308 = vector.load %arg5[%c4_190, %c0_191, %c0_192] : memref<8x8x32xf32, #tpu.memory_space<vmem>>, vector<1x8x32xf32>
    %309 = vector.shape_cast %308 : vector<1x8x32xf32> to vector<8x32xf32>
    %cst_193 = arith.constant dense<0.000000e+00> : vector<8x32xf32>
    %310 = tpu.matmul %307, %309, %cst_193 {dimension_numbers = #tpu.dot_dimension_numbers<[1], [0], [0], [1], [0, 0, 1, 1], [], []>} : vector<8x8xf32>, vector<8x32xf32>, vector<8x32xf32> -> vector<8x32xf32>
    %311 = arith.addf %271, %310 : vector<8x32xf32>
    %c13 = arith.constant 13 : index
    %c0_194 = arith.constant 0 : index
    %c0_195 = arith.constant 0 : index
    %312 = vector.load %arg3[%c13, %c0_194, %c0_195] : memref<24x32x8xf32, #tpu.memory_space<vmem>>, vector<1x32x8xf32>
    %313 = vector.shape_cast %312 : vector<1x32x8xf32> to vector<32x8xf32>
    %cst_196 = arith.constant dense<0.000000e+00> : vector<8x8xf32>
    %314 = tpu.matmul %270, %313, %cst_196 {dimension_numbers = #tpu.dot_dimension_numbers<[1], [0], [0], [1], [0, 0, 1, 1], [], []>} : vector<8x32xf32>, vector<32x8xf32>, vector<8x8xf32> -> vector<8x8xf32>
    %c13_197 = arith.constant 13 : index
    %c0_198 = arith.constant 0 : index
    %c0_199 = arith.constant 0 : index
    %315 = vector.load %arg4[%c13_197, %c0_198, %c0_199] : memref<24x1x8xf32, #tpu.memory_space<vmem>>, vector<1x1x8xf32>
    %316 = vector.shape_cast %315 : vector<1x1x8xf32> to vector<1x8xf32>
    %317 = vector.broadcast %316 : vector<1x8xf32> to vector<8x8xf32>
    %318 = arith.addf %314, %317 : vector<8x8xf32>
    %c17 = arith.constant 17 : index
    %c0_200 = arith.constant 0 : index
    %c0_201 = arith.constant 0 : index
    %319 = vector.load %arg3[%c17, %c0_200, %c0_201] : memref<24x32x8xf32, #tpu.memory_space<vmem>>, vector<1x32x8xf32>
    %320 = vector.shape_cast %319 : vector<1x32x8xf32> to vector<32x8xf32>
    %cst_202 = arith.constant dense<0.000000e+00> : vector<8x8xf32>
    %321 = tpu.matmul %270, %320, %cst_202 {dimension_numbers = #tpu.dot_dimension_numbers<[1], [0], [0], [1], [0, 0, 1, 1], [], []>} : vector<8x32xf32>, vector<32x8xf32>, vector<8x8xf32> -> vector<8x8xf32>
    %c17_203 = arith.constant 17 : index
    %c0_204 = arith.constant 0 : index
    %c0_205 = arith.constant 0 : index
    %322 = vector.load %arg4[%c17_203, %c0_204, %c0_205] : memref<24x1x8xf32, #tpu.memory_space<vmem>>, vector<1x1x8xf32>
    %323 = vector.shape_cast %322 : vector<1x1x8xf32> to vector<1x8xf32>
    %324 = vector.broadcast %323 : vector<1x8xf32> to vector<8x8xf32>
    %325 = arith.addf %321, %324 : vector<8x8xf32>
    %c21 = arith.constant 21 : index
    %c0_206 = arith.constant 0 : index
    %c0_207 = arith.constant 0 : index
    %326 = vector.load %arg3[%c21, %c0_206, %c0_207] : memref<24x32x8xf32, #tpu.memory_space<vmem>>, vector<1x32x8xf32>
    %327 = vector.shape_cast %326 : vector<1x32x8xf32> to vector<32x8xf32>
    %cst_208 = arith.constant dense<0.000000e+00> : vector<8x8xf32>
    %328 = tpu.matmul %270, %327, %cst_208 {dimension_numbers = #tpu.dot_dimension_numbers<[1], [0], [0], [1], [0, 0, 1, 1], [], []>} : vector<8x32xf32>, vector<32x8xf32>, vector<8x8xf32> -> vector<8x8xf32>
    %c21_209 = arith.constant 21 : index
    %c0_210 = arith.constant 0 : index
    %c0_211 = arith.constant 0 : index
    %329 = vector.load %arg4[%c21_209, %c0_210, %c0_211] : memref<24x1x8xf32, #tpu.memory_space<vmem>>, vector<1x1x8xf32>
    %330 = vector.shape_cast %329 : vector<1x1x8xf32> to vector<1x8xf32>
    %331 = vector.broadcast %330 : vector<1x8xf32> to vector<8x8xf32>
    %332 = arith.addf %328, %331 : vector<8x8xf32>
    %cst_212 = arith.constant dense<0.000000e+00> : vector<8x8xf32>
    %333 = tpu.matmul %318, %325, %cst_212 {dimension_numbers = #tpu.dot_dimension_numbers<[1], [1], [0], [0], [0, 0, 1, 0], [], []>} : vector<8x8xf32>, vector<8x8xf32>, vector<8x8xf32> -> vector<8x8xf32>
    %cst_213 = arith.constant 0.353553385 : f32
    %334 = vector.broadcast %cst_213 : f32 to vector<8x8xf32>
    %335 = arith.mulf %333, %334 : vector<8x8xf32>
    %336 = vector.broadcast %6 : vector<1x8xf32> to vector<8x8xf32>
    %337 = arith.addf %335, %336 : vector<8x8xf32>
    %cst_214 = arith.constant dense<0xFF800000> : vector<8xf32>
    %338 = vector.multi_reduction <maximumf>, %337, %cst_214 [1] : vector<8x8xf32> to vector<8xf32>
    %339 = vector.shape_cast %338 : vector<8xf32> to vector<8x1xf32>
    %340 = vector.broadcast %339 : vector<8x1xf32> to vector<8x8xf32>
    %341 = arith.subf %337, %340 : vector<8x8xf32>
    %342 = math.exp %341 : vector<8x8xf32>
    %cst_215 = arith.constant dense<0.000000e+00> : vector<8xf32>
    %343 = vector.multi_reduction <add>, %342, %cst_215 [1] : vector<8x8xf32> to vector<8xf32>
    %344 = vector.shape_cast %343 : vector<8xf32> to vector<8x1xf32>
    %345 = vector.broadcast %344 : vector<8x1xf32> to vector<8x8xf32>
    %346 = arith.divf %342, %345 : vector<8x8xf32>
    %cst_216 = arith.constant dense<0.000000e+00> : vector<8x8xf32>
    %347 = tpu.matmul %346, %332, %cst_216 {dimension_numbers = #tpu.dot_dimension_numbers<[1], [0], [0], [1], [0, 0, 1, 1], [], []>} : vector<8x8xf32>, vector<8x8xf32>, vector<8x8xf32> -> vector<8x8xf32>
    %c5_217 = arith.constant 5 : index
    %c0_218 = arith.constant 0 : index
    %c0_219 = arith.constant 0 : index
    %348 = vector.load %arg5[%c5_217, %c0_218, %c0_219] : memref<8x8x32xf32, #tpu.memory_space<vmem>>, vector<1x8x32xf32>
    %349 = vector.shape_cast %348 : vector<1x8x32xf32> to vector<8x32xf32>
    %cst_220 = arith.constant dense<0.000000e+00> : vector<8x32xf32>
    %350 = tpu.matmul %347, %349, %cst_220 {dimension_numbers = #tpu.dot_dimension_numbers<[1], [0], [0], [1], [0, 0, 1, 1], [], []>} : vector<8x8xf32>, vector<8x32xf32>, vector<8x32xf32> -> vector<8x32xf32>
    %351 = arith.addf %311, %350 : vector<8x32xf32>
    %c14 = arith.constant 14 : index
    %c0_221 = arith.constant 0 : index
    %c0_222 = arith.constant 0 : index
    %352 = vector.load %arg3[%c14, %c0_221, %c0_222] : memref<24x32x8xf32, #tpu.memory_space<vmem>>, vector<1x32x8xf32>
    %353 = vector.shape_cast %352 : vector<1x32x8xf32> to vector<32x8xf32>
    %cst_223 = arith.constant dense<0.000000e+00> : vector<8x8xf32>
    %354 = tpu.matmul %270, %353, %cst_223 {dimension_numbers = #tpu.dot_dimension_numbers<[1], [0], [0], [1], [0, 0, 1, 1], [], []>} : vector<8x32xf32>, vector<32x8xf32>, vector<8x8xf32> -> vector<8x8xf32>
    %c14_224 = arith.constant 14 : index
    %c0_225 = arith.constant 0 : index
    %c0_226 = arith.constant 0 : index
    %355 = vector.load %arg4[%c14_224, %c0_225, %c0_226] : memref<24x1x8xf32, #tpu.memory_space<vmem>>, vector<1x1x8xf32>
    %356 = vector.shape_cast %355 : vector<1x1x8xf32> to vector<1x8xf32>
    %357 = vector.broadcast %356 : vector<1x8xf32> to vector<8x8xf32>
    %358 = arith.addf %354, %357 : vector<8x8xf32>
    %c18 = arith.constant 18 : index
    %c0_227 = arith.constant 0 : index
    %c0_228 = arith.constant 0 : index
    %359 = vector.load %arg3[%c18, %c0_227, %c0_228] : memref<24x32x8xf32, #tpu.memory_space<vmem>>, vector<1x32x8xf32>
    %360 = vector.shape_cast %359 : vector<1x32x8xf32> to vector<32x8xf32>
    %cst_229 = arith.constant dense<0.000000e+00> : vector<8x8xf32>
    %361 = tpu.matmul %270, %360, %cst_229 {dimension_numbers = #tpu.dot_dimension_numbers<[1], [0], [0], [1], [0, 0, 1, 1], [], []>} : vector<8x32xf32>, vector<32x8xf32>, vector<8x8xf32> -> vector<8x8xf32>
    %c18_230 = arith.constant 18 : index
    %c0_231 = arith.constant 0 : index
    %c0_232 = arith.constant 0 : index
    %362 = vector.load %arg4[%c18_230, %c0_231, %c0_232] : memref<24x1x8xf32, #tpu.memory_space<vmem>>, vector<1x1x8xf32>
    %363 = vector.shape_cast %362 : vector<1x1x8xf32> to vector<1x8xf32>
    %364 = vector.broadcast %363 : vector<1x8xf32> to vector<8x8xf32>
    %365 = arith.addf %361, %364 : vector<8x8xf32>
    %c22 = arith.constant 22 : index
    %c0_233 = arith.constant 0 : index
    %c0_234 = arith.constant 0 : index
    %366 = vector.load %arg3[%c22, %c0_233, %c0_234] : memref<24x32x8xf32, #tpu.memory_space<vmem>>, vector<1x32x8xf32>
    %367 = vector.shape_cast %366 : vector<1x32x8xf32> to vector<32x8xf32>
    %cst_235 = arith.constant dense<0.000000e+00> : vector<8x8xf32>
    %368 = tpu.matmul %270, %367, %cst_235 {dimension_numbers = #tpu.dot_dimension_numbers<[1], [0], [0], [1], [0, 0, 1, 1], [], []>} : vector<8x32xf32>, vector<32x8xf32>, vector<8x8xf32> -> vector<8x8xf32>
    %c22_236 = arith.constant 22 : index
    %c0_237 = arith.constant 0 : index
    %c0_238 = arith.constant 0 : index
    %369 = vector.load %arg4[%c22_236, %c0_237, %c0_238] : memref<24x1x8xf32, #tpu.memory_space<vmem>>, vector<1x1x8xf32>
    %370 = vector.shape_cast %369 : vector<1x1x8xf32> to vector<1x8xf32>
    %371 = vector.broadcast %370 : vector<1x8xf32> to vector<8x8xf32>
    %372 = arith.addf %368, %371 : vector<8x8xf32>
    %cst_239 = arith.constant dense<0.000000e+00> : vector<8x8xf32>
    %373 = tpu.matmul %358, %365, %cst_239 {dimension_numbers = #tpu.dot_dimension_numbers<[1], [1], [0], [0], [0, 0, 1, 0], [], []>} : vector<8x8xf32>, vector<8x8xf32>, vector<8x8xf32> -> vector<8x8xf32>
    %cst_240 = arith.constant 0.353553385 : f32
    %374 = vector.broadcast %cst_240 : f32 to vector<8x8xf32>
    %375 = arith.mulf %373, %374 : vector<8x8xf32>
    %376 = vector.broadcast %6 : vector<1x8xf32> to vector<8x8xf32>
    %377 = arith.addf %375, %376 : vector<8x8xf32>
    %cst_241 = arith.constant dense<0xFF800000> : vector<8xf32>
    %378 = vector.multi_reduction <maximumf>, %377, %cst_241 [1] : vector<8x8xf32> to vector<8xf32>
    %379 = vector.shape_cast %378 : vector<8xf32> to vector<8x1xf32>
    %380 = vector.broadcast %379 : vector<8x1xf32> to vector<8x8xf32>
    %381 = arith.subf %377, %380 : vector<8x8xf32>
    %382 = math.exp %381 : vector<8x8xf32>
    %cst_242 = arith.constant dense<0.000000e+00> : vector<8xf32>
    %383 = vector.multi_reduction <add>, %382, %cst_242 [1] : vector<8x8xf32> to vector<8xf32>
    %384 = vector.shape_cast %383 : vector<8xf32> to vector<8x1xf32>
    %385 = vector.broadcast %384 : vector<8x1xf32> to vector<8x8xf32>
    %386 = arith.divf %382, %385 : vector<8x8xf32>
    %cst_243 = arith.constant dense<0.000000e+00> : vector<8x8xf32>
    %387 = tpu.matmul %386, %372, %cst_243 {dimension_numbers = #tpu.dot_dimension_numbers<[1], [0], [0], [1], [0, 0, 1, 1], [], []>} : vector<8x8xf32>, vector<8x8xf32>, vector<8x8xf32> -> vector<8x8xf32>
    %c6_244 = arith.constant 6 : index
    %c0_245 = arith.constant 0 : index
    %c0_246 = arith.constant 0 : index
    %388 = vector.load %arg5[%c6_244, %c0_245, %c0_246] : memref<8x8x32xf32, #tpu.memory_space<vmem>>, vector<1x8x32xf32>
    %389 = vector.shape_cast %388 : vector<1x8x32xf32> to vector<8x32xf32>
    %cst_247 = arith.constant dense<0.000000e+00> : vector<8x32xf32>
    %390 = tpu.matmul %387, %389, %cst_247 {dimension_numbers = #tpu.dot_dimension_numbers<[1], [0], [0], [1], [0, 0, 1, 1], [], []>} : vector<8x8xf32>, vector<8x32xf32>, vector<8x32xf32> -> vector<8x32xf32>
    %391 = arith.addf %351, %390 : vector<8x32xf32>
    %c15 = arith.constant 15 : index
    %c0_248 = arith.constant 0 : index
    %c0_249 = arith.constant 0 : index
    %392 = vector.load %arg3[%c15, %c0_248, %c0_249] : memref<24x32x8xf32, #tpu.memory_space<vmem>>, vector<1x32x8xf32>
    %393 = vector.shape_cast %392 : vector<1x32x8xf32> to vector<32x8xf32>
    %cst_250 = arith.constant dense<0.000000e+00> : vector<8x8xf32>
    %394 = tpu.matmul %270, %393, %cst_250 {dimension_numbers = #tpu.dot_dimension_numbers<[1], [0], [0], [1], [0, 0, 1, 1], [], []>} : vector<8x32xf32>, vector<32x8xf32>, vector<8x8xf32> -> vector<8x8xf32>
    %c15_251 = arith.constant 15 : index
    %c0_252 = arith.constant 0 : index
    %c0_253 = arith.constant 0 : index
    %395 = vector.load %arg4[%c15_251, %c0_252, %c0_253] : memref<24x1x8xf32, #tpu.memory_space<vmem>>, vector<1x1x8xf32>
    %396 = vector.shape_cast %395 : vector<1x1x8xf32> to vector<1x8xf32>
    %397 = vector.broadcast %396 : vector<1x8xf32> to vector<8x8xf32>
    %398 = arith.addf %394, %397 : vector<8x8xf32>
    %c19 = arith.constant 19 : index
    %c0_254 = arith.constant 0 : index
    %c0_255 = arith.constant 0 : index
    %399 = vector.load %arg3[%c19, %c0_254, %c0_255] : memref<24x32x8xf32, #tpu.memory_space<vmem>>, vector<1x32x8xf32>
    %400 = vector.shape_cast %399 : vector<1x32x8xf32> to vector<32x8xf32>
    %cst_256 = arith.constant dense<0.000000e+00> : vector<8x8xf32>
    %401 = tpu.matmul %270, %400, %cst_256 {dimension_numbers = #tpu.dot_dimension_numbers<[1], [0], [0], [1], [0, 0, 1, 1], [], []>} : vector<8x32xf32>, vector<32x8xf32>, vector<8x8xf32> -> vector<8x8xf32>
    %c19_257 = arith.constant 19 : index
    %c0_258 = arith.constant 0 : index
    %c0_259 = arith.constant 0 : index
    %402 = vector.load %arg4[%c19_257, %c0_258, %c0_259] : memref<24x1x8xf32, #tpu.memory_space<vmem>>, vector<1x1x8xf32>
    %403 = vector.shape_cast %402 : vector<1x1x8xf32> to vector<1x8xf32>
    %404 = vector.broadcast %403 : vector<1x8xf32> to vector<8x8xf32>
    %405 = arith.addf %401, %404 : vector<8x8xf32>
    %c23 = arith.constant 23 : index
    %c0_260 = arith.constant 0 : index
    %c0_261 = arith.constant 0 : index
    %406 = vector.load %arg3[%c23, %c0_260, %c0_261] : memref<24x32x8xf32, #tpu.memory_space<vmem>>, vector<1x32x8xf32>
    %407 = vector.shape_cast %406 : vector<1x32x8xf32> to vector<32x8xf32>
    %cst_262 = arith.constant dense<0.000000e+00> : vector<8x8xf32>
    %408 = tpu.matmul %270, %407, %cst_262 {dimension_numbers = #tpu.dot_dimension_numbers<[1], [0], [0], [1], [0, 0, 1, 1], [], []>} : vector<8x32xf32>, vector<32x8xf32>, vector<8x8xf32> -> vector<8x8xf32>
    %c23_263 = arith.constant 23 : index
    %c0_264 = arith.constant 0 : index
    %c0_265 = arith.constant 0 : index
    %409 = vector.load %arg4[%c23_263, %c0_264, %c0_265] : memref<24x1x8xf32, #tpu.memory_space<vmem>>, vector<1x1x8xf32>
    %410 = vector.shape_cast %409 : vector<1x1x8xf32> to vector<1x8xf32>
    %411 = vector.broadcast %410 : vector<1x8xf32> to vector<8x8xf32>
    %412 = arith.addf %408, %411 : vector<8x8xf32>
    %cst_266 = arith.constant dense<0.000000e+00> : vector<8x8xf32>
    %413 = tpu.matmul %398, %405, %cst_266 {dimension_numbers = #tpu.dot_dimension_numbers<[1], [1], [0], [0], [0, 0, 1, 0], [], []>} : vector<8x8xf32>, vector<8x8xf32>, vector<8x8xf32> -> vector<8x8xf32>
    %cst_267 = arith.constant 0.353553385 : f32
    %414 = vector.broadcast %cst_267 : f32 to vector<8x8xf32>
    %415 = arith.mulf %413, %414 : vector<8x8xf32>
    %416 = vector.broadcast %6 : vector<1x8xf32> to vector<8x8xf32>
    %417 = arith.addf %415, %416 : vector<8x8xf32>
    %cst_268 = arith.constant dense<0xFF800000> : vector<8xf32>
    %418 = vector.multi_reduction <maximumf>, %417, %cst_268 [1] : vector<8x8xf32> to vector<8xf32>
    %419 = vector.shape_cast %418 : vector<8xf32> to vector<8x1xf32>
    %420 = vector.broadcast %419 : vector<8x1xf32> to vector<8x8xf32>
    %421 = arith.subf %417, %420 : vector<8x8xf32>
    %422 = math.exp %421 : vector<8x8xf32>
    %cst_269 = arith.constant dense<0.000000e+00> : vector<8xf32>
    %423 = vector.multi_reduction <add>, %422, %cst_269 [1] : vector<8x8xf32> to vector<8xf32>
    %424 = vector.shape_cast %423 : vector<8xf32> to vector<8x1xf32>
    %425 = vector.broadcast %424 : vector<8x1xf32> to vector<8x8xf32>
    %426 = arith.divf %422, %425 : vector<8x8xf32>
    %cst_270 = arith.constant dense<0.000000e+00> : vector<8x8xf32>
    %427 = tpu.matmul %426, %412, %cst_270 {dimension_numbers = #tpu.dot_dimension_numbers<[1], [0], [0], [1], [0, 0, 1, 1], [], []>} : vector<8x8xf32>, vector<8x8xf32>, vector<8x8xf32> -> vector<8x8xf32>
    %c7_271 = arith.constant 7 : index
    %c0_272 = arith.constant 0 : index
    %c0_273 = arith.constant 0 : index
    %428 = vector.load %arg5[%c7_271, %c0_272, %c0_273] : memref<8x8x32xf32, #tpu.memory_space<vmem>>, vector<1x8x32xf32>
    %429 = vector.shape_cast %428 : vector<1x8x32xf32> to vector<8x32xf32>
    %cst_274 = arith.constant dense<0.000000e+00> : vector<8x32xf32>
    %430 = tpu.matmul %427, %429, %cst_274 {dimension_numbers = #tpu.dot_dimension_numbers<[1], [0], [0], [1], [0, 0, 1, 1], [], []>} : vector<8x8xf32>, vector<8x32xf32>, vector<8x32xf32> -> vector<8x32xf32>
    %431 = arith.addf %391, %430 : vector<8x32xf32>
    %c1_275 = arith.constant 1 : index
    %c0_276 = arith.constant 0 : index
    %c0_277 = arith.constant 0 : index
    %432 = vector.load %arg6[%c1_275, %c0_276, %c0_277] : memref<2x1x32xf32, #tpu.memory_space<vmem>>, vector<1x1x32xf32>
    %433 = vector.shape_cast %432 : vector<1x1x32xf32> to vector<1x32xf32>
    %434 = vector.broadcast %433 : vector<1x32xf32> to vector<8x32xf32>
    %435 = arith.addf %431, %434 : vector<8x32xf32>
    %436 = arith.addf %435, %270 : vector<8x32xf32>
    %c1_278 = arith.constant 1 : index
    %c0_279 = arith.constant 0 : index
    %c0_280 = arith.constant 0 : index
    %437 = vector.load %arg7[%c1_278, %c0_279, %c0_280] : memref<2x1x32xf32, #tpu.memory_space<vmem>>, vector<1x1x32xf32>
    %438 = vector.shape_cast %437 : vector<1x1x32xf32> to vector<1x32xf32>
    %c1_281 = arith.constant 1 : index
    %c0_282 = arith.constant 0 : index
    %c0_283 = arith.constant 0 : index
    %439 = vector.load %arg8[%c1_281, %c0_282, %c0_283] : memref<2x1x32xf32, #tpu.memory_space<vmem>>, vector<1x1x32xf32>
    %440 = vector.shape_cast %439 : vector<1x1x32xf32> to vector<1x32xf32>
    %cst_284 = arith.constant dense<0.000000e+00> : vector<8xf32>
    %441 = vector.multi_reduction <add>, %436, %cst_284 [1] : vector<8x32xf32> to vector<8xf32>
    %442 = vector.shape_cast %441 : vector<8xf32> to vector<8x1xf32>
    %cst_285 = arith.constant 3.200000e+01 : f32
    %443 = vector.broadcast %cst_285 : f32 to vector<8x1xf32>
    %444 = arith.divf %442, %443 : vector<8x1xf32>
    %445 = vector.broadcast %444 : vector<8x1xf32> to vector<8x32xf32>
    %446 = arith.subf %436, %445 : vector<8x32xf32>
    %447 = arith.mulf %446, %446 : vector<8x32xf32>
    %cst_286 = arith.constant dense<0.000000e+00> : vector<8xf32>
    %448 = vector.multi_reduction <add>, %447, %cst_286 [1] : vector<8x32xf32> to vector<8xf32>
    %449 = vector.shape_cast %448 : vector<8xf32> to vector<8x1xf32>
    %cst_287 = arith.constant 3.200000e+01 : f32
    %450 = vector.broadcast %cst_287 : f32 to vector<8x1xf32>
    %451 = arith.divf %449, %450 : vector<8x1xf32>
    %cst_288 = arith.constant 9.99999996E-13 : f32
    %452 = vector.broadcast %cst_288 : f32 to vector<8x1xf32>
    %453 = arith.addf %451, %452 : vector<8x1xf32>
    %454 = math.rsqrt %453 : vector<8x1xf32>
    %455 = vector.broadcast %454 : vector<8x1xf32> to vector<8x32xf32>
    %456 = arith.mulf %446, %455 : vector<8x32xf32>
    %457 = vector.broadcast %438 : vector<1x32xf32> to vector<8x32xf32>
    %458 = arith.mulf %456, %457 : vector<8x32xf32>
    %459 = vector.broadcast %440 : vector<1x32xf32> to vector<8x32xf32>
    %460 = arith.addf %458, %459 : vector<8x32xf32>
    %c1_289 = arith.constant 1 : index
    %c0_290 = arith.constant 0 : index
    %c0_291 = arith.constant 0 : index
    %461 = vector.load %arg9[%c1_289, %c0_290, %c0_291] : memref<2x32x64xf32, #tpu.memory_space<vmem>>, vector<1x32x64xf32>
    %462 = vector.shape_cast %461 : vector<1x32x64xf32> to vector<32x64xf32>
    %cst_292 = arith.constant dense<0.000000e+00> : vector<8x64xf32>
    %463 = tpu.matmul %460, %462, %cst_292 {dimension_numbers = #tpu.dot_dimension_numbers<[1], [0], [0], [1], [0, 0, 1, 1], [], []>} : vector<8x32xf32>, vector<32x64xf32>, vector<8x64xf32> -> vector<8x64xf32>
    %c1_293 = arith.constant 1 : index
    %c0_294 = arith.constant 0 : index
    %c0_295 = arith.constant 0 : index
    %464 = vector.load %arg10[%c1_293, %c0_294, %c0_295] : memref<2x1x64xf32, #tpu.memory_space<vmem>>, vector<1x1x64xf32>
    %465 = vector.shape_cast %464 : vector<1x1x64xf32> to vector<1x64xf32>
    %466 = vector.broadcast %465 : vector<1x64xf32> to vector<8x64xf32>
    %467 = arith.addf %463, %466 : vector<8x64xf32>
    %cst_296 = arith.constant 5.000000e-01 : f32
    %468 = vector.broadcast %cst_296 : f32 to vector<8x64xf32>
    %469 = arith.mulf %468, %467 : vector<8x64xf32>
    %cst_297 = arith.constant 4.471500e-02 : f32
    %470 = vector.broadcast %cst_297 : f32 to vector<8x64xf32>
    %471 = arith.mulf %470, %467 : vector<8x64xf32>
    %472 = arith.mulf %471, %467 : vector<8x64xf32>
    %473 = arith.mulf %472, %467 : vector<8x64xf32>
    %474 = arith.addf %467, %473 : vector<8x64xf32>
    %cst_298 = arith.constant 0.797884583 : f32
    %475 = vector.broadcast %cst_298 : f32 to vector<8x64xf32>
    %476 = arith.mulf %475, %474 : vector<8x64xf32>
    %477 = math.tanh %476 : vector<8x64xf32>
    %cst_299 = arith.constant 1.000000e+00 : f32
    %478 = vector.broadcast %cst_299 : f32 to vector<8x64xf32>
    %479 = arith.addf %478, %477 : vector<8x64xf32>
    %480 = arith.mulf %469, %479 : vector<8x64xf32>
    %c1_300 = arith.constant 1 : index
    %c0_301 = arith.constant 0 : index
    %c0_302 = arith.constant 0 : index
    %481 = vector.load %arg11[%c1_300, %c0_301, %c0_302] : memref<2x64x32xf32, #tpu.memory_space<vmem>>, vector<1x64x32xf32>
    %482 = vector.shape_cast %481 : vector<1x64x32xf32> to vector<64x32xf32>
    %cst_303 = arith.constant dense<0.000000e+00> : vector<8x32xf32>
    %483 = tpu.matmul %480, %482, %cst_303 {dimension_numbers = #tpu.dot_dimension_numbers<[1], [0], [0], [1], [0, 0, 1, 1], [], []>} : vector<8x64xf32>, vector<64x32xf32>, vector<8x32xf32> -> vector<8x32xf32>
    %c1_304 = arith.constant 1 : index
    %c0_305 = arith.constant 0 : index
    %c0_306 = arith.constant 0 : index
    %484 = vector.load %arg12[%c1_304, %c0_305, %c0_306] : memref<2x1x32xf32, #tpu.memory_space<vmem>>, vector<1x1x32xf32>
    %485 = vector.shape_cast %484 : vector<1x1x32xf32> to vector<1x32xf32>
    %486 = vector.broadcast %485 : vector<1x32xf32> to vector<8x32xf32>
    %487 = arith.addf %483, %486 : vector<8x32xf32>
    %488 = arith.addf %487, %460 : vector<8x32xf32>
    %c1_307 = arith.constant 1 : index
    %c0_308 = arith.constant 0 : index
    %c0_309 = arith.constant 0 : index
    %489 = vector.load %arg13[%c1_307, %c0_308, %c0_309] : memref<2x1x32xf32, #tpu.memory_space<vmem>>, vector<1x1x32xf32>
    %490 = vector.shape_cast %489 : vector<1x1x32xf32> to vector<1x32xf32>
    %c1_310 = arith.constant 1 : index
    %c0_311 = arith.constant 0 : index
    %c0_312 = arith.constant 0 : index
    %491 = vector.load %arg14[%c1_310, %c0_311, %c0_312] : memref<2x1x32xf32, #tpu.memory_space<vmem>>, vector<1x1x32xf32>
    %492 = vector.shape_cast %491 : vector<1x1x32xf32> to vector<1x32xf32>
    %cst_313 = arith.constant dense<0.000000e+00> : vector<8xf32>
    %493 = vector.multi_reduction <add>, %488, %cst_313 [1] : vector<8x32xf32> to vector<8xf32>
    %494 = vector.shape_cast %493 : vector<8xf32> to vector<8x1xf32>
    %cst_314 = arith.constant 3.200000e+01 : f32
    %495 = vector.broadcast %cst_314 : f32 to vector<8x1xf32>
    %496 = arith.divf %494, %495 : vector<8x1xf32>
    %497 = vector.broadcast %496 : vector<8x1xf32> to vector<8x32xf32>
    %498 = arith.subf %488, %497 : vector<8x32xf32>
    %499 = arith.mulf %498, %498 : vector<8x32xf32>
    %cst_315 = arith.constant dense<0.000000e+00> : vector<8xf32>
    %500 = vector.multi_reduction <add>, %499, %cst_315 [1] : vector<8x32xf32> to vector<8xf32>
    %501 = vector.shape_cast %500 : vector<8xf32> to vector<8x1xf32>
    %cst_316 = arith.constant 3.200000e+01 : f32
    %502 = vector.broadcast %cst_316 : f32 to vector<8x1xf32>
    %503 = arith.divf %501, %502 : vector<8x1xf32>
    %cst_317 = arith.constant 9.99999996E-13 : f32
    %504 = vector.broadcast %cst_317 : f32 to vector<8x1xf32>
    %505 = arith.addf %503, %504 : vector<8x1xf32>
    %506 = math.rsqrt %505 : vector<8x1xf32>
    %507 = vector.broadcast %506 : vector<8x1xf32> to vector<8x32xf32>
    %508 = arith.mulf %498, %507 : vector<8x32xf32>
    %509 = vector.broadcast %490 : vector<1x32xf32> to vector<8x32xf32>
    %510 = arith.mulf %508, %509 : vector<8x32xf32>
    %511 = vector.broadcast %492 : vector<1x32xf32> to vector<8x32xf32>
    %512 = arith.addf %510, %511 : vector<8x32xf32>
    %513 = vector.extract_strided_slice %512 {offsets = [0, 0], sizes = [1, 32], strides = [1, 1]} : vector<8x32xf32> to vector<1x32xf32>
    %c0_318 = arith.constant 0 : index
    %c0_319 = arith.constant 0 : index
    %514 = vector.load %arg17[%c0_318, %c0_319] : memref<32x32xf32, #tpu.memory_space<vmem>>, vector<32x32xf32>
    %cst_320 = arith.constant dense<0.000000e+00> : vector<1x32xf32>
    %515 = tpu.matmul %513, %514, %cst_320 {dimension_numbers = #tpu.dot_dimension_numbers<[1], [0], [0], [1], [0, 0, 1, 1], [], []>} : vector<1x32xf32>, vector<32x32xf32>, vector<1x32xf32> -> vector<1x32xf32>
    %c0_321 = arith.constant 0 : index
    %c0_322 = arith.constant 0 : index
    %516 = vector.load %arg18[%c0_321, %c0_322] : memref<1x32xf32, #tpu.memory_space<vmem>>, vector<1x32xf32>
    %517 = arith.addf %515, %516 : vector<1x32xf32>
    %518 = math.tanh %517 : vector<1x32xf32>
    %c0_323 = arith.constant 0 : index
    %c0_324 = arith.constant 0 : index
    %519 = vector.load %arg19[%c0_323, %c0_324] : memref<1x32xf32, #tpu.memory_space<vmem>>, vector<1x32xf32>
    %520 = arith.mulf %518, %519 : vector<1x32xf32>
    %cst_325 = arith.constant dense<0.000000e+00> : vector<1xf32>
    %521 = vector.multi_reduction <add>, %520, %cst_325 [1] : vector<1x32xf32> to vector<1xf32>
    %522 = vector.shape_cast %521 : vector<1xf32> to vector<1x1xf32>
    %c0_326 = arith.constant 0 : index
    %c0_327 = arith.constant 0 : index
    %523 = vector.load %arg20[%c0_326, %c0_327] : memref<1x1xf32, #tpu.memory_space<vmem>>, vector<1x1xf32>
    %524 = arith.addf %522, %523 : vector<1x1xf32>
    %c0_i32 = arith.constant 0 : i32
    %525 = vector.broadcast %c0_i32 : i32 to vector<1x128xi32>
    %526 = arith.cmpi eq, %2, %525 : vector<1x128xi32>
    %527 = vector.shape_cast %524 : vector<1x1xf32> to vector<1x1xf32>
    %528 = vector.broadcast %527 : vector<1x1xf32> to vector<1x128xf32>
    %529 = arith.select %526, %528, %3 : vector<1x128xi1>, vector<1x128xf32>
    %530 = vector.extract_strided_slice %0 {offsets = [1, 0, 0], sizes = [1, 8, 32], strides = [1, 1, 1]} : vector<2x8x32xf32> to vector<1x8x32xf32>
    %531 = vector.shape_cast %530 : vector<1x8x32xf32> to vector<8x32xf32>
    %532 = vector.extract_strided_slice %1 {offsets = [1, 0], sizes = [1, 8], strides = [1, 1]} : vector<2x8xf32> to vector<1x8xf32>
    %c0_328 = arith.constant 0 : index
    %c0_329 = arith.constant 0 : index
    %533 = vector.load %arg15[%c0_328, %c0_329] : memref<1x32xf32, #tpu.memory_space<vmem>>, vector<1x32xf32>
    %c0_330 = arith.constant 0 : index
    %c0_331 = arith.constant 0 : index
    %534 = vector.load %arg16[%c0_330, %c0_331] : memref<1x32xf32, #tpu.memory_space<vmem>>, vector<1x32xf32>
    %cst_332 = arith.constant dense<0.000000e+00> : vector<8xf32>
    %535 = vector.multi_reduction <add>, %531, %cst_332 [1] : vector<8x32xf32> to vector<8xf32>
    %536 = vector.shape_cast %535 : vector<8xf32> to vector<8x1xf32>
    %cst_333 = arith.constant 3.200000e+01 : f32
    %537 = vector.broadcast %cst_333 : f32 to vector<8x1xf32>
    %538 = arith.divf %536, %537 : vector<8x1xf32>
    %539 = vector.broadcast %538 : vector<8x1xf32> to vector<8x32xf32>
    %540 = arith.subf %531, %539 : vector<8x32xf32>
    %541 = arith.mulf %540, %540 : vector<8x32xf32>
    %cst_334 = arith.constant dense<0.000000e+00> : vector<8xf32>
    %542 = vector.multi_reduction <add>, %541, %cst_334 [1] : vector<8x32xf32> to vector<8xf32>
    %543 = vector.shape_cast %542 : vector<8xf32> to vector<8x1xf32>
    %cst_335 = arith.constant 3.200000e+01 : f32
    %544 = vector.broadcast %cst_335 : f32 to vector<8x1xf32>
    %545 = arith.divf %543, %544 : vector<8x1xf32>
    %cst_336 = arith.constant 9.99999996E-13 : f32
    %546 = vector.broadcast %cst_336 : f32 to vector<8x1xf32>
    %547 = arith.addf %545, %546 : vector<8x1xf32>
    %548 = math.rsqrt %547 : vector<8x1xf32>
    %549 = vector.broadcast %548 : vector<8x1xf32> to vector<8x32xf32>
    %550 = arith.mulf %540, %549 : vector<8x32xf32>
    %551 = vector.broadcast %533 : vector<1x32xf32> to vector<8x32xf32>
    %552 = arith.mulf %550, %551 : vector<8x32xf32>
    %553 = vector.broadcast %534 : vector<1x32xf32> to vector<8x32xf32>
    %554 = arith.addf %552, %553 : vector<8x32xf32>
    %cst_337 = arith.constant 0.000000e+00 : f32
    %555 = vector.broadcast %cst_337 : f32 to vector<8x32xf32>
    %c0_338 = arith.constant 0 : index
    %c0_339 = arith.constant 0 : index
    %c0_340 = arith.constant 0 : index
    %556 = vector.load %arg3[%c0_338, %c0_339, %c0_340] : memref<24x32x8xf32, #tpu.memory_space<vmem>>, vector<1x32x8xf32>
    %557 = vector.shape_cast %556 : vector<1x32x8xf32> to vector<32x8xf32>
    %cst_341 = arith.constant dense<0.000000e+00> : vector<8x8xf32>
    %558 = tpu.matmul %554, %557, %cst_341 {dimension_numbers = #tpu.dot_dimension_numbers<[1], [0], [0], [1], [0, 0, 1, 1], [], []>} : vector<8x32xf32>, vector<32x8xf32>, vector<8x8xf32> -> vector<8x8xf32>
    %c0_342 = arith.constant 0 : index
    %c0_343 = arith.constant 0 : index
    %c0_344 = arith.constant 0 : index
    %559 = vector.load %arg4[%c0_342, %c0_343, %c0_344] : memref<24x1x8xf32, #tpu.memory_space<vmem>>, vector<1x1x8xf32>
    %560 = vector.shape_cast %559 : vector<1x1x8xf32> to vector<1x8xf32>
    %561 = vector.broadcast %560 : vector<1x8xf32> to vector<8x8xf32>
    %562 = arith.addf %558, %561 : vector<8x8xf32>
    %c4_345 = arith.constant 4 : index
    %c0_346 = arith.constant 0 : index
    %c0_347 = arith.constant 0 : index
    %563 = vector.load %arg3[%c4_345, %c0_346, %c0_347] : memref<24x32x8xf32, #tpu.memory_space<vmem>>, vector<1x32x8xf32>
    %564 = vector.shape_cast %563 : vector<1x32x8xf32> to vector<32x8xf32>
    %cst_348 = arith.constant dense<0.000000e+00> : vector<8x8xf32>
    %565 = tpu.matmul %554, %564, %cst_348 {dimension_numbers = #tpu.dot_dimension_numbers<[1], [0], [0], [1], [0, 0, 1, 1], [], []>} : vector<8x32xf32>, vector<32x8xf32>, vector<8x8xf32> -> vector<8x8xf32>
    %c4_349 = arith.constant 4 : index
    %c0_350 = arith.constant 0 : index
    %c0_351 = arith.constant 0 : index
    %566 = vector.load %arg4[%c4_349, %c0_350, %c0_351] : memref<24x1x8xf32, #tpu.memory_space<vmem>>, vector<1x1x8xf32>
    %567 = vector.shape_cast %566 : vector<1x1x8xf32> to vector<1x8xf32>
    %568 = vector.broadcast %567 : vector<1x8xf32> to vector<8x8xf32>
    %569 = arith.addf %565, %568 : vector<8x8xf32>
    %c8_352 = arith.constant 8 : index
    %c0_353 = arith.constant 0 : index
    %c0_354 = arith.constant 0 : index
    %570 = vector.load %arg3[%c8_352, %c0_353, %c0_354] : memref<24x32x8xf32, #tpu.memory_space<vmem>>, vector<1x32x8xf32>
    %571 = vector.shape_cast %570 : vector<1x32x8xf32> to vector<32x8xf32>
    %cst_355 = arith.constant dense<0.000000e+00> : vector<8x8xf32>
    %572 = tpu.matmul %554, %571, %cst_355 {dimension_numbers = #tpu.dot_dimension_numbers<[1], [0], [0], [1], [0, 0, 1, 1], [], []>} : vector<8x32xf32>, vector<32x8xf32>, vector<8x8xf32> -> vector<8x8xf32>
    %c8_356 = arith.constant 8 : index
    %c0_357 = arith.constant 0 : index
    %c0_358 = arith.constant 0 : index
    %573 = vector.load %arg4[%c8_356, %c0_357, %c0_358] : memref<24x1x8xf32, #tpu.memory_space<vmem>>, vector<1x1x8xf32>
    %574 = vector.shape_cast %573 : vector<1x1x8xf32> to vector<1x8xf32>
    %575 = vector.broadcast %574 : vector<1x8xf32> to vector<8x8xf32>
    %576 = arith.addf %572, %575 : vector<8x8xf32>
    %cst_359 = arith.constant dense<0.000000e+00> : vector<8x8xf32>
    %577 = tpu.matmul %562, %569, %cst_359 {dimension_numbers = #tpu.dot_dimension_numbers<[1], [1], [0], [0], [0, 0, 1, 0], [], []>} : vector<8x8xf32>, vector<8x8xf32>, vector<8x8xf32> -> vector<8x8xf32>
    %cst_360 = arith.constant 0.353553385 : f32
    %578 = vector.broadcast %cst_360 : f32 to vector<8x8xf32>
    %579 = arith.mulf %577, %578 : vector<8x8xf32>
    %580 = vector.broadcast %532 : vector<1x8xf32> to vector<8x8xf32>
    %581 = arith.addf %579, %580 : vector<8x8xf32>
    %cst_361 = arith.constant dense<0xFF800000> : vector<8xf32>
    %582 = vector.multi_reduction <maximumf>, %581, %cst_361 [1] : vector<8x8xf32> to vector<8xf32>
    %583 = vector.shape_cast %582 : vector<8xf32> to vector<8x1xf32>
    %584 = vector.broadcast %583 : vector<8x1xf32> to vector<8x8xf32>
    %585 = arith.subf %581, %584 : vector<8x8xf32>
    %586 = math.exp %585 : vector<8x8xf32>
    %cst_362 = arith.constant dense<0.000000e+00> : vector<8xf32>
    %587 = vector.multi_reduction <add>, %586, %cst_362 [1] : vector<8x8xf32> to vector<8xf32>
    %588 = vector.shape_cast %587 : vector<8xf32> to vector<8x1xf32>
    %589 = vector.broadcast %588 : vector<8x1xf32> to vector<8x8xf32>
    %590 = arith.divf %586, %589 : vector<8x8xf32>
    %cst_363 = arith.constant dense<0.000000e+00> : vector<8x8xf32>
    %591 = tpu.matmul %590, %576, %cst_363 {dimension_numbers = #tpu.dot_dimension_numbers<[1], [0], [0], [1], [0, 0, 1, 1], [], []>} : vector<8x8xf32>, vector<8x8xf32>, vector<8x8xf32> -> vector<8x8xf32>
    %c0_364 = arith.constant 0 : index
    %c0_365 = arith.constant 0 : index
    %c0_366 = arith.constant 0 : index
    %592 = vector.load %arg5[%c0_364, %c0_365, %c0_366] : memref<8x8x32xf32, #tpu.memory_space<vmem>>, vector<1x8x32xf32>
    %593 = vector.shape_cast %592 : vector<1x8x32xf32> to vector<8x32xf32>
    %cst_367 = arith.constant dense<0.000000e+00> : vector<8x32xf32>
    %594 = tpu.matmul %591, %593, %cst_367 {dimension_numbers = #tpu.dot_dimension_numbers<[1], [0], [0], [1], [0, 0, 1, 1], [], []>} : vector<8x8xf32>, vector<8x32xf32>, vector<8x32xf32> -> vector<8x32xf32>
    %595 = arith.addf %555, %594 : vector<8x32xf32>
    %c1_368 = arith.constant 1 : index
    %c0_369 = arith.constant 0 : index
    %c0_370 = arith.constant 0 : index
    %596 = vector.load %arg3[%c1_368, %c0_369, %c0_370] : memref<24x32x8xf32, #tpu.memory_space<vmem>>, vector<1x32x8xf32>
    %597 = vector.shape_cast %596 : vector<1x32x8xf32> to vector<32x8xf32>
    %cst_371 = arith.constant dense<0.000000e+00> : vector<8x8xf32>
    %598 = tpu.matmul %554, %597, %cst_371 {dimension_numbers = #tpu.dot_dimension_numbers<[1], [0], [0], [1], [0, 0, 1, 1], [], []>} : vector<8x32xf32>, vector<32x8xf32>, vector<8x8xf32> -> vector<8x8xf32>
    %c1_372 = arith.constant 1 : index
    %c0_373 = arith.constant 0 : index
    %c0_374 = arith.constant 0 : index
    %599 = vector.load %arg4[%c1_372, %c0_373, %c0_374] : memref<24x1x8xf32, #tpu.memory_space<vmem>>, vector<1x1x8xf32>
    %600 = vector.shape_cast %599 : vector<1x1x8xf32> to vector<1x8xf32>
    %601 = vector.broadcast %600 : vector<1x8xf32> to vector<8x8xf32>
    %602 = arith.addf %598, %601 : vector<8x8xf32>
    %c5_375 = arith.constant 5 : index
    %c0_376 = arith.constant 0 : index
    %c0_377 = arith.constant 0 : index
    %603 = vector.load %arg3[%c5_375, %c0_376, %c0_377] : memref<24x32x8xf32, #tpu.memory_space<vmem>>, vector<1x32x8xf32>
    %604 = vector.shape_cast %603 : vector<1x32x8xf32> to vector<32x8xf32>
    %cst_378 = arith.constant dense<0.000000e+00> : vector<8x8xf32>
    %605 = tpu.matmul %554, %604, %cst_378 {dimension_numbers = #tpu.dot_dimension_numbers<[1], [0], [0], [1], [0, 0, 1, 1], [], []>} : vector<8x32xf32>, vector<32x8xf32>, vector<8x8xf32> -> vector<8x8xf32>
    %c5_379 = arith.constant 5 : index
    %c0_380 = arith.constant 0 : index
    %c0_381 = arith.constant 0 : index
    %606 = vector.load %arg4[%c5_379, %c0_380, %c0_381] : memref<24x1x8xf32, #tpu.memory_space<vmem>>, vector<1x1x8xf32>
    %607 = vector.shape_cast %606 : vector<1x1x8xf32> to vector<1x8xf32>
    %608 = vector.broadcast %607 : vector<1x8xf32> to vector<8x8xf32>
    %609 = arith.addf %605, %608 : vector<8x8xf32>
    %c9_382 = arith.constant 9 : index
    %c0_383 = arith.constant 0 : index
    %c0_384 = arith.constant 0 : index
    %610 = vector.load %arg3[%c9_382, %c0_383, %c0_384] : memref<24x32x8xf32, #tpu.memory_space<vmem>>, vector<1x32x8xf32>
    %611 = vector.shape_cast %610 : vector<1x32x8xf32> to vector<32x8xf32>
    %cst_385 = arith.constant dense<0.000000e+00> : vector<8x8xf32>
    %612 = tpu.matmul %554, %611, %cst_385 {dimension_numbers = #tpu.dot_dimension_numbers<[1], [0], [0], [1], [0, 0, 1, 1], [], []>} : vector<8x32xf32>, vector<32x8xf32>, vector<8x8xf32> -> vector<8x8xf32>
    %c9_386 = arith.constant 9 : index
    %c0_387 = arith.constant 0 : index
    %c0_388 = arith.constant 0 : index
    %613 = vector.load %arg4[%c9_386, %c0_387, %c0_388] : memref<24x1x8xf32, #tpu.memory_space<vmem>>, vector<1x1x8xf32>
    %614 = vector.shape_cast %613 : vector<1x1x8xf32> to vector<1x8xf32>
    %615 = vector.broadcast %614 : vector<1x8xf32> to vector<8x8xf32>
    %616 = arith.addf %612, %615 : vector<8x8xf32>
    %cst_389 = arith.constant dense<0.000000e+00> : vector<8x8xf32>
    %617 = tpu.matmul %602, %609, %cst_389 {dimension_numbers = #tpu.dot_dimension_numbers<[1], [1], [0], [0], [0, 0, 1, 0], [], []>} : vector<8x8xf32>, vector<8x8xf32>, vector<8x8xf32> -> vector<8x8xf32>
    %cst_390 = arith.constant 0.353553385 : f32
    %618 = vector.broadcast %cst_390 : f32 to vector<8x8xf32>
    %619 = arith.mulf %617, %618 : vector<8x8xf32>
    %620 = vector.broadcast %532 : vector<1x8xf32> to vector<8x8xf32>
    %621 = arith.addf %619, %620 : vector<8x8xf32>
    %cst_391 = arith.constant dense<0xFF800000> : vector<8xf32>
    %622 = vector.multi_reduction <maximumf>, %621, %cst_391 [1] : vector<8x8xf32> to vector<8xf32>
    %623 = vector.shape_cast %622 : vector<8xf32> to vector<8x1xf32>
    %624 = vector.broadcast %623 : vector<8x1xf32> to vector<8x8xf32>
    %625 = arith.subf %621, %624 : vector<8x8xf32>
    %626 = math.exp %625 : vector<8x8xf32>
    %cst_392 = arith.constant dense<0.000000e+00> : vector<8xf32>
    %627 = vector.multi_reduction <add>, %626, %cst_392 [1] : vector<8x8xf32> to vector<8xf32>
    %628 = vector.shape_cast %627 : vector<8xf32> to vector<8x1xf32>
    %629 = vector.broadcast %628 : vector<8x1xf32> to vector<8x8xf32>
    %630 = arith.divf %626, %629 : vector<8x8xf32>
    %cst_393 = arith.constant dense<0.000000e+00> : vector<8x8xf32>
    %631 = tpu.matmul %630, %616, %cst_393 {dimension_numbers = #tpu.dot_dimension_numbers<[1], [0], [0], [1], [0, 0, 1, 1], [], []>} : vector<8x8xf32>, vector<8x8xf32>, vector<8x8xf32> -> vector<8x8xf32>
    %c1_394 = arith.constant 1 : index
    %c0_395 = arith.constant 0 : index
    %c0_396 = arith.constant 0 : index
    %632 = vector.load %arg5[%c1_394, %c0_395, %c0_396] : memref<8x8x32xf32, #tpu.memory_space<vmem>>, vector<1x8x32xf32>
    %633 = vector.shape_cast %632 : vector<1x8x32xf32> to vector<8x32xf32>
    %cst_397 = arith.constant dense<0.000000e+00> : vector<8x32xf32>
    %634 = tpu.matmul %631, %633, %cst_397 {dimension_numbers = #tpu.dot_dimension_numbers<[1], [0], [0], [1], [0, 0, 1, 1], [], []>} : vector<8x8xf32>, vector<8x32xf32>, vector<8x32xf32> -> vector<8x32xf32>
    %635 = arith.addf %595, %634 : vector<8x32xf32>
    %c2_398 = arith.constant 2 : index
    %c0_399 = arith.constant 0 : index
    %c0_400 = arith.constant 0 : index
    %636 = vector.load %arg3[%c2_398, %c0_399, %c0_400] : memref<24x32x8xf32, #tpu.memory_space<vmem>>, vector<1x32x8xf32>
    %637 = vector.shape_cast %636 : vector<1x32x8xf32> to vector<32x8xf32>
    %cst_401 = arith.constant dense<0.000000e+00> : vector<8x8xf32>
    %638 = tpu.matmul %554, %637, %cst_401 {dimension_numbers = #tpu.dot_dimension_numbers<[1], [0], [0], [1], [0, 0, 1, 1], [], []>} : vector<8x32xf32>, vector<32x8xf32>, vector<8x8xf32> -> vector<8x8xf32>
    %c2_402 = arith.constant 2 : index
    %c0_403 = arith.constant 0 : index
    %c0_404 = arith.constant 0 : index
    %639 = vector.load %arg4[%c2_402, %c0_403, %c0_404] : memref<24x1x8xf32, #tpu.memory_space<vmem>>, vector<1x1x8xf32>
    %640 = vector.shape_cast %639 : vector<1x1x8xf32> to vector<1x8xf32>
    %641 = vector.broadcast %640 : vector<1x8xf32> to vector<8x8xf32>
    %642 = arith.addf %638, %641 : vector<8x8xf32>
    %c6_405 = arith.constant 6 : index
    %c0_406 = arith.constant 0 : index
    %c0_407 = arith.constant 0 : index
    %643 = vector.load %arg3[%c6_405, %c0_406, %c0_407] : memref<24x32x8xf32, #tpu.memory_space<vmem>>, vector<1x32x8xf32>
    %644 = vector.shape_cast %643 : vector<1x32x8xf32> to vector<32x8xf32>
    %cst_408 = arith.constant dense<0.000000e+00> : vector<8x8xf32>
    %645 = tpu.matmul %554, %644, %cst_408 {dimension_numbers = #tpu.dot_dimension_numbers<[1], [0], [0], [1], [0, 0, 1, 1], [], []>} : vector<8x32xf32>, vector<32x8xf32>, vector<8x8xf32> -> vector<8x8xf32>
    %c6_409 = arith.constant 6 : index
    %c0_410 = arith.constant 0 : index
    %c0_411 = arith.constant 0 : index
    %646 = vector.load %arg4[%c6_409, %c0_410, %c0_411] : memref<24x1x8xf32, #tpu.memory_space<vmem>>, vector<1x1x8xf32>
    %647 = vector.shape_cast %646 : vector<1x1x8xf32> to vector<1x8xf32>
    %648 = vector.broadcast %647 : vector<1x8xf32> to vector<8x8xf32>
    %649 = arith.addf %645, %648 : vector<8x8xf32>
    %c10_412 = arith.constant 10 : index
    %c0_413 = arith.constant 0 : index
    %c0_414 = arith.constant 0 : index
    %650 = vector.load %arg3[%c10_412, %c0_413, %c0_414] : memref<24x32x8xf32, #tpu.memory_space<vmem>>, vector<1x32x8xf32>
    %651 = vector.shape_cast %650 : vector<1x32x8xf32> to vector<32x8xf32>
    %cst_415 = arith.constant dense<0.000000e+00> : vector<8x8xf32>
    %652 = tpu.matmul %554, %651, %cst_415 {dimension_numbers = #tpu.dot_dimension_numbers<[1], [0], [0], [1], [0, 0, 1, 1], [], []>} : vector<8x32xf32>, vector<32x8xf32>, vector<8x8xf32> -> vector<8x8xf32>
    %c10_416 = arith.constant 10 : index
    %c0_417 = arith.constant 0 : index
    %c0_418 = arith.constant 0 : index
    %653 = vector.load %arg4[%c10_416, %c0_417, %c0_418] : memref<24x1x8xf32, #tpu.memory_space<vmem>>, vector<1x1x8xf32>
    %654 = vector.shape_cast %653 : vector<1x1x8xf32> to vector<1x8xf32>
    %655 = vector.broadcast %654 : vector<1x8xf32> to vector<8x8xf32>
    %656 = arith.addf %652, %655 : vector<8x8xf32>
    %cst_419 = arith.constant dense<0.000000e+00> : vector<8x8xf32>
    %657 = tpu.matmul %642, %649, %cst_419 {dimension_numbers = #tpu.dot_dimension_numbers<[1], [1], [0], [0], [0, 0, 1, 0], [], []>} : vector<8x8xf32>, vector<8x8xf32>, vector<8x8xf32> -> vector<8x8xf32>
    %cst_420 = arith.constant 0.353553385 : f32
    %658 = vector.broadcast %cst_420 : f32 to vector<8x8xf32>
    %659 = arith.mulf %657, %658 : vector<8x8xf32>
    %660 = vector.broadcast %532 : vector<1x8xf32> to vector<8x8xf32>
    %661 = arith.addf %659, %660 : vector<8x8xf32>
    %cst_421 = arith.constant dense<0xFF800000> : vector<8xf32>
    %662 = vector.multi_reduction <maximumf>, %661, %cst_421 [1] : vector<8x8xf32> to vector<8xf32>
    %663 = vector.shape_cast %662 : vector<8xf32> to vector<8x1xf32>
    %664 = vector.broadcast %663 : vector<8x1xf32> to vector<8x8xf32>
    %665 = arith.subf %661, %664 : vector<8x8xf32>
    %666 = math.exp %665 : vector<8x8xf32>
    %cst_422 = arith.constant dense<0.000000e+00> : vector<8xf32>
    %667 = vector.multi_reduction <add>, %666, %cst_422 [1] : vector<8x8xf32> to vector<8xf32>
    %668 = vector.shape_cast %667 : vector<8xf32> to vector<8x1xf32>
    %669 = vector.broadcast %668 : vector<8x1xf32> to vector<8x8xf32>
    %670 = arith.divf %666, %669 : vector<8x8xf32>
    %cst_423 = arith.constant dense<0.000000e+00> : vector<8x8xf32>
    %671 = tpu.matmul %670, %656, %cst_423 {dimension_numbers = #tpu.dot_dimension_numbers<[1], [0], [0], [1], [0, 0, 1, 1], [], []>} : vector<8x8xf32>, vector<8x8xf32>, vector<8x8xf32> -> vector<8x8xf32>
    %c2_424 = arith.constant 2 : index
    %c0_425 = arith.constant 0 : index
    %c0_426 = arith.constant 0 : index
    %672 = vector.load %arg5[%c2_424, %c0_425, %c0_426] : memref<8x8x32xf32, #tpu.memory_space<vmem>>, vector<1x8x32xf32>
    %673 = vector.shape_cast %672 : vector<1x8x32xf32> to vector<8x32xf32>
    %cst_427 = arith.constant dense<0.000000e+00> : vector<8x32xf32>
    %674 = tpu.matmul %671, %673, %cst_427 {dimension_numbers = #tpu.dot_dimension_numbers<[1], [0], [0], [1], [0, 0, 1, 1], [], []>} : vector<8x8xf32>, vector<8x32xf32>, vector<8x32xf32> -> vector<8x32xf32>
    %675 = arith.addf %635, %674 : vector<8x32xf32>
    %c3_428 = arith.constant 3 : index
    %c0_429 = arith.constant 0 : index
    %c0_430 = arith.constant 0 : index
    %676 = vector.load %arg3[%c3_428, %c0_429, %c0_430] : memref<24x32x8xf32, #tpu.memory_space<vmem>>, vector<1x32x8xf32>
    %677 = vector.shape_cast %676 : vector<1x32x8xf32> to vector<32x8xf32>
    %cst_431 = arith.constant dense<0.000000e+00> : vector<8x8xf32>
    %678 = tpu.matmul %554, %677, %cst_431 {dimension_numbers = #tpu.dot_dimension_numbers<[1], [0], [0], [1], [0, 0, 1, 1], [], []>} : vector<8x32xf32>, vector<32x8xf32>, vector<8x8xf32> -> vector<8x8xf32>
    %c3_432 = arith.constant 3 : index
    %c0_433 = arith.constant 0 : index
    %c0_434 = arith.constant 0 : index
    %679 = vector.load %arg4[%c3_432, %c0_433, %c0_434] : memref<24x1x8xf32, #tpu.memory_space<vmem>>, vector<1x1x8xf32>
    %680 = vector.shape_cast %679 : vector<1x1x8xf32> to vector<1x8xf32>
    %681 = vector.broadcast %680 : vector<1x8xf32> to vector<8x8xf32>
    %682 = arith.addf %678, %681 : vector<8x8xf32>
    %c7_435 = arith.constant 7 : index
    %c0_436 = arith.constant 0 : index
    %c0_437 = arith.constant 0 : index
    %683 = vector.load %arg3[%c7_435, %c0_436, %c0_437] : memref<24x32x8xf32, #tpu.memory_space<vmem>>, vector<1x32x8xf32>
    %684 = vector.shape_cast %683 : vector<1x32x8xf32> to vector<32x8xf32>
    %cst_438 = arith.constant dense<0.000000e+00> : vector<8x8xf32>
    %685 = tpu.matmul %554, %684, %cst_438 {dimension_numbers = #tpu.dot_dimension_numbers<[1], [0], [0], [1], [0, 0, 1, 1], [], []>} : vector<8x32xf32>, vector<32x8xf32>, vector<8x8xf32> -> vector<8x8xf32>
    %c7_439 = arith.constant 7 : index
    %c0_440 = arith.constant 0 : index
    %c0_441 = arith.constant 0 : index
    %686 = vector.load %arg4[%c7_439, %c0_440, %c0_441] : memref<24x1x8xf32, #tpu.memory_space<vmem>>, vector<1x1x8xf32>
    %687 = vector.shape_cast %686 : vector<1x1x8xf32> to vector<1x8xf32>
    %688 = vector.broadcast %687 : vector<1x8xf32> to vector<8x8xf32>
    %689 = arith.addf %685, %688 : vector<8x8xf32>
    %c11_442 = arith.constant 11 : index
    %c0_443 = arith.constant 0 : index
    %c0_444 = arith.constant 0 : index
    %690 = vector.load %arg3[%c11_442, %c0_443, %c0_444] : memref<24x32x8xf32, #tpu.memory_space<vmem>>, vector<1x32x8xf32>
    %691 = vector.shape_cast %690 : vector<1x32x8xf32> to vector<32x8xf32>
    %cst_445 = arith.constant dense<0.000000e+00> : vector<8x8xf32>
    %692 = tpu.matmul %554, %691, %cst_445 {dimension_numbers = #tpu.dot_dimension_numbers<[1], [0], [0], [1], [0, 0, 1, 1], [], []>} : vector<8x32xf32>, vector<32x8xf32>, vector<8x8xf32> -> vector<8x8xf32>
    %c11_446 = arith.constant 11 : index
    %c0_447 = arith.constant 0 : index
    %c0_448 = arith.constant 0 : index
    %693 = vector.load %arg4[%c11_446, %c0_447, %c0_448] : memref<24x1x8xf32, #tpu.memory_space<vmem>>, vector<1x1x8xf32>
    %694 = vector.shape_cast %693 : vector<1x1x8xf32> to vector<1x8xf32>
    %695 = vector.broadcast %694 : vector<1x8xf32> to vector<8x8xf32>
    %696 = arith.addf %692, %695 : vector<8x8xf32>
    %cst_449 = arith.constant dense<0.000000e+00> : vector<8x8xf32>
    %697 = tpu.matmul %682, %689, %cst_449 {dimension_numbers = #tpu.dot_dimension_numbers<[1], [1], [0], [0], [0, 0, 1, 0], [], []>} : vector<8x8xf32>, vector<8x8xf32>, vector<8x8xf32> -> vector<8x8xf32>
    %cst_450 = arith.constant 0.353553385 : f32
    %698 = vector.broadcast %cst_450 : f32 to vector<8x8xf32>
    %699 = arith.mulf %697, %698 : vector<8x8xf32>
    %700 = vector.broadcast %532 : vector<1x8xf32> to vector<8x8xf32>
    %701 = arith.addf %699, %700 : vector<8x8xf32>
    %cst_451 = arith.constant dense<0xFF800000> : vector<8xf32>
    %702 = vector.multi_reduction <maximumf>, %701, %cst_451 [1] : vector<8x8xf32> to vector<8xf32>
    %703 = vector.shape_cast %702 : vector<8xf32> to vector<8x1xf32>
    %704 = vector.broadcast %703 : vector<8x1xf32> to vector<8x8xf32>
    %705 = arith.subf %701, %704 : vector<8x8xf32>
    %706 = math.exp %705 : vector<8x8xf32>
    %cst_452 = arith.constant dense<0.000000e+00> : vector<8xf32>
    %707 = vector.multi_reduction <add>, %706, %cst_452 [1] : vector<8x8xf32> to vector<8xf32>
    %708 = vector.shape_cast %707 : vector<8xf32> to vector<8x1xf32>
    %709 = vector.broadcast %708 : vector<8x1xf32> to vector<8x8xf32>
    %710 = arith.divf %706, %709 : vector<8x8xf32>
    %cst_453 = arith.constant dense<0.000000e+00> : vector<8x8xf32>
    %711 = tpu.matmul %710, %696, %cst_453 {dimension_numbers = #tpu.dot_dimension_numbers<[1], [0], [0], [1], [0, 0, 1, 1], [], []>} : vector<8x8xf32>, vector<8x8xf32>, vector<8x8xf32> -> vector<8x8xf32>
    %c3_454 = arith.constant 3 : index
    %c0_455 = arith.constant 0 : index
    %c0_456 = arith.constant 0 : index
    %712 = vector.load %arg5[%c3_454, %c0_455, %c0_456] : memref<8x8x32xf32, #tpu.memory_space<vmem>>, vector<1x8x32xf32>
    %713 = vector.shape_cast %712 : vector<1x8x32xf32> to vector<8x32xf32>
    %cst_457 = arith.constant dense<0.000000e+00> : vector<8x32xf32>
    %714 = tpu.matmul %711, %713, %cst_457 {dimension_numbers = #tpu.dot_dimension_numbers<[1], [0], [0], [1], [0, 0, 1, 1], [], []>} : vector<8x8xf32>, vector<8x32xf32>, vector<8x32xf32> -> vector<8x32xf32>
    %715 = arith.addf %675, %714 : vector<8x32xf32>
    %c0_458 = arith.constant 0 : index
    %c0_459 = arith.constant 0 : index
    %c0_460 = arith.constant 0 : index
    %716 = vector.load %arg6[%c0_458, %c0_459, %c0_460] : memref<2x1x32xf32, #tpu.memory_space<vmem>>, vector<1x1x32xf32>
    %717 = vector.shape_cast %716 : vector<1x1x32xf32> to vector<1x32xf32>
    %718 = vector.broadcast %717 : vector<1x32xf32> to vector<8x32xf32>
    %719 = arith.addf %715, %718 : vector<8x32xf32>
    %720 = arith.addf %719, %554 : vector<8x32xf32>
    %c0_461 = arith.constant 0 : index
    %c0_462 = arith.constant 0 : index
    %c0_463 = arith.constant 0 : index
    %721 = vector.load %arg7[%c0_461, %c0_462, %c0_463] : memref<2x1x32xf32, #tpu.memory_space<vmem>>, vector<1x1x32xf32>
    %722 = vector.shape_cast %721 : vector<1x1x32xf32> to vector<1x32xf32>
    %c0_464 = arith.constant 0 : index
    %c0_465 = arith.constant 0 : index
    %c0_466 = arith.constant 0 : index
    %723 = vector.load %arg8[%c0_464, %c0_465, %c0_466] : memref<2x1x32xf32, #tpu.memory_space<vmem>>, vector<1x1x32xf32>
    %724 = vector.shape_cast %723 : vector<1x1x32xf32> to vector<1x32xf32>
    %cst_467 = arith.constant dense<0.000000e+00> : vector<8xf32>
    %725 = vector.multi_reduction <add>, %720, %cst_467 [1] : vector<8x32xf32> to vector<8xf32>
    %726 = vector.shape_cast %725 : vector<8xf32> to vector<8x1xf32>
    %cst_468 = arith.constant 3.200000e+01 : f32
    %727 = vector.broadcast %cst_468 : f32 to vector<8x1xf32>
    %728 = arith.divf %726, %727 : vector<8x1xf32>
    %729 = vector.broadcast %728 : vector<8x1xf32> to vector<8x32xf32>
    %730 = arith.subf %720, %729 : vector<8x32xf32>
    %731 = arith.mulf %730, %730 : vector<8x32xf32>
    %cst_469 = arith.constant dense<0.000000e+00> : vector<8xf32>
    %732 = vector.multi_reduction <add>, %731, %cst_469 [1] : vector<8x32xf32> to vector<8xf32>
    %733 = vector.shape_cast %732 : vector<8xf32> to vector<8x1xf32>
    %cst_470 = arith.constant 3.200000e+01 : f32
    %734 = vector.broadcast %cst_470 : f32 to vector<8x1xf32>
    %735 = arith.divf %733, %734 : vector<8x1xf32>
    %cst_471 = arith.constant 9.99999996E-13 : f32
    %736 = vector.broadcast %cst_471 : f32 to vector<8x1xf32>
    %737 = arith.addf %735, %736 : vector<8x1xf32>
    %738 = math.rsqrt %737 : vector<8x1xf32>
    %739 = vector.broadcast %738 : vector<8x1xf32> to vector<8x32xf32>
    %740 = arith.mulf %730, %739 : vector<8x32xf32>
    %741 = vector.broadcast %722 : vector<1x32xf32> to vector<8x32xf32>
    %742 = arith.mulf %740, %741 : vector<8x32xf32>
    %743 = vector.broadcast %724 : vector<1x32xf32> to vector<8x32xf32>
    %744 = arith.addf %742, %743 : vector<8x32xf32>
    %c0_472 = arith.constant 0 : index
    %c0_473 = arith.constant 0 : index
    %c0_474 = arith.constant 0 : index
    %745 = vector.load %arg9[%c0_472, %c0_473, %c0_474] : memref<2x32x64xf32, #tpu.memory_space<vmem>>, vector<1x32x64xf32>
    %746 = vector.shape_cast %745 : vector<1x32x64xf32> to vector<32x64xf32>
    %cst_475 = arith.constant dense<0.000000e+00> : vector<8x64xf32>
    %747 = tpu.matmul %744, %746, %cst_475 {dimension_numbers = #tpu.dot_dimension_numbers<[1], [0], [0], [1], [0, 0, 1, 1], [], []>} : vector<8x32xf32>, vector<32x64xf32>, vector<8x64xf32> -> vector<8x64xf32>
    %c0_476 = arith.constant 0 : index
    %c0_477 = arith.constant 0 : index
    %c0_478 = arith.constant 0 : index
    %748 = vector.load %arg10[%c0_476, %c0_477, %c0_478] : memref<2x1x64xf32, #tpu.memory_space<vmem>>, vector<1x1x64xf32>
    %749 = vector.shape_cast %748 : vector<1x1x64xf32> to vector<1x64xf32>
    %750 = vector.broadcast %749 : vector<1x64xf32> to vector<8x64xf32>
    %751 = arith.addf %747, %750 : vector<8x64xf32>
    %cst_479 = arith.constant 5.000000e-01 : f32
    %752 = vector.broadcast %cst_479 : f32 to vector<8x64xf32>
    %753 = arith.mulf %752, %751 : vector<8x64xf32>
    %cst_480 = arith.constant 4.471500e-02 : f32
    %754 = vector.broadcast %cst_480 : f32 to vector<8x64xf32>
    %755 = arith.mulf %754, %751 : vector<8x64xf32>
    %756 = arith.mulf %755, %751 : vector<8x64xf32>
    %757 = arith.mulf %756, %751 : vector<8x64xf32>
    %758 = arith.addf %751, %757 : vector<8x64xf32>
    %cst_481 = arith.constant 0.797884583 : f32
    %759 = vector.broadcast %cst_481 : f32 to vector<8x64xf32>
    %760 = arith.mulf %759, %758 : vector<8x64xf32>
    %761 = math.tanh %760 : vector<8x64xf32>
    %cst_482 = arith.constant 1.000000e+00 : f32
    %762 = vector.broadcast %cst_482 : f32 to vector<8x64xf32>
    %763 = arith.addf %762, %761 : vector<8x64xf32>
    %764 = arith.mulf %753, %763 : vector<8x64xf32>
    %c0_483 = arith.constant 0 : index
    %c0_484 = arith.constant 0 : index
    %c0_485 = arith.constant 0 : index
    %765 = vector.load %arg11[%c0_483, %c0_484, %c0_485] : memref<2x64x32xf32, #tpu.memory_space<vmem>>, vector<1x64x32xf32>
    %766 = vector.shape_cast %765 : vector<1x64x32xf32> to vector<64x32xf32>
    %cst_486 = arith.constant dense<0.000000e+00> : vector<8x32xf32>
    %767 = tpu.matmul %764, %766, %cst_486 {dimension_numbers = #tpu.dot_dimension_numbers<[1], [0], [0], [1], [0, 0, 1, 1], [], []>} : vector<8x64xf32>, vector<64x32xf32>, vector<8x32xf32> -> vector<8x32xf32>
    %c0_487 = arith.constant 0 : index
    %c0_488 = arith.constant 0 : index
    %c0_489 = arith.constant 0 : index
    %768 = vector.load %arg12[%c0_487, %c0_488, %c0_489] : memref<2x1x32xf32, #tpu.memory_space<vmem>>, vector<1x1x32xf32>
    %769 = vector.shape_cast %768 : vector<1x1x32xf32> to vector<1x32xf32>
    %770 = vector.broadcast %769 : vector<1x32xf32> to vector<8x32xf32>
    %771 = arith.addf %767, %770 : vector<8x32xf32>
    %772 = arith.addf %771, %744 : vector<8x32xf32>
    %c0_490 = arith.constant 0 : index
    %c0_491 = arith.constant 0 : index
    %c0_492 = arith.constant 0 : index
    %773 = vector.load %arg13[%c0_490, %c0_491, %c0_492] : memref<2x1x32xf32, #tpu.memory_space<vmem>>, vector<1x1x32xf32>
    %774 = vector.shape_cast %773 : vector<1x1x32xf32> to vector<1x32xf32>
    %c0_493 = arith.constant 0 : index
    %c0_494 = arith.constant 0 : index
    %c0_495 = arith.constant 0 : index
    %775 = vector.load %arg14[%c0_493, %c0_494, %c0_495] : memref<2x1x32xf32, #tpu.memory_space<vmem>>, vector<1x1x32xf32>
    %776 = vector.shape_cast %775 : vector<1x1x32xf32> to vector<1x32xf32>
    %cst_496 = arith.constant dense<0.000000e+00> : vector<8xf32>
    %777 = vector.multi_reduction <add>, %772, %cst_496 [1] : vector<8x32xf32> to vector<8xf32>
    %778 = vector.shape_cast %777 : vector<8xf32> to vector<8x1xf32>
    %cst_497 = arith.constant 3.200000e+01 : f32
    %779 = vector.broadcast %cst_497 : f32 to vector<8x1xf32>
    %780 = arith.divf %778, %779 : vector<8x1xf32>
    %781 = vector.broadcast %780 : vector<8x1xf32> to vector<8x32xf32>
    %782 = arith.subf %772, %781 : vector<8x32xf32>
    %783 = arith.mulf %782, %782 : vector<8x32xf32>
    %cst_498 = arith.constant dense<0.000000e+00> : vector<8xf32>
    %784 = vector.multi_reduction <add>, %783, %cst_498 [1] : vector<8x32xf32> to vector<8xf32>
    %785 = vector.shape_cast %784 : vector<8xf32> to vector<8x1xf32>
    %cst_499 = arith.constant 3.200000e+01 : f32
    %786 = vector.broadcast %cst_499 : f32 to vector<8x1xf32>
    %787 = arith.divf %785, %786 : vector<8x1xf32>
    %cst_500 = arith.constant 9.99999996E-13 : f32
    %788 = vector.broadcast %cst_500 : f32 to vector<8x1xf32>
    %789 = arith.addf %787, %788 : vector<8x1xf32>
    %790 = math.rsqrt %789 : vector<8x1xf32>
    %791 = vector.broadcast %790 : vector<8x1xf32> to vector<8x32xf32>
    %792 = arith.mulf %782, %791 : vector<8x32xf32>
    %793 = vector.broadcast %774 : vector<1x32xf32> to vector<8x32xf32>
    %794 = arith.mulf %792, %793 : vector<8x32xf32>
    %795 = vector.broadcast %776 : vector<1x32xf32> to vector<8x32xf32>
    %796 = arith.addf %794, %795 : vector<8x32xf32>
    %cst_501 = arith.constant 0.000000e+00 : f32
    %797 = vector.broadcast %cst_501 : f32 to vector<8x32xf32>
    %c12_502 = arith.constant 12 : index
    %c0_503 = arith.constant 0 : index
    %c0_504 = arith.constant 0 : index
    %798 = vector.load %arg3[%c12_502, %c0_503, %c0_504] : memref<24x32x8xf32, #tpu.memory_space<vmem>>, vector<1x32x8xf32>
    %799 = vector.shape_cast %798 : vector<1x32x8xf32> to vector<32x8xf32>
    %cst_505 = arith.constant dense<0.000000e+00> : vector<8x8xf32>
    %800 = tpu.matmul %796, %799, %cst_505 {dimension_numbers = #tpu.dot_dimension_numbers<[1], [0], [0], [1], [0, 0, 1, 1], [], []>} : vector<8x32xf32>, vector<32x8xf32>, vector<8x8xf32> -> vector<8x8xf32>
    %c12_506 = arith.constant 12 : index
    %c0_507 = arith.constant 0 : index
    %c0_508 = arith.constant 0 : index
    %801 = vector.load %arg4[%c12_506, %c0_507, %c0_508] : memref<24x1x8xf32, #tpu.memory_space<vmem>>, vector<1x1x8xf32>
    %802 = vector.shape_cast %801 : vector<1x1x8xf32> to vector<1x8xf32>
    %803 = vector.broadcast %802 : vector<1x8xf32> to vector<8x8xf32>
    %804 = arith.addf %800, %803 : vector<8x8xf32>
    %c16_509 = arith.constant 16 : index
    %c0_510 = arith.constant 0 : index
    %c0_511 = arith.constant 0 : index
    %805 = vector.load %arg3[%c16_509, %c0_510, %c0_511] : memref<24x32x8xf32, #tpu.memory_space<vmem>>, vector<1x32x8xf32>
    %806 = vector.shape_cast %805 : vector<1x32x8xf32> to vector<32x8xf32>
    %cst_512 = arith.constant dense<0.000000e+00> : vector<8x8xf32>
    %807 = tpu.matmul %796, %806, %cst_512 {dimension_numbers = #tpu.dot_dimension_numbers<[1], [0], [0], [1], [0, 0, 1, 1], [], []>} : vector<8x32xf32>, vector<32x8xf32>, vector<8x8xf32> -> vector<8x8xf32>
    %c16_513 = arith.constant 16 : index
    %c0_514 = arith.constant 0 : index
    %c0_515 = arith.constant 0 : index
    %808 = vector.load %arg4[%c16_513, %c0_514, %c0_515] : memref<24x1x8xf32, #tpu.memory_space<vmem>>, vector<1x1x8xf32>
    %809 = vector.shape_cast %808 : vector<1x1x8xf32> to vector<1x8xf32>
    %810 = vector.broadcast %809 : vector<1x8xf32> to vector<8x8xf32>
    %811 = arith.addf %807, %810 : vector<8x8xf32>
    %c20_516 = arith.constant 20 : index
    %c0_517 = arith.constant 0 : index
    %c0_518 = arith.constant 0 : index
    %812 = vector.load %arg3[%c20_516, %c0_517, %c0_518] : memref<24x32x8xf32, #tpu.memory_space<vmem>>, vector<1x32x8xf32>
    %813 = vector.shape_cast %812 : vector<1x32x8xf32> to vector<32x8xf32>
    %cst_519 = arith.constant dense<0.000000e+00> : vector<8x8xf32>
    %814 = tpu.matmul %796, %813, %cst_519 {dimension_numbers = #tpu.dot_dimension_numbers<[1], [0], [0], [1], [0, 0, 1, 1], [], []>} : vector<8x32xf32>, vector<32x8xf32>, vector<8x8xf32> -> vector<8x8xf32>
    %c20_520 = arith.constant 20 : index
    %c0_521 = arith.constant 0 : index
    %c0_522 = arith.constant 0 : index
    %815 = vector.load %arg4[%c20_520, %c0_521, %c0_522] : memref<24x1x8xf32, #tpu.memory_space<vmem>>, vector<1x1x8xf32>
    %816 = vector.shape_cast %815 : vector<1x1x8xf32> to vector<1x8xf32>
    %817 = vector.broadcast %816 : vector<1x8xf32> to vector<8x8xf32>
    %818 = arith.addf %814, %817 : vector<8x8xf32>
    %cst_523 = arith.constant dense<0.000000e+00> : vector<8x8xf32>
    %819 = tpu.matmul %804, %811, %cst_523 {dimension_numbers = #tpu.dot_dimension_numbers<[1], [1], [0], [0], [0, 0, 1, 0], [], []>} : vector<8x8xf32>, vector<8x8xf32>, vector<8x8xf32> -> vector<8x8xf32>
    %cst_524 = arith.constant 0.353553385 : f32
    %820 = vector.broadcast %cst_524 : f32 to vector<8x8xf32>
    %821 = arith.mulf %819, %820 : vector<8x8xf32>
    %822 = vector.broadcast %532 : vector<1x8xf32> to vector<8x8xf32>
    %823 = arith.addf %821, %822 : vector<8x8xf32>
    %cst_525 = arith.constant dense<0xFF800000> : vector<8xf32>
    %824 = vector.multi_reduction <maximumf>, %823, %cst_525 [1] : vector<8x8xf32> to vector<8xf32>
    %825 = vector.shape_cast %824 : vector<8xf32> to vector<8x1xf32>
    %826 = vector.broadcast %825 : vector<8x1xf32> to vector<8x8xf32>
    %827 = arith.subf %823, %826 : vector<8x8xf32>
    %828 = math.exp %827 : vector<8x8xf32>
    %cst_526 = arith.constant dense<0.000000e+00> : vector<8xf32>
    %829 = vector.multi_reduction <add>, %828, %cst_526 [1] : vector<8x8xf32> to vector<8xf32>
    %830 = vector.shape_cast %829 : vector<8xf32> to vector<8x1xf32>
    %831 = vector.broadcast %830 : vector<8x1xf32> to vector<8x8xf32>
    %832 = arith.divf %828, %831 : vector<8x8xf32>
    %cst_527 = arith.constant dense<0.000000e+00> : vector<8x8xf32>
    %833 = tpu.matmul %832, %818, %cst_527 {dimension_numbers = #tpu.dot_dimension_numbers<[1], [0], [0], [1], [0, 0, 1, 1], [], []>} : vector<8x8xf32>, vector<8x8xf32>, vector<8x8xf32> -> vector<8x8xf32>
    %c4_528 = arith.constant 4 : index
    %c0_529 = arith.constant 0 : index
    %c0_530 = arith.constant 0 : index
    %834 = vector.load %arg5[%c4_528, %c0_529, %c0_530] : memref<8x8x32xf32, #tpu.memory_space<vmem>>, vector<1x8x32xf32>
    %835 = vector.shape_cast %834 : vector<1x8x32xf32> to vector<8x32xf32>
    %cst_531 = arith.constant dense<0.000000e+00> : vector<8x32xf32>
    %836 = tpu.matmul %833, %835, %cst_531 {dimension_numbers = #tpu.dot_dimension_numbers<[1], [0], [0], [1], [0, 0, 1, 1], [], []>} : vector<8x8xf32>, vector<8x32xf32>, vector<8x32xf32> -> vector<8x32xf32>
    %837 = arith.addf %797, %836 : vector<8x32xf32>
    %c13_532 = arith.constant 13 : index
    %c0_533 = arith.constant 0 : index
    %c0_534 = arith.constant 0 : index
    %838 = vector.load %arg3[%c13_532, %c0_533, %c0_534] : memref<24x32x8xf32, #tpu.memory_space<vmem>>, vector<1x32x8xf32>
    %839 = vector.shape_cast %838 : vector<1x32x8xf32> to vector<32x8xf32>
    %cst_535 = arith.constant dense<0.000000e+00> : vector<8x8xf32>
    %840 = tpu.matmul %796, %839, %cst_535 {dimension_numbers = #tpu.dot_dimension_numbers<[1], [0], [0], [1], [0, 0, 1, 1], [], []>} : vector<8x32xf32>, vector<32x8xf32>, vector<8x8xf32> -> vector<8x8xf32>
    %c13_536 = arith.constant 13 : index
    %c0_537 = arith.constant 0 : index
    %c0_538 = arith.constant 0 : index
    %841 = vector.load %arg4[%c13_536, %c0_537, %c0_538] : memref<24x1x8xf32, #tpu.memory_space<vmem>>, vector<1x1x8xf32>
    %842 = vector.shape_cast %841 : vector<1x1x8xf32> to vector<1x8xf32>
    %843 = vector.broadcast %842 : vector<1x8xf32> to vector<8x8xf32>
    %844 = arith.addf %840, %843 : vector<8x8xf32>
    %c17_539 = arith.constant 17 : index
    %c0_540 = arith.constant 0 : index
    %c0_541 = arith.constant 0 : index
    %845 = vector.load %arg3[%c17_539, %c0_540, %c0_541] : memref<24x32x8xf32, #tpu.memory_space<vmem>>, vector<1x32x8xf32>
    %846 = vector.shape_cast %845 : vector<1x32x8xf32> to vector<32x8xf32>
    %cst_542 = arith.constant dense<0.000000e+00> : vector<8x8xf32>
    %847 = tpu.matmul %796, %846, %cst_542 {dimension_numbers = #tpu.dot_dimension_numbers<[1], [0], [0], [1], [0, 0, 1, 1], [], []>} : vector<8x32xf32>, vector<32x8xf32>, vector<8x8xf32> -> vector<8x8xf32>
    %c17_543 = arith.constant 17 : index
    %c0_544 = arith.constant 0 : index
    %c0_545 = arith.constant 0 : index
    %848 = vector.load %arg4[%c17_543, %c0_544, %c0_545] : memref<24x1x8xf32, #tpu.memory_space<vmem>>, vector<1x1x8xf32>
    %849 = vector.shape_cast %848 : vector<1x1x8xf32> to vector<1x8xf32>
    %850 = vector.broadcast %849 : vector<1x8xf32> to vector<8x8xf32>
    %851 = arith.addf %847, %850 : vector<8x8xf32>
    %c21_546 = arith.constant 21 : index
    %c0_547 = arith.constant 0 : index
    %c0_548 = arith.constant 0 : index
    %852 = vector.load %arg3[%c21_546, %c0_547, %c0_548] : memref<24x32x8xf32, #tpu.memory_space<vmem>>, vector<1x32x8xf32>
    %853 = vector.shape_cast %852 : vector<1x32x8xf32> to vector<32x8xf32>
    %cst_549 = arith.constant dense<0.000000e+00> : vector<8x8xf32>
    %854 = tpu.matmul %796, %853, %cst_549 {dimension_numbers = #tpu.dot_dimension_numbers<[1], [0], [0], [1], [0, 0, 1, 1], [], []>} : vector<8x32xf32>, vector<32x8xf32>, vector<8x8xf32> -> vector<8x8xf32>
    %c21_550 = arith.constant 21 : index
    %c0_551 = arith.constant 0 : index
    %c0_552 = arith.constant 0 : index
    %855 = vector.load %arg4[%c21_550, %c0_551, %c0_552] : memref<24x1x8xf32, #tpu.memory_space<vmem>>, vector<1x1x8xf32>
    %856 = vector.shape_cast %855 : vector<1x1x8xf32> to vector<1x8xf32>
    %857 = vector.broadcast %856 : vector<1x8xf32> to vector<8x8xf32>
    %858 = arith.addf %854, %857 : vector<8x8xf32>
    %cst_553 = arith.constant dense<0.000000e+00> : vector<8x8xf32>
    %859 = tpu.matmul %844, %851, %cst_553 {dimension_numbers = #tpu.dot_dimension_numbers<[1], [1], [0], [0], [0, 0, 1, 0], [], []>} : vector<8x8xf32>, vector<8x8xf32>, vector<8x8xf32> -> vector<8x8xf32>
    %cst_554 = arith.constant 0.353553385 : f32
    %860 = vector.broadcast %cst_554 : f32 to vector<8x8xf32>
    %861 = arith.mulf %859, %860 : vector<8x8xf32>
    %862 = vector.broadcast %532 : vector<1x8xf32> to vector<8x8xf32>
    %863 = arith.addf %861, %862 : vector<8x8xf32>
    %cst_555 = arith.constant dense<0xFF800000> : vector<8xf32>
    %864 = vector.multi_reduction <maximumf>, %863, %cst_555 [1] : vector<8x8xf32> to vector<8xf32>
    %865 = vector.shape_cast %864 : vector<8xf32> to vector<8x1xf32>
    %866 = vector.broadcast %865 : vector<8x1xf32> to vector<8x8xf32>
    %867 = arith.subf %863, %866 : vector<8x8xf32>
    %868 = math.exp %867 : vector<8x8xf32>
    %cst_556 = arith.constant dense<0.000000e+00> : vector<8xf32>
    %869 = vector.multi_reduction <add>, %868, %cst_556 [1] : vector<8x8xf32> to vector<8xf32>
    %870 = vector.shape_cast %869 : vector<8xf32> to vector<8x1xf32>
    %871 = vector.broadcast %870 : vector<8x1xf32> to vector<8x8xf32>
    %872 = arith.divf %868, %871 : vector<8x8xf32>
    %cst_557 = arith.constant dense<0.000000e+00> : vector<8x8xf32>
    %873 = tpu.matmul %872, %858, %cst_557 {dimension_numbers = #tpu.dot_dimension_numbers<[1], [0], [0], [1], [0, 0, 1, 1], [], []>} : vector<8x8xf32>, vector<8x8xf32>, vector<8x8xf32> -> vector<8x8xf32>
    %c5_558 = arith.constant 5 : index
    %c0_559 = arith.constant 0 : index
    %c0_560 = arith.constant 0 : index
    %874 = vector.load %arg5[%c5_558, %c0_559, %c0_560] : memref<8x8x32xf32, #tpu.memory_space<vmem>>, vector<1x8x32xf32>
    %875 = vector.shape_cast %874 : vector<1x8x32xf32> to vector<8x32xf32>
    %cst_561 = arith.constant dense<0.000000e+00> : vector<8x32xf32>
    %876 = tpu.matmul %873, %875, %cst_561 {dimension_numbers = #tpu.dot_dimension_numbers<[1], [0], [0], [1], [0, 0, 1, 1], [], []>} : vector<8x8xf32>, vector<8x32xf32>, vector<8x32xf32> -> vector<8x32xf32>
    %877 = arith.addf %837, %876 : vector<8x32xf32>
    %c14_562 = arith.constant 14 : index
    %c0_563 = arith.constant 0 : index
    %c0_564 = arith.constant 0 : index
    %878 = vector.load %arg3[%c14_562, %c0_563, %c0_564] : memref<24x32x8xf32, #tpu.memory_space<vmem>>, vector<1x32x8xf32>
    %879 = vector.shape_cast %878 : vector<1x32x8xf32> to vector<32x8xf32>
    %cst_565 = arith.constant dense<0.000000e+00> : vector<8x8xf32>
    %880 = tpu.matmul %796, %879, %cst_565 {dimension_numbers = #tpu.dot_dimension_numbers<[1], [0], [0], [1], [0, 0, 1, 1], [], []>} : vector<8x32xf32>, vector<32x8xf32>, vector<8x8xf32> -> vector<8x8xf32>
    %c14_566 = arith.constant 14 : index
    %c0_567 = arith.constant 0 : index
    %c0_568 = arith.constant 0 : index
    %881 = vector.load %arg4[%c14_566, %c0_567, %c0_568] : memref<24x1x8xf32, #tpu.memory_space<vmem>>, vector<1x1x8xf32>
    %882 = vector.shape_cast %881 : vector<1x1x8xf32> to vector<1x8xf32>
    %883 = vector.broadcast %882 : vector<1x8xf32> to vector<8x8xf32>
    %884 = arith.addf %880, %883 : vector<8x8xf32>
    %c18_569 = arith.constant 18 : index
    %c0_570 = arith.constant 0 : index
    %c0_571 = arith.constant 0 : index
    %885 = vector.load %arg3[%c18_569, %c0_570, %c0_571] : memref<24x32x8xf32, #tpu.memory_space<vmem>>, vector<1x32x8xf32>
    %886 = vector.shape_cast %885 : vector<1x32x8xf32> to vector<32x8xf32>
    %cst_572 = arith.constant dense<0.000000e+00> : vector<8x8xf32>
    %887 = tpu.matmul %796, %886, %cst_572 {dimension_numbers = #tpu.dot_dimension_numbers<[1], [0], [0], [1], [0, 0, 1, 1], [], []>} : vector<8x32xf32>, vector<32x8xf32>, vector<8x8xf32> -> vector<8x8xf32>
    %c18_573 = arith.constant 18 : index
    %c0_574 = arith.constant 0 : index
    %c0_575 = arith.constant 0 : index
    %888 = vector.load %arg4[%c18_573, %c0_574, %c0_575] : memref<24x1x8xf32, #tpu.memory_space<vmem>>, vector<1x1x8xf32>
    %889 = vector.shape_cast %888 : vector<1x1x8xf32> to vector<1x8xf32>
    %890 = vector.broadcast %889 : vector<1x8xf32> to vector<8x8xf32>
    %891 = arith.addf %887, %890 : vector<8x8xf32>
    %c22_576 = arith.constant 22 : index
    %c0_577 = arith.constant 0 : index
    %c0_578 = arith.constant 0 : index
    %892 = vector.load %arg3[%c22_576, %c0_577, %c0_578] : memref<24x32x8xf32, #tpu.memory_space<vmem>>, vector<1x32x8xf32>
    %893 = vector.shape_cast %892 : vector<1x32x8xf32> to vector<32x8xf32>
    %cst_579 = arith.constant dense<0.000000e+00> : vector<8x8xf32>
    %894 = tpu.matmul %796, %893, %cst_579 {dimension_numbers = #tpu.dot_dimension_numbers<[1], [0], [0], [1], [0, 0, 1, 1], [], []>} : vector<8x32xf32>, vector<32x8xf32>, vector<8x8xf32> -> vector<8x8xf32>
    %c22_580 = arith.constant 22 : index
    %c0_581 = arith.constant 0 : index
    %c0_582 = arith.constant 0 : index
    %895 = vector.load %arg4[%c22_580, %c0_581, %c0_582] : memref<24x1x8xf32, #tpu.memory_space<vmem>>, vector<1x1x8xf32>
    %896 = vector.shape_cast %895 : vector<1x1x8xf32> to vector<1x8xf32>
    %897 = vector.broadcast %896 : vector<1x8xf32> to vector<8x8xf32>
    %898 = arith.addf %894, %897 : vector<8x8xf32>
    %cst_583 = arith.constant dense<0.000000e+00> : vector<8x8xf32>
    %899 = tpu.matmul %884, %891, %cst_583 {dimension_numbers = #tpu.dot_dimension_numbers<[1], [1], [0], [0], [0, 0, 1, 0], [], []>} : vector<8x8xf32>, vector<8x8xf32>, vector<8x8xf32> -> vector<8x8xf32>
    %cst_584 = arith.constant 0.353553385 : f32
    %900 = vector.broadcast %cst_584 : f32 to vector<8x8xf32>
    %901 = arith.mulf %899, %900 : vector<8x8xf32>
    %902 = vector.broadcast %532 : vector<1x8xf32> to vector<8x8xf32>
    %903 = arith.addf %901, %902 : vector<8x8xf32>
    %cst_585 = arith.constant dense<0xFF800000> : vector<8xf32>
    %904 = vector.multi_reduction <maximumf>, %903, %cst_585 [1] : vector<8x8xf32> to vector<8xf32>
    %905 = vector.shape_cast %904 : vector<8xf32> to vector<8x1xf32>
    %906 = vector.broadcast %905 : vector<8x1xf32> to vector<8x8xf32>
    %907 = arith.subf %903, %906 : vector<8x8xf32>
    %908 = math.exp %907 : vector<8x8xf32>
    %cst_586 = arith.constant dense<0.000000e+00> : vector<8xf32>
    %909 = vector.multi_reduction <add>, %908, %cst_586 [1] : vector<8x8xf32> to vector<8xf32>
    %910 = vector.shape_cast %909 : vector<8xf32> to vector<8x1xf32>
    %911 = vector.broadcast %910 : vector<8x1xf32> to vector<8x8xf32>
    %912 = arith.divf %908, %911 : vector<8x8xf32>
    %cst_587 = arith.constant dense<0.000000e+00> : vector<8x8xf32>
    %913 = tpu.matmul %912, %898, %cst_587 {dimension_numbers = #tpu.dot_dimension_numbers<[1], [0], [0], [1], [0, 0, 1, 1], [], []>} : vector<8x8xf32>, vector<8x8xf32>, vector<8x8xf32> -> vector<8x8xf32>
    %c6_588 = arith.constant 6 : index
    %c0_589 = arith.constant 0 : index
    %c0_590 = arith.constant 0 : index
    %914 = vector.load %arg5[%c6_588, %c0_589, %c0_590] : memref<8x8x32xf32, #tpu.memory_space<vmem>>, vector<1x8x32xf32>
    %915 = vector.shape_cast %914 : vector<1x8x32xf32> to vector<8x32xf32>
    %cst_591 = arith.constant dense<0.000000e+00> : vector<8x32xf32>
    %916 = tpu.matmul %913, %915, %cst_591 {dimension_numbers = #tpu.dot_dimension_numbers<[1], [0], [0], [1], [0, 0, 1, 1], [], []>} : vector<8x8xf32>, vector<8x32xf32>, vector<8x32xf32> -> vector<8x32xf32>
    %917 = arith.addf %877, %916 : vector<8x32xf32>
    %c15_592 = arith.constant 15 : index
    %c0_593 = arith.constant 0 : index
    %c0_594 = arith.constant 0 : index
    %918 = vector.load %arg3[%c15_592, %c0_593, %c0_594] : memref<24x32x8xf32, #tpu.memory_space<vmem>>, vector<1x32x8xf32>
    %919 = vector.shape_cast %918 : vector<1x32x8xf32> to vector<32x8xf32>
    %cst_595 = arith.constant dense<0.000000e+00> : vector<8x8xf32>
    %920 = tpu.matmul %796, %919, %cst_595 {dimension_numbers = #tpu.dot_dimension_numbers<[1], [0], [0], [1], [0, 0, 1, 1], [], []>} : vector<8x32xf32>, vector<32x8xf32>, vector<8x8xf32> -> vector<8x8xf32>
    %c15_596 = arith.constant 15 : index
    %c0_597 = arith.constant 0 : index
    %c0_598 = arith.constant 0 : index
    %921 = vector.load %arg4[%c15_596, %c0_597, %c0_598] : memref<24x1x8xf32, #tpu.memory_space<vmem>>, vector<1x1x8xf32>
    %922 = vector.shape_cast %921 : vector<1x1x8xf32> to vector<1x8xf32>
    %923 = vector.broadcast %922 : vector<1x8xf32> to vector<8x8xf32>
    %924 = arith.addf %920, %923 : vector<8x8xf32>
    %c19_599 = arith.constant 19 : index
    %c0_600 = arith.constant 0 : index
    %c0_601 = arith.constant 0 : index
    %925 = vector.load %arg3[%c19_599, %c0_600, %c0_601] : memref<24x32x8xf32, #tpu.memory_space<vmem>>, vector<1x32x8xf32>
    %926 = vector.shape_cast %925 : vector<1x32x8xf32> to vector<32x8xf32>
    %cst_602 = arith.constant dense<0.000000e+00> : vector<8x8xf32>
    %927 = tpu.matmul %796, %926, %cst_602 {dimension_numbers = #tpu.dot_dimension_numbers<[1], [0], [0], [1], [0, 0, 1, 1], [], []>} : vector<8x32xf32>, vector<32x8xf32>, vector<8x8xf32> -> vector<8x8xf32>
    %c19_603 = arith.constant 19 : index
    %c0_604 = arith.constant 0 : index
    %c0_605 = arith.constant 0 : index
    %928 = vector.load %arg4[%c19_603, %c0_604, %c0_605] : memref<24x1x8xf32, #tpu.memory_space<vmem>>, vector<1x1x8xf32>
    %929 = vector.shape_cast %928 : vector<1x1x8xf32> to vector<1x8xf32>
    %930 = vector.broadcast %929 : vector<1x8xf32> to vector<8x8xf32>
    %931 = arith.addf %927, %930 : vector<8x8xf32>
    %c23_606 = arith.constant 23 : index
    %c0_607 = arith.constant 0 : index
    %c0_608 = arith.constant 0 : index
    %932 = vector.load %arg3[%c23_606, %c0_607, %c0_608] : memref<24x32x8xf32, #tpu.memory_space<vmem>>, vector<1x32x8xf32>
    %933 = vector.shape_cast %932 : vector<1x32x8xf32> to vector<32x8xf32>
    %cst_609 = arith.constant dense<0.000000e+00> : vector<8x8xf32>
    %934 = tpu.matmul %796, %933, %cst_609 {dimension_numbers = #tpu.dot_dimension_numbers<[1], [0], [0], [1], [0, 0, 1, 1], [], []>} : vector<8x32xf32>, vector<32x8xf32>, vector<8x8xf32> -> vector<8x8xf32>
    %c23_610 = arith.constant 23 : index
    %c0_611 = arith.constant 0 : index
    %c0_612 = arith.constant 0 : index
    %935 = vector.load %arg4[%c23_610, %c0_611, %c0_612] : memref<24x1x8xf32, #tpu.memory_space<vmem>>, vector<1x1x8xf32>
    %936 = vector.shape_cast %935 : vector<1x1x8xf32> to vector<1x8xf32>
    %937 = vector.broadcast %936 : vector<1x8xf32> to vector<8x8xf32>
    %938 = arith.addf %934, %937 : vector<8x8xf32>
    %cst_613 = arith.constant dense<0.000000e+00> : vector<8x8xf32>
    %939 = tpu.matmul %924, %931, %cst_613 {dimension_numbers = #tpu.dot_dimension_numbers<[1], [1], [0], [0], [0, 0, 1, 0], [], []>} : vector<8x8xf32>, vector<8x8xf32>, vector<8x8xf32> -> vector<8x8xf32>
    %cst_614 = arith.constant 0.353553385 : f32
    %940 = vector.broadcast %cst_614 : f32 to vector<8x8xf32>
    %941 = arith.mulf %939, %940 : vector<8x8xf32>
    %942 = vector.broadcast %532 : vector<1x8xf32> to vector<8x8xf32>
    %943 = arith.addf %941, %942 : vector<8x8xf32>
    %cst_615 = arith.constant dense<0xFF800000> : vector<8xf32>
    %944 = vector.multi_reduction <maximumf>, %943, %cst_615 [1] : vector<8x8xf32> to vector<8xf32>
    %945 = vector.shape_cast %944 : vector<8xf32> to vector<8x1xf32>
    %946 = vector.broadcast %945 : vector<8x1xf32> to vector<8x8xf32>
    %947 = arith.subf %943, %946 : vector<8x8xf32>
    %948 = math.exp %947 : vector<8x8xf32>
    %cst_616 = arith.constant dense<0.000000e+00> : vector<8xf32>
    %949 = vector.multi_reduction <add>, %948, %cst_616 [1] : vector<8x8xf32> to vector<8xf32>
    %950 = vector.shape_cast %949 : vector<8xf32> to vector<8x1xf32>
    %951 = vector.broadcast %950 : vector<8x1xf32> to vector<8x8xf32>
    %952 = arith.divf %948, %951 : vector<8x8xf32>
    %cst_617 = arith.constant dense<0.000000e+00> : vector<8x8xf32>
    %953 = tpu.matmul %952, %938, %cst_617 {dimension_numbers = #tpu.dot_dimension_numbers<[1], [0], [0], [1], [0, 0, 1, 1], [], []>} : vector<8x8xf32>, vector<8x8xf32>, vector<8x8xf32> -> vector<8x8xf32>
    %c7_618 = arith.constant 7 : index
    %c0_619 = arith.constant 0 : index
    %c0_620 = arith.constant 0 : index
    %954 = vector.load %arg5[%c7_618, %c0_619, %c0_620] : memref<8x8x32xf32, #tpu.memory_space<vmem>>, vector<1x8x32xf32>
    %955 = vector.shape_cast %954 : vector<1x8x32xf32> to vector<8x32xf32>
    %cst_621 = arith.constant dense<0.000000e+00> : vector<8x32xf32>
    %956 = tpu.matmul %953, %955, %cst_621 {dimension_numbers = #tpu.dot_dimension_numbers<[1], [0], [0], [1], [0, 0, 1, 1], [], []>} : vector<8x8xf32>, vector<8x32xf32>, vector<8x32xf32> -> vector<8x32xf32>
    %957 = arith.addf %917, %956 : vector<8x32xf32>
    %c1_622 = arith.constant 1 : index
    %c0_623 = arith.constant 0 : index
    %c0_624 = arith.constant 0 : index
    %958 = vector.load %arg6[%c1_622, %c0_623, %c0_624] : memref<2x1x32xf32, #tpu.memory_space<vmem>>, vector<1x1x32xf32>
    %959 = vector.shape_cast %958 : vector<1x1x32xf32> to vector<1x32xf32>
    %960 = vector.broadcast %959 : vector<1x32xf32> to vector<8x32xf32>
    %961 = arith.addf %957, %960 : vector<8x32xf32>
    %962 = arith.addf %961, %796 : vector<8x32xf32>
    %c1_625 = arith.constant 1 : index
    %c0_626 = arith.constant 0 : index
    %c0_627 = arith.constant 0 : index
    %963 = vector.load %arg7[%c1_625, %c0_626, %c0_627] : memref<2x1x32xf32, #tpu.memory_space<vmem>>, vector<1x1x32xf32>
    %964 = vector.shape_cast %963 : vector<1x1x32xf32> to vector<1x32xf32>
    %c1_628 = arith.constant 1 : index
    %c0_629 = arith.constant 0 : index
    %c0_630 = arith.constant 0 : index
    %965 = vector.load %arg8[%c1_628, %c0_629, %c0_630] : memref<2x1x32xf32, #tpu.memory_space<vmem>>, vector<1x1x32xf32>
    %966 = vector.shape_cast %965 : vector<1x1x32xf32> to vector<1x32xf32>
    %cst_631 = arith.constant dense<0.000000e+00> : vector<8xf32>
    %967 = vector.multi_reduction <add>, %962, %cst_631 [1] : vector<8x32xf32> to vector<8xf32>
    %968 = vector.shape_cast %967 : vector<8xf32> to vector<8x1xf32>
    %cst_632 = arith.constant 3.200000e+01 : f32
    %969 = vector.broadcast %cst_632 : f32 to vector<8x1xf32>
    %970 = arith.divf %968, %969 : vector<8x1xf32>
    %971 = vector.broadcast %970 : vector<8x1xf32> to vector<8x32xf32>
    %972 = arith.subf %962, %971 : vector<8x32xf32>
    %973 = arith.mulf %972, %972 : vector<8x32xf32>
    %cst_633 = arith.constant dense<0.000000e+00> : vector<8xf32>
    %974 = vector.multi_reduction <add>, %973, %cst_633 [1] : vector<8x32xf32> to vector<8xf32>
    %975 = vector.shape_cast %974 : vector<8xf32> to vector<8x1xf32>
    %cst_634 = arith.constant 3.200000e+01 : f32
    %976 = vector.broadcast %cst_634 : f32 to vector<8x1xf32>
    %977 = arith.divf %975, %976 : vector<8x1xf32>
    %cst_635 = arith.constant 9.99999996E-13 : f32
    %978 = vector.broadcast %cst_635 : f32 to vector<8x1xf32>
    %979 = arith.addf %977, %978 : vector<8x1xf32>
    %980 = math.rsqrt %979 : vector<8x1xf32>
    %981 = vector.broadcast %980 : vector<8x1xf32> to vector<8x32xf32>
    %982 = arith.mulf %972, %981 : vector<8x32xf32>
    %983 = vector.broadcast %964 : vector<1x32xf32> to vector<8x32xf32>
    %984 = arith.mulf %982, %983 : vector<8x32xf32>
    %985 = vector.broadcast %966 : vector<1x32xf32> to vector<8x32xf32>
    %986 = arith.addf %984, %985 : vector<8x32xf32>
    %c1_636 = arith.constant 1 : index
    %c0_637 = arith.constant 0 : index
    %c0_638 = arith.constant 0 : index
    %987 = vector.load %arg9[%c1_636, %c0_637, %c0_638] : memref<2x32x64xf32, #tpu.memory_space<vmem>>, vector<1x32x64xf32>
    %988 = vector.shape_cast %987 : vector<1x32x64xf32> to vector<32x64xf32>
    %cst_639 = arith.constant dense<0.000000e+00> : vector<8x64xf32>
    %989 = tpu.matmul %986, %988, %cst_639 {dimension_numbers = #tpu.dot_dimension_numbers<[1], [0], [0], [1], [0, 0, 1, 1], [], []>} : vector<8x32xf32>, vector<32x64xf32>, vector<8x64xf32> -> vector<8x64xf32>
    %c1_640 = arith.constant 1 : index
    %c0_641 = arith.constant 0 : index
    %c0_642 = arith.constant 0 : index
    %990 = vector.load %arg10[%c1_640, %c0_641, %c0_642] : memref<2x1x64xf32, #tpu.memory_space<vmem>>, vector<1x1x64xf32>
    %991 = vector.shape_cast %990 : vector<1x1x64xf32> to vector<1x64xf32>
    %992 = vector.broadcast %991 : vector<1x64xf32> to vector<8x64xf32>
    %993 = arith.addf %989, %992 : vector<8x64xf32>
    %cst_643 = arith.constant 5.000000e-01 : f32
    %994 = vector.broadcast %cst_643 : f32 to vector<8x64xf32>
    %995 = arith.mulf %994, %993 : vector<8x64xf32>
    %cst_644 = arith.constant 4.471500e-02 : f32
    %996 = vector.broadcast %cst_644 : f32 to vector<8x64xf32>
    %997 = arith.mulf %996, %993 : vector<8x64xf32>
    %998 = arith.mulf %997, %993 : vector<8x64xf32>
    %999 = arith.mulf %998, %993 : vector<8x64xf32>
    %1000 = arith.addf %993, %999 : vector<8x64xf32>
    %cst_645 = arith.constant 0.797884583 : f32
    %1001 = vector.broadcast %cst_645 : f32 to vector<8x64xf32>
    %1002 = arith.mulf %1001, %1000 : vector<8x64xf32>
    %1003 = math.tanh %1002 : vector<8x64xf32>
    %cst_646 = arith.constant 1.000000e+00 : f32
    %1004 = vector.broadcast %cst_646 : f32 to vector<8x64xf32>
    %1005 = arith.addf %1004, %1003 : vector<8x64xf32>
    %1006 = arith.mulf %995, %1005 : vector<8x64xf32>
    %c1_647 = arith.constant 1 : index
    %c0_648 = arith.constant 0 : index
    %c0_649 = arith.constant 0 : index
    %1007 = vector.load %arg11[%c1_647, %c0_648, %c0_649] : memref<2x64x32xf32, #tpu.memory_space<vmem>>, vector<1x64x32xf32>
    %1008 = vector.shape_cast %1007 : vector<1x64x32xf32> to vector<64x32xf32>
    %cst_650 = arith.constant dense<0.000000e+00> : vector<8x32xf32>
    %1009 = tpu.matmul %1006, %1008, %cst_650 {dimension_numbers = #tpu.dot_dimension_numbers<[1], [0], [0], [1], [0, 0, 1, 1], [], []>} : vector<8x64xf32>, vector<64x32xf32>, vector<8x32xf32> -> vector<8x32xf32>
    %c1_651 = arith.constant 1 : index
    %c0_652 = arith.constant 0 : index
    %c0_653 = arith.constant 0 : index
    %1010 = vector.load %arg12[%c1_651, %c0_652, %c0_653] : memref<2x1x32xf32, #tpu.memory_space<vmem>>, vector<1x1x32xf32>
    %1011 = vector.shape_cast %1010 : vector<1x1x32xf32> to vector<1x32xf32>
    %1012 = vector.broadcast %1011 : vector<1x32xf32> to vector<8x32xf32>
    %1013 = arith.addf %1009, %1012 : vector<8x32xf32>
    %1014 = arith.addf %1013, %986 : vector<8x32xf32>
    %c1_654 = arith.constant 1 : index
    %c0_655 = arith.constant 0 : index
    %c0_656 = arith.constant 0 : index
    %1015 = vector.load %arg13[%c1_654, %c0_655, %c0_656] : memref<2x1x32xf32, #tpu.memory_space<vmem>>, vector<1x1x32xf32>
    %1016 = vector.shape_cast %1015 : vector<1x1x32xf32> to vector<1x32xf32>
    %c1_657 = arith.constant 1 : index
    %c0_658 = arith.constant 0 : index
    %c0_659 = arith.constant 0 : index
    %1017 = vector.load %arg14[%c1_657, %c0_658, %c0_659] : memref<2x1x32xf32, #tpu.memory_space<vmem>>, vector<1x1x32xf32>
    %1018 = vector.shape_cast %1017 : vector<1x1x32xf32> to vector<1x32xf32>
    %cst_660 = arith.constant dense<0.000000e+00> : vector<8xf32>
    %1019 = vector.multi_reduction <add>, %1014, %cst_660 [1] : vector<8x32xf32> to vector<8xf32>
    %1020 = vector.shape_cast %1019 : vector<8xf32> to vector<8x1xf32>
    %cst_661 = arith.constant 3.200000e+01 : f32
    %1021 = vector.broadcast %cst_661 : f32 to vector<8x1xf32>
    %1022 = arith.divf %1020, %1021 : vector<8x1xf32>
    %1023 = vector.broadcast %1022 : vector<8x1xf32> to vector<8x32xf32>
    %1024 = arith.subf %1014, %1023 : vector<8x32xf32>
    %1025 = arith.mulf %1024, %1024 : vector<8x32xf32>
    %cst_662 = arith.constant dense<0.000000e+00> : vector<8xf32>
    %1026 = vector.multi_reduction <add>, %1025, %cst_662 [1] : vector<8x32xf32> to vector<8xf32>
    %1027 = vector.shape_cast %1026 : vector<8xf32> to vector<8x1xf32>
    %cst_663 = arith.constant 3.200000e+01 : f32
    %1028 = vector.broadcast %cst_663 : f32 to vector<8x1xf32>
    %1029 = arith.divf %1027, %1028 : vector<8x1xf32>
    %cst_664 = arith.constant 9.99999996E-13 : f32
    %1030 = vector.broadcast %cst_664 : f32 to vector<8x1xf32>
    %1031 = arith.addf %1029, %1030 : vector<8x1xf32>
    %1032 = math.rsqrt %1031 : vector<8x1xf32>
    %1033 = vector.broadcast %1032 : vector<8x1xf32> to vector<8x32xf32>
    %1034 = arith.mulf %1024, %1033 : vector<8x32xf32>
    %1035 = vector.broadcast %1016 : vector<1x32xf32> to vector<8x32xf32>
    %1036 = arith.mulf %1034, %1035 : vector<8x32xf32>
    %1037 = vector.broadcast %1018 : vector<1x32xf32> to vector<8x32xf32>
    %1038 = arith.addf %1036, %1037 : vector<8x32xf32>
    %1039 = vector.extract_strided_slice %1038 {offsets = [0, 0], sizes = [1, 32], strides = [1, 1]} : vector<8x32xf32> to vector<1x32xf32>
    %c0_665 = arith.constant 0 : index
    %c0_666 = arith.constant 0 : index
    %1040 = vector.load %arg17[%c0_665, %c0_666] : memref<32x32xf32, #tpu.memory_space<vmem>>, vector<32x32xf32>
    %cst_667 = arith.constant dense<0.000000e+00> : vector<1x32xf32>
    %1041 = tpu.matmul %1039, %1040, %cst_667 {dimension_numbers = #tpu.dot_dimension_numbers<[1], [0], [0], [1], [0, 0, 1, 1], [], []>} : vector<1x32xf32>, vector<32x32xf32>, vector<1x32xf32> -> vector<1x32xf32>
    %c0_668 = arith.constant 0 : index
    %c0_669 = arith.constant 0 : index
    %1042 = vector.load %arg18[%c0_668, %c0_669] : memref<1x32xf32, #tpu.memory_space<vmem>>, vector<1x32xf32>
    %1043 = arith.addf %1041, %1042 : vector<1x32xf32>
    %1044 = math.tanh %1043 : vector<1x32xf32>
    %c0_670 = arith.constant 0 : index
    %c0_671 = arith.constant 0 : index
    %1045 = vector.load %arg19[%c0_670, %c0_671] : memref<1x32xf32, #tpu.memory_space<vmem>>, vector<1x32xf32>
    %1046 = arith.mulf %1044, %1045 : vector<1x32xf32>
    %cst_672 = arith.constant dense<0.000000e+00> : vector<1xf32>
    %1047 = vector.multi_reduction <add>, %1046, %cst_672 [1] : vector<1x32xf32> to vector<1xf32>
    %1048 = vector.shape_cast %1047 : vector<1xf32> to vector<1x1xf32>
    %c0_673 = arith.constant 0 : index
    %c0_674 = arith.constant 0 : index
    %1049 = vector.load %arg20[%c0_673, %c0_674] : memref<1x1xf32, #tpu.memory_space<vmem>>, vector<1x1xf32>
    %1050 = arith.addf %1048, %1049 : vector<1x1xf32>
    %c1_i32 = arith.constant 1 : i32
    %1051 = vector.broadcast %c1_i32 : i32 to vector<1x128xi32>
    %1052 = arith.cmpi eq, %2, %1051 : vector<1x128xi32>
    %1053 = vector.shape_cast %1050 : vector<1x1xf32> to vector<1x1xf32>
    %1054 = vector.broadcast %1053 : vector<1x1xf32> to vector<1x128xf32>
    %1055 = arith.select %1052, %1054, %529 : vector<1x128xi1>, vector<1x128xf32>
    %c0_675 = arith.constant 0 : index
    %c0_676 = arith.constant 0 : index
    %1056 = vector.load %arg21[%c0_675, %c0_676] : memref<1x128xf32, #tpu.memory_space<vmem>>, vector<1x128xf32>
    tpu.vector_store %arg21[%c0_675, %c0_676], %1055 {strides = array<i32>} : memref<1x128xf32, #tpu.memory_space<vmem>>, vector<1x128xf32>,
    return
  }
  func.func @transform_0(%arg0: i32) -> (i32, i32, i32) {
    %c0_i32 = arith.constant 0 : i32
    %c0_i32_0 = arith.constant 0 : i32
    %c0_i32_1 = arith.constant 0 : i32
    return %arg0, %c0_i32, %c0_i32_0 : i32, i32, i32
  }
  func.func @transform_1(%arg0: i32) -> (i32, i32) {
    %c0_i32 = arith.constant 0 : i32
    %c0_i32_0 = arith.constant 0 : i32
    return %arg0, %c0_i32 : i32, i32
  }
  func.func @transform_2(%arg0: i32) -> (i32, i32, i32) {
    %c0_i32 = arith.constant 0 : i32
    %c0_i32_0 = arith.constant 0 : i32
    %c0_i32_1 = arith.constant 0 : i32
    %c0_i32_2 = arith.constant 0 : i32
    return %c0_i32, %c0_i32_0, %c0_i32_1 : i32, i32, i32
  }
  func.func @transform_3(%arg0: i32) -> (i32, i32, i32) {
    %c0_i32 = arith.constant 0 : i32
    %c0_i32_0 = arith.constant 0 : i32
    %c0_i32_1 = arith.constant 0 : i32
    %c0_i32_2 = arith.constant 0 : i32
    return %c0_i32, %c0_i32_0, %c0_i32_1 : i32, i32, i32
  }
  func.func @transform_4(%arg0: i32) -> (i32, i32, i32) {
    %c0_i32 = arith.constant 0 : i32
    %c0_i32_0 = arith.constant 0 : i32
    %c0_i32_1 = arith.constant 0 : i32
    %c0_i32_2 = arith.constant 0 : i32
    return %c0_i32, %c0_i32_0, %c0_i32_1 : i32, i32, i32
  }
  func.func @transform_5(%arg0: i32) -> (i32, i32, i32) {
    %c0_i32 = arith.constant 0 : i32
    %c0_i32_0 = arith.constant 0 : i32
    %c0_i32_1 = arith.constant 0 : i32
    %c0_i32_2 = arith.constant 0 : i32
    return %c0_i32, %c0_i32_0, %c0_i32_1 : i32, i32, i32
  }
  func.func @transform_6(%arg0: i32) -> (i32, i32, i32) {
    %c0_i32 = arith.constant 0 : i32
    %c0_i32_0 = arith.constant 0 : i32
    %c0_i32_1 = arith.constant 0 : i32
    %c0_i32_2 = arith.constant 0 : i32
    return %c0_i32, %c0_i32_0, %c0_i32_1 : i32, i32, i32
  }
  func.func @transform_7(%arg0: i32) -> (i32, i32, i32) {
    %c0_i32 = arith.constant 0 : i32
    %c0_i32_0 = arith.constant 0 : i32
    %c0_i32_1 = arith.constant 0 : i32
    %c0_i32_2 = arith.constant 0 : i32
    return %c0_i32, %c0_i32_0, %c0_i32_1 : i32, i32, i32
  }
  func.func @transform_8(%arg0: i32) -> (i32, i32, i32) {
    %c0_i32 = arith.constant 0 : i32
    %c0_i32_0 = arith.constant 0 : i32
    %c0_i32_1 = arith.constant 0 : i32
    %c0_i32_2 = arith.constant 0 : i32
    return %c0_i32, %c0_i32_0, %c0_i32_1 : i32, i32, i32
  }
  func.func @transform_9(%arg0: i32) -> (i32, i32, i32) {
    %c0_i32 = arith.constant 0 : i32
    %c0_i32_0 = arith.constant 0 : i32
    %c0_i32_1 = arith.constant 0 : i32
    %c0_i32_2 = arith.constant 0 : i32
    return %c0_i32, %c0_i32_0, %c0_i32_1 : i32, i32, i32
  }
  func.func @transform_10(%arg0: i32) -> (i32, i32, i32) {
    %c0_i32 = arith.constant 0 : i32
    %c0_i32_0 = arith.constant 0 : i32
    %c0_i32_1 = arith.constant 0 : i32
    %c0_i32_2 = arith.constant 0 : i32
    return %c0_i32, %c0_i32_0, %c0_i32_1 : i32, i32, i32
  }
  func.func @transform_11(%arg0: i32) -> (i32, i32, i32) {
    %c0_i32 = arith.constant 0 : i32
    %c0_i32_0 = arith.constant 0 : i32
    %c0_i32_1 = arith.constant 0 : i32
    %c0_i32_2 = arith.constant 0 : i32
    return %c0_i32, %c0_i32_0, %c0_i32_1 : i32, i32, i32
  }
  func.func @transform_12(%arg0: i32) -> (i32, i32, i32) {
    %c0_i32 = arith.constant 0 : i32
    %c0_i32_0 = arith.constant 0 : i32
    %c0_i32_1 = arith.constant 0 : i32
    %c0_i32_2 = arith.constant 0 : i32
    return %c0_i32, %c0_i32_0, %c0_i32_1 : i32, i32, i32
  }
  func.func @transform_13(%arg0: i32) -> (i32, i32, i32) {
    %c0_i32 = arith.constant 0 : i32
    %c0_i32_0 = arith.constant 0 : i32
    %c0_i32_1 = arith.constant 0 : i32
    %c0_i32_2 = arith.constant 0 : i32
    return %c0_i32, %c0_i32_0, %c0_i32_1 : i32, i32, i32
  }
  func.func @transform_14(%arg0: i32) -> (i32, i32) {
    %c0_i32 = arith.constant 0 : i32
    %c0_i32_0 = arith.constant 0 : i32
    %c0_i32_1 = arith.constant 0 : i32
    return %c0_i32, %c0_i32_0 : i32, i32
  }
  func.func @transform_15(%arg0: i32) -> (i32, i32) {
    %c0_i32 = arith.constant 0 : i32
    %c0_i32_0 = arith.constant 0 : i32
    %c0_i32_1 = arith.constant 0 : i32
    return %c0_i32, %c0_i32_0 : i32, i32
  }
  func.func @transform_16(%arg0: i32) -> (i32, i32) {
    %c0_i32 = arith.constant 0 : i32
    %c0_i32_0 = arith.constant 0 : i32
    %c0_i32_1 = arith.constant 0 : i32
    return %c0_i32, %c0_i32_0 : i32, i32
  }
  func.func @transform_17(%arg0: i32) -> (i32, i32) {
    %c0_i32 = arith.constant 0 : i32
    %c0_i32_0 = arith.constant 0 : i32
    %c0_i32_1 = arith.constant 0 : i32
    return %c0_i32, %c0_i32_0 : i32, i32
  }
  func.func @transform_18(%arg0: i32) -> (i32, i32) {
    %c0_i32 = arith.constant 0 : i32
    %c0_i32_0 = arith.constant 0 : i32
    %c0_i32_1 = arith.constant 0 : i32
    return %c0_i32, %c0_i32_0 : i32, i32
  }
  func.func @transform_19(%arg0: i32) -> (i32, i32) {
    %c0_i32 = arith.constant 0 : i32
    %c0_i32_0 = arith.constant 0 : i32
    %c0_i32_1 = arith.constant 0 : i32
    return %c0_i32, %c0_i32_0 : i32, i32
  }
  func.func @transform_20(%arg0: i32) -> (i32, i32) {
    %c0_i32 = arith.constant 0 : i32
    %c0_i32_0 = arith.constant 0 : i32
    return %arg0, %c0_i32 : i32, i32
  }
}

</mosaic_0001>

<llo_original>
// kernel: legal_bert_regression.1
$region0: #{legal_bert_regression.1}
  #allocation0 [shape = 'u32[]', space=smem, size = 0x4, offset = 0x4, fixed_abs, tag = 'smem constant byte address 0x4 - core index']
  #allocation1 [shape = 'u32[144,128]{1,0:T(1,128)}', space=vmem, size = 0x12000, scoped, tag = 'internal scratch']
  #allocation2 [shape = 'f32[1,1]{1,0:T(1,128)S(1)}', space=vmem, size = 0x200, scoped, tag = 'scoped memory for legal_bert_regression.1']
  %s0 = inlined_call_operand.vmem [shape: f32[2,8,32], index: 0, kind: input, shape index: {}]
  %s1 = inlined_call_operand.vmem [shape: f32[2,8], index: 1, kind: input, shape index: {}]
  %s2 = inlined_call_operand.vmem [shape: f32[24,32,8], index: 2, kind: input, shape index: {}]
  %s3 = inlined_call_operand.vmem [shape: f32[24,1,8], index: 3, kind: input, shape index: {}]
  %s4 = inlined_call_operand.vmem [shape: f32[8,8,32], index: 4, kind: input, shape index: {}]
  %s5 = inlined_call_operand.vmem [shape: f32[2,1,32], index: 5, kind: input, shape index: {}]
  %s6 = inlined_call_operand.vmem [shape: f32[2,1,32], index: 6, kind: input, shape index: {}]
  %s7 = inlined_call_operand.vmem [shape: f32[2,1,32], index: 7, kind: input, shape index: {}]
  %s8 = inlined_call_operand.vmem [shape: f32[2,32,64], index: 8, kind: input, shape index: {}]
  %s9 = inlined_call_operand.vmem [shape: f32[2,1,64], index: 9, kind: input, shape index: {}]
  %s10 = inlined_call_operand.vmem [shape: f32[2,64,32], index: 10, kind: input, shape index: {}]
  %s11 = inlined_call_operand.vmem [shape: f32[2,1,32], index: 11, kind: input, shape index: {}]
  %s12 = inlined_call_operand.vmem [shape: f32[2,1,32], index: 12, kind: input, shape index: {}]
  %s13 = inlined_call_operand.vmem [shape: f32[2,1,32], index: 13, kind: input, shape index: {}]
  %s14 = inlined_call_operand.vmem [shape: f32[1,32], index: 14, kind: input, shape index: {}]
  %s15 = inlined_call_operand.vmem [shape: f32[1,32], index: 15, kind: input, shape index: {}]
  %s16 = inlined_call_operand.vmem [shape: f32[32,32], index: 16, kind: input, shape index: {}]
  %s17 = inlined_call_operand.vmem [shape: f32[1,32], index: 17, kind: input, shape index: {}]
  %s18 = inlined_call_operand.vmem [shape: f32[1,32], index: 18, kind: input, shape index: {}]
  %s19 = inlined_call_operand.<no memory space> [shape: f32[1,1], index: 19, kind: input, shape index: {}]
  %s20 = inlined_call_operand.vmem [shape: f32[1,128], index: 20, kind: output, shape index: {}]
  %s21 = sld [smem:[#allocation0]]
  $region90: #{legal_bert_regression.1} parent=0
    _
  %s23 = ssub.s32 1, %s21
  %s24 = scalar_select 0, %s23, %s21
  %v25 = vstv %s19
  %26 = vst [vmem:[#allocation2] sm:$0x1] %v25
  // Predicated region
  $region2: #{legal_bert_regression.1} parent=0 // pred_check
    _
  $region3: #{legal_bert_regression.1} parent=0 // pred_check_branch
    %28 = sbr.rel (0) target = $region5
  $region4: #{legal_bert_regression.1} parent=0 // pred_region
    _
  $region5: #{legal_bert_regression.1} parent=0 // pred_fallthru
    _
  // Predicated region
  $region6: #{legal_bert_regression.1} parent=0 // pred_check
    _
  $region7: #{legal_bert_regression.1} parent=0 // pred_check_branch
    %30 = sbr.rel (0) target = $region9
  $region8: #{legal_bert_regression.1} parent=0 // pred_region
    _
  $region9: #{legal_bert_regression.1} parent=0 // pred_fallthru
    _
  // Predicated region
  $region10: #{legal_bert_regression.1} parent=0 // pred_check
    _
  $region11: #{legal_bert_regression.1} parent=0 // pred_check_branch
    %32 = sbr.rel (0) target = $region13
  $region12: #{legal_bert_regression.1} parent=0 // pred_region
    _
  $region13: #{legal_bert_regression.1} parent=0 // pred_fallthru
    _
  // Predicated region
  $region14: #{legal_bert_regression.1} parent=0 // pred_check
    _
  $region15: #{legal_bert_regression.1} parent=0 // pred_check_branch
    %34 = sbr.rel (0) target = $region17
  $region16: #{legal_bert_regression.1} parent=0 // pred_region
    _
  $region17: #{legal_bert_regression.1} parent=0 // pred_fallthru
    _
  // Predicated region
  $region18: #{legal_bert_regression.1} parent=0 // pred_check
    _
  $region19: #{legal_bert_regression.1} parent=0 // pred_check_branch
    %36 = sbr.rel (0) target = $region21
  $region20: #{legal_bert_regression.1} parent=0 // pred_region
    _
  $region21: #{legal_bert_regression.1} parent=0 // pred_fallthru
    _
  // Predicated region
  $region22: #{legal_bert_regression.1} parent=0 // pred_check
    _
  $region23: #{legal_bert_regression.1} parent=0 // pred_check_branch
    %38 = sbr.rel (0) target = $region25
  $region24: #{legal_bert_regression.1} parent=0 // pred_region
    _
  $region25: #{legal_bert_regression.1} parent=0 // pred_fallthru
    _
  // Predicated region
  $region26: #{legal_bert_regression.1} parent=0 // pred_check
    _
  $region27: #{legal_bert_regression.1} parent=0 // pred_check_branch
    %40 = sbr.rel (0) target = $region29
  $region28: #{legal_bert_regression.1} parent=0 // pred_region
    _
  $region29: #{legal_bert_regression.1} parent=0 // pred_fallthru
    _
  // Predicated region
  $region30: #{legal_bert_regression.1} parent=0 // pred_check
    _
  $region31: #{legal_bert_regression.1} parent=0 // pred_check_branch
    %42 = sbr.rel (0) target = $region33
  $region32: #{legal_bert_regression.1} parent=0 // pred_region
    _
  $region33: #{legal_bert_regression.1} parent=0 // pred_fallthru
    _
  // Predicated region
  $region34: #{legal_bert_regression.1} parent=0 // pred_check
    _
  $region35: #{legal_bert_regression.1} parent=0 // pred_check_branch
    %44 = sbr.rel (0) target = $region37
  $region36: #{legal_bert_regression.1} parent=0 // pred_region
    _
  $region37: #{legal_bert_regression.1} parent=0 // pred_fallthru
    _
  // Predicated region
  $region38: #{legal_bert_regression.1} parent=0 // pred_check
    _
  $region39: #{legal_bert_regression.1} parent=0 // pred_check_branch
    %46 = sbr.rel (0) target = $region41
  $region40: #{legal_bert_regression.1} parent=0 // pred_region
    _
  $region41: #{legal_bert_regression.1} parent=0 // pred_fallthru
    _
  // Predicated region
  $region42: #{legal_bert_regression.1} parent=0 // pred_check
    _
  $region43: #{legal_bert_regression.1} parent=0 // pred_check_branch
    %48 = sbr.rel (0) target = $region45
  $region44: #{legal_bert_regression.1} parent=0 // pred_region
    _
  $region45: #{legal_bert_regression.1} parent=0 // pred_fallthru
    _
  // Predicated region
  $region46: #{legal_bert_regression.1} parent=0 // pred_check
    _
  $region47: #{legal_bert_regression.1} parent=0 // pred_check_branch
    %50 = sbr.rel (0) target = $region49
  $region48: #{legal_bert_regression.1} parent=0 // pred_region
    _
  $region49: #{legal_bert_regression.1} parent=0 // pred_fallthru
    _
  // Predicated region
  $region50: #{legal_bert_regression.1} parent=0 // pred_check
    _
  $region51: #{legal_bert_regression.1} parent=0 // pred_check_branch
    %52 = sbr.rel (0) target = $region53
  $region52: #{legal_bert_regression.1} parent=0 // pred_region
    _
  $region53: #{legal_bert_regression.1} parent=0 // pred_fallthru
    _
  // Predicated region
  $region54: #{legal_bert_regression.1} parent=0 // pred_check
    _
  $region55: #{legal_bert_regression.1} parent=0 // pred_check_branch
    %54 = sbr.rel (0) target = $region57
  $region56: #{legal_bert_regression.1} parent=0 // pred_region
    _
  $region57: #{legal_bert_regression.1} parent=0 // pred_fallthru
    _
  // Predicated region
  $region58: #{legal_bert_regression.1} parent=0 // pred_check
    _
  $region59: #{legal_bert_regression.1} parent=0 // pred_check_branch
    %56 = sbr.rel (0) target = $region61
  $region60: #{legal_bert_regression.1} parent=0 // pred_region
    _
  $region61: #{legal_bert_regression.1} parent=0 // pred_fallthru
    _
  // Predicated region
  $region62: #{legal_bert_regression.1} parent=0 // pred_check
    _
  $region63: #{legal_bert_regression.1} parent=0 // pred_check_branch
    %58 = sbr.rel (0) target = $region65
  $region64: #{legal_bert_regression.1} parent=0 // pred_region
    _
  $region65: #{legal_bert_regression.1} parent=0 // pred_fallthru
    _
  // Predicated region
  $region66: #{legal_bert_regression.1} parent=0 // pred_check
    _
  $region67: #{legal_bert_regression.1} parent=0 // pred_check_branch
    %60 = sbr.rel (0) target = $region69
  $region68: #{legal_bert_regression.1} parent=0 // pred_region
    _
  $region69: #{legal_bert_regression.1} parent=0 // pred_fallthru
    _
  // Predicated region
  $region70: #{legal_bert_regression.1} parent=0 // pred_check
    _
  $region71: #{legal_bert_regression.1} parent=0 // pred_check_branch
    %62 = sbr.rel (0) target = $region73
  $region72: #{legal_bert_regression.1} parent=0 // pred_region
    _
  $region73: #{legal_bert_regression.1} parent=0 // pred_fallthru
    _
  // Predicated region
  $region74: #{legal_bert_regression.1} parent=0 // pred_check
    _
  $region75: #{legal_bert_regression.1} parent=0 // pred_check_branch
    %64 = sbr.rel (0) target = $region77
  $region76: #{legal_bert_regression.1} parent=0 // pred_region
    _
  $region77: #{legal_bert_regression.1} parent=0 // pred_fallthru
    _
  // Predicated region
  $region78: #{legal_bert_regression.1} parent=0 // pred_check
    _
  $region79: #{legal_bert_regression.1} parent=0 // pred_check_branch
    %66 = sbr.rel (0) target = $region81
  $region80: #{legal_bert_regression.1} parent=0 // pred_region
    _
  $region81: #{legal_bert_regression.1} parent=0 // pred_fallthru
    _
  %v67 = vld [vmem:[%s0] sm:$0xff]
  %v68 = vld [vmem:[%s0 + $0x8] sm:$0xff]
  %v69 = vld [vmem:[%s1] sm:$0x3]
  %v70 = vlaneseq
  %v71 = vand.u32 %v70, 127
  %v72 = vld [vmem:[%s14] sm:$0x1]
  %v73 = vld [vmem:[%s15] sm:$0x1]
  %vm74 = vcmask 261120
  %v75 = vsel %vm74, %v67, 0.0
  %76 = vadd.xlane.f32.xlu0 %v75
  %v77 = vpop.xlane.xlu0 %76
  %v78 = vrcp.pop 32.0
  %v79 = vmul.f32 %v77, %v78
  %v80 = vsub.f32 %v67, %v79
  %v81 = vmul.f32 %v80, %v80
  %v82 = vsel %vm74, %v81, 0.0
  %83 = vadd.xlane.f32.xlu0 %v82
  %v84 = vpop.xlane.xlu0 %83
  %v85 = vmul.f32 %v84, %v78
  %v86 = vadd.f32 %v85, 1e-12
  %v87 = vrsqrt.pop %v86
  %v88 = vmul.f32 %v80, %v87
  %v90 = vlaneseq
  %v91 = vshrl.u32 %v90, 7
  %v92 = vsub.s32 0, %v91
  %v93 = vrot.slane %v72, %v92
  %v95 = vmul.f32 %v88, %v93
  %v97 = vlaneseq
  %v98 = vshrl.u32 %v97, 7
  %v99 = vsub.s32 0, %v98
  %v100 = vrot.slane %v73, %v99
  %v102 = vadd.f32 %v95, %v100
  %v103 = vld [vmem:[%s2] sm:$0xff]
  %v104 = vld [vmem:[%s2 + $0x8] sm:$0xff]
  %v105 = vld [vmem:[%s2 + $0x10] sm:$0xff]
  %v106 = vld [vmem:[%s2 + $0x18] sm:$0xff]
  %v107 = vld [vmem:[%s3] sm:$0x1]
  %v109 = vlaneseq
  %v110 = vshrl.u32 %v109, 7
  %v111 = vsub.s32 0, %v110
  %v112 = vrot.slane %v107, %v111
  %v115 = vsel %vm74, %v102, 0
  %117 = vmatprep.subr.mxu0 0.0
  %118 = vmatpush1.msra.mxu0 %v103
  %119 = vmatprep.subr.mxu0 0.0
  %120 = vmatpush1.msra.mxu0 %v104
  %121 = vmatprep.subr.mxu0 0.0
  %122 = vmatpush1.msra.mxu0 %v105
  %123 = vmatprep.subr.mxu0 0.0
  %124 = vmatpush1.msra.mxu0 %v106
  %125 = vmatprep.subr.mxu0 0.0
  %126 = vmatpush1.msra.mxu0 0.0
  %127 = vmatprep.subr.mxu0 0.0
  %128 = vmatpush1.msra.mxu0 0.0
  %129 = vmatprep.subr.mxu0 0.0
  %130 = vmatpush1.msra.mxu0 0.0
  %131 = vmatprep.subr.mxu0 0.0
  %132 = vmatpush1.msra.mxu0 0.0
  %133 = vmatprep.subr.mxu0 0.0
  %134 = vmatpush1.msra.mxu0 0.0
  %135 = vmatprep.subr.mxu0 0.0
  %136 = vmatpush1.msra.mxu0 0.0
  %137 = vmatprep.subr.mxu0 0.0
  %138 = vmatpush1.msra.mxu0 0.0
  %139 = vmatprep.subr.mxu0 0.0
  %140 = vmatpush1.msra.mxu0 0.0
  %141 = vmatprep.subr.mxu0 0.0
  %142 = vmatpush1.msra.mxu0 0.0
  %143 = vmatprep.subr.mxu0 0.0
  %144 = vmatpush1.msra.mxu0 0.0
  %145 = vmatprep.subr.mxu0 0.0
  %146 = vmatpush1.msra.mxu0 0.0
  %147 = vmatprep.subr.mxu0 0.0
  %148 = vmatpush1.msra.mxu0 0.0
  %149 = vmatprep.subr.mxu0 0.0
  %150 = vmatpush1.msra.mxu0 0.0
  %151 = vmatprep.subr.mxu0 0.0
  %152 = vmatpush1.msra.mxu0 0.0
  %153 = vmatprep.subr.mxu0 0.0
  %154 = vmatpush1.msra.mxu0 0.0
  %155 = vmatprep.subr.mxu0 0.0
  %156 = vmatpush1.msra.mxu0 0.0
  %157 = vmatprep.subr.mxu0 0.0
  %158 = vmatpush1.msra.mxu0 0.0
  %159 = vmatprep.subr.mxu0 0.0
  %160 = vmatpush1.msra.mxu0 0.0
  %161 = vmatprep.subr.mxu0 0.0
  %162 = vmatpush1.msra.mxu0 0.0
  %163 = vmatprep.subr.mxu0 0.0
  %164 = vmatpush1.msra.mxu0 0.0
  %165 = vmatprep.subr.mxu0 0.0
  %166 = vmatpush1.msra.mxu0 0.0
  %167 = vmatprep.subr.mxu0 0.0
  %168 = vmatpush1.msra.mxu0 0.0
  %169 = vmatprep.subr.mxu0 0.0
  %170 = vmatpush1.msra.mxu0 0.0
  %171 = vmatprep.subr.mxu0 0.0
  %172 = vmatpush1.msra.mxu0 0.0
  %173 = vmatprep.subr.mxu0 0.0
  %174 = vmatpush1.msra.mxu0 0.0
  %175 = vmatprep.subr.mxu0 0.0
  %176 = vmatpush1.msra.mxu0 0.0
  %177 = vmatprep.subr.mxu0 0.0
  %178 = vmatpush1.msra.mxu0 0.0
  %179 = vmatprep.subr.mxu0 0.0
  %180 = vmatpush1.msra.mxu0 0.0
  %181 = vmatprep.mubr.f32.mxu0 0.0
  %182 = vmatmul.mubr.f32.gmra.mrb[0].mxu0 %v115
  %v183 = vpop.f32.mrb[0].mxu0
  %v184 = vadd.f32 %v112, %v183
  %v185 = vpop.f32.mrb[0].mxu0
  %186 = vdwg.mxu0
  %s187 = scalar_lea.vmem %s2, 128
  %v188 = vld [vmem:[%s187] sm:$0xff]
  %v189 = vld [vmem:[%s187 + $0x8] sm:$0xff]
  %v190 = vld [vmem:[%s187 + $0x10] sm:$0xff]
  %v191 = vld [vmem:[%s187 + $0x18] sm:$0xff]
  %s192 = scalar_lea.vmem %s3, 4
  %v193 = vld [vmem:[%s192] sm:$0x1]
  %v195 = vlaneseq
  %v196 = vshrl.u32 %v195, 7
  %v197 = vsub.s32 0, %v196
  %v198 = vrot.slane %v193, %v197
  %200 = vmatprep.subr.mxu0 0.0
  %201 = vmatpush1.msra.mxu0 %v188
  %202 = vmatprep.subr.mxu0 0.0
  %203 = vmatpush1.msra.mxu0 %v189
  %204 = vmatprep.subr.mxu0 0.0
  %205 = vmatpush1.msra.mxu0 %v190
  %206 = vmatprep.subr.mxu0 0.0
  %207 = vmatpush1.msra.mxu0 %v191
  %208 = vmatprep.subr.mxu0 0.0
  %209 = vmatpush1.msra.mxu0 0.0
  %210 = vmatprep.subr.mxu0 0.0
  %211 = vmatpush1.msra.mxu0 0.0
  %212 = vmatprep.subr.mxu0 0.0
  %213 = vmatpush1.msra.mxu0 0.0
  %214 = vmatprep.subr.mxu0 0.0
  %215 = vmatpush1.msra.mxu0 0.0
  %216 = vmatprep.subr.mxu0 0.0
  %217 = vmatpush1.msra.mxu0 0.0
  %218 = vmatprep.subr.mxu0 0.0
  %219 = vmatpush1.msra.mxu0 0.0
  %220 = vmatprep.subr.mxu0 0.0
  %221 = vmatpush1.msra.mxu0 0.0
  %222 = vmatprep.subr.mxu0 0.0
  %223 = vmatpush1.msra.mxu0 0.0
  %224 = vmatprep.subr.mxu0 0.0
  %225 = vmatpush1.msra.mxu0 0.0
  %226 = vmatprep.subr.mxu0 0.0
  %227 = vmatpush1.msra.mxu0 0.0
  %228 = vmatprep.subr.mxu0 0.0
  %229 = vmatpush1.msra.mxu0 0.0
  %230 = vmatprep.subr.mxu0 0.0
  %231 = vmatpush1.msra.mxu0 0.0
  %232 = vmatprep.subr.mxu0 0.0
  %233 = vmatpush1.msra.mxu0 0.0
  %234 = vmatprep.subr.mxu0 0.0
  %235 = vmatpush1.msra.mxu0 0.0
  %236 = vmatprep.subr.mxu0 0.0
  %237 = vmatpush1.msra.mxu0 0.0
  %238 = vmatprep.subr.mxu0 0.0
  %239 = vmatpush1.msra.mxu0 0.0
  %240 = vmatprep.subr.mxu0 0.0
  %241 = vmatpush1.msra.mxu0 0.0
  %242 = vmatprep.subr.mxu0 0.0
  %243 = vmatpush1.msra.mxu0 0.0
  %244 = vmatprep.subr.mxu0 0.0
  %245 = vmatpush1.msra.mxu0 0.0
  %246 = vmatprep.subr.mxu0 0.0
  %247 = vmatpush1.msra.mxu0 0.0
  %248 = vmatprep.subr.mxu0 0.0
  %249 = vmatpush1.msra.mxu0 0.0
  %250 = vmatprep.subr.mxu0 0.0
  %251 = vmatpush1.msra.mxu0 0.0
  %252 = vmatprep.subr.mxu0 0.0
  %253 = vmatpush1.msra.mxu0 0.0
  %254 = vmatprep.subr.mxu0 0.0
  %255 = vmatpush1.msra.mxu0 0.0
  %256 = vmatprep.subr.mxu0 0.0
  %257 = vmatpush1.msra.mxu0 0.0
  %258 = vmatprep.subr.mxu0 0.0
  %259 = vmatpush1.msra.mxu0 0.0
  %260 = vmatprep.subr.mxu0 0.0
  %261 = vmatpush1.msra.mxu0 0.0
  %262 = vmatprep.subr.mxu0 0.0
  %263 = vmatpush1.msra.mxu0 0.0
  %264 = vmatprep.mubr.f32.mxu0 0.0
  %265 = vmatmul.mubr.f32.gmra.mrb[0].mxu0 %v115
  %v266 = vpop.f32.mrb[0].mxu0
  %v267 = vadd.f32 %v198, %v266
  %v268 = vpop.f32.mrb[0].mxu0
  %269 = vdwg.mxu0
  %s270 = scalar_lea.vmem %s2, 256
  %v271 = vld [vmem:[%s270] sm:$0xff]
  %v272 = vld [vmem:[%s270 + $0x8] sm:$0xff]
  %v273 = vld [vmem:[%s270 + $0x10] sm:$0xff]
  %v274 = vld [vmem:[%s270 + $0x18] sm:$0xff]
  %s275 = scalar_lea.vmem %s3, 8
  %v276 = vld [vmem:[%s275] sm:$0x1]
  %v278 = vlaneseq
  %v279 = vshrl.u32 %v278, 7
  %v280 = vsub.s32 0, %v279
  %v281 = vrot.slane %v276, %v280
  %283 = vmatprep.subr.mxu0 0.0
  %284 = vmatpush1.msra.mxu0 %v271
  %285 = vmatprep.subr.mxu0 0.0
  %286 = vmatpush1.msra.mxu0 %v272
  %287 = vmatprep.subr.mxu0 0.0
  %288 = vmatpush1.msra.mxu0 %v273
  %289 = vmatprep.subr.mxu0 0.0
  %290 = vmatpush1.msra.mxu0 %v274
  %291 = vmatprep.subr.mxu0 0.0
  %292 = vmatpush1.msra.mxu0 0.0
  %293 = vmatprep.subr.mxu0 0.0
  %294 = vmatpush1.msra.mxu0 0.0
  %295 = vmatprep.subr.mxu0 0.0
  %296 = vmatpush1.msra.mxu0 0.0
  %297 = vmatprep.subr.mxu0 0.0
  %298 = vmatpush1.msra.mxu0 0.0
  %299 = vmatprep.subr.mxu0 0.0
  %300 = vmatpush1.msra.mxu0 0.0
  %301 = vmatprep.subr.mxu0 0.0
  %302 = vmatpush1.msra.mxu0 0.0
  %303 = vmatprep.subr.mxu0 0.0
  %304 = vmatpush1.msra.mxu0 0.0
  %305 = vmatprep.subr.mxu0 0.0
  %306 = vmatpush1.msra.mxu0 0.0
  %307 = vmatprep.subr.mxu0 0.0
  %308 = vmatpush1.msra.mxu0 0.0
  %309 = vmatprep.subr.mxu0 0.0
  %310 = vmatpush1.msra.mxu0 0.0
  %311 = vmatprep.subr.mxu0 0.0
  %312 = vmatpush1.msra.mxu0 0.0
  %313 = vmatprep.subr.mxu0 0.0
  %314 = vmatpush1.msra.mxu0 0.0
  %315 = vmatprep.subr.mxu0 0.0
  %316 = vmatpush1.msra.mxu0 0.0
  %317 = vmatprep.subr.mxu0 0.0
  %318 = vmatpush1.msra.mxu0 0.0
  %319 = vmatprep.subr.mxu0 0.0
  %320 = vmatpush1.msra.mxu0 0.0
  %321 = vmatprep.subr.mxu0 0.0
  %322 = vmatpush1.msra.mxu0 0.0
  %323 = vmatprep.subr.mxu0 0.0
  %324 = vmatpush1.msra.mxu0 0.0
  %325 = vmatprep.subr.mxu0 0.0
  %326 = vmatpush1.msra.mxu0 0.0
  %327 = vmatprep.subr.mxu0 0.0
  %328 = vmatpush1.msra.mxu0 0.0
  %329 = vmatprep.subr.mxu0 0.0
  %330 = vmatpush1.msra.mxu0 0.0
  %331 = vmatprep.subr.mxu0 0.0
  %332 = vmatpush1.msra.mxu0 0.0
  %333 = vmatprep.subr.mxu0 0.0
  %334 = vmatpush1.msra.mxu0 0.0
  %335 = vmatprep.subr.mxu0 0.0
  %336 = vmatpush1.msra.mxu0 0.0
  %337 = vmatprep.subr.mxu0 0.0
  %338 = vmatpush1.msra.mxu0 0.0
  %339 = vmatprep.subr.mxu0 0.0
  %340 = vmatpush1.msra.mxu0 0.0
  %341 = vmatprep.subr.mxu0 0.0
  %342 = vmatpush1.msra.mxu0 0.0
  %343 = vmatprep.subr.mxu0 0.0
  %344 = vmatpush1.msra.mxu0 0.0
  %345 = vmatprep.subr.mxu0 0.0
  %346 = vmatpush1.msra.mxu0 0.0
  %347 = vmatprep.mubr.f32.mxu0 0.0
  %348 = vmatmul.mubr.f32.gmra.mrb[0].mxu0 %v115
  %v349 = vpop.f32.mrb[0].mxu0
  %v350 = vadd.f32 %v281, %v349
  %v351 = vpop.f32.mrb[0].mxu0
  %352 = vdwg.mxu0
  %vm353 = vcmask 64512
  %v355 = vsel %vm353, %v184, 0
  %v358 = vsel %vm353, %v267, 0
  %360 = vmatprep.subr.mxu0 0.0
  %361 = vmatpush1.xpose.msra.mxu0 %v358
  %362 = vmatprep.subr.mxu0 0.0
  %363 = vmatpush1.xpose.msra.mxu0 0.0
  %364 = vmatprep.subr.mxu0 0.0
  %365 = vmatpush1.xpose.msra.mxu0 0.0
  %366 = vmatprep.subr.mxu0 0.0
  %367 = vmatpush1.xpose.msra.mxu0 0.0
  %368 = vmatprep.subr.mxu0 0.0
  %369 = vmatpush1.xpose.msra.mxu0 0.0
  %370 = vmatprep.subr.mxu0 0.0
  %371 = vmatpush1.xpose.msra.mxu0 0.0
  %372 = vmatprep.subr.mxu0 0.0
  %373 = vmatpush1.xpose.msra.mxu0 0.0
  %374 = vmatprep.subr.mxu0 0.0
  %375 = vmatpush1.xpose.msra.mxu0 0.0
  %376 = vmatprep.subr.mxu0 0.0
  %377 = vmatpush1.xpose.msra.mxu0 0.0
  %378 = vmatprep.subr.mxu0 0.0
  %379 = vmatpush1.xpose.msra.mxu0 0.0
  %380 = vmatprep.subr.mxu0 0.0
  %381 = vmatpush1.xpose.msra.mxu0 0.0
  %382 = vmatprep.subr.mxu0 0.0
  %383 = vmatpush1.xpose.msra.mxu0 0.0
  %384 = vmatprep.subr.mxu0 0.0
  %385 = vmatpush1.xpose.msra.mxu0 0.0
  %386 = vmatprep.subr.mxu0 0.0
  %387 = vmatpush1.xpose.msra.mxu0 0.0
  %388 = vmatprep.subr.mxu0 0.0
  %389 = vmatpush1.xpose.msra.mxu0 0.0
  %390 = vmatprep.subr.mxu0 0.0
  %391 = vmatpush1.xpose.msra.mxu0 0.0
  %392 = vmatprep.subr.mxu0 0.0
  %393 = vmatpush1.xpose.msra.mxu0 0.0
  %394 = vmatprep.subr.mxu0 0.0
  %395 = vmatpush1.xpose.msra.mxu0 0.0
  %396 = vmatprep.subr.mxu0 0.0
  %397 = vmatpush1.xpose.msra.mxu0 0.0
  %398 = vmatprep.subr.mxu0 0.0
  %399 = vmatpush1.xpose.msra.mxu0 0.0
  %400 = vmatprep.subr.mxu0 0.0
  %401 = vmatpush1.xpose.msra.mxu0 0.0
  %402 = vmatprep.subr.mxu0 0.0
  %403 = vmatpush1.xpose.msra.mxu0 0.0
  %404 = vmatprep.subr.mxu0 0.0
  %405 = vmatpush1.xpose.msra.mxu0 0.0
  %406 = vmatprep.subr.mxu0 0.0
  %407 = vmatpush1.xpose.msra.mxu0 0.0
  %408 = vmatprep.subr.mxu0 0.0
  %409 = vmatpush1.xpose.msra.mxu0 0.0
  %410 = vmatprep.subr.mxu0 0.0
  %411 = vmatpush1.xpose.msra.mxu0 0.0
  %412 = vmatprep.subr.mxu0 0.0
  %413 = vmatpush1.xpose.msra.mxu0 0.0
  %414 = vmatprep.subr.mxu0 0.0
  %415 = vmatpush1.xpose.msra.mxu0 0.0
  %416 = vmatprep.subr.mxu0 0.0
  %417 = vmatpush1.xpose.msra.mxu0 0.0
  %418 = vmatprep.subr.mxu0 0.0
  %419 = vmatpush1.xpose.msra.mxu0 0.0
  %420 = vmatprep.subr.mxu0 0.0
  %421 = vmatpush1.xpose.msra.mxu0 0.0
  %422 = vmatprep.subr.mxu0 0.0
  %423 = vmatpush1.xpose.msra.mxu0 0.0
  %424 = vmatprep.mubr.f32.mxu0 0.0
  %425 = vmatmul.mubr.f32.gmra.mrb[0].mxu0 %v355
  %v426 = vpop.f32.mrb[0].mxu0
  %v427 = vadd.f32 0.0, %v426
  %v428 = vpop.f32.mrb[0].mxu0
  %429 = vdwg.mxu0
  %v430 = vmul.f32 %v427, 0.35355338
  %v431 = vlaneseq
  %v432 = vshrl.u32 %v431, 7
  %v433 = vsub.s32 0, %v432
  %v434 = vrot.slane %v69, %v433
  %v435 = vadd.f32 %v430, %v434
  %v436 = vsel %vm353, %v435, -inf
  %437 = vmax.xlane.f32.xlu0 %v436
  %v438 = vpop.xlane.xlu0 %437
  %v439 = vsub.f32 %v435, %v438
  %v440 = vmul.f32 %v439, 1.442695
  %v441 = vpow.pop %v440
  %v442 = vsel %vm353, %v441, 0.0
  %443 = vadd.xlane.f32.xlu0 %v442
  %v444 = vpop.xlane.xlu0 %443
  %v445 = vrcp.pop %v444
  %v446 = vmul.f32 %v441, %v445
  %v448 = vsel %vm353, %v446, 0
  %450 = vmatprep.subr.mxu0 0.0
  %451 = vmatpush1.msra.mxu0 %v350
  %452 = vmatprep.subr.mxu0 0.0
  %453 = vmatpush1.msra.mxu0 0.0
  %454 = vmatprep.subr.mxu0 0.0
  %455 = vmatpush1.msra.mxu0 0.0
  %456 = vmatprep.subr.mxu0 0.0
  %457 = vmatpush1.msra.mxu0 0.0
  %458 = vmatprep.subr.mxu0 0.0
  %459 = vmatpush1.msra.mxu0 0.0
  %460 = vmatprep.subr.mxu0 0.0
  %461 = vmatpush1.msra.mxu0 0.0
  %462 = vmatprep.subr.mxu0 0.0
  %463 = vmatpush1.msra.mxu0 0.0
  %464 = vmatprep.subr.mxu0 0.0
  %465 = vmatpush1.msra.mxu0 0.0
  %466 = vmatprep.subr.mxu0 0.0
  %467 = vmatpush1.msra.mxu0 0.0
  %468 = vmatprep.subr.mxu0 0.0
  %469 = vmatpush1.msra.mxu0 0.0
  %470 = vmatprep.subr.mxu0 0.0
  %471 = vmatpush1.msra.mxu0 0.0
  %472 = vmatprep.subr.mxu0 0.0
  %473 = vmatpush1.msra.mxu0 0.0
  %474 = vmatprep.subr.mxu0 0.0
  %475 = vmatpush1.msra.mxu0 0.0
  %476 = vmatprep.subr.mxu0 0.0
  %477 = vmatpush1.msra.mxu0 0.0
  %478 = vmatprep.subr.mxu0 0.0
  %479 = vmatpush1.msra.mxu0 0.0
  %480 = vmatprep.subr.mxu0 0.0
  %481 = vmatpush1.msra.mxu0 0.0
  %482 = vmatprep.subr.mxu0 0.0
  %483 = vmatpush1.msra.mxu0 0.0
  %484 = vmatprep.subr.mxu0 0.0
  %485 = vmatpush1.msra.mxu0 0.0
  %486 = vmatprep.subr.mxu0 0.0
  %487 = vmatpush1.msra.mxu0 0.0
  %488 = vmatprep.subr.mxu0 0.0
  %489 = vmatpush1.msra.mxu0 0.0
  %490 = vmatprep.subr.mxu0 0.0
  %491 = vmatpush1.msra.mxu0 0.0
  %492 = vmatprep.subr.mxu0 0.0
  %493 = vmatpush1.msra.mxu0 0.0
  %494 = vmatprep.subr.mxu0 0.0
  %495 = vmatpush1.msra.mxu0 0.0
  %496 = vmatprep.subr.mxu0 0.0
  %497 = vmatpush1.msra.mxu0 0.0
  %498 = vmatprep.subr.mxu0 0.0
  %499 = vmatpush1.msra.mxu0 0.0
  %500 = vmatprep.subr.mxu0 0.0
  %501 = vmatpush1.msra.mxu0 0.0
  %502 = vmatprep.subr.mxu0 0.0
  %503 = vmatpush1.msra.mxu0 0.0
  %504 = vmatprep.subr.mxu0 0.0
  %505 = vmatpush1.msra.mxu0 0.0
  %506 = vmatprep.subr.mxu0 0.0
  %507 = vmatpush1.msra.mxu0 0.0
  %508 = vmatprep.subr.mxu0 0.0
  %509 = vmatpush1.msra.mxu0 0.0
  %510 = vmatprep.subr.mxu0 0.0
  %511 = vmatpush1.msra.mxu0 0.0
  %512 = vmatprep.subr.mxu0 0.0
  %513 = vmatpush1.msra.mxu0 0.0
  %514 = vmatprep.mubr.f32.mxu0 0.0
  %515 = vmatmul.mubr.f32.gmra.mrb[0].mxu0 %v448
  %v516 = vpop.f32.mrb[0].mxu0
  %v517 = vadd.f32 0.0, %v516
  %v518 = vpop.f32.mrb[0].mxu0
  %519 = vdwg.mxu0
  %v520 = vld [vmem:[%s4] sm:$0xff]
  %s521 = scalar_lea.vmem %s2, 32
  %v522 = vld [vmem:[%s521] sm:$0xff]
  %v523 = vld [vmem:[%s521 + $0x8] sm:$0xff]
  %v524 = vld [vmem:[%s521 + $0x10] sm:$0xff]
  %v525 = vld [vmem:[%s521 + $0x18] sm:$0xff]
  %s526 = scalar_lea.vmem %s3, 1
  %v527 = vld [vmem:[%s526] sm:$0x1]
  %v529 = vlaneseq
  %v530 = vshrl.u32 %v529, 7
  %v531 = vsub.s32 0, %v530
  %v532 = vrot.slane %v527, %v531
  %534 = vmatprep.subr.mxu0 0.0
  %535 = vmatpush1.msra.mxu0 %v522
  %536 = vmatprep.subr.mxu0 0.0
  %537 = vmatpush1.msra.mxu0 %v523
  %538 = vmatprep.subr.mxu0 0.0
  %539 = vmatpush1.msra.mxu0 %v524
  %540 = vmatprep.subr.mxu0 0.0
  %541 = vmatpush1.msra.mxu0 %v525
  %542 = vmatprep.subr.mxu0 0.0
  %543 = vmatpush1.msra.mxu0 0.0
  %544 = vmatprep.subr.mxu0 0.0
  %545 = vmatpush1.msra.mxu0 0.0
  %546 = vmatprep.subr.mxu0 0.0
  %547 = vmatpush1.msra.mxu0 0.0
  %548 = vmatprep.subr.mxu0 0.0
  %549 = vmatpush1.msra.mxu0 0.0
  %550 = vmatprep.subr.mxu0 0.0
  %551 = vmatpush1.msra.mxu0 0.0
  %552 = vmatprep.subr.mxu0 0.0
  %553 = vmatpush1.msra.mxu0 0.0
  %554 = vmatprep.subr.mxu0 0.0
  %555 = vmatpush1.msra.mxu0 0.0
  %556 = vmatprep.subr.mxu0 0.0
  %557 = vmatpush1.msra.mxu0 0.0
  %558 = vmatprep.subr.mxu0 0.0
  %559 = vmatpush1.msra.mxu0 0.0
  %560 = vmatprep.subr.mxu0 0.0
  %561 = vmatpush1.msra.mxu0 0.0
  %562 = vmatprep.subr.mxu0 0.0
  %563 = vmatpush1.msra.mxu0 0.0
  %564 = vmatprep.subr.mxu0 0.0
  %565 = vmatpush1.msra.mxu0 0.0
  %566 = vmatprep.subr.mxu0 0.0
  %567 = vmatpush1.msra.mxu0 0.0
  %568 = vmatprep.subr.mxu0 0.0
  %569 = vmatpush1.msra.mxu0 0.0
  %570 = vmatprep.subr.mxu0 0.0
  %571 = vmatpush1.msra.mxu0 0.0
  %572 = vmatprep.subr.mxu0 0.0
  %573 = vmatpush1.msra.mxu0 0.0
  %574 = vmatprep.subr.mxu0 0.0
  %575 = vmatpush1.msra.mxu0 0.0
  %576 = vmatprep.subr.mxu0 0.0
  %577 = vmatpush1.msra.mxu0 0.0
  %578 = vmatprep.subr.mxu0 0.0
  %579 = vmatpush1.msra.mxu0 0.0
  %580 = vmatprep.subr.mxu0 0.0
  %581 = vmatpush1.msra.mxu0 0.0
  %582 = vmatprep.subr.mxu0 0.0
  %583 = vmatpush1.msra.mxu0 0.0
  %584 = vmatprep.subr.mxu0 0.0
  %585 = vmatpush1.msra.mxu0 0.0
  %586 = vmatprep.subr.mxu0 0.0
  %587 = vmatpush1.msra.mxu0 0.0
  %588 = vmatprep.subr.mxu0 0.0
  %589 = vmatpush1.msra.mxu0 0.0
  %590 = vmatprep.subr.mxu0 0.0
  %591 = vmatpush1.msra.mxu0 0.0
  %592 = vmatprep.subr.mxu0 0.0
  %593 = vmatpush1.msra.mxu0 0.0
  %594 = vmatprep.subr.mxu0 0.0
  %595 = vmatpush1.msra.mxu0 0.0
  %596 = vmatprep.subr.mxu0 0.0
  %597 = vmatpush1.msra.mxu0 0.0
  %598 = vmatprep.mubr.f32.mxu0 0.0
  %599 = vmatmul.mubr.f32.gmra.mrb[0].mxu0 %v115
  %v600 = vpop.f32.mrb[0].mxu0
  %v601 = vadd.f32 %v532, %v600
  %v602 = vpop.f32.mrb[0].mxu0
  %603 = vdwg.mxu0
  %s604 = scalar_lea.vmem %s2, 160
  %v605 = vld [vmem:[%s604] sm:$0xff]
  %v606 = vld [vmem:[%s604 + $0x8] sm:$0xff]
  %v607 = vld [vmem:[%s604 + $0x10] sm:$0xff]
  %v608 = vld [vmem:[%s604 + $0x18] sm:$0xff]
  %s609 = scalar_lea.vmem %s3, 5
  %v610 = vld [vmem:[%s609] sm:$0x1]
  %v612 = vlaneseq
  %v613 = vshrl.u32 %v612, 7
  %v614 = vsub.s32 0, %v613
  %v615 = vrot.slane %v610, %v614
  %617 = vmatprep.subr.mxu0 0.0
  %618 = vmatpush1.msra.mxu0 %v605
  %619 = vmatprep.subr.mxu0 0.0
  %620 = vmatpush1.msra.mxu0 %v606
  %621 = vmatprep.subr.mxu0 0.0
  %622 = vmatpush1.msra.mxu0 %v607
  %623 = vmatprep.subr.mxu0 0.0
  %624 = vmatpush1.msra.mxu0 %v608
  %625 = vmatprep.subr.mxu0 0.0
  %626 = vmatpush1.msra.mxu0 0.0
  %627 = vmatprep.subr.mxu0 0.0
  %628 = vmatpush1.msra.mxu0 0.0
  %629 = vmatprep.subr.mxu0 0.0
  %630 = vmatpush1.msra.mxu0 0.0
  %631 = vmatprep.subr.mxu0 0.0
  %632 = vmatpush1.msra.mxu0 0.0
  %633 = vmatprep.subr.mxu0 0.0
  %634 = vmatpush1.msra.mxu0 0.0
  %635 = vmatprep.subr.mxu0 0.0
  %636 = vmatpush1.msra.mxu0 0.0
  %637 = vmatprep.subr.mxu0 0.0
  %638 = vmatpush1.msra.mxu0 0.0
  %639 = vmatprep.subr.mxu0 0.0
  %640 = vmatpush1.msra.mxu0 0.0
  %641 = vmatprep.subr.mxu0 0.0
  %642 = vmatpush1.msra.mxu0 0.0
  %643 = vmatprep.subr.mxu0 0.0
  %644 = vmatpush1.msra.mxu0 0.0
  %645 = vmatprep.subr.mxu0 0.0
  %646 = vmatpush1.msra.mxu0 0.0
  %647 = vmatprep.subr.mxu0 0.0
  %648 = vmatpush1.msra.mxu0 0.0
  %649 = vmatprep.subr.mxu0 0.0
  %650 = vmatpush1.msra.mxu0 0.0
  %651 = vmatprep.subr.mxu0 0.0
  %652 = vmatpush1.msra.mxu0 0.0
  %653 = vmatprep.subr.mxu0 0.0
  %654 = vmatpush1.msra.mxu0 0.0
  %655 = vmatprep.subr.mxu0 0.0
  %656 = vmatpush1.msra.mxu0 0.0
  %657 = vmatprep.subr.mxu0 0.0
  %658 = vmatpush1.msra.mxu0 0.0
  %659 = vmatprep.subr.mxu0 0.0
  %660 = vmatpush1.msra.mxu0 0.0
  %661 = vmatprep.subr.mxu0 0.0
  %662 = vmatpush1.msra.mxu0 0.0
  %663 = vmatprep.subr.mxu0 0.0
  %664 = vmatpush1.msra.mxu0 0.0
  %665 = vmatprep.subr.mxu0 0.0
  %666 = vmatpush1.msra.mxu0 0.0
  %667 = vmatprep.subr.mxu0 0.0
  %668 = vmatpush1.msra.mxu0 0.0
  %669 = vmatprep.subr.mxu0 0.0
  %670 = vmatpush1.msra.mxu0 0.0
  %671 = vmatprep.subr.mxu0 0.0
  %672 = vmatpush1.msra.mxu0 0.0
  %673 = vmatprep.subr.mxu0 0.0
  %674 = vmatpush1.msra.mxu0 0.0
  %675 = vmatprep.subr.mxu0 0.0
  %676 = vmatpush1.msra.mxu0 0.0
  %677 = vmatprep.subr.mxu0 0.0
  %678 = vmatpush1.msra.mxu0 0.0
  %679 = vmatprep.subr.mxu0 0.0
  %680 = vmatpush1.msra.mxu0 0.0
  %681 = vmatprep.mubr.f32.mxu0 0.0
  %682 = vmatmul.mubr.f32.gmra.mrb[0].mxu0 %v115
  %v683 = vpop.f32.mrb[0].mxu0
  %v684 = vadd.f32 %v615, %v683
  %v685 = vpop.f32.mrb[0].mxu0
  %686 = vdwg.mxu0
  %s687 = scalar_lea.vmem %s2, 288
  %v688 = vld [vmem:[%s687] sm:$0xff]
  %v689 = vld [vmem:[%s687 + $0x8] sm:$0xff]
  %v690 = vld [vmem:[%s687 + $0x10] sm:$0xff]
  %v691 = vld [vmem:[%s687 + $0x18] sm:$0xff]
  %s692 = scalar_lea.vmem %s3, 9
  %v693 = vld [vmem:[%s692] sm:$0x1]
  %v695 = vlaneseq
  %v696 = vshrl.u32 %v695, 7
  %v697 = vsub.s32 0, %v696
  %v698 = vrot.slane %v693, %v697
  %700 = vmatprep.subr.mxu0 0.0
  %701 = vmatpush1.msra.mxu0 %v688
  %702 = vmatprep.subr.mxu0 0.0
  %703 = vmatpush1.msra.mxu0 %v689
  %704 = vmatprep.subr.mxu0 0.0
  %705 = vmatpush1.msra.mxu0 %v690
  %706 = vmatprep.subr.mxu0 0.0
  %707 = vmatpush1.msra.mxu0 %v691
  %708 = vmatprep.subr.mxu0 0.0
  %709 = vmatpush1.msra.mxu0 0.0
  %710 = vmatprep.subr.mxu0 0.0
  %711 = vmatpush1.msra.mxu0 0.0
  %712 = vmatprep.subr.mxu0 0.0
  %713 = vmatpush1.msra.mxu0 0.0
  %714 = vmatprep.subr.mxu0 0.0
  %715 = vmatpush1.msra.mxu0 0.0
  %716 = vmatprep.subr.mxu0 0.0
  %717 = vmatpush1.msra.mxu0 0.0
  %718 = vmatprep.subr.mxu0 0.0
  %719 = vmatpush1.msra.mxu0 0.0
  %720 = vmatprep.subr.mxu0 0.0
  %721 = vmatpush1.msra.mxu0 0.0
  %722 = vmatprep.subr.mxu0 0.0
  %723 = vmatpush1.msra.mxu0 0.0
  %724 = vmatprep.subr.mxu0 0.0
  %725 = vmatpush1.msra.mxu0 0.0
  %726 = vmatprep.subr.mxu0 0.0
  %727 = vmatpush1.msra.mxu0 0.0
  %728 = vmatprep.subr.mxu0 0.0
  %729 = vmatpush1.msra.mxu0 0.0
  %730 = vmatprep.subr.mxu0 0.0
  %731 = vmatpush1.msra.mxu0 0.0
  %732 = vmatprep.subr.mxu0 0.0
  %733 = vmatpush1.msra.mxu0 0.0
  %734 = vmatprep.subr.mxu0 0.0
  %735 = vmatpush1.msra.mxu0 0.0
  %736 = vmatprep.subr.mxu0 0.0
  %737 = vmatpush1.msra.mxu0 0.0
  %738 = vmatprep.subr.mxu0 0.0
  %739 = vmatpush1.msra.mxu0 0.0
  %740 = vmatprep.subr.mxu0 0.0
  %741 = vmatpush1.msra.mxu0 0.0
  %742 = vmatprep.subr.mxu0 0.0
  %743 = vmatpush1.msra.mxu0 0.0
  %744 = vmatprep.subr.mxu0 0.0
  %745 = vmatpush1.msra.mxu0 0.0
  %746 = vmatprep.subr.mxu0 0.0
  %747 = vmatpush1.msra.mxu0 0.0
  %748 = vmatprep.subr.mxu0 0.0
  %749 = vmatpush1.msra.mxu0 0.0
  %750 = vmatprep.subr.mxu0 0.0
  %751 = vmatpush1.msra.mxu0 0.0
  %752 = vmatprep.subr.mxu0 0.0
  %753 = vmatpush1.msra.mxu0 0.0
  %754 = vmatprep.subr.mxu0 0.0
  %755 = vmatpush1.msra.mxu0 0.0
  %756 = vmatprep.subr.mxu0 0.0
  %757 = vmatpush1.msra.mxu0 0.0
  %758 = vmatprep.subr.mxu0 0.0
  %759 = vmatpush1.msra.mxu0 0.0
  %760 = vmatprep.subr.mxu0 0.0
  %761 = vmatpush1.msra.mxu0 0.0
  %762 = vmatprep.subr.mxu0 0.0
  %763 = vmatpush1.msra.mxu0 0.0
  %764 = vmatprep.mubr.f32.mxu0 0.0
  %765 = vmatmul.mubr.f32.gmra.mrb[0].mxu0 %v115
  %v766 = vpop.f32.mrb[0].mxu0
  %v767 = vadd.f32 %v698, %v766
  %v768 = vpop.f32.mrb[0].mxu0
  %769 = vdwg.mxu0
  %v771 = vsel %vm353, %v601, 0
  %v774 = vsel %vm353, %v684, 0
  %776 = vmatprep.subr.mxu0 0.0
  %777 = vmatpush1.xpose.msra.mxu0 %v774
  %778 = vmatprep.subr.mxu0 0.0
  %779 = vmatpush1.xpose.msra.mxu0 0.0
  %780 = vmatprep.subr.mxu0 0.0
  %781 = vmatpush1.xpose.msra.mxu0 0.0
  %782 = vmatprep.subr.mxu0 0.0
  %783 = vmatpush1.xpose.msra.mxu0 0.0
  %784 = vmatprep.subr.mxu0 0.0
  %785 = vmatpush1.xpose.msra.mxu0 0.0
  %786 = vmatprep.subr.mxu0 0.0
  %787 = vmatpush1.xpose.msra.mxu0 0.0
  %788 = vmatprep.subr.mxu0 0.0
  %789 = vmatpush1.xpose.msra.mxu0 0.0
  %790 = vmatprep.subr.mxu0 0.0
  %791 = vmatpush1.xpose.msra.mxu0 0.0
  %792 = vmatprep.subr.mxu0 0.0
  %793 = vmatpush1.xpose.msra.mxu0 0.0
  %794 = vmatprep.subr.mxu0 0.0
  %795 = vmatpush1.xpose.msra.mxu0 0.0
  %796 = vmatprep.subr.mxu0 0.0
  %797 = vmatpush1.xpose.msra.mxu0 0.0
  %798 = vmatprep.subr.mxu0 0.0
  %799 = vmatpush1.xpose.msra.mxu0 0.0
  %800 = vmatprep.subr.mxu0 0.0
  %801 = vmatpush1.xpose.msra.mxu0 0.0
  %802 = vmatprep.subr.mxu0 0.0
  %803 = vmatpush1.xpose.msra.mxu0 0.0
  %804 = vmatprep.subr.mxu0 0.0
  %805 = vmatpush1.xpose.msra.mxu0 0.0
  %806 = vmatprep.subr.mxu0 0.0
  %807 = vmatpush1.xpose.msra.mxu0 0.0
  %808 = vmatprep.subr.mxu0 0.0
  %809 = vmatpush1.xpose.msra.mxu0 0.0
  %810 = vmatprep.subr.mxu0 0.0
  %811 = vmatpush1.xpose.msra.mxu0 0.0
  %812 = vmatprep.subr.mxu0 0.0
  %813 = vmatpush1.xpose.msra.mxu0 0.0
  %814 = vmatprep.subr.mxu0 0.0
  %815 = vmatpush1.xpose.msra.mxu0 0.0
  %816 = vmatprep.subr.mxu0 0.0
  %817 = vmatpush1.xpose.msra.mxu0 0.0
  %818 = vmatprep.subr.mxu0 0.0
  %819 = vmatpush1.xpose.msra.mxu0 0.0
  %820 = vmatprep.subr.mxu0 0.0
  %821 = vmatpush1.xpose.msra.mxu0 0.0
  %822 = vmatprep.subr.mxu0 0.0
  %823 = vmatpush1.xpose.msra.mxu0 0.0
  %824 = vmatprep.subr.mxu0 0.0
  %825 = vmatpush1.xpose.msra.mxu0 0.0
  %826 = vmatprep.subr.mxu0 0.0
  %827 = vmatpush1.xpose.msra.mxu0 0.0
  %828 = vmatprep.subr.mxu0 0.0
  %829 = vmatpush1.xpose.msra.mxu0 0.0
  %830 = vmatprep.subr.mxu0 0.0
  %831 = vmatpush1.xpose.msra.mxu0 0.0
  %832 = vmatprep.subr.mxu0 0.0
  %833 = vmatpush1.xpose.msra.mxu0 0.0
  %834 = vmatprep.subr.mxu0 0.0
  %835 = vmatpush1.xpose.msra.mxu0 0.0
  %836 = vmatprep.subr.mxu0 0.0
  %837 = vmatpush1.xpose.msra.mxu0 0.0
  %838 = vmatprep.subr.mxu0 0.0
  %839 = vmatpush1.xpose.msra.mxu0 0.0
  %840 = vmatprep.mubr.f32.mxu0 0.0
  %841 = vmatmul.mubr.f32.gmra.mrb[0].mxu0 %v771
  %v842 = vpop.f32.mrb[0].mxu0
  %v843 = vadd.f32 0.0, %v842
  %v844 = vpop.f32.mrb[0].mxu0
  %845 = vdwg.mxu0
  %v846 = vmul.f32 %v843, 0.35355338
  %v847 = vadd.f32 %v846, %v434
  %v848 = vsel %vm353, %v847, -inf
  %849 = vmax.xlane.f32.xlu0 %v848
  %v850 = vpop.xlane.xlu0 %849
  %v851 = vsub.f32 %v847, %v850
  %v852 = vmul.f32 %v851, 1.442695
  %v853 = vpow.pop %v852
  %v854 = vsel %vm353, %v853, 0.0
  %855 = vadd.xlane.f32.xlu0 %v854
  %v856 = vpop.xlane.xlu0 %855
  %v857 = vrcp.pop %v856
  %v858 = vmul.f32 %v853, %v857
  %v860 = vsel %vm353, %v858, 0
  %862 = vmatprep.subr.mxu0 0.0
  %863 = vmatpush1.msra.mxu0 %v767
  %864 = vmatprep.subr.mxu0 0.0
  %865 = vmatpush1.msra.mxu0 0.0
  %866 = vmatprep.subr.mxu0 0.0
  %867 = vmatpush1.msra.mxu0 0.0
  %868 = vmatprep.subr.mxu0 0.0
  %869 = vmatpush1.msra.mxu0 0.0
  %870 = vmatprep.subr.mxu0 0.0
  %871 = vmatpush1.msra.mxu0 0.0
  %872 = vmatprep.subr.mxu0 0.0
  %873 = vmatpush1.msra.mxu0 0.0
  %874 = vmatprep.subr.mxu0 0.0
  %875 = vmatpush1.msra.mxu0 0.0
  %876 = vmatprep.subr.mxu0 0.0
  %877 = vmatpush1.msra.mxu0 0.0
  %878 = vmatprep.subr.mxu0 0.0
  %879 = vmatpush1.msra.mxu0 0.0
  %880 = vmatprep.subr.mxu0 0.0
  %881 = vmatpush1.msra.mxu0 0.0
  %882 = vmatprep.subr.mxu0 0.0
  %883 = vmatpush1.msra.mxu0 0.0
  %884 = vmatprep.subr.mxu0 0.0
  %885 = vmatpush1.msra.mxu0 0.0
  %886 = vmatprep.subr.mxu0 0.0
  %887 = vmatpush1.msra.mxu0 0.0
  %888 = vmatprep.subr.mxu0 0.0
  %889 = vmatpush1.msra.mxu0 0.0
  %890 = vmatprep.subr.mxu0 0.0
  %891 = vmatpush1.msra.mxu0 0.0
  %892 = vmatprep.subr.mxu0 0.0
  %893 = vmatpush1.msra.mxu0 0.0
  %894 = vmatprep.subr.mxu0 0.0
  %895 = vmatpush1.msra.mxu0 0.0
  %896 = vmatprep.subr.mxu0 0.0
  %897 = vmatpush1.msra.mxu0 0.0
  %898 = vmatprep.subr.mxu0 0.0
  %899 = vmatpush1.msra.mxu0 0.0
  %900 = vmatprep.subr.mxu0 0.0
  %901 = vmatpush1.msra.mxu0 0.0
  %902 = vmatprep.subr.mxu0 0.0
  %903 = vmatpush1.msra.mxu0 0.0
  %904 = vmatprep.subr.mxu0 0.0
  %905 = vmatpush1.msra.mxu0 0.0
  %906 = vmatprep.subr.mxu0 0.0
  %907 = vmatpush1.msra.mxu0 0.0
  %908 = vmatprep.subr.mxu0 0.0
  %909 = vmatpush1.msra.mxu0 0.0
  %910 = vmatprep.subr.mxu0 0.0
  %911 = vmatpush1.msra.mxu0 0.0
  %912 = vmatprep.subr.mxu0 0.0
  %913 = vmatpush1.msra.mxu0 0.0
  %914 = vmatprep.subr.mxu0 0.0
  %915 = vmatpush1.msra.mxu0 0.0
  %916 = vmatprep.subr.mxu0 0.0
  %917 = vmatpush1.msra.mxu0 0.0
  %918 = vmatprep.subr.mxu0 0.0
  %919 = vmatpush1.msra.mxu0 0.0
  %920 = vmatprep.subr.mxu0 0.0
  %921 = vmatpush1.msra.mxu0 0.0
  %922 = vmatprep.subr.mxu0 0.0
  %923 = vmatpush1.msra.mxu0 0.0
  %924 = vmatprep.subr.mxu0 0.0
  %925 = vmatpush1.msra.mxu0 0.0
  %926 = vmatprep.mubr.f32.mxu0 0.0
  %927 = vmatmul.mubr.f32.gmra.mrb[0].mxu0 %v860
  %v928 = vpop.f32.mrb[0].mxu0
  %v929 = vadd.f32 0.0, %v928
  %v930 = vpop.f32.mrb[0].mxu0
  %931 = vdwg.mxu0
  %s932 = scalar_lea.vmem %s4, 8
  %v933 = vld [vmem:[%s932] sm:$0xff]
  %v935 = vsel %vm353, %v929, 0
  %937 = vmatprep.subr.mxu0 0.0
  %938 = vmatpush1.msra.mxu0 %v933
  %939 = vmatprep.subr.mxu0 0.0
  %940 = vmatpush1.msra.mxu0 0.0
  %941 = vmatprep.subr.mxu0 0.0
  %942 = vmatpush1.msra.mxu0 0.0
  %943 = vmatprep.subr.mxu0 0.0
  %944 = vmatpush1.msra.mxu0 0.0
  %945 = vmatprep.subr.mxu0 0.0
  %946 = vmatpush1.msra.mxu0 0.0
  %947 = vmatprep.subr.mxu0 0.0
  %948 = vmatpush1.msra.mxu0 0.0
  %949 = vmatprep.subr.mxu0 0.0
  %950 = vmatpush1.msra.mxu0 0.0
  %951 = vmatprep.subr.mxu0 0.0
  %952 = vmatpush1.msra.mxu0 0.0
  %953 = vmatprep.subr.mxu0 0.0
  %954 = vmatpush1.msra.mxu0 0.0
  %955 = vmatprep.subr.mxu0 0.0
  %956 = vmatpush1.msra.mxu0 0.0
  %957 = vmatprep.subr.mxu0 0.0
  %958 = vmatpush1.msra.mxu0 0.0
  %959 = vmatprep.subr.mxu0 0.0
  %960 = vmatpush1.msra.mxu0 0.0
  %961 = vmatprep.subr.mxu0 0.0
  %962 = vmatpush1.msra.mxu0 0.0
  %963 = vmatprep.subr.mxu0 0.0
  %964 = vmatpush1.msra.mxu0 0.0
  %965 = vmatprep.subr.mxu0 0.0
  %966 = vmatpush1.msra.mxu0 0.0
  %967 = vmatprep.subr.mxu0 0.0
  %968 = vmatpush1.msra.mxu0 0.0
  %969 = vmatprep.subr.mxu0 0.0
  %970 = vmatpush1.msra.mxu0 0.0
  %971 = vmatprep.subr.mxu0 0.0
  %972 = vmatpush1.msra.mxu0 0.0
  %973 = vmatprep.subr.mxu0 0.0
  %974 = vmatpush1.msra.mxu0 0.0
  %975 = vmatprep.subr.mxu0 0.0
  %976 = vmatpush1.msra.mxu0 0.0
  %977 = vmatprep.subr.mxu0 0.0
  %978 = vmatpush1.msra.mxu0 0.0
  %979 = vmatprep.subr.mxu0 0.0
  %980 = vmatpush1.msra.mxu0 0.0
  %981 = vmatprep.subr.mxu0 0.0
  %982 = vmatpush1.msra.mxu0 0.0
  %983 = vmatprep.subr.mxu0 0.0
  %984 = vmatpush1.msra.mxu0 0.0
  %985 = vmatprep.subr.mxu0 0.0
  %986 = vmatpush1.msra.mxu0 0.0
  %987 = vmatprep.subr.mxu0 0.0
  %988 = vmatpush1.msra.mxu0 0.0
  %989 = vmatprep.subr.mxu0 0.0
  %990 = vmatpush1.msra.mxu0 0.0
  %991 = vmatprep.subr.mxu0 0.0
  %992 = vmatpush1.msra.mxu0 0.0
  %993 = vmatprep.subr.mxu0 0.0
  %994 = vmatpush1.msra.mxu0 0.0
  %995 = vmatprep.subr.mxu0 0.0
  %996 = vmatpush1.msra.mxu0 0.0
  %997 = vmatprep.subr.mxu0 0.0
  %998 = vmatpush1.msra.mxu0 0.0
  %999 = vmatprep.subr.mxu0 0.0
  %1000 = vmatpush1.msra.mxu0 0.0
  %1001 = vmatprep.mubr.f32.mxu0 0.0
  %1002 = vmatmul.mubr.f32.gmra.mrb[0].mxu0 %v935
  %v1003 = vpop.f32.mrb[0].mxu0
  %v1004 = vadd.f32 0.0, %v1003
  %v1005 = vpop.f32.mrb[0].mxu0
  %1006 = vdwg.mxu0
  %v1008 = vsel %vm353, %v517, 0
  %1010 = vmatprep.subr.mxu0 0.0
  %1011 = vmatpush1.msra.mxu0 %v520
  %1012 = vmatprep.subr.mxu0 0.0
  %1013 = vmatpush1.msra.mxu0 0.0
  %1014 = vmatprep.subr.mxu0 0.0
  %1015 = vmatpush1.msra.mxu0 0.0
  %1016 = vmatprep.subr.mxu0 0.0
  %1017 = vmatpush1.msra.mxu0 0.0
  %1018 = vmatprep.subr.mxu0 0.0
  %1019 = vmatpush1.msra.mxu0 0.0
  %1020 = vmatprep.subr.mxu0 0.0
  %1021 = vmatpush1.msra.mxu0 0.0
  %1022 = vmatprep.subr.mxu0 0.0
  %1023 = vmatpush1.msra.mxu0 0.0
  %1024 = vmatprep.subr.mxu0 0.0
  %1025 = vmatpush1.msra.mxu0 0.0
  %1026 = vmatprep.subr.mxu0 0.0
  %1027 = vmatpush1.msra.mxu0 0.0
  %1028 = vmatprep.subr.mxu0 0.0
  %1029 = vmatpush1.msra.mxu0 0.0
  %1030 = vmatprep.subr.mxu0 0.0
  %1031 = vmatpush1.msra.mxu0 0.0
  %1032 = vmatprep.subr.mxu0 0.0
  %1033 = vmatpush1.msra.mxu0 0.0
  %1034 = vmatprep.subr.mxu0 0.0
  %1035 = vmatpush1.msra.mxu0 0.0
  %1036 = vmatprep.subr.mxu0 0.0
  %1037 = vmatpush1.msra.mxu0 0.0
  %1038 = vmatprep.subr.mxu0 0.0
  %1039 = vmatpush1.msra.mxu0 0.0
  %1040 = vmatprep.subr.mxu0 0.0
  %1041 = vmatpush1.msra.mxu0 0.0
  %1042 = vmatprep.subr.mxu0 0.0
  %1043 = vmatpush1.msra.mxu0 0.0
  %1044 = vmatprep.subr.mxu0 0.0
  %1045 = vmatpush1.msra.mxu0 0.0
  %1046 = vmatprep.subr.mxu0 0.0
  %1047 = vmatpush1.msra.mxu0 0.0
  %1048 = vmatprep.subr.mxu0 0.0
  %1049 = vmatpush1.msra.mxu0 0.0
  %1050 = vmatprep.subr.mxu0 0.0
  %1051 = vmatpush1.msra.mxu0 0.0
  %1052 = vmatprep.subr.mxu0 0.0
  %1053 = vmatpush1.msra.mxu0 0.0
  %1054 = vmatprep.subr.mxu0 0.0
  %1055 = vmatpush1.msra.mxu0 0.0
  %1056 = vmatprep.subr.mxu0 0.0
  %1057 = vmatpush1.msra.mxu0 0.0
  %1058 = vmatprep.subr.mxu0 0.0
  %1059 = vmatpush1.msra.mxu0 0.0
  %1060 = vmatprep.subr.mxu0 0.0
  %1061 = vmatpush1.msra.mxu0 0.0
  %1062 = vmatprep.subr.mxu0 0.0
  %1063 = vmatpush1.msra.mxu0 0.0
  %1064 = vmatprep.subr.mxu0 0.0
  %1065 = vmatpush1.msra.mxu0 0.0
  %1066 = vmatprep.subr.mxu0 0.0
  %1067 = vmatpush1.msra.mxu0 0.0
  %1068 = vmatprep.subr.mxu0 0.0
  %1069 = vmatpush1.msra.mxu0 0.0
  %1070 = vmatprep.subr.mxu0 0.0
  %1071 = vmatpush1.msra.mxu0 0.0
  %1072 = vmatprep.subr.mxu0 0.0
  %1073 = vmatpush1.msra.mxu0 0.0
  %1074 = vmatprep.mubr.f32.mxu0 0.0
  %1075 = vmatmul.mubr.f32.gmra.mrb[0].mxu0 %v1008
  %v1076 = vpop.f32.mrb[0].mxu0
  %v1077 = vadd.f32 %v1004, %v1076
  %v1078 = vpop.f32.mrb[0].mxu0
  %1079 = vdwg.mxu0
  %s1080 = scalar_lea.vmem %s2, 64
  %v1081 = vld [vmem:[%s1080] sm:$0xff]
  %v1082 = vld [vmem:[%s1080 + $0x8] sm:$0xff]
  %v1083 = vld [vmem:[%s1080 + $0x10] sm:$0xff]
  %v1084 = vld [vmem:[%s1080 + $0x18] sm:$0xff]
  %s1085 = scalar_lea.vmem %s3, 2
  %v1086 = vld [vmem:[%s1085] sm:$0x1]
  %v1088 = vlaneseq
  %v1089 = vshrl.u32 %v1088, 7
  %v1090 = vsub.s32 0, %v1089
  %v1091 = vrot.slane %v1086, %v1090
  %1093 = vmatprep.subr.mxu0 0.0
  %1094 = vmatpush1.msra.mxu0 %v1081
  %1095 = vmatprep.subr.mxu0 0.0
  %1096 = vmatpush1.msra.mxu0 %v1082
  %1097 = vmatprep.subr.mxu0 0.0
  %1098 = vmatpush1.msra.mxu0 %v1083
  %1099 = vmatprep.subr.mxu0 0.0
  %1100 = vmatpush1.msra.mxu0 %v1084
  %1101 = vmatprep.subr.mxu0 0.0
  %1102 = vmatpush1.msra.mxu0 0.0
  %1103 = vmatprep.subr.mxu0 0.0
  %1104 = vmatpush1.msra.mxu0 0.0
  %1105 = vmatprep.subr.mxu0 0.0
  %1106 = vmatpush1.msra.mxu0 0.0
  %1107 = vmatprep.subr.mxu0 0.0
  %1108 = vmatpush1.msra.mxu0 0.0
  %1109 = vmatprep.subr.mxu0 0.0
  %1110 = vmatpush1.msra.mxu0 0.0
  %1111 = vmatprep.subr.mxu0 0.0
  %1112 = vmatpush1.msra.mxu0 0.0
  %1113 = vmatprep.subr.mxu0 0.0
  %1114 = vmatpush1.msra.mxu0 0.0
  %1115 = vmatprep.subr.mxu0 0.0
  %1116 = vmatpush1.msra.mxu0 0.0
  %1117 = vmatprep.subr.mxu0 0.0
  %1118 = vmatpush1.msra.mxu0 0.0
  %1119 = vmatprep.subr.mxu0 0.0
  %1120 = vmatpush1.msra.mxu0 0.0
  %1121 = vmatprep.subr.mxu0 0.0
  %1122 = vmatpush1.msra.mxu0 0.0
  %1123 = vmatprep.subr.mxu0 0.0
  %1124 = vmatpush1.msra.mxu0 0.0
  %1125 = vmatprep.subr.mxu0 0.0
  %1126 = vmatpush1.msra.mxu0 0.0
  %1127 = vmatprep.subr.mxu0 0.0
  %1128 = vmatpush1.msra.mxu0 0.0
  %1129 = vmatprep.subr.mxu0 0.0
  %1130 = vmatpush1.msra.mxu0 0.0
  %1131 = vmatprep.subr.mxu0 0.0
  %1132 = vmatpush1.msra.mxu0 0.0
  %1133 = vmatprep.subr.mxu0 0.0
  %1134 = vmatpush1.msra.mxu0 0.0
  %1135 = vmatprep.subr.mxu0 0.0
  %1136 = vmatpush1.msra.mxu0 0.0
  %1137 = vmatprep.subr.mxu0 0.0
  %1138 = vmatpush1.msra.mxu0 0.0
  %1139 = vmatprep.subr.mxu0 0.0
  %1140 = vmatpush1.msra.mxu0 0.0
  %1141 = vmatprep.subr.mxu0 0.0
  %1142 = vmatpush1.msra.mxu0 0.0
  %1143 = vmatprep.subr.mxu0 0.0
  %1144 = vmatpush1.msra.mxu0 0.0
  %1145 = vmatprep.subr.mxu0 0.0
  %1146 = vmatpush1.msra.mxu0 0.0
  %1147 = vmatprep.subr.mxu0 0.0
  %1148 = vmatpush1.msra.mxu0 0.0
  %1149 = vmatprep.subr.mxu0 0.0
  %1150 = vmatpush1.msra.mxu0 0.0
  %1151 = vmatprep.subr.mxu0 0.0
  %1152 = vmatpush1.msra.mxu0 0.0
  %1153 = vmatprep.subr.mxu0 0.0
  %1154 = vmatpush1.msra.mxu0 0.0
  %1155 = vmatprep.subr.mxu0 0.0
  %1156 = vmatpush1.msra.mxu0 0.0
  %1157 = vmatprep.mubr.f32.mxu0 0.0
  %1158 = vmatmul.mubr.f32.gmra.mrb[0].mxu0 %v115
  %v1159 = vpop.f32.mrb[0].mxu0
  %v1160 = vadd.f32 %v1091, %v1159
  %v1161 = vpop.f32.mrb[0].mxu0
  %1162 = vdwg.mxu0
  %s1163 = scalar_lea.vmem %s2, 192
  %v1164 = vld [vmem:[%s1163] sm:$0xff]
  %v1165 = vld [vmem:[%s1163 + $0x8] sm:$0xff]
  %v1166 = vld [vmem:[%s1163 + $0x10] sm:$0xff]
  %v1167 = vld [vmem:[%s1163 + $0x18] sm:$0xff]
  %s1168 = scalar_lea.vmem %s3, 6
  %v1169 = vld [vmem:[%s1168] sm:$0x1]
  %v1171 = vlaneseq
  %v1172 = vshrl.u32 %v1171, 7
  %v1173 = vsub.s32 0, %v1172
  %v1174 = vrot.slane %v1169, %v1173
  %1176 = vmatprep.subr.mxu0 0.0
  %1177 = vmatpush1.msra.mxu0 %v1164
  %1178 = vmatprep.subr.mxu0 0.0
  %1179 = vmatpush1.msra.mxu0 %v1165
  %1180 = vmatprep.subr.mxu0 0.0
  %1181 = vmatpush1.msra.mxu0 %v1166
  %1182 = vmatprep.subr.mxu0 0.0
  %1183 = vmatpush1.msra.mxu0 %v1167
  %1184 = vmatprep.subr.mxu0 0.0
  %1185 = vmatpush1.msra.mxu0 0.0
  %1186 = vmatprep.subr.mxu0 0.0
  %1187 = vmatpush1.msra.mxu0 0.0
  %1188 = vmatprep.subr.mxu0 0.0
  %1189 = vmatpush1.msra.mxu0 0.0
  %1190 = vmatprep.subr.mxu0 0.0
  %1191 = vmatpush1.msra.mxu0 0.0
  %1192 = vmatprep.subr.mxu0 0.0
  %1193 = vmatpush1.msra.mxu0 0.0
  %1194 = vmatprep.subr.mxu0 0.0
  %1195 = vmatpush1.msra.mxu0 0.0
  %1196 = vmatprep.subr.mxu0 0.0
  %1197 = vmatpush1.msra.mxu0 0.0
  %1198 = vmatprep.subr.mxu0 0.0
  %1199 = vmatpush1.msra.mxu0 0.0
  %1200 = vmatprep.subr.mxu0 0.0
  %1201 = vmatpush1.msra.mxu0 0.0
  %1202 = vmatprep.subr.mxu0 0.0
  %1203 = vmatpush1.msra.mxu0 0.0
  %1204 = vmatprep.subr.mxu0 0.0
  %1205 = vmatpush1.msra.mxu0 0.0
  %1206 = vmatprep.subr.mxu0 0.0
  %1207 = vmatpush1.msra.mxu0 0.0
  %1208 = vmatprep.subr.mxu0 0.0
  %1209 = vmatpush1.msra.mxu0 0.0
  %1210 = vmatprep.subr.mxu0 0.0
  %1211 = vmatpush1.msra.mxu0 0.0
  %1212 = vmatprep.subr.mxu0 0.0
  %1213 = vmatpush1.msra.mxu0 0.0
  %1214 = vmatprep.subr.mxu0 0.0
  %1215 = vmatpush1.msra.mxu0 0.0
  %1216 = vmatprep.subr.mxu0 0.0
  %1217 = vmatpush1.msra.mxu0 0.0
  %1218 = vmatprep.subr.mxu0 0.0
  %1219 = vmatpush1.msra.mxu0 0.0
  %1220 = vmatprep.subr.mxu0 0.0
  %1221 = vmatpush1.msra.mxu0 0.0
  %1222 = vmatprep.subr.mxu0 0.0
  %1223 = vmatpush1.msra.mxu0 0.0
  %1224 = vmatprep.subr.mxu0 0.0
  %1225 = vmatpush1.msra.mxu0 0.0
  %1226 = vmatprep.subr.mxu0 0.0
  %1227 = vmatpush1.msra.mxu0 0.0
  %1228 = vmatprep.subr.mxu0 0.0
  %1229 = vmatpush1.msra.mxu0 0.0
  %1230 = vmatprep.subr.mxu0 0.0
  %1231 = vmatpush1.msra.mxu0 0.0
  %1232 = vmatprep.subr.mxu0 0.0
  %1233 = vmatpush1.msra.mxu0 0.0
  %1234 = vmatprep.subr.mxu0 0.0
  %1235 = vmatpush1.msra.mxu0 0.0
  %1236 = vmatprep.subr.mxu0 0.0
  %1237 = vmatpush1.msra.mxu0 0.0
  %1238 = vmatprep.subr.mxu0 0.0
  %1239 = vmatpush1.msra.mxu0 0.0
  %1240 = vmatprep.mubr.f32.mxu0 0.0
  %1241 = vmatmul.mubr.f32.gmra.mrb[0].mxu0 %v115
  %v1242 = vpop.f32.mrb[0].mxu0
  %v1243 = vadd.f32 %v1174, %v1242
  %v1244 = vpop.f32.mrb[0].mxu0
  %1245 = vdwg.mxu0
  %s1246 = scalar_lea.vmem %s2, 320
  %v1247 = vld [vmem:[%s1246] sm:$0xff]
  %v1248 = vld [vmem:[%s1246 + $0x8] sm:$0xff]
  %v1249 = vld [vmem:[%s1246 + $0x10] sm:$0xff]
  %v1250 = vld [vmem:[%s1246 + $0x18] sm:$0xff]
  %s1251 = scalar_lea.vmem %s3, 10
  %v1252 = vld [vmem:[%s1251] sm:$0x1]
  %v1254 = vlaneseq
  %v1255 = vshrl.u32 %v1254, 7
  %v1256 = vsub.s32 0, %v1255
  %v1257 = vrot.slane %v1252, %v1256
  %1259 = vmatprep.subr.mxu0 0.0
  %1260 = vmatpush1.msra.mxu0 %v1247
  %1261 = vmatprep.subr.mxu0 0.0
  %1262 = vmatpush1.msra.mxu0 %v1248
  %1263 = vmatprep.subr.mxu0 0.0
  %1264 = vmatpush1.msra.mxu0 %v1249
  %1265 = vmatprep.subr.mxu0 0.0
  %1266 = vmatpush1.msra.mxu0 %v1250
  %1267 = vmatprep.subr.mxu0 0.0
  %1268 = vmatpush1.msra.mxu0 0.0
  %1269 = vmatprep.subr.mxu0 0.0
  %1270 = vmatpush1.msra.mxu0 0.0
  %1271 = vmatprep.subr.mxu0 0.0
  %1272 = vmatpush1.msra.mxu0 0.0
  %1273 = vmatprep.subr.mxu0 0.0
  %1274 = vmatpush1.msra.mxu0 0.0
  %1275 = vmatprep.subr.mxu0 0.0
  %1276 = vmatpush1.msra.mxu0 0.0
  %1277 = vmatprep.subr.mxu0 0.0
  %1278 = vmatpush1.msra.mxu0 0.0
  %1279 = vmatprep.subr.mxu0 0.0
  %1280 = vmatpush1.msra.mxu0 0.0
  %1281 = vmatprep.subr.mxu0 0.0
  %1282 = vmatpush1.msra.mxu0 0.0
  %1283 = vmatprep.subr.mxu0 0.0
  %1284 = vmatpush1.msra.mxu0 0.0
  %1285 = vmatprep.subr.mxu0 0.0
  %1286 = vmatpush1.msra.mxu0 0.0
  %1287 = vmatprep.subr.mxu0 0.0
  %1288 = vmatpush1.msra.mxu0 0.0
  %1289 = vmatprep.subr.mxu0 0.0
  %1290 = vmatpush1.msra.mxu0 0.0
  %1291 = vmatprep.subr.mxu0 0.0
  %1292 = vmatpush1.msra.mxu0 0.0
  %1293 = vmatprep.subr.mxu0 0.0
  %1294 = vmatpush1.msra.mxu0 0.0
  %1295 = vmatprep.subr.mxu0 0.0
  %1296 = vmatpush1.msra.mxu0 0.0
  %1297 = vmatprep.subr.mxu0 0.0
  %1298 = vmatpush1.msra.mxu0 0.0
  %1299 = vmatprep.subr.mxu0 0.0
  %1300 = vmatpush1.msra.mxu0 0.0
  %1301 = vmatprep.subr.mxu0 0.0
  %1302 = vmatpush1.msra.mxu0 0.0
  %1303 = vmatprep.subr.mxu0 0.0
  %1304 = vmatpush1.msra.mxu0 0.0
  %1305 = vmatprep.subr.mxu0 0.0
  %1306 = vmatpush1.msra.mxu0 0.0
  %1307 = vmatprep.subr.mxu0 0.0
  %1308 = vmatpush1.msra.mxu0 0.0
  %1309 = vmatprep.subr.mxu0 0.0
  %1310 = vmatpush1.msra.mxu0 0.0
  %1311 = vmatprep.subr.mxu0 0.0
  %1312 = vmatpush1.msra.mxu0 0.0
  %1313 = vmatprep.subr.mxu0 0.0
  %1314 = vmatpush1.msra.mxu0 0.0
  %1315 = vmatprep.subr.mxu0 0.0
  %1316 = vmatpush1.msra.mxu0 0.0
  %1317 = vmatprep.subr.mxu0 0.0
  %1318 = vmatpush1.msra.mxu0 0.0
  %1319 = vmatprep.subr.mxu0 0.0
  %1320 = vmatpush1.msra.mxu0 0.0
  %1321 = vmatprep.subr.mxu0 0.0
  %1322 = vmatpush1.msra.mxu0 0.0
  %1323 = vmatprep.mubr.f32.mxu0 0.0
  %1324 = vmatmul.mubr.f32.gmra.mrb[0].mxu0 %v115
  %v1325 = vpop.f32.mrb[0].mxu0
  %v1326 = vadd.f32 %v1257, %v1325
  %v1327 = vpop.f32.mrb[0].mxu0
  %1328 = vdwg.mxu0
  %v1330 = vsel %vm353, %v1160, 0
  %v1333 = vsel %vm353, %v1243, 0
  %1335 = vmatprep.subr.mxu0 0.0
  %1336 = vmatpush1.xpose.msra.mxu0 %v1333
  %1337 = vmatprep.subr.mxu0 0.0
  %1338 = vmatpush1.xpose.msra.mxu0 0.0
  %1339 = vmatprep.subr.mxu0 0.0
  %1340 = vmatpush1.xpose.msra.mxu0 0.0
  %1341 = vmatprep.subr.mxu0 0.0
  %1342 = vmatpush1.xpose.msra.mxu0 0.0
  %1343 = vmatprep.subr.mxu0 0.0
  %1344 = vmatpush1.xpose.msra.mxu0 0.0
  %1345 = vmatprep.subr.mxu0 0.0
  %1346 = vmatpush1.xpose.msra.mxu0 0.0
  %1347 = vmatprep.subr.mxu0 0.0
  %1348 = vmatpush1.xpose.msra.mxu0 0.0
  %1349 = vmatprep.subr.mxu0 0.0
  %1350 = vmatpush1.xpose.msra.mxu0 0.0
  %1351 = vmatprep.subr.mxu0 0.0
  %1352 = vmatpush1.xpose.msra.mxu0 0.0
  %1353 = vmatprep.subr.mxu0 0.0
  %1354 = vmatpush1.xpose.msra.mxu0 0.0
  %1355 = vmatprep.subr.mxu0 0.0
  %1356 = vmatpush1.xpose.msra.mxu0 0.0
  %1357 = vmatprep.subr.mxu0 0.0
  %1358 = vmatpush1.xpose.msra.mxu0 0.0
  %1359 = vmatprep.subr.mxu0 0.0
  %1360 = vmatpush1.xpose.msra.mxu0 0.0
  %1361 = vmatprep.subr.mxu0 0.0
  %1362 = vmatpush1.xpose.msra.mxu0 0.0
  %1363 = vmatprep.subr.mxu0 0.0
  %1364 = vmatpush1.xpose.msra.mxu0 0.0
  %1365 = vmatprep.subr.mxu0 0.0
  %1366 = vmatpush1.xpose.msra.mxu0 0.0
  %1367 = vmatprep.subr.mxu0 0.0
  %1368 = vmatpush1.xpose.msra.mxu0 0.0
  %1369 = vmatprep.subr.mxu0 0.0
  %1370 = vmatpush1.xpose.msra.mxu0 0.0
  %1371 = vmatprep.subr.mxu0 0.0
  %1372 = vmatpush1.xpose.msra.mxu0 0.0
  %1373 = vmatprep.subr.mxu0 0.0
  %1374 = vmatpush1.xpose.msra.mxu0 0.0
  %1375 = vmatprep.subr.mxu0 0.0
  %1376 = vmatpush1.xpose.msra.mxu0 0.0
  %1377 = vmatprep.subr.mxu0 0.0
  %1378 = vmatpush1.xpose.msra.mxu0 0.0
  %1379 = vmatprep.subr.mxu0 0.0
  %1380 = vmatpush1.xpose.msra.mxu0 0.0
  %1381 = vmatprep.subr.mxu0 0.0
  %1382 = vmatpush1.xpose.msra.mxu0 0.0
  %1383 = vmatprep.subr.mxu0 0.0
  %1384 = vmatpush1.xpose.msra.mxu0 0.0
  %1385 = vmatprep.subr.mxu0 0.0
  %1386 = vmatpush1.xpose.msra.mxu0 0.0
  %1387 = vmatprep.subr.mxu0 0.0
  %1388 = vmatpush1.xpose.msra.mxu0 0.0
  %1389 = vmatprep.subr.mxu0 0.0
  %1390 = vmatpush1.xpose.msra.mxu0 0.0
  %1391 = vmatprep.subr.mxu0 0.0
  %1392 = vmatpush1.xpose.msra.mxu0 0.0
  %1393 = vmatprep.subr.mxu0 0.0
  %1394 = vmatpush1.xpose.msra.mxu0 0.0
  %1395 = vmatprep.subr.mxu0 0.0
  %1396 = vmatpush1.xpose.msra.mxu0 0.0
  %1397 = vmatprep.subr.mxu0 0.0
  %1398 = vmatpush1.xpose.msra.mxu0 0.0
  %1399 = vmatprep.mubr.f32.mxu0 0.0
  %1400 = vmatmul.mubr.f32.gmra.mrb[0].mxu0 %v1330
  %v1401 = vpop.f32.mrb[0].mxu0
  %v1402 = vadd.f32 0.0, %v1401
  %v1403 = vpop.f32.mrb[0].mxu0
  %1404 = vdwg.mxu0
  %v1405 = vmul.f32 %v1402, 0.35355338
  %v1406 = vadd.f32 %v1405, %v434
  %v1407 = vsel %vm353, %v1406, -inf
  %1408 = vmax.xlane.f32.xlu0 %v1407
  %v1409 = vpop.xlane.xlu0 %1408
  %v1410 = vsub.f32 %v1406, %v1409
  %v1411 = vmul.f32 %v1410, 1.442695
  %v1412 = vpow.pop %v1411
  %v1413 = vsel %vm353, %v1412, 0.0
  %1414 = vadd.xlane.f32.xlu0 %v1413
  %v1415 = vpop.xlane.xlu0 %1414
  %v1416 = vrcp.pop %v1415
  %v1417 = vmul.f32 %v1412, %v1416
  %v1419 = vsel %vm353, %v1417, 0
  %1421 = vmatprep.subr.mxu0 0.0
  %1422 = vmatpush1.msra.mxu0 %v1326
  %1423 = vmatprep.subr.mxu0 0.0
  %1424 = vmatpush1.msra.mxu0 0.0
  %1425 = vmatprep.subr.mxu0 0.0
  %1426 = vmatpush1.msra.mxu0 0.0
  %1427 = vmatprep.subr.mxu0 0.0
  %1428 = vmatpush1.msra.mxu0 0.0
  %1429 = vmatprep.subr.mxu0 0.0
  %1430 = vmatpush1.msra.mxu0 0.0
  %1431 = vmatprep.subr.mxu0 0.0
  %1432 = vmatpush1.msra.mxu0 0.0
  %1433 = vmatprep.subr.mxu0 0.0
  %1434 = vmatpush1.msra.mxu0 0.0
  %1435 = vmatprep.subr.mxu0 0.0
  %1436 = vmatpush1.msra.mxu0 0.0
  %1437 = vmatprep.subr.mxu0 0.0
  %1438 = vmatpush1.msra.mxu0 0.0
  %1439 = vmatprep.subr.mxu0 0.0
  %1440 = vmatpush1.msra.mxu0 0.0
  %1441 = vmatprep.subr.mxu0 0.0
  %1442 = vmatpush1.msra.mxu0 0.0
  %1443 = vmatprep.subr.mxu0 0.0
  %1444 = vmatpush1.msra.mxu0 0.0
  %1445 = vmatprep.subr.mxu0 0.0
  %1446 = vmatpush1.msra.mxu0 0.0
  %1447 = vmatprep.subr.mxu0 0.0
  %1448 = vmatpush1.msra.mxu0 0.0
  %1449 = vmatprep.subr.mxu0 0.0
  %1450 = vmatpush1.msra.mxu0 0.0
  %1451 = vmatprep.subr.mxu0 0.0
  %1452 = vmatpush1.msra.mxu0 0.0
  %1453 = vmatprep.subr.mxu0 0.0
  %1454 = vmatpush1.msra.mxu0 0.0
  %1455 = vmatprep.subr.mxu0 0.0
  %1456 = vmatpush1.msra.mxu0 0.0
  %1457 = vmatprep.subr.mxu0 0.0
  %1458 = vmatpush1.msra.mxu0 0.0
  %1459 = vmatprep.subr.mxu0 0.0
  %1460 = vmatpush1.msra.mxu0 0.0
  %1461 = vmatprep.subr.mxu0 0.0
  %1462 = vmatpush1.msra.mxu0 0.0
  %1463 = vmatprep.subr.mxu0 0.0
  %1464 = vmatpush1.msra.mxu0 0.0
  %1465 = vmatprep.subr.mxu0 0.0
  %1466 = vmatpush1.msra.mxu0 0.0
  %1467 = vmatprep.subr.mxu0 0.0
  %1468 = vmatpush1.msra.mxu0 0.0
  %1469 = vmatprep.subr.mxu0 0.0
  %1470 = vmatpush1.msra.mxu0 0.0
  %1471 = vmatprep.subr.mxu0 0.0
  %1472 = vmatpush1.msra.mxu0 0.0
  %1473 = vmatprep.subr.mxu0 0.0
  %1474 = vmatpush1.msra.mxu0 0.0
  %1475 = vmatprep.subr.mxu0 0.0
  %1476 = vmatpush1.msra.mxu0 0.0
  %1477 = vmatprep.subr.mxu0 0.0
  %1478 = vmatpush1.msra.mxu0 0.0
  %1479 = vmatprep.subr.mxu0 0.0
  %1480 = vmatpush1.msra.mxu0 0.0
  %1481 = vmatprep.subr.mxu0 0.0
  %1482 = vmatpush1.msra.mxu0 0.0
  %1483 = vmatprep.subr.mxu0 0.0
  %1484 = vmatpush1.msra.mxu0 0.0
  %1485 = vmatprep.mubr.f32.mxu0 0.0
  %1486 = vmatmul.mubr.f32.gmra.mrb[0].mxu0 %v1419
  %v1487 = vpop.f32.mrb[0].mxu0
  %v1488 = vadd.f32 0.0, %v1487
  %v1489 = vpop.f32.mrb[0].mxu0
  %1490 = vdwg.mxu0
  %s1491 = scalar_lea.vmem %s4, 16
  %v1492 = vld [vmem:[%s1491] sm:$0xff]
  %v1494 = vsel %vm353, %v1488, 0
  %1496 = vmatprep.subr.mxu0 0.0
  %1497 = vmatpush1.msra.mxu0 %v1492
  %1498 = vmatprep.subr.mxu0 0.0
  %1499 = vmatpush1.msra.mxu0 0.0
  %1500 = vmatprep.subr.mxu0 0.0
  %1501 = vmatpush1.msra.mxu0 0.0
  %1502 = vmatprep.subr.mxu0 0.0
  %1503 = vmatpush1.msra.mxu0 0.0
  %1504 = vmatprep.subr.mxu0 0.0
  %1505 = vmatpush1.msra.mxu0 0.0
  %1506 = vmatprep.subr.mxu0 0.0
  %1507 = vmatpush1.msra.mxu0 0.0
  %1508 = vmatprep.subr.mxu0 0.0
  %1509 = vmatpush1.msra.mxu0 0.0
  %1510 = vmatprep.subr.mxu0 0.0
  %1511 = vmatpush1.msra.mxu0 0.0
  %1512 = vmatprep.subr.mxu0 0.0
  %1513 = vmatpush1.msra.mxu0 0.0
  %1514 = vmatprep.subr.mxu0 0.0
  %1515 = vmatpush1.msra.mxu0 0.0
  %1516 = vmatprep.subr.mxu0 0.0
  %1517 = vmatpush1.msra.mxu0 0.0
  %1518 = vmatprep.subr.mxu0 0.0
  %1519 = vmatpush1.msra.mxu0 0.0
  %1520 = vmatprep.subr.mxu0 0.0
  %1521 = vmatpush1.msra.mxu0 0.0
  %1522 = vmatprep.subr.mxu0 0.0
  %1523 = vmatpush1.msra.mxu0 0.0
  %1524 = vmatprep.subr.mxu0 0.0
  %1525 = vmatpush1.msra.mxu0 0.0
  %1526 = vmatprep.subr.mxu0 0.0
  %1527 = vmatpush1.msra.mxu0 0.0
  %1528 = vmatprep.subr.mxu0 0.0
  %1529 = vmatpush1.msra.mxu0 0.0
  %1530 = vmatprep.subr.mxu0 0.0
  %1531 = vmatpush1.msra.mxu0 0.0
  %1532 = vmatprep.subr.mxu0 0.0
  %1533 = vmatpush1.msra.mxu0 0.0
  %1534 = vmatprep.subr.mxu0 0.0
  %1535 = vmatpush1.msra.mxu0 0.0
  %1536 = vmatprep.subr.mxu0 0.0
  %1537 = vmatpush1.msra.mxu0 0.0
  %1538 = vmatprep.subr.mxu0 0.0
  %1539 = vmatpush1.msra.mxu0 0.0
  %1540 = vmatprep.subr.mxu0 0.0
  %1541 = vmatpush1.msra.mxu0 0.0
  %1542 = vmatprep.subr.mxu0 0.0
  %1543 = vmatpush1.msra.mxu0 0.0
  %1544 = vmatprep.subr.mxu0 0.0
  %1545 = vmatpush1.msra.mxu0 0.0
  %1546 = vmatprep.subr.mxu0 0.0
  %1547 = vmatpush1.msra.mxu0 0.0
  %1548 = vmatprep.subr.mxu0 0.0
  %1549 = vmatpush1.msra.mxu0 0.0
  %1550 = vmatprep.subr.mxu0 0.0
  %1551 = vmatpush1.msra.mxu0 0.0
  %1552 = vmatprep.subr.mxu0 0.0
  %1553 = vmatpush1.msra.mxu0 0.0
  %1554 = vmatprep.subr.mxu0 0.0
  %1555 = vmatpush1.msra.mxu0 0.0
  %1556 = vmatprep.subr.mxu0 0.0
  %1557 = vmatpush1.msra.mxu0 0.0
  %1558 = vmatprep.subr.mxu0 0.0
  %1559 = vmatpush1.msra.mxu0 0.0
  %1560 = vmatprep.mubr.f32.mxu0 0.0
  %1561 = vmatmul.mubr.f32.gmra.mrb[0].mxu0 %v1494
  %v1562 = vpop.f32.mrb[0].mxu0
  %v1563 = vadd.f32 0.0, %v1562
  %v1564 = vpop.f32.mrb[0].mxu0
  %1565 = vdwg.mxu0
  %v1566 = vadd.f32 %v1077, %v1563
  %s1567 = scalar_lea.vmem %s2, 96
  %v1568 = vld [vmem:[%s1567] sm:$0xff]
  %v1569 = vld [vmem:[%s1567 + $0x8] sm:$0xff]
  %v1570 = vld [vmem:[%s1567 + $0x10] sm:$0xff]
  %v1571 = vld [vmem:[%s1567 + $0x18] sm:$0xff]
  %s1572 = scalar_lea.vmem %s3, 3
  %v1573 = vld [vmem:[%s1572] sm:$0x1]
  %v1575 = vlaneseq
  %v1576 = vshrl.u32 %v1575, 7
  %v1577 = vsub.s32 0, %v1576
  %v1578 = vrot.slane %v1573, %v1577
  %1580 = vmatprep.subr.mxu0 0.0
  %1581 = vmatpush1.msra.mxu0 %v1568
  %1582 = vmatprep.subr.mxu0 0.0
  %1583 = vmatpush1.msra.mxu0 %v1569
  %1584 = vmatprep.subr.mxu0 0.0
  %1585 = vmatpush1.msra.mxu0 %v1570
  %1586 = vmatprep.subr.mxu0 0.0
  %1587 = vmatpush1.msra.mxu0 %v1571
  %1588 = vmatprep.subr.mxu0 0.0
  %1589 = vmatpush1.msra.mxu0 0.0
  %1590 = vmatprep.subr.mxu0 0.0
  %1591 = vmatpush1.msra.mxu0 0.0
  %1592 = vmatprep.subr.mxu0 0.0
  %1593 = vmatpush1.msra.mxu0 0.0
  %1594 = vmatprep.subr.mxu0 0.0
  %1595 = vmatpush1.msra.mxu0 0.0
  %1596 = vmatprep.subr.mxu0 0.0
  %1597 = vmatpush1.msra.mxu0 0.0
  %1598 = vmatprep.subr.mxu0 0.0
  %1599 = vmatpush1.msra.mxu0 0.0
  %1600 = vmatprep.subr.mxu0 0.0
  %1601 = vmatpush1.msra.mxu0 0.0
  %1602 = vmatprep.subr.mxu0 0.0
  %1603 = vmatpush1.msra.mxu0 0.0
  %1604 = vmatprep.subr.mxu0 0.0
  %1605 = vmatpush1.msra.mxu0 0.0
  %1606 = vmatprep.subr.mxu0 0.0
  %1607 = vmatpush1.msra.mxu0 0.0
  %1608 = vmatprep.subr.mxu0 0.0
  %1609 = vmatpush1.msra.mxu0 0.0
  %1610 = vmatprep.subr.mxu0 0.0
  %1611 = vmatpush1.msra.mxu0 0.0
  %1612 = vmatprep.subr.mxu0 0.0
  %1613 = vmatpush1.msra.mxu0 0.0
  %1614 = vmatprep.subr.mxu0 0.0
  %1615 = vmatpush1.msra.mxu0 0.0
  %1616 = vmatprep.subr.mxu0 0.0
  %1617 = vmatpush1.msra.mxu0 0.0
  %1618 = vmatprep.subr.mxu0 0.0
  %1619 = vmatpush1.msra.mxu0 0.0
  %1620 = vmatprep.subr.mxu0 0.0
  %1621 = vmatpush1.msra.mxu0 0.0
  %1622 = vmatprep.subr.mxu0 0.0
  %1623 = vmatpush1.msra.mxu0 0.0
  %1624 = vmatprep.subr.mxu0 0.0
  %1625 = vmatpush1.msra.mxu0 0.0
  %1626 = vmatprep.subr.mxu0 0.0
  %1627 = vmatpush1.msra.mxu0 0.0
  %1628 = vmatprep.subr.mxu0 0.0
  %1629 = vmatpush1.msra.mxu0 0.0
  %1630 = vmatprep.subr.mxu0 0.0
  %1631 = vmatpush1.msra.mxu0 0.0
  %1632 = vmatprep.subr.mxu0 0.0
  %1633 = vmatpush1.msra.mxu0 0.0
  %1634 = vmatprep.subr.mxu0 0.0
  %1635 = vmatpush1.msra.mxu0 0.0
  %1636 = vmatprep.subr.mxu0 0.0
  %1637 = vmatpush1.msra.mxu0 0.0
  %1638 = vmatprep.subr.mxu0 0.0
  %1639 = vmatpush1.msra.mxu0 0.0
  %1640 = vmatprep.subr.mxu0 0.0
  %1641 = vmatpush1.msra.mxu0 0.0
  %1642 = vmatprep.subr.mxu0 0.0
  %1643 = vmatpush1.msra.mxu0 0.0
  %1644 = vmatprep.mubr.f32.mxu0 0.0
  %1645 = vmatmul.mubr.f32.gmra.mrb[0].mxu0 %v115
  %v1646 = vpop.f32.mrb[0].mxu0
  %v1647 = vadd.f32 %v1578, %v1646
  %v1648 = vpop.f32.mrb[0].mxu0
  %1649 = vdwg.mxu0
  %s1650 = scalar_lea.vmem %s2, 224
  %v1651 = vld [vmem:[%s1650] sm:$0xff]
  %v1652 = vld [vmem:[%s1650 + $0x8] sm:$0xff]
  %v1653 = vld [vmem:[%s1650 + $0x10] sm:$0xff]
  %v1654 = vld [vmem:[%s1650 + $0x18] sm:$0xff]
  %s1655 = scalar_lea.vmem %s3, 7
  %v1656 = vld [vmem:[%s1655] sm:$0x1]
  %v1658 = vlaneseq
  %v1659 = vshrl.u32 %v1658, 7
  %v1660 = vsub.s32 0, %v1659
  %v1661 = vrot.slane %v1656, %v1660
  %1663 = vmatprep.subr.mxu0 0.0
  %1664 = vmatpush1.msra.mxu0 %v1651
  %1665 = vmatprep.subr.mxu0 0.0
  %1666 = vmatpush1.msra.mxu0 %v1652
  %1667 = vmatprep.subr.mxu0 0.0
  %1668 = vmatpush1.msra.mxu0 %v1653
  %1669 = vmatprep.subr.mxu0 0.0
  %1670 = vmatpush1.msra.mxu0 %v1654
  %1671 = vmatprep.subr.mxu0 0.0
  %1672 = vmatpush1.msra.mxu0 0.0
  %1673 = vmatprep.subr.mxu0 0.0
  %1674 = vmatpush1.msra.mxu0 0.0
  %1675 = vmatprep.subr.mxu0 0.0
  %1676 = vmatpush1.msra.mxu0 0.0
  %1677 = vmatprep.subr.mxu0 0.0
  %1678 = vmatpush1.msra.mxu0 0.0
  %1679 = vmatprep.subr.mxu0 0.0
  %1680 = vmatpush1.msra.mxu0 0.0
  %1681 = vmatprep.subr.mxu0 0.0
  %1682 = vmatpush1.msra.mxu0 0.0
  %1683 = vmatprep.subr.mxu0 0.0
  %1684 = vmatpush1.msra.mxu0 0.0
  %1685 = vmatprep.subr.mxu0 0.0
  %1686 = vmatpush1.msra.mxu0 0.0
  %1687 = vmatprep.subr.mxu0 0.0
  %1688 = vmatpush1.msra.mxu0 0.0
  %1689 = vmatprep.subr.mxu0 0.0
  %1690 = vmatpush1.msra.mxu0 0.0
  %1691 = vmatprep.subr.mxu0 0.0
  %1692 = vmatpush1.msra.mxu0 0.0
  %1693 = vmatprep.subr.mxu0 0.0
  %1694 = vmatpush1.msra.mxu0 0.0
  %1695 = vmatprep.subr.mxu0 0.0
  %1696 = vmatpush1.msra.mxu0 0.0
  %1697 = vmatprep.subr.mxu0 0.0
  %1698 = vmatpush1.msra.mxu0 0.0
  %1699 = vmatprep.subr.mxu0 0.0
  %1700 = vmatpush1.msra.mxu0 0.0
  %1701 = vmatprep.subr.mxu0 0.0
  %1702 = vmatpush1.msra.mxu0 0.0
  %1703 = vmatprep.subr.mxu0 0.0
  %1704 = vmatpush1.msra.mxu0 0.0
  %1705 = vmatprep.subr.mxu0 0.0
  %1706 = vmatpush1.msra.mxu0 0.0
  %1707 = vmatprep.subr.mxu0 0.0
  %1708 = vmatpush1.msra.mxu0 0.0
  %1709 = vmatprep.subr.mxu0 0.0
  %1710 = vmatpush1.msra.mxu0 0.0
  %1711 = vmatprep.subr.mxu0 0.0
  %1712 = vmatpush1.msra.mxu0 0.0
  %1713 = vmatprep.subr.mxu0 0.0
  %1714 = vmatpush1.msra.mxu0 0.0
  %1715 = vmatprep.subr.mxu0 0.0
  %1716 = vmatpush1.msra.mxu0 0.0
  %1717 = vmatprep.subr.mxu0 0.0
  %1718 = vmatpush1.msra.mxu0 0.0
  %1719 = vmatprep.subr.mxu0 0.0
  %1720 = vmatpush1.msra.mxu0 0.0
  %1721 = vmatprep.subr.mxu0 0.0
  %1722 = vmatpush1.msra.mxu0 0.0
  %1723 = vmatprep.subr.mxu0 0.0
  %1724 = vmatpush1.msra.mxu0 0.0
  %1725 = vmatprep.subr.mxu0 0.0
  %1726 = vmatpush1.msra.mxu0 0.0
  %1727 = vmatprep.mubr.f32.mxu0 0.0
  %1728 = vmatmul.mubr.f32.gmra.mrb[0].mxu0 %v115
  %v1729 = vpop.f32.mrb[0].mxu0
  %v1730 = vadd.f32 %v1661, %v1729
  %v1731 = vpop.f32.mrb[0].mxu0
  %1732 = vdwg.mxu0
  %s1733 = scalar_lea.vmem %s2, 352
  %v1734 = vld [vmem:[%s1733] sm:$0xff]
  %v1735 = vld [vmem:[%s1733 + $0x8] sm:$0xff]
  %v1736 = vld [vmem:[%s1733 + $0x10] sm:$0xff]
  %v1737 = vld [vmem:[%s1733 + $0x18] sm:$0xff]
  %s1738 = scalar_lea.vmem %s3, 11
  %v1739 = vld [vmem:[%s1738] sm:$0x1]
  %v1741 = vlaneseq
  %v1742 = vshrl.u32 %v1741, 7
  %v1743 = vsub.s32 0, %v1742
  %v1744 = vrot.slane %v1739, %v1743
  %1746 = vmatprep.subr.mxu0 0.0
  %1747 = vmatpush1.msra.mxu0 %v1734
  %1748 = vmatprep.subr.mxu0 0.0
  %1749 = vmatpush1.msra.mxu0 %v1735
  %1750 = vmatprep.subr.mxu0 0.0
  %1751 = vmatpush1.msra.mxu0 %v1736
  %1752 = vmatprep.subr.mxu0 0.0
  %1753 = vmatpush1.msra.mxu0 %v1737
  %1754 = vmatprep.subr.mxu0 0.0
  %1755 = vmatpush1.msra.mxu0 0.0
  %1756 = vmatprep.subr.mxu0 0.0
  %1757 = vmatpush1.msra.mxu0 0.0
  %1758 = vmatprep.subr.mxu0 0.0
  %1759 = vmatpush1.msra.mxu0 0.0
  %1760 = vmatprep.subr.mxu0 0.0
  %1761 = vmatpush1.msra.mxu0 0.0
  %1762 = vmatprep.subr.mxu0 0.0
  %1763 = vmatpush1.msra.mxu0 0.0
  %1764 = vmatprep.subr.mxu0 0.0
  %1765 = vmatpush1.msra.mxu0 0.0
  %1766 = vmatprep.subr.mxu0 0.0
  %1767 = vmatpush1.msra.mxu0 0.0
  %1768 = vmatprep.subr.mxu0 0.0
  %1769 = vmatpush1.msra.mxu0 0.0
  %1770 = vmatprep.subr.mxu0 0.0
  %1771 = vmatpush1.msra.mxu0 0.0
  %1772 = vmatprep.subr.mxu0 0.0
  %1773 = vmatpush1.msra.mxu0 0.0
  %1774 = vmatprep.subr.mxu0 0.0
  %1775 = vmatpush1.msra.mxu0 0.0
  %1776 = vmatprep.subr.mxu0 0.0
  %1777 = vmatpush1.msra.mxu0 0.0
  %1778 = vmatprep.subr.mxu0 0.0
  %1779 = vmatpush1.msra.mxu0 0.0
  %1780 = vmatprep.subr.mxu0 0.0
  %1781 = vmatpush1.msra.mxu0 0.0
  %1782 = vmatprep.subr.mxu0 0.0
  %1783 = vmatpush1.msra.mxu0 0.0
  %1784 = vmatprep.subr.mxu0 0.0
  %1785 = vmatpush1.msra.mxu0 0.0
  %1786 = vmatprep.subr.mxu0 0.0
  %1787 = vmatpush1.msra.mxu0 0.0
  %1788 = vmatprep.subr.mxu0 0.0
  %1789 = vmatpush1.msra.mxu0 0.0
  %1790 = vmatprep.subr.mxu0 0.0
  %1791 = vmatpush1.msra.mxu0 0.0
  %1792 = vmatprep.subr.mxu0 0.0
  %1793 = vmatpush1.msra.mxu0 0.0
  %1794 = vmatprep.subr.mxu0 0.0
  %1795 = vmatpush1.msra.mxu0 0.0
  %1796 = vmatprep.subr.mxu0 0.0
  %1797 = vmatpush1.msra.mxu0 0.0
  %1798 = vmatprep.subr.mxu0 0.0
  %1799 = vmatpush1.msra.mxu0 0.0
  %1800 = vmatprep.subr.mxu0 0.0
  %1801 = vmatpush1.msra.mxu0 0.0
  %1802 = vmatprep.subr.mxu0 0.0
  %1803 = vmatpush1.msra.mxu0 0.0
  %1804 = vmatprep.subr.mxu0 0.0
  %1805 = vmatpush1.msra.mxu0 0.0
  %1806 = vmatprep.subr.mxu0 0.0
  %1807 = vmatpush1.msra.mxu0 0.0
  %1808 = vmatprep.subr.mxu0 0.0
  %1809 = vmatpush1.msra.mxu0 0.0
  %1810 = vmatprep.mubr.f32.mxu0 0.0
  %1811 = vmatmul.mubr.f32.gmra.mrb[0].mxu0 %v115
  %v1812 = vpop.f32.mrb[0].mxu0
  %v1813 = vadd.f32 %v1744, %v1812
  %v1814 = vpop.f32.mrb[0].mxu0
  %1815 = vdwg.mxu0
  %v1817 = vsel %vm353, %v1647, 0
  %v1820 = vsel %vm353, %v1730, 0
  %1822 = vmatprep.subr.mxu0 0.0
  %1823 = vmatpush1.xpose.msra.mxu0 %v1820
  %1824 = vmatprep.subr.mxu0 0.0
  %1825 = vmatpush1.xpose.msra.mxu0 0.0
  %1826 = vmatprep.subr.mxu0 0.0
  %1827 = vmatpush1.xpose.msra.mxu0 0.0
  %1828 = vmatprep.subr.mxu0 0.0
  %1829 = vmatpush1.xpose.msra.mxu0 0.0
  %1830 = vmatprep.subr.mxu0 0.0
  %1831 = vmatpush1.xpose.msra.mxu0 0.0
  %1832 = vmatprep.subr.mxu0 0.0
  %1833 = vmatpush1.xpose.msra.mxu0 0.0
  %1834 = vmatprep.subr.mxu0 0.0
  %1835 = vmatpush1.xpose.msra.mxu0 0.0
  %1836 = vmatprep.subr.mxu0 0.0
  %1837 = vmatpush1.xpose.msra.mxu0 0.0
  %1838 = vmatprep.subr.mxu0 0.0
  %1839 = vmatpush1.xpose.msra.mxu0 0.0
  %1840 = vmatprep.subr.mxu0 0.0
  %1841 = vmatpush1.xpose.msra.mxu0 0.0
  %1842 = vmatprep.subr.mxu0 0.0
  %1843 = vmatpush1.xpose.msra.mxu0 0.0
  %1844 = vmatprep.subr.mxu0 0.0
  %1845 = vmatpush1.xpose.msra.mxu0 0.0
  %1846 = vmatprep.subr.mxu0 0.0
  %1847 = vmatpush1.xpose.msra.mxu0 0.0
  %1848 = vmatprep.subr.mxu0 0.0
  %1849 = vmatpush1.xpose.msra.mxu0 0.0
  %1850 = vmatprep.subr.mxu0 0.0
  %1851 = vmatpush1.xpose.msra.mxu0 0.0
  %1852 = vmatprep.subr.mxu0 0.0
  %1853 = vmatpush1.xpose.msra.mxu0 0.0
  %1854 = vmatprep.subr.mxu0 0.0
  %1855 = vmatpush1.xpose.msra.mxu0 0.0
  %1856 = vmatprep.subr.mxu0 0.0
  %1857 = vmatpush1.xpose.msra.mxu0 0.0
  %1858 = vmatprep.subr.mxu0 0.0
  %1859 = vmatpush1.xpose.msra.mxu0 0.0
  %1860 = vmatprep.subr.mxu0 0.0
  %1861 = vmatpush1.xpose.msra.mxu0 0.0
  %1862 = vmatprep.subr.mxu0 0.0
  %1863 = vmatpush1.xpose.msra.mxu0 0.0
  %1864 = vmatprep.subr.mxu0 0.0
  %1865 = vmatpush1.xpose.msra.mxu0 0.0
  %1866 = vmatprep.subr.mxu0 0.0
  %1867 = vmatpush1.xpose.msra.mxu0 0.0
  %1868 = vmatprep.subr.mxu0 0.0
  %1869 = vmatpush1.xpose.msra.mxu0 0.0
  %1870 = vmatprep.subr.mxu0 0.0
  %1871 = vmatpush1.xpose.msra.mxu0 0.0
  %1872 = vmatprep.subr.mxu0 0.0
  %1873 = vmatpush1.xpose.msra.mxu0 0.0
  %1874 = vmatprep.subr.mxu0 0.0
  %1875 = vmatpush1.xpose.msra.mxu0 0.0
  %1876 = vmatprep.subr.mxu0 0.0
  %1877 = vmatpush1.xpose.msra.mxu0 0.0
  %1878 = vmatprep.subr.mxu0 0.0
  %1879 = vmatpush1.xpose.msra.mxu0 0.0
  %1880 = vmatprep.subr.mxu0 0.0
  %1881 = vmatpush1.xpose.msra.mxu0 0.0
  %1882 = vmatprep.subr.mxu0 0.0
  %1883 = vmatpush1.xpose.msra.mxu0 0.0
  %1884 = vmatprep.subr.mxu0 0.0
  %1885 = vmatpush1.xpose.msra.mxu0 0.0
  %1886 = vmatprep.mubr.f32.mxu0 0.0
  %1887 = vmatmul.mubr.f32.gmra.mrb[0].mxu0 %v1817
  %v1888 = vpop.f32.mrb[0].mxu0
  %v1889 = vadd.f32 0.0, %v1888
  %v1890 = vpop.f32.mrb[0].mxu0
  %1891 = vdwg.mxu0
  %v1892 = vmul.f32 %v1889, 0.35355338
  %v1893 = vadd.f32 %v1892, %v434
  %v1894 = vsel %vm353, %v1893, -inf
  %1895 = vmax.xlane.f32.xlu0 %v1894
  %v1896 = vpop.xlane.xlu0 %1895
  %v1897 = vsub.f32 %v1893, %v1896
  %v1898 = vmul.f32 %v1897, 1.442695
  %v1899 = vpow.pop %v1898
  %v1900 = vsel %vm353, %v1899, 0.0
  %1901 = vadd.xlane.f32.xlu0 %v1900
  %v1902 = vpop.xlane.xlu0 %1901
  %v1903 = vrcp.pop %v1902
  %v1904 = vmul.f32 %v1899, %v1903
  %v1906 = vsel %vm353, %v1904, 0
  %1908 = vmatprep.subr.mxu0 0.0
  %1909 = vmatpush1.msra.mxu0 %v1813
  %1910 = vmatprep.subr.mxu0 0.0
  %1911 = vmatpush1.msra.mxu0 0.0
  %1912 = vmatprep.subr.mxu0 0.0
  %1913 = vmatpush1.msra.mxu0 0.0
  %1914 = vmatprep.subr.mxu0 0.0
  %1915 = vmatpush1.msra.mxu0 0.0
  %1916 = vmatprep.subr.mxu0 0.0
  %1917 = vmatpush1.msra.mxu0 0.0
  %1918 = vmatprep.subr.mxu0 0.0
  %1919 = vmatpush1.msra.mxu0 0.0
  %1920 = vmatprep.subr.mxu0 0.0
  %1921 = vmatpush1.msra.mxu0 0.0
  %1922 = vmatprep.subr.mxu0 0.0
  %1923 = vmatpush1.msra.mxu0 0.0
  %1924 = vmatprep.subr.mxu0 0.0
  %1925 = vmatpush1.msra.mxu0 0.0
  %1926 = vmatprep.subr.mxu0 0.0
  %1927 = vmatpush1.msra.mxu0 0.0
  %1928 = vmatprep.subr.mxu0 0.0
  %1929 = vmatpush1.msra.mxu0 0.0
  %1930 = vmatprep.subr.mxu0 0.0
  %1931 = vmatpush1.msra.mxu0 0.0
  %1932 = vmatprep.subr.mxu0 0.0
  %1933 = vmatpush1.msra.mxu0 0.0
  %1934 = vmatprep.subr.mxu0 0.0
  %1935 = vmatpush1.msra.mxu0 0.0
  %1936 = vmatprep.subr.mxu0 0.0
  %1937 = vmatpush1.msra.mxu0 0.0
  %1938 = vmatprep.subr.mxu0 0.0
  %1939 = vmatpush1.msra.mxu0 0.0
  %1940 = vmatprep.subr.mxu0 0.0
  %1941 = vmatpush1.msra.mxu0 0.0
  %1942 = vmatprep.subr.mxu0 0.0
  %1943 = vmatpush1.msra.mxu0 0.0
  %1944 = vmatprep.subr.mxu0 0.0
  %1945 = vmatpush1.msra.mxu0 0.0
  %1946 = vmatprep.subr.mxu0 0.0
  %1947 = vmatpush1.msra.mxu0 0.0
  %1948 = vmatprep.subr.mxu0 0.0
  %1949 = vmatpush1.msra.mxu0 0.0
  %1950 = vmatprep.subr.mxu0 0.0
  %1951 = vmatpush1.msra.mxu0 0.0
  %1952 = vmatprep.subr.mxu0 0.0
  %1953 = vmatpush1.msra.mxu0 0.0
  %1954 = vmatprep.subr.mxu0 0.0
  %1955 = vmatpush1.msra.mxu0 0.0
  %1956 = vmatprep.subr.mxu0 0.0
  %1957 = vmatpush1.msra.mxu0 0.0
  %1958 = vmatprep.subr.mxu0 0.0
  %1959 = vmatpush1.msra.mxu0 0.0
  %1960 = vmatprep.subr.mxu0 0.0
  %1961 = vmatpush1.msra.mxu0 0.0
  %1962 = vmatprep.subr.mxu0 0.0
  %1963 = vmatpush1.msra.mxu0 0.0
  %1964 = vmatprep.subr.mxu0 0.0
  %1965 = vmatpush1.msra.mxu0 0.0
  %1966 = vmatprep.subr.mxu0 0.0
  %1967 = vmatpush1.msra.mxu0 0.0
  %1968 = vmatprep.subr.mxu0 0.0
  %1969 = vmatpush1.msra.mxu0 0.0
  %1970 = vmatprep.subr.mxu0 0.0
  %1971 = vmatpush1.msra.mxu0 0.0
  %1972 = vmatprep.mubr.f32.mxu0 0.0
  %1973 = vmatmul.mubr.f32.gmra.mrb[0].mxu0 %v1906
  %v1974 = vpop.f32.mrb[0].mxu0
  %v1975 = vadd.f32 0.0, %v1974
  %v1976 = vpop.f32.mrb[0].mxu0
  %1977 = vdwg.mxu0
  %s1978 = scalar_lea.vmem %s4, 24
  %v1979 = vld [vmem:[%s1978] sm:$0xff]
  %v1981 = vsel %vm353, %v1975, 0
  %1983 = vmatprep.subr.mxu0 0.0
  %1984 = vmatpush1.msra.mxu0 %v1979
  %1985 = vmatprep.subr.mxu0 0.0
  %1986 = vmatpush1.msra.mxu0 0.0
  %1987 = vmatprep.subr.mxu0 0.0
  %1988 = vmatpush1.msra.mxu0 0.0
  %1989 = vmatprep.subr.mxu0 0.0
  %1990 = vmatpush1.msra.mxu0 0.0
  %1991 = vmatprep.subr.mxu0 0.0
  %1992 = vmatpush1.msra.mxu0 0.0
  %1993 = vmatprep.subr.mxu0 0.0
  %1994 = vmatpush1.msra.mxu0 0.0
  %1995 = vmatprep.subr.mxu0 0.0
  %1996 = vmatpush1.msra.mxu0 0.0
  %1997 = vmatprep.subr.mxu0 0.0
  %1998 = vmatpush1.msra.mxu0 0.0
  %1999 = vmatprep.subr.mxu0 0.0
  %2000 = vmatpush1.msra.mxu0 0.0
  %2001 = vmatprep.subr.mxu0 0.0
  %2002 = vmatpush1.msra.mxu0 0.0
  %2003 = vmatprep.subr.mxu0 0.0
  %2004 = vmatpush1.msra.mxu0 0.0
  %2005 = vmatprep.subr.mxu0 0.0
  %2006 = vmatpush1.msra.mxu0 0.0
  %2007 = vmatprep.subr.mxu0 0.0
  %2008 = vmatpush1.msra.mxu0 0.0
  %2009 = vmatprep.subr.mxu0 0.0
  %2010 = vmatpush1.msra.mxu0 0.0
  %2011 = vmatprep.subr.mxu0 0.0
  %2012 = vmatpush1.msra.mxu0 0.0
  %2013 = vmatprep.subr.mxu0 0.0
  %2014 = vmatpush1.msra.mxu0 0.0
  %2015 = vmatprep.subr.mxu0 0.0
  %2016 = vmatpush1.msra.mxu0 0.0
  %2017 = vmatprep.subr.mxu0 0.0
  %2018 = vmatpush1.msra.mxu0 0.0
  %2019 = vmatprep.subr.mxu0 0.0
  %2020 = vmatpush1.msra.mxu0 0.0
  %2021 = vmatprep.subr.mxu0 0.0
  %2022 = vmatpush1.msra.mxu0 0.0
  %2023 = vmatprep.subr.mxu0 0.0
  %2024 = vmatpush1.msra.mxu0 0.0
  %2025 = vmatprep.subr.mxu0 0.0
  %2026 = vmatpush1.msra.mxu0 0.0
  %2027 = vmatprep.subr.mxu0 0.0
  %2028 = vmatpush1.msra.mxu0 0.0
  %2029 = vmatprep.subr.mxu0 0.0
  %2030 = vmatpush1.msra.mxu0 0.0
  %2031 = vmatprep.subr.mxu0 0.0
  %2032 = vmatpush1.msra.mxu0 0.0
  %2033 = vmatprep.subr.mxu0 0.0
  %2034 = vmatpush1.msra.mxu0 0.0
  %2035 = vmatprep.subr.mxu0 0.0
  %2036 = vmatpush1.msra.mxu0 0.0
  %2037 = vmatprep.subr.mxu0 0.0
  %2038 = vmatpush1.msra.mxu0 0.0
  %2039 = vmatprep.subr.mxu0 0.0
  %2040 = vmatpush1.msra.mxu0 0.0
  %2041 = vmatprep.subr.mxu0 0.0
  %2042 = vmatpush1.msra.mxu0 0.0
  %2043 = vmatprep.subr.mxu0 0.0
  %2044 = vmatpush1.msra.mxu0 0.0
  %2045 = vmatprep.subr.mxu0 0.0
  %2046 = vmatpush1.msra.mxu0 0.0
  %2047 = vmatprep.mubr.f32.mxu0 0.0
  %2048 = vmatmul.mubr.f32.gmra.mrb[0].mxu0 %v1981
  %v2049 = vpop.f32.mrb[0].mxu0
  %v2050 = vadd.f32 0.0, %v2049
  %v2051 = vpop.f32.mrb[0].mxu0
  %2052 = vdwg.mxu0
  %v2053 = vadd.f32 %v1566, %v2050
  %v2054 = vld [vmem:[%s5] sm:$0x1]
  %v2056 = vlaneseq
  %v2057 = vshrl.u32 %v2056, 7
  %v2058 = vsub.s32 0, %v2057
  %v2059 = vrot.slane %v2054, %v2058
  %v2061 = vadd.f32 %v2053, %v2059
  %v2062 = vadd.f32 %v2061, %v102
  %v2063 = vld [vmem:[%s6] sm:$0x1]
  %v2064 = vld [vmem:[%s7] sm:$0x1]
  %v2065 = vsel %vm74, %v2062, 0.0
  %2066 = vadd.xlane.f32.xlu0 %v2065
  %v2067 = vpop.xlane.xlu0 %2066
  %v2068 = vmul.f32 %v2067, %v78
  %v2069 = vsub.f32 %v2062, %v2068
  %v2070 = vmul.f32 %v2069, %v2069
  %v2071 = vsel %vm74, %v2070, 0.0
  %2072 = vadd.xlane.f32.xlu0 %v2071
  %v2073 = vpop.xlane.xlu0 %2072
  %v2074 = vmul.f32 %v2073, %v78
  %v2075 = vadd.f32 %v2074, 1e-12
  %v2076 = vrsqrt.pop %v2075
  %v2077 = vmul.f32 %v2069, %v2076
  %v2079 = vlaneseq
  %v2080 = vshrl.u32 %v2079, 7
  %v2081 = vsub.s32 0, %v2080
  %v2082 = vrot.slane %v2063, %v2081
  %v2084 = vmul.f32 %v2077, %v2082
  %v2086 = vlaneseq
  %v2087 = vshrl.u32 %v2086, 7
  %v2088 = vsub.s32 0, %v2087
  %v2089 = vrot.slane %v2064, %v2088
  %v2091 = vadd.f32 %v2084, %v2089
  %v2092 = vld [vmem:[%s8] sm:$0xff]
  %v2093 = vld [vmem:[%s8 + $0x8] sm:$0xff]
  %v2094 = vld [vmem:[%s8 + $0x10] sm:$0xff]
  %v2095 = vld [vmem:[%s8 + $0x18] sm:$0xff]
  %v2096 = vld [vmem:[%s9] sm:$0x1]
  %v2098 = vlaneseq
  %v2099 = vshrl.u32 %v2098, 7
  %v2100 = vsub.s32 0, %v2099
  %v2101 = vrot.slane %v2096, %v2100
  %v2104 = vsel %vm74, %v2091, 0
  %2106 = vmatprep.subr.mxu0 0.0
  %2107 = vmatpush1.msra.mxu0 %v2092
  %2108 = vmatprep.subr.mxu0 0.0
  %2109 = vmatpush1.msra.mxu0 %v2093
  %2110 = vmatprep.subr.mxu0 0.0
  %2111 = vmatpush1.msra.mxu0 %v2094
  %2112 = vmatprep.subr.mxu0 0.0
  %2113 = vmatpush1.msra.mxu0 %v2095
  %2114 = vmatprep.subr.mxu0 0.0
  %2115 = vmatpush1.msra.mxu0 0.0
  %2116 = vmatprep.subr.mxu0 0.0
  %2117 = vmatpush1.msra.mxu0 0.0
  %2118 = vmatprep.subr.mxu0 0.0
  %2119 = vmatpush1.msra.mxu0 0.0
  %2120 = vmatprep.subr.mxu0 0.0
  %2121 = vmatpush1.msra.mxu0 0.0
  %2122 = vmatprep.subr.mxu0 0.0
  %2123 = vmatpush1.msra.mxu0 0.0
  %2124 = vmatprep.subr.mxu0 0.0
  %2125 = vmatpush1.msra.mxu0 0.0
  %2126 = vmatprep.subr.mxu0 0.0
  %2127 = vmatpush1.msra.mxu0 0.0
  %2128 = vmatprep.subr.mxu0 0.0
  %2129 = vmatpush1.msra.mxu0 0.0
  %2130 = vmatprep.subr.mxu0 0.0
  %2131 = vmatpush1.msra.mxu0 0.0
  %2132 = vmatprep.subr.mxu0 0.0
  %2133 = vmatpush1.msra.mxu0 0.0
  %2134 = vmatprep.subr.mxu0 0.0
  %2135 = vmatpush1.msra.mxu0 0.0
  %2136 = vmatprep.subr.mxu0 0.0
  %2137 = vmatpush1.msra.mxu0 0.0
  %2138 = vmatprep.subr.mxu0 0.0
  %2139 = vmatpush1.msra.mxu0 0.0
  %2140 = vmatprep.subr.mxu0 0.0
  %2141 = vmatpush1.msra.mxu0 0.0
  %2142 = vmatprep.subr.mxu0 0.0
  %2143 = vmatpush1.msra.mxu0 0.0
  %2144 = vmatprep.subr.mxu0 0.0
  %2145 = vmatpush1.msra.mxu0 0.0
  %2146 = vmatprep.subr.mxu0 0.0
  %2147 = vmatpush1.msra.mxu0 0.0
  %2148 = vmatprep.subr.mxu0 0.0
  %2149 = vmatpush1.msra.mxu0 0.0
  %2150 = vmatprep.subr.mxu0 0.0
  %2151 = vmatpush1.msra.mxu0 0.0
  %2152 = vmatprep.subr.mxu0 0.0
  %2153 = vmatpush1.msra.mxu0 0.0
  %2154 = vmatprep.subr.mxu0 0.0
  %2155 = vmatpush1.msra.mxu0 0.0
  %2156 = vmatprep.subr.mxu0 0.0
  %2157 = vmatpush1.msra.mxu0 0.0
  %2158 = vmatprep.subr.mxu0 0.0
  %2159 = vmatpush1.msra.mxu0 0.0
  %2160 = vmatprep.subr.mxu0 0.0
  %2161 = vmatpush1.msra.mxu0 0.0
  %2162 = vmatprep.subr.mxu0 0.0
  %2163 = vmatpush1.msra.mxu0 0.0
  %2164 = vmatprep.subr.mxu0 0.0
  %2165 = vmatpush1.msra.mxu0 0.0
  %2166 = vmatprep.subr.mxu0 0.0
  %2167 = vmatpush1.msra.mxu0 0.0
  %2168 = vmatprep.subr.mxu0 0.0
  %2169 = vmatpush1.msra.mxu0 0.0
  %2170 = vmatprep.mubr.f32.mxu0 0.0
  %2171 = vmatmul.mubr.f32.gmra.mrb[0].mxu0 %v2104
  %v2172 = vpop.f32.mrb[0].mxu0
  %v2173 = vadd.f32 %v2101, %v2172
  %v2174 = vpop.f32.mrb[0].mxu0
  %2175 = vdwg.mxu0
  %v2176 = vmul.f32 %v2173, 0.5
  %v2177 = vmul.f32 %v2173, 0.044715
  %v2178 = vmul.f32 %v2177, %v2173
  %v2179 = vmul.f32 %v2178, %v2173
  %v2180 = vadd.f32 %v2173, %v2179
  %v2181 = vmul.f32 %v2180, 0.7978846
  %v2182 = vtanh.pop %v2181
  %v2183 = vadd.f32 %v2182, 1.0
  %v2184 = vmul.f32 %v2176, %v2183
  %v2185 = vld [vmem:[%s10] sm:$0xff]
  %v2186 = vld [vmem:[%s10 + $0x8] sm:$0xff]
  %v2187 = vld [vmem:[%s10 + $0x10] sm:$0xff]
  %v2188 = vld [vmem:[%s10 + $0x18] sm:$0xff]
  %v2189 = vld [vmem:[%s10 + $0x20] sm:$0xff]
  %v2190 = vld [vmem:[%s10 + $0x28] sm:$0xff]
  %v2191 = vld [vmem:[%s10 + $0x30] sm:$0xff]
  %v2192 = vld [vmem:[%s10 + $0x38] sm:$0xff]
  %v2193 = vld [vmem:[%s11] sm:$0x1]
  %v2195 = vlaneseq
  %v2196 = vshrl.u32 %v2195, 7
  %v2197 = vsub.s32 0, %v2196
  %v2198 = vrot.slane %v2193, %v2197
  %vm2200 = vcmask 523264
  %v2202 = vsel %vm2200, %v2184, 0
  %2204 = vmatprep.subr.mxu0 0.0
  %2205 = vmatpush1.msra.mxu0 %v2185
  %2206 = vmatprep.subr.mxu0 0.0
  %2207 = vmatpush1.msra.mxu0 %v2186
  %2208 = vmatprep.subr.mxu0 0.0
  %2209 = vmatpush1.msra.mxu0 %v2187
  %2210 = vmatprep.subr.mxu0 0.0
  %2211 = vmatpush1.msra.mxu0 %v2188
  %2212 = vmatprep.subr.mxu0 0.0
  %2213 = vmatpush1.msra.mxu0 %v2189
  %2214 = vmatprep.subr.mxu0 0.0
  %2215 = vmatpush1.msra.mxu0 %v2190
  %2216 = vmatprep.subr.mxu0 0.0
  %2217 = vmatpush1.msra.mxu0 %v2191
  %2218 = vmatprep.subr.mxu0 0.0
  %2219 = vmatpush1.msra.mxu0 %v2192
  %2220 = vmatprep.subr.mxu0 0.0
  %2221 = vmatpush1.msra.mxu0 0.0
  %2222 = vmatprep.subr.mxu0 0.0
  %2223 = vmatpush1.msra.mxu0 0.0
  %2224 = vmatprep.subr.mxu0 0.0
  %2225 = vmatpush1.msra.mxu0 0.0
  %2226 = vmatprep.subr.mxu0 0.0
  %2227 = vmatpush1.msra.mxu0 0.0
  %2228 = vmatprep.subr.mxu0 0.0
  %2229 = vmatpush1.msra.mxu0 0.0
  %2230 = vmatprep.subr.mxu0 0.0
  %2231 = vmatpush1.msra.mxu0 0.0
  %2232 = vmatprep.subr.mxu0 0.0
  %2233 = vmatpush1.msra.mxu0 0.0
  %2234 = vmatprep.subr.mxu0 0.0
  %2235 = vmatpush1.msra.mxu0 0.0
  %2236 = vmatprep.subr.mxu0 0.0
  %2237 = vmatpush1.msra.mxu0 0.0
  %2238 = vmatprep.subr.mxu0 0.0
  %2239 = vmatpush1.msra.mxu0 0.0
  %2240 = vmatprep.subr.mxu0 0.0
  %2241 = vmatpush1.msra.mxu0 0.0
  %2242 = vmatprep.subr.mxu0 0.0
  %2243 = vmatpush1.msra.mxu0 0.0
  %2244 = vmatprep.subr.mxu0 0.0
  %2245 = vmatpush1.msra.mxu0 0.0
  %2246 = vmatprep.subr.mxu0 0.0
  %2247 = vmatpush1.msra.mxu0 0.0
  %2248 = vmatprep.subr.mxu0 0.0
  %2249 = vmatpush1.msra.mxu0 0.0
  %2250 = vmatprep.subr.mxu0 0.0
  %2251 = vmatpush1.msra.mxu0 0.0
  %2252 = vmatprep.subr.mxu0 0.0
  %2253 = vmatpush1.msra.mxu0 0.0
  %2254 = vmatprep.subr.mxu0 0.0
  %2255 = vmatpush1.msra.mxu0 0.0
  %2256 = vmatprep.subr.mxu0 0.0
  %2257 = vmatpush1.msra.mxu0 0.0
  %2258 = vmatprep.subr.mxu0 0.0
  %2259 = vmatpush1.msra.mxu0 0.0
  %2260 = vmatprep.subr.mxu0 0.0
  %2261 = vmatpush1.msra.mxu0 0.0
  %2262 = vmatprep.subr.mxu0 0.0
  %2263 = vmatpush1.msra.mxu0 0.0
  %2264 = vmatprep.subr.mxu0 0.0
  %2265 = vmatpush1.msra.mxu0 0.0
  %2266 = vmatprep.subr.mxu0 0.0
  %2267 = vmatpush1.msra.mxu0 0.0
  %2268 = vmatprep.mubr.f32.mxu0 0.0
  %2269 = vmatmul.mubr.f32.gmra.mrb[0].mxu0 %v2202
  %v2270 = vpop.f32.mrb[0].mxu0
  %v2271 = vadd.f32 %v2198, %v2270
  %v2272 = vpop.f32.mrb[0].mxu0
  %2273 = vdwg.mxu0
  %v2274 = vadd.f32 %v2271, %v2091
  %v2275 = vld [vmem:[%s12] sm:$0x1]
  %v2276 = vld [vmem:[%s13] sm:$0x1]
  %v2277 = vsel %vm74, %v2274, 0.0
  %2278 = vadd.xlane.f32.xlu0 %v2277
  %v2279 = vpop.xlane.xlu0 %2278
  %v2280 = vmul.f32 %v2279, %v78
  %v2281 = vsub.f32 %v2274, %v2280
  %v2282 = vmul.f32 %v2281, %v2281
  %v2283 = vsel %vm74, %v2282, 0.0
  %2284 = vadd.xlane.f32.xlu0 %v2283
  %v2285 = vpop.xlane.xlu0 %2284
  %v2286 = vmul.f32 %v2285, %v78
  %v2287 = vadd.f32 %v2286, 1e-12
  %v2288 = vrsqrt.pop %v2287
  %v2289 = vmul.f32 %v2281, %v2288
  %v2291 = vlaneseq
  %v2292 = vshrl.u32 %v2291, 7
  %v2293 = vsub.s32 0, %v2292
  %v2294 = vrot.slane %v2275, %v2293
  %v2296 = vmul.f32 %v2289, %v2294
  %v2298 = vlaneseq
  %v2299 = vshrl.u32 %v2298, 7
  %v2300 = vsub.s32 0, %v2299
  %v2301 = vrot.slane %v2276, %v2300
  %v2303 = vadd.f32 %v2296, %v2301
  %s2304 = scalar_lea.vmem %s2, 384
  %v2305 = vld [vmem:[%s2304] sm:$0xff]
  %v2306 = vld [vmem:[%s2304 + $0x8] sm:$0xff]
  %v2307 = vld [vmem:[%s2304 + $0x10] sm:$0xff]
  %v2308 = vld [vmem:[%s2304 + $0x18] sm:$0xff]
  %s2309 = scalar_lea.vmem %s3, 12
  %v2310 = vld [vmem:[%s2309] sm:$0x1]
  %v2312 = vlaneseq
  %v2313 = vshrl.u32 %v2312, 7
  %v2314 = vsub.s32 0, %v2313
  %v2315 = vrot.slane %v2310, %v2314
  %v2318 = vsel %vm74, %v2303, 0
  %2320 = vmatprep.subr.mxu0 0.0
  %2321 = vmatpush1.msra.mxu0 %v2305
  %2322 = vmatprep.subr.mxu0 0.0
  %2323 = vmatpush1.msra.mxu0 %v2306
  %2324 = vmatprep.subr.mxu0 0.0
  %2325 = vmatpush1.msra.mxu0 %v2307
  %2326 = vmatprep.subr.mxu0 0.0
  %2327 = vmatpush1.msra.mxu0 %v2308
  %2328 = vmatprep.subr.mxu0 0.0
  %2329 = vmatpush1.msra.mxu0 0.0
  %2330 = vmatprep.subr.mxu0 0.0
  %2331 = vmatpush1.msra.mxu0 0.0
  %2332 = vmatprep.subr.mxu0 0.0
  %2333 = vmatpush1.msra.mxu0 0.0
  %2334 = vmatprep.subr.mxu0 0.0
  %2335 = vmatpush1.msra.mxu0 0.0
  %2336 = vmatprep.subr.mxu0 0.0
  %2337 = vmatpush1.msra.mxu0 0.0
  %2338 = vmatprep.subr.mxu0 0.0
  %2339 = vmatpush1.msra.mxu0 0.0
  %2340 = vmatprep.subr.mxu0 0.0
  %2341 = vmatpush1.msra.mxu0 0.0
  %2342 = vmatprep.subr.mxu0 0.0
  %2343 = vmatpush1.msra.mxu0 0.0
  %2344 = vmatprep.subr.mxu0 0.0
  %2345 = vmatpush1.msra.mxu0 0.0
  %2346 = vmatprep.subr.mxu0 0.0
  %2347 = vmatpush1.msra.mxu0 0.0
  %2348 = vmatprep.subr.mxu0 0.0
  %2349 = vmatpush1.msra.mxu0 0.0
  %2350 = vmatprep.subr.mxu0 0.0
  %2351 = vmatpush1.msra.mxu0 0.0
  %2352 = vmatprep.subr.mxu0 0.0
  %2353 = vmatpush1.msra.mxu0 0.0
  %2354 = vmatprep.subr.mxu0 0.0
  %2355 = vmatpush1.msra.mxu0 0.0
  %2356 = vmatprep.subr.mxu0 0.0
  %2357 = vmatpush1.msra.mxu0 0.0
  %2358 = vmatprep.subr.mxu0 0.0
  %2359 = vmatpush1.msra.mxu0 0.0
  %2360 = vmatprep.subr.mxu0 0.0
  %2361 = vmatpush1.msra.mxu0 0.0
  %2362 = vmatprep.subr.mxu0 0.0
  %2363 = vmatpush1.msra.mxu0 0.0
  %2364 = vmatprep.subr.mxu0 0.0
  %2365 = vmatpush1.msra.mxu0 0.0
  %2366 = vmatprep.subr.mxu0 0.0
  %2367 = vmatpush1.msra.mxu0 0.0
  %2368 = vmatprep.subr.mxu0 0.0
  %2369 = vmatpush1.msra.mxu0 0.0
  %2370 = vmatprep.subr.mxu0 0.0
  %2371 = vmatpush1.msra.mxu0 0.0
  %2372 = vmatprep.subr.mxu0 0.0
  %2373 = vmatpush1.msra.mxu0 0.0
  %2374 = vmatprep.subr.mxu0 0.0
  %2375 = vmatpush1.msra.mxu0 0.0
  %2376 = vmatprep.subr.mxu0 0.0
  %2377 = vmatpush1.msra.mxu0 0.0
  %2378 = vmatprep.subr.mxu0 0.0
  %2379 = vmatpush1.msra.mxu0 0.0
  %2380 = vmatprep.subr.mxu0 0.0
  %2381 = vmatpush1.msra.mxu0 0.0
  %2382 = vmatprep.subr.mxu0 0.0
  %2383 = vmatpush1.msra.mxu0 0.0
  %2384 = vmatprep.mubr.f32.mxu0 0.0
  %2385 = vmatmul.mubr.f32.gmra.mrb[0].mxu0 %v2318
  %v2386 = vpop.f32.mrb[0].mxu0
  %v2387 = vadd.f32 %v2315, %v2386
  %v2388 = vpop.f32.mrb[0].mxu0
  %2389 = vdwg.mxu0
  %s2390 = scalar_lea.vmem %s2, 512
  %v2391 = vld [vmem:[%s2390] sm:$0xff]
  %v2392 = vld [vmem:[%s2390 + $0x8] sm:$0xff]
  %v2393 = vld [vmem:[%s2390 + $0x10] sm:$0xff]
  %v2394 = vld [vmem:[%s2390 + $0x18] sm:$0xff]
  %s2395 = scalar_lea.vmem %s3, 16
  %v2396 = vld [vmem:[%s2395] sm:$0x1]
  %v2398 = vlaneseq
  %v2399 = vshrl.u32 %v2398, 7
  %v2400 = vsub.s32 0, %v2399
  %v2401 = vrot.slane %v2396, %v2400
  %2403 = vmatprep.subr.mxu0 0.0
  %2404 = vmatpush1.msra.mxu0 %v2391
  %2405 = vmatprep.subr.mxu0 0.0
  %2406 = vmatpush1.msra.mxu0 %v2392
  %2407 = vmatprep.subr.mxu0 0.0
  %2408 = vmatpush1.msra.mxu0 %v2393
  %2409 = vmatprep.subr.mxu0 0.0
  %2410 = vmatpush1.msra.mxu0 %v2394
  %2411 = vmatprep.subr.mxu0 0.0
  %2412 = vmatpush1.msra.mxu0 0.0
  %2413 = vmatprep.subr.mxu0 0.0
  %2414 = vmatpush1.msra.mxu0 0.0
  %2415 = vmatprep.subr.mxu0 0.0
  %2416 = vmatpush1.msra.mxu0 0.0
  %2417 = vmatprep.subr.mxu0 0.0
  %2418 = vmatpush1.msra.mxu0 0.0
  %2419 = vmatprep.subr.mxu0 0.0
  %2420 = vmatpush1.msra.mxu0 0.0
  %2421 = vmatprep.subr.mxu0 0.0
  %2422 = vmatpush1.msra.mxu0 0.0
  %2423 = vmatprep.subr.mxu0 0.0
  %2424 = vmatpush1.msra.mxu0 0.0
  %2425 = vmatprep.subr.mxu0 0.0
  %2426 = vmatpush1.msra.mxu0 0.0
  %2427 = vmatprep.subr.mxu0 0.0
  %2428 = vmatpush1.msra.mxu0 0.0
  %2429 = vmatprep.subr.mxu0 0.0
  %2430 = vmatpush1.msra.mxu0 0.0
  %2431 = vmatprep.subr.mxu0 0.0
  %2432 = vmatpush1.msra.mxu0 0.0
  %2433 = vmatprep.subr.mxu0 0.0
  %2434 = vmatpush1.msra.mxu0 0.0
  %2435 = vmatprep.subr.mxu0 0.0
  %2436 = vmatpush1.msra.mxu0 0.0
  %2437 = vmatprep.subr.mxu0 0.0
  %2438 = vmatpush1.msra.mxu0 0.0
  %2439 = vmatprep.subr.mxu0 0.0
  %2440 = vmatpush1.msra.mxu0 0.0
  %2441 = vmatprep.subr.mxu0 0.0
  %2442 = vmatpush1.msra.mxu0 0.0
  %2443 = vmatprep.subr.mxu0 0.0
  %2444 = vmatpush1.msra.mxu0 0.0
  %2445 = vmatprep.subr.mxu0 0.0
  %2446 = vmatpush1.msra.mxu0 0.0
  %2447 = vmatprep.subr.mxu0 0.0
  %2448 = vmatpush1.msra.mxu0 0.0
  %2449 = vmatprep.subr.mxu0 0.0
  %2450 = vmatpush1.msra.mxu0 0.0
  %2451 = vmatprep.subr.mxu0 0.0
  %2452 = vmatpush1.msra.mxu0 0.0
  %2453 = vmatprep.subr.mxu0 0.0
  %2454 = vmatpush1.msra.mxu0 0.0
  %2455 = vmatprep.subr.mxu0 0.0
  %2456 = vmatpush1.msra.mxu0 0.0
  %2457 = vmatprep.subr.mxu0 0.0
  %2458 = vmatpush1.msra.mxu0 0.0
  %2459 = vmatprep.subr.mxu0 0.0
  %2460 = vmatpush1.msra.mxu0 0.0
  %2461 = vmatprep.subr.mxu0 0.0
  %2462 = vmatpush1.msra.mxu0 0.0
  %2463 = vmatprep.subr.mxu0 0.0
  %2464 = vmatpush1.msra.mxu0 0.0
  %2465 = vmatprep.subr.mxu0 0.0
  %2466 = vmatpush1.msra.mxu0 0.0
  %2467 = vmatprep.mubr.f32.mxu0 0.0
  %2468 = vmatmul.mubr.f32.gmra.mrb[0].mxu0 %v2318
  %v2469 = vpop.f32.mrb[0].mxu0
  %v2470 = vadd.f32 %v2401, %v2469
  %v2471 = vpop.f32.mrb[0].mxu0
  %2472 = vdwg.mxu0
  %s2473 = scalar_lea.vmem %s2, 640
  %v2474 = vld [vmem:[%s2473] sm:$0xff]
  %v2475 = vld [vmem:[%s2473 + $0x8] sm:$0xff]
  %v2476 = vld [vmem:[%s2473 + $0x10] sm:$0xff]
  %v2477 = vld [vmem:[%s2473 + $0x18] sm:$0xff]
  %s2478 = scalar_lea.vmem %s3, 20
  %v2479 = vld [vmem:[%s2478] sm:$0x1]
  %v2481 = vlaneseq
  %v2482 = vshrl.u32 %v2481, 7
  %v2483 = vsub.s32 0, %v2482
  %v2484 = vrot.slane %v2479, %v2483
  %2486 = vmatprep.subr.mxu0 0.0
  %2487 = vmatpush1.msra.mxu0 %v2474
  %2488 = vmatprep.subr.mxu0 0.0
  %2489 = vmatpush1.msra.mxu0 %v2475
  %2490 = vmatprep.subr.mxu0 0.0
  %2491 = vmatpush1.msra.mxu0 %v2476
  %2492 = vmatprep.subr.mxu0 0.0
  %2493 = vmatpush1.msra.mxu0 %v2477
  %2494 = vmatprep.subr.mxu0 0.0
  %2495 = vmatpush1.msra.mxu0 0.0
  %2496 = vmatprep.subr.mxu0 0.0
  %2497 = vmatpush1.msra.mxu0 0.0
  %2498 = vmatprep.subr.mxu0 0.0
  %2499 = vmatpush1.msra.mxu0 0.0
  %2500 = vmatprep.subr.mxu0 0.0
  %2501 = vmatpush1.msra.mxu0 0.0
  %2502 = vmatprep.subr.mxu0 0.0
  %2503 = vmatpush1.msra.mxu0 0.0
  %2504 = vmatprep.subr.mxu0 0.0
  %2505 = vmatpush1.msra.mxu0 0.0
  %2506 = vmatprep.subr.mxu0 0.0
  %2507 = vmatpush1.msra.mxu0 0.0
  %2508 = vmatprep.subr.mxu0 0.0
  %2509 = vmatpush1.msra.mxu0 0.0
  %2510 = vmatprep.subr.mxu0 0.0
  %2511 = vmatpush1.msra.mxu0 0.0
  %2512 = vmatprep.subr.mxu0 0.0
  %2513 = vmatpush1.msra.mxu0 0.0
  %2514 = vmatprep.subr.mxu0 0.0
  %2515 = vmatpush1.msra.mxu0 0.0
  %2516 = vmatprep.subr.mxu0 0.0
  %2517 = vmatpush1.msra.mxu0 0.0
  %2518 = vmatprep.subr.mxu0 0.0
  %2519 = vmatpush1.msra.mxu0 0.0
  %2520 = vmatprep.subr.mxu0 0.0
  %2521 = vmatpush1.msra.mxu0 0.0
  %2522 = vmatprep.subr.mxu0 0.0
  %2523 = vmatpush1.msra.mxu0 0.0
  %2524 = vmatprep.subr.mxu0 0.0
  %2525 = vmatpush1.msra.mxu0 0.0
  %2526 = vmatprep.subr.mxu0 0.0
  %2527 = vmatpush1.msra.mxu0 0.0
  %2528 = vmatprep.subr.mxu0 0.0
  %2529 = vmatpush1.msra.mxu0 0.0
  %2530 = vmatprep.subr.mxu0 0.0
  %2531 = vmatpush1.msra.mxu0 0.0
  %2532 = vmatprep.subr.mxu0 0.0
  %2533 = vmatpush1.msra.mxu0 0.0
  %2534 = vmatprep.subr.mxu0 0.0
  %2535 = vmatpush1.msra.mxu0 0.0
  %2536 = vmatprep.subr.mxu0 0.0
  %2537 = vmatpush1.msra.mxu0 0.0
  %2538 = vmatprep.subr.mxu0 0.0
  %2539 = vmatpush1.msra.mxu0 0.0
  %2540 = vmatprep.subr.mxu0 0.0
  %2541 = vmatpush1.msra.mxu0 0.0
  %2542 = vmatprep.subr.mxu0 0.0
  %2543 = vmatpush1.msra.mxu0 0.0
  %2544 = vmatprep.subr.mxu0 0.0
  %2545 = vmatpush1.msra.mxu0 0.0
  %2546 = vmatprep.subr.mxu0 0.0
  %2547 = vmatpush1.msra.mxu0 0.0
  %2548 = vmatprep.subr.mxu0 0.0
  %2549 = vmatpush1.msra.mxu0 0.0
  %2550 = vmatprep.mubr.f32.mxu0 0.0
  %2551 = vmatmul.mubr.f32.gmra.mrb[0].mxu0 %v2318
  %v2552 = vpop.f32.mrb[0].mxu0
  %v2553 = vadd.f32 %v2484, %v2552
  %v2554 = vpop.f32.mrb[0].mxu0
  %2555 = vdwg.mxu0
  %v2557 = vsel %vm353, %v2387, 0
  %v2560 = vsel %vm353, %v2470, 0
  %2562 = vmatprep.subr.mxu0 0.0
  %2563 = vmatpush1.xpose.msra.mxu0 %v2560
  %2564 = vmatprep.subr.mxu0 0.0
  %2565 = vmatpush1.xpose.msra.mxu0 0.0
  %2566 = vmatprep.subr.mxu0 0.0
  %2567 = vmatpush1.xpose.msra.mxu0 0.0
  %2568 = vmatprep.subr.mxu0 0.0
  %2569 = vmatpush1.xpose.msra.mxu0 0.0
  %2570 = vmatprep.subr.mxu0 0.0
  %2571 = vmatpush1.xpose.msra.mxu0 0.0
  %2572 = vmatprep.subr.mxu0 0.0
  %2573 = vmatpush1.xpose.msra.mxu0 0.0
  %2574 = vmatprep.subr.mxu0 0.0
  %2575 = vmatpush1.xpose.msra.mxu0 0.0
  %2576 = vmatprep.subr.mxu0 0.0
  %2577 = vmatpush1.xpose.msra.mxu0 0.0
  %2578 = vmatprep.subr.mxu0 0.0
  %2579 = vmatpush1.xpose.msra.mxu0 0.0
  %2580 = vmatprep.subr.mxu0 0.0
  %2581 = vmatpush1.xpose.msra.mxu0 0.0
  %2582 = vmatprep.subr.mxu0 0.0
  %2583 = vmatpush1.xpose.msra.mxu0 0.0
  %2584 = vmatprep.subr.mxu0 0.0
  %2585 = vmatpush1.xpose.msra.mxu0 0.0
  %2586 = vmatprep.subr.mxu0 0.0
  %2587 = vmatpush1.xpose.msra.mxu0 0.0
  %2588 = vmatprep.subr.mxu0 0.0
  %2589 = vmatpush1.xpose.msra.mxu0 0.0
  %2590 = vmatprep.subr.mxu0 0.0
  %2591 = vmatpush1.xpose.msra.mxu0 0.0
  %2592 = vmatprep.subr.mxu0 0.0
  %2593 = vmatpush1.xpose.msra.mxu0 0.0
  %2594 = vmatprep.subr.mxu0 0.0
  %2595 = vmatpush1.xpose.msra.mxu0 0.0
  %2596 = vmatprep.subr.mxu0 0.0
  %2597 = vmatpush1.xpose.msra.mxu0 0.0
  %2598 = vmatprep.subr.mxu0 0.0
  %2599 = vmatpush1.xpose.msra.mxu0 0.0
  %2600 = vmatprep.subr.mxu0 0.0
  %2601 = vmatpush1.xpose.msra.mxu0 0.0
  %2602 = vmatprep.subr.mxu0 0.0
  %2603 = vmatpush1.xpose.msra.mxu0 0.0
  %2604 = vmatprep.subr.mxu0 0.0
  %2605 = vmatpush1.xpose.msra.mxu0 0.0
  %2606 = vmatprep.subr.mxu0 0.0
  %2607 = vmatpush1.xpose.msra.mxu0 0.0
  %2608 = vmatprep.subr.mxu0 0.0
  %2609 = vmatpush1.xpose.msra.mxu0 0.0
  %2610 = vmatprep.subr.mxu0 0.0
  %2611 = vmatpush1.xpose.msra.mxu0 0.0
  %2612 = vmatprep.subr.mxu0 0.0
  %2613 = vmatpush1.xpose.msra.mxu0 0.0
  %2614 = vmatprep.subr.mxu0 0.0
  %2615 = vmatpush1.xpose.msra.mxu0 0.0
  %2616 = vmatprep.subr.mxu0 0.0
  %2617 = vmatpush1.xpose.msra.mxu0 0.0
  %2618 = vmatprep.subr.mxu0 0.0
  %2619 = vmatpush1.xpose.msra.mxu0 0.0
  %2620 = vmatprep.subr.mxu0 0.0
  %2621 = vmatpush1.xpose.msra.mxu0 0.0
  %2622 = vmatprep.subr.mxu0 0.0
  %2623 = vmatpush1.xpose.msra.mxu0 0.0
  %2624 = vmatprep.subr.mxu0 0.0
  %2625 = vmatpush1.xpose.msra.mxu0 0.0
  %2626 = vmatprep.mubr.f32.mxu0 0.0
  %2627 = vmatmul.mubr.f32.gmra.mrb[0].mxu0 %v2557
  %v2628 = vpop.f32.mrb[0].mxu0
  %v2629 = vadd.f32 0.0, %v2628
  %v2630 = vpop.f32.mrb[0].mxu0
  %2631 = vdwg.mxu0
  %v2632 = vmul.f32 %v2629, 0.35355338
  %v2633 = vadd.f32 %v2632, %v434
  %v2634 = vsel %vm353, %v2633, -inf
  %2635 = vmax.xlane.f32.xlu0 %v2634
  %v2636 = vpop.xlane.xlu0 %2635
  %v2637 = vsub.f32 %v2633, %v2636
  %v2638 = vmul.f32 %v2637, 1.442695
  %v2639 = vpow.pop %v2638
  %v2640 = vsel %vm353, %v2639, 0.0
  %2641 = vadd.xlane.f32.xlu0 %v2640
  %v2642 = vpop.xlane.xlu0 %2641
  %v2643 = vrcp.pop %v2642
  %v2644 = vmul.f32 %v2639, %v2643
  %v2646 = vsel %vm353, %v2644, 0
  %2648 = vmatprep.subr.mxu0 0.0
  %2649 = vmatpush1.msra.mxu0 %v2553
  %2650 = vmatprep.subr.mxu0 0.0
  %2651 = vmatpush1.msra.mxu0 0.0
  %2652 = vmatprep.subr.mxu0 0.0
  %2653 = vmatpush1.msra.mxu0 0.0
  %2654 = vmatprep.subr.mxu0 0.0
  %2655 = vmatpush1.msra.mxu0 0.0
  %2656 = vmatprep.subr.mxu0 0.0
  %2657 = vmatpush1.msra.mxu0 0.0
  %2658 = vmatprep.subr.mxu0 0.0
  %2659 = vmatpush1.msra.mxu0 0.0
  %2660 = vmatprep.subr.mxu0 0.0
  %2661 = vmatpush1.msra.mxu0 0.0
  %2662 = vmatprep.subr.mxu0 0.0
  %2663 = vmatpush1.msra.mxu0 0.0
  %2664 = vmatprep.subr.mxu0 0.0
  %2665 = vmatpush1.msra.mxu0 0.0
  %2666 = vmatprep.subr.mxu0 0.0
  %2667 = vmatpush1.msra.mxu0 0.0
  %2668 = vmatprep.subr.mxu0 0.0
  %2669 = vmatpush1.msra.mxu0 0.0
  %2670 = vmatprep.subr.mxu0 0.0
  %2671 = vmatpush1.msra.mxu0 0.0
  %2672 = vmatprep.subr.mxu0 0.0
  %2673 = vmatpush1.msra.mxu0 0.0
  %2674 = vmatprep.subr.mxu0 0.0
  %2675 = vmatpush1.msra.mxu0 0.0
  %2676 = vmatprep.subr.mxu0 0.0
  %2677 = vmatpush1.msra.mxu0 0.0
  %2678 = vmatprep.subr.mxu0 0.0
  %2679 = vmatpush1.msra.mxu0 0.0
  %2680 = vmatprep.subr.mxu0 0.0
  %2681 = vmatpush1.msra.mxu0 0.0
  %2682 = vmatprep.subr.mxu0 0.0
  %2683 = vmatpush1.msra.mxu0 0.0
  %2684 = vmatprep.subr.mxu0 0.0
  %2685 = vmatpush1.msra.mxu0 0.0
  %2686 = vmatprep.subr.mxu0 0.0
  %2687 = vmatpush1.msra.mxu0 0.0
  %2688 = vmatprep.subr.mxu0 0.0
  %2689 = vmatpush1.msra.mxu0 0.0
  %2690 = vmatprep.subr.mxu0 0.0
  %2691 = vmatpush1.msra.mxu0 0.0
  %2692 = vmatprep.subr.mxu0 0.0
  %2693 = vmatpush1.msra.mxu0 0.0
  %2694 = vmatprep.subr.mxu0 0.0
  %2695 = vmatpush1.msra.mxu0 0.0
  %2696 = vmatprep.subr.mxu0 0.0
  %2697 = vmatpush1.msra.mxu0 0.0
  %2698 = vmatprep.subr.mxu0 0.0
  %2699 = vmatpush1.msra.mxu0 0.0
  %2700 = vmatprep.subr.mxu0 0.0
  %2701 = vmatpush1.msra.mxu0 0.0
  %2702 = vmatprep.subr.mxu0 0.0
  %2703 = vmatpush1.msra.mxu0 0.0
  %2704 = vmatprep.subr.mxu0 0.0
  %2705 = vmatpush1.msra.mxu0 0.0
  %2706 = vmatprep.subr.mxu0 0.0
  %2707 = vmatpush1.msra.mxu0 0.0
  %2708 = vmatprep.subr.mxu0 0.0
  %2709 = vmatpush1.msra.mxu0 0.0
  %2710 = vmatprep.subr.mxu0 0.0
  %2711 = vmatpush1.msra.mxu0 0.0
  %2712 = vmatprep.mubr.f32.mxu0 0.0
  %2713 = vmatmul.mubr.f32.gmra.mrb[0].mxu0 %v2646
  %v2714 = vpop.f32.mrb[0].mxu0
  %v2715 = vadd.f32 0.0, %v2714
  %v2716 = vpop.f32.mrb[0].mxu0
  %2717 = vdwg.mxu0
  %s2718 = scalar_lea.vmem %s4, 32
  %v2719 = vld [vmem:[%s2718] sm:$0xff]
  %s2720 = scalar_lea.vmem %s2, 416
  %v2721 = vld [vmem:[%s2720] sm:$0xff]
  %v2722 = vld [vmem:[%s2720 + $0x8] sm:$0xff]
  %v2723 = vld [vmem:[%s2720 + $0x10] sm:$0xff]
  %v2724 = vld [vmem:[%s2720 + $0x18] sm:$0xff]
  %s2725 = scalar_lea.vmem %s3, 13
  %v2726 = vld [vmem:[%s2725] sm:$0x1]
  %v2728 = vlaneseq
  %v2729 = vshrl.u32 %v2728, 7
  %v2730 = vsub.s32 0, %v2729
  %v2731 = vrot.slane %v2726, %v2730
  %2733 = vmatprep.subr.mxu0 0.0
  %2734 = vmatpush1.msra.mxu0 %v2721
  %2735 = vmatprep.subr.mxu0 0.0
  %2736 = vmatpush1.msra.mxu0 %v2722
  %2737 = vmatprep.subr.mxu0 0.0
  %2738 = vmatpush1.msra.mxu0 %v2723
  %2739 = vmatprep.subr.mxu0 0.0
  %2740 = vmatpush1.msra.mxu0 %v2724
  %2741 = vmatprep.subr.mxu0 0.0
  %2742 = vmatpush1.msra.mxu0 0.0
  %2743 = vmatprep.subr.mxu0 0.0
  %2744 = vmatpush1.msra.mxu0 0.0
  %2745 = vmatprep.subr.mxu0 0.0
  %2746 = vmatpush1.msra.mxu0 0.0
  %2747 = vmatprep.subr.mxu0 0.0
  %2748 = vmatpush1.msra.mxu0 0.0
  %2749 = vmatprep.subr.mxu0 0.0
  %2750 = vmatpush1.msra.mxu0 0.0
  %2751 = vmatprep.subr.mxu0 0.0
  %2752 = vmatpush1.msra.mxu0 0.0
  %2753 = vmatprep.subr.mxu0 0.0
  %2754 = vmatpush1.msra.mxu0 0.0
  %2755 = vmatprep.subr.mxu0 0.0
  %2756 = vmatpush1.msra.mxu0 0.0
  %2757 = vmatprep.subr.mxu0 0.0
  %2758 = vmatpush1.msra.mxu0 0.0
  %2759 = vmatprep.subr.mxu0 0.0
  %2760 = vmatpush1.msra.mxu0 0.0
  %2761 = vmatprep.subr.mxu0 0.0
  %2762 = vmatpush1.msra.mxu0 0.0
  %2763 = vmatprep.subr.mxu0 0.0
  %2764 = vmatpush1.msra.mxu0 0.0
  %2765 = vmatprep.subr.mxu0 0.0
  %2766 = vmatpush1.msra.mxu0 0.0
  %2767 = vmatprep.subr.mxu0 0.0
  %2768 = vmatpush1.msra.mxu0 0.0
  %2769 = vmatprep.subr.mxu0 0.0
  %2770 = vmatpush1.msra.mxu0 0.0
  %2771 = vmatprep.subr.mxu0 0.0
  %2772 = vmatpush1.msra.mxu0 0.0
  %2773 = vmatprep.subr.mxu0 0.0
  %2774 = vmatpush1.msra.mxu0 0.0
  %2775 = vmatprep.subr.mxu0 0.0
  %2776 = vmatpush1.msra.mxu0 0.0
  %2777 = vmatprep.subr.mxu0 0.0
  %2778 = vmatpush1.msra.mxu0 0.0
  %2779 = vmatprep.subr.mxu0 0.0
  %2780 = vmatpush1.msra.mxu0 0.0
  %2781 = vmatprep.subr.mxu0 0.0
  %2782 = vmatpush1.msra.mxu0 0.0
  %2783 = vmatprep.subr.mxu0 0.0
  %2784 = vmatpush1.msra.mxu0 0.0
  %2785 = vmatprep.subr.mxu0 0.0
  %2786 = vmatpush1.msra.mxu0 0.0
  %2787 = vmatprep.subr.mxu0 0.0
  %2788 = vmatpush1.msra.mxu0 0.0
  %2789 = vmatprep.subr.mxu0 0.0
  %2790 = vmatpush1.msra.mxu0 0.0
  %2791 = vmatprep.subr.mxu0 0.0
  %2792 = vmatpush1.msra.mxu0 0.0
  %2793 = vmatprep.subr.mxu0 0.0
  %2794 = vmatpush1.msra.mxu0 0.0
  %2795 = vmatprep.subr.mxu0 0.0
  %2796 = vmatpush1.msra.mxu0 0.0
  %2797 = vmatprep.mubr.f32.mxu0 0.0
  %2798 = vmatmul.mubr.f32.gmra.mrb[0].mxu0 %v2318
  %v2799 = vpop.f32.mrb[0].mxu0
  %v2800 = vadd.f32 %v2731, %v2799
  %v2801 = vpop.f32.mrb[0].mxu0
  %2802 = vdwg.mxu0
  %s2803 = scalar_lea.vmem %s2, 544
  %v2804 = vld [vmem:[%s2803] sm:$0xff]
  %v2805 = vld [vmem:[%s2803 + $0x8] sm:$0xff]
  %v2806 = vld [vmem:[%s2803 + $0x10] sm:$0xff]
  %v2807 = vld [vmem:[%s2803 + $0x18] sm:$0xff]
  %s2808 = scalar_lea.vmem %s3, 17
  %v2809 = vld [vmem:[%s2808] sm:$0x1]
  %v2811 = vlaneseq
  %v2812 = vshrl.u32 %v2811, 7
  %v2813 = vsub.s32 0, %v2812
  %v2814 = vrot.slane %v2809, %v2813
  %2816 = vmatprep.subr.mxu0 0.0
  %2817 = vmatpush1.msra.mxu0 %v2804
  %2818 = vmatprep.subr.mxu0 0.0
  %2819 = vmatpush1.msra.mxu0 %v2805
  %2820 = vmatprep.subr.mxu0 0.0
  %2821 = vmatpush1.msra.mxu0 %v2806
  %2822 = vmatprep.subr.mxu0 0.0
  %2823 = vmatpush1.msra.mxu0 %v2807
  %2824 = vmatprep.subr.mxu0 0.0
  %2825 = vmatpush1.msra.mxu0 0.0
  %2826 = vmatprep.subr.mxu0 0.0
  %2827 = vmatpush1.msra.mxu0 0.0
  %2828 = vmatprep.subr.mxu0 0.0
  %2829 = vmatpush1.msra.mxu0 0.0
  %2830 = vmatprep.subr.mxu0 0.0
  %2831 = vmatpush1.msra.mxu0 0.0
  %2832 = vmatprep.subr.mxu0 0.0
  %2833 = vmatpush1.msra.mxu0 0.0
  %2834 = vmatprep.subr.mxu0 0.0
  %2835 = vmatpush1.msra.mxu0 0.0
  %2836 = vmatprep.subr.mxu0 0.0
  %2837 = vmatpush1.msra.mxu0 0.0
  %2838 = vmatprep.subr.mxu0 0.0
  %2839 = vmatpush1.msra.mxu0 0.0
  %2840 = vmatprep.subr.mxu0 0.0
  %2841 = vmatpush1.msra.mxu0 0.0
  %2842 = vmatprep.subr.mxu0 0.0
  %2843 = vmatpush1.msra.mxu0 0.0
  %2844 = vmatprep.subr.mxu0 0.0
  %2845 = vmatpush1.msra.mxu0 0.0
  %2846 = vmatprep.subr.mxu0 0.0
  %2847 = vmatpush1.msra.mxu0 0.0
  %2848 = vmatprep.subr.mxu0 0.0
  %2849 = vmatpush1.msra.mxu0 0.0
  %2850 = vmatprep.subr.mxu0 0.0
  %2851 = vmatpush1.msra.mxu0 0.0
  %2852 = vmatprep.subr.mxu0 0.0
  %2853 = vmatpush1.msra.mxu0 0.0
  %2854 = vmatprep.subr.mxu0 0.0
  %2855 = vmatpush1.msra.mxu0 0.0
  %2856 = vmatprep.subr.mxu0 0.0
  %2857 = vmatpush1.msra.mxu0 0.0
  %2858 = vmatprep.subr.mxu0 0.0
  %2859 = vmatpush1.msra.mxu0 0.0
  %2860 = vmatprep.subr.mxu0 0.0
  %2861 = vmatpush1.msra.mxu0 0.0
  %2862 = vmatprep.subr.mxu0 0.0
  %2863 = vmatpush1.msra.mxu0 0.0
  %2864 = vmatprep.subr.mxu0 0.0
  %2865 = vmatpush1.msra.mxu0 0.0
  %2866 = vmatprep.subr.mxu0 0.0
  %2867 = vmatpush1.msra.mxu0 0.0
  %2868 = vmatprep.subr.mxu0 0.0
  %2869 = vmatpush1.msra.mxu0 0.0
  %2870 = vmatprep.subr.mxu0 0.0
  %2871 = vmatpush1.msra.mxu0 0.0
  %2872 = vmatprep.subr.mxu0 0.0
  %2873 = vmatpush1.msra.mxu0 0.0
  %2874 = vmatprep.subr.mxu0 0.0
  %2875 = vmatpush1.msra.mxu0 0.0
  %2876 = vmatprep.subr.mxu0 0.0
  %2877 = vmatpush1.msra.mxu0 0.0
  %2878 = vmatprep.subr.mxu0 0.0
  %2879 = vmatpush1.msra.mxu0 0.0
  %2880 = vmatprep.mubr.f32.mxu0 0.0
  %2881 = vmatmul.mubr.f32.gmra.mrb[0].mxu0 %v2318
  %v2882 = vpop.f32.mrb[0].mxu0
  %v2883 = vadd.f32 %v2814, %v2882
  %v2884 = vpop.f32.mrb[0].mxu0
  %2885 = vdwg.mxu0
  %s2886 = scalar_lea.vmem %s2, 672
  %v2887 = vld [vmem:[%s2886] sm:$0xff]
  %v2888 = vld [vmem:[%s2886 + $0x8] sm:$0xff]
  %v2889 = vld [vmem:[%s2886 + $0x10] sm:$0xff]
  %v2890 = vld [vmem:[%s2886 + $0x18] sm:$0xff]
  %s2891 = scalar_lea.vmem %s3, 21
  %v2892 = vld [vmem:[%s2891] sm:$0x1]
  %v2894 = vlaneseq
  %v2895 = vshrl.u32 %v2894, 7
  %v2896 = vsub.s32 0, %v2895
  %v2897 = vrot.slane %v2892, %v2896
  %2899 = vmatprep.subr.mxu0 0.0
  %2900 = vmatpush1.msra.mxu0 %v2887
  %2901 = vmatprep.subr.mxu0 0.0
  %2902 = vmatpush1.msra.mxu0 %v2888
  %2903 = vmatprep.subr.mxu0 0.0
  %2904 = vmatpush1.msra.mxu0 %v2889
  %2905 = vmatprep.subr.mxu0 0.0
  %2906 = vmatpush1.msra.mxu0 %v2890
  %2907 = vmatprep.subr.mxu0 0.0
  %2908 = vmatpush1.msra.mxu0 0.0
  %2909 = vmatprep.subr.mxu0 0.0
  %2910 = vmatpush1.msra.mxu0 0.0
  %2911 = vmatprep.subr.mxu0 0.0
  %2912 = vmatpush1.msra.mxu0 0.0
  %2913 = vmatprep.subr.mxu0 0.0
  %2914 = vmatpush1.msra.mxu0 0.0
  %2915 = vmatprep.subr.mxu0 0.0
  %2916 = vmatpush1.msra.mxu0 0.0
  %2917 = vmatprep.subr.mxu0 0.0
  %2918 = vmatpush1.msra.mxu0 0.0
  %2919 = vmatprep.subr.mxu0 0.0
  %2920 = vmatpush1.msra.mxu0 0.0
  %2921 = vmatprep.subr.mxu0 0.0
  %2922 = vmatpush1.msra.mxu0 0.0
  %2923 = vmatprep.subr.mxu0 0.0
  %2924 = vmatpush1.msra.mxu0 0.0
  %2925 = vmatprep.subr.mxu0 0.0
  %2926 = vmatpush1.msra.mxu0 0.0
  %2927 = vmatprep.subr.mxu0 0.0
  %2928 = vmatpush1.msra.mxu0 0.0
  %2929 = vmatprep.subr.mxu0 0.0
  %2930 = vmatpush1.msra.mxu0 0.0
  %2931 = vmatprep.subr.mxu0 0.0
  %2932 = vmatpush1.msra.mxu0 0.0
  %2933 = vmatprep.subr.mxu0 0.0
  %2934 = vmatpush1.msra.mxu0 0.0
  %2935 = vmatprep.subr.mxu0 0.0
  %2936 = vmatpush1.msra.mxu0 0.0
  %2937 = vmatprep.subr.mxu0 0.0
  %2938 = vmatpush1.msra.mxu0 0.0
  %2939 = vmatprep.subr.mxu0 0.0
  %2940 = vmatpush1.msra.mxu0 0.0
  %2941 = vmatprep.subr.mxu0 0.0
  %2942 = vmatpush1.msra.mxu0 0.0
  %2943 = vmatprep.subr.mxu0 0.0
  %2944 = vmatpush1.msra.mxu0 0.0
  %2945 = vmatprep.subr.mxu0 0.0
  %2946 = vmatpush1.msra.mxu0 0.0
  %2947 = vmatprep.subr.mxu0 0.0
  %2948 = vmatpush1.msra.mxu0 0.0
  %2949 = vmatprep.subr.mxu0 0.0
  %2950 = vmatpush1.msra.mxu0 0.0
  %2951 = vmatprep.subr.mxu0 0.0
  %2952 = vmatpush1.msra.mxu0 0.0
  %2953 = vmatprep.subr.mxu0 0.0
  %2954 = vmatpush1.msra.mxu0 0.0
  %2955 = vmatprep.subr.mxu0 0.0
  %2956 = vmatpush1.msra.mxu0 0.0
  %2957 = vmatprep.subr.mxu0 0.0
  %2958 = vmatpush1.msra.mxu0 0.0
  %2959 = vmatprep.subr.mxu0 0.0
  %2960 = vmatpush1.msra.mxu0 0.0
  %2961 = vmatprep.subr.mxu0 0.0
  %2962 = vmatpush1.msra.mxu0 0.0
  %2963 = vmatprep.mubr.f32.mxu0 0.0
  %2964 = vmatmul.mubr.f32.gmra.mrb[0].mxu0 %v2318
  %v2965 = vpop.f32.mrb[0].mxu0
  %v2966 = vadd.f32 %v2897, %v2965
  %v2967 = vpop.f32.mrb[0].mxu0
  %2968 = vdwg.mxu0
  %v2970 = vsel %vm353, %v2800, 0
  %v2973 = vsel %vm353, %v2883, 0
  %2975 = vmatprep.subr.mxu0 0.0
  %2976 = vmatpush1.xpose.msra.mxu0 %v2973
  %2977 = vmatprep.subr.mxu0 0.0
  %2978 = vmatpush1.xpose.msra.mxu0 0.0
  %2979 = vmatprep.subr.mxu0 0.0
  %2980 = vmatpush1.xpose.msra.mxu0 0.0
  %2981 = vmatprep.subr.mxu0 0.0
  %2982 = vmatpush1.xpose.msra.mxu0 0.0
  %2983 = vmatprep.subr.mxu0 0.0
  %2984 = vmatpush1.xpose.msra.mxu0 0.0
  %2985 = vmatprep.subr.mxu0 0.0
  %2986 = vmatpush1.xpose.msra.mxu0 0.0
  %2987 = vmatprep.subr.mxu0 0.0
  %2988 = vmatpush1.xpose.msra.mxu0 0.0
  %2989 = vmatprep.subr.mxu0 0.0
  %2990 = vmatpush1.xpose.msra.mxu0 0.0
  %2991 = vmatprep.subr.mxu0 0.0
  %2992 = vmatpush1.xpose.msra.mxu0 0.0
  %2993 = vmatprep.subr.mxu0 0.0
  %2994 = vmatpush1.xpose.msra.mxu0 0.0
  %2995 = vmatprep.subr.mxu0 0.0
  %2996 = vmatpush1.xpose.msra.mxu0 0.0
  %2997 = vmatprep.subr.mxu0 0.0
  %2998 = vmatpush1.xpose.msra.mxu0 0.0
  %2999 = vmatprep.subr.mxu0 0.0
  %3000 = vmatpush1.xpose.msra.mxu0 0.0
  %3001 = vmatprep.subr.mxu0 0.0
  %3002 = vmatpush1.xpose.msra.mxu0 0.0
  %3003 = vmatprep.subr.mxu0 0.0
  %3004 = vmatpush1.xpose.msra.mxu0 0.0
  %3005 = vmatprep.subr.mxu0 0.0
  %3006 = vmatpush1.xpose.msra.mxu0 0.0
  %3007 = vmatprep.subr.mxu0 0.0
  %3008 = vmatpush1.xpose.msra.mxu0 0.0
  %3009 = vmatprep.subr.mxu0 0.0
  %3010 = vmatpush1.xpose.msra.mxu0 0.0
  %3011 = vmatprep.subr.mxu0 0.0
  %3012 = vmatpush1.xpose.msra.mxu0 0.0
  %3013 = vmatprep.subr.mxu0 0.0
  %3014 = vmatpush1.xpose.msra.mxu0 0.0
  %3015 = vmatprep.subr.mxu0 0.0
  %3016 = vmatpush1.xpose.msra.mxu0 0.0
  %3017 = vmatprep.subr.mxu0 0.0
  %3018 = vmatpush1.xpose.msra.mxu0 0.0
  %3019 = vmatprep.subr.mxu0 0.0
  %3020 = vmatpush1.xpose.msra.mxu0 0.0
  %3021 = vmatprep.subr.mxu0 0.0
  %3022 = vmatpush1.xpose.msra.mxu0 0.0
  %3023 = vmatprep.subr.mxu0 0.0
  %3024 = vmatpush1.xpose.msra.mxu0 0.0
  %3025 = vmatprep.subr.mxu0 0.0
  %3026 = vmatpush1.xpose.msra.mxu0 0.0
  %3027 = vmatprep.subr.mxu0 0.0
  %3028 = vmatpush1.xpose.msra.mxu0 0.0
  %3029 = vmatprep.subr.mxu0 0.0
  %3030 = vmatpush1.xpose.msra.mxu0 0.0
  %3031 = vmatprep.subr.mxu0 0.0
  %3032 = vmatpush1.xpose.msra.mxu0 0.0
  %3033 = vmatprep.subr.mxu0 0.0
  %3034 = vmatpush1.xpose.msra.mxu0 0.0
  %3035 = vmatprep.subr.mxu0 0.0
  %3036 = vmatpush1.xpose.msra.mxu0 0.0
  %3037 = vmatprep.subr.mxu0 0.0
  %3038 = vmatpush1.xpose.msra.mxu0 0.0
  %3039 = vmatprep.mubr.f32.mxu0 0.0
  %3040 = vmatmul.mubr.f32.gmra.mrb[0].mxu0 %v2970
  %v3041 = vpop.f32.mrb[0].mxu0
  %v3042 = vadd.f32 0.0, %v3041
  %v3043 = vpop.f32.mrb[0].mxu0
  %3044 = vdwg.mxu0
  %v3045 = vmul.f32 %v3042, 0.35355338
  %v3046 = vadd.f32 %v3045, %v434
  %v3047 = vsel %vm353, %v3046, -inf
  %3048 = vmax.xlane.f32.xlu0 %v3047
  %v3049 = vpop.xlane.xlu0 %3048
  %v3050 = vsub.f32 %v3046, %v3049
  %v3051 = vmul.f32 %v3050, 1.442695
  %v3052 = vpow.pop %v3051
  %v3053 = vsel %vm353, %v3052, 0.0
  %3054 = vadd.xlane.f32.xlu0 %v3053
  %v3055 = vpop.xlane.xlu0 %3054
  %v3056 = vrcp.pop %v3055
  %v3057 = vmul.f32 %v3052, %v3056
  %v3059 = vsel %vm353, %v3057, 0
  %3061 = vmatprep.subr.mxu0 0.0
  %3062 = vmatpush1.msra.mxu0 %v2966
  %3063 = vmatprep.subr.mxu0 0.0
  %3064 = vmatpush1.msra.mxu0 0.0
  %3065 = vmatprep.subr.mxu0 0.0
  %3066 = vmatpush1.msra.mxu0 0.0
  %3067 = vmatprep.subr.mxu0 0.0
  %3068 = vmatpush1.msra.mxu0 0.0
  %3069 = vmatprep.subr.mxu0 0.0
  %3070 = vmatpush1.msra.mxu0 0.0
  %3071 = vmatprep.subr.mxu0 0.0
  %3072 = vmatpush1.msra.mxu0 0.0
  %3073 = vmatprep.subr.mxu0 0.0
  %3074 = vmatpush1.msra.mxu0 0.0
  %3075 = vmatprep.subr.mxu0 0.0
  %3076 = vmatpush1.msra.mxu0 0.0
  %3077 = vmatprep.subr.mxu0 0.0
  %3078 = vmatpush1.msra.mxu0 0.0
  %3079 = vmatprep.subr.mxu0 0.0
  %3080 = vmatpush1.msra.mxu0 0.0
  %3081 = vmatprep.subr.mxu0 0.0
  %3082 = vmatpush1.msra.mxu0 0.0
  %3083 = vmatprep.subr.mxu0 0.0
  %3084 = vmatpush1.msra.mxu0 0.0
  %3085 = vmatprep.subr.mxu0 0.0
  %3086 = vmatpush1.msra.mxu0 0.0
  %3087 = vmatprep.subr.mxu0 0.0
  %3088 = vmatpush1.msra.mxu0 0.0
  %3089 = vmatprep.subr.mxu0 0.0
  %3090 = vmatpush1.msra.mxu0 0.0
  %3091 = vmatprep.subr.mxu0 0.0
  %3092 = vmatpush1.msra.mxu0 0.0
  %3093 = vmatprep.subr.mxu0 0.0
  %3094 = vmatpush1.msra.mxu0 0.0
  %3095 = vmatprep.subr.mxu0 0.0
  %3096 = vmatpush1.msra.mxu0 0.0
  %3097 = vmatprep.subr.mxu0 0.0
  %3098 = vmatpush1.msra.mxu0 0.0
  %3099 = vmatprep.subr.mxu0 0.0
  %3100 = vmatpush1.msra.mxu0 0.0
  %3101 = vmatprep.subr.mxu0 0.0
  %3102 = vmatpush1.msra.mxu0 0.0
  %3103 = vmatprep.subr.mxu0 0.0
  %3104 = vmatpush1.msra.mxu0 0.0
  %3105 = vmatprep.subr.mxu0 0.0
  %3106 = vmatpush1.msra.mxu0 0.0
  %3107 = vmatprep.subr.mxu0 0.0
  %3108 = vmatpush1.msra.mxu0 0.0
  %3109 = vmatprep.subr.mxu0 0.0
  %3110 = vmatpush1.msra.mxu0 0.0
  %3111 = vmatprep.subr.mxu0 0.0
  %3112 = vmatpush1.msra.mxu0 0.0
  %3113 = vmatprep.subr.mxu0 0.0
  %3114 = vmatpush1.msra.mxu0 0.0
  %3115 = vmatprep.subr.mxu0 0.0
  %3116 = vmatpush1.msra.mxu0 0.0
  %3117 = vmatprep.subr.mxu0 0.0
  %3118 = vmatpush1.msra.mxu0 0.0
  %3119 = vmatprep.subr.mxu0 0.0
  %3120 = vmatpush1.msra.mxu0 0.0
  %3121 = vmatprep.subr.mxu0 0.0
  %3122 = vmatpush1.msra.mxu0 0.0
  %3123 = vmatprep.subr.mxu0 0.0
  %3124 = vmatpush1.msra.mxu0 0.0
  %3125 = vmatprep.mubr.f32.mxu0 0.0
  %3126 = vmatmul.mubr.f32.gmra.mrb[0].mxu0 %v3059
  %v3127 = vpop.f32.mrb[0].mxu0
  %v3128 = vadd.f32 0.0, %v3127
  %v3129 = vpop.f32.mrb[0].mxu0
  %3130 = vdwg.mxu0
  %s3131 = scalar_lea.vmem %s4, 40
  %v3132 = vld [vmem:[%s3131] sm:$0xff]
  %v3134 = vsel %vm353, %v3128, 0
  %3136 = vmatprep.subr.mxu0 0.0
  %3137 = vmatpush1.msra.mxu0 %v3132
  %3138 = vmatprep.subr.mxu0 0.0
  %3139 = vmatpush1.msra.mxu0 0.0
  %3140 = vmatprep.subr.mxu0 0.0
  %3141 = vmatpush1.msra.mxu0 0.0
  %3142 = vmatprep.subr.mxu0 0.0
  %3143 = vmatpush1.msra.mxu0 0.0
  %3144 = vmatprep.subr.mxu0 0.0
  %3145 = vmatpush1.msra.mxu0 0.0
  %3146 = vmatprep.subr.mxu0 0.0
  %3147 = vmatpush1.msra.mxu0 0.0
  %3148 = vmatprep.subr.mxu0 0.0
  %3149 = vmatpush1.msra.mxu0 0.0
  %3150 = vmatprep.subr.mxu0 0.0
  %3151 = vmatpush1.msra.mxu0 0.0
  %3152 = vmatprep.subr.mxu0 0.0
  %3153 = vmatpush1.msra.mxu0 0.0
  %3154 = vmatprep.subr.mxu0 0.0
  %3155 = vmatpush1.msra.mxu0 0.0
  %3156 = vmatprep.subr.mxu0 0.0
  %3157 = vmatpush1.msra.mxu0 0.0
  %3158 = vmatprep.subr.mxu0 0.0
  %3159 = vmatpush1.msra.mxu0 0.0
  %3160 = vmatprep.subr.mxu0 0.0
  %3161 = vmatpush1.msra.mxu0 0.0
  %3162 = vmatprep.subr.mxu0 0.0
  %3163 = vmatpush1.msra.mxu0 0.0
  %3164 = vmatprep.subr.mxu0 0.0
  %3165 = vmatpush1.msra.mxu0 0.0
  %3166 = vmatprep.subr.mxu0 0.0
  %3167 = vmatpush1.msra.mxu0 0.0
  %3168 = vmatprep.subr.mxu0 0.0
  %3169 = vmatpush1.msra.mxu0 0.0
  %3170 = vmatprep.subr.mxu0 0.0
  %3171 = vmatpush1.msra.mxu0 0.0
  %3172 = vmatprep.subr.mxu0 0.0
  %3173 = vmatpush1.msra.mxu0 0.0
  %3174 = vmatprep.subr.mxu0 0.0
  %3175 = vmatpush1.msra.mxu0 0.0
  %3176 = vmatprep.subr.mxu0 0.0
  %3177 = vmatpush1.msra.mxu0 0.0
  %3178 = vmatprep.subr.mxu0 0.0
  %3179 = vmatpush1.msra.mxu0 0.0
  %3180 = vmatprep.subr.mxu0 0.0
  %3181 = vmatpush1.msra.mxu0 0.0
  %3182 = vmatprep.subr.mxu0 0.0
  %3183 = vmatpush1.msra.mxu0 0.0
  %3184 = vmatprep.subr.mxu0 0.0
  %3185 = vmatpush1.msra.mxu0 0.0
  %3186 = vmatprep.subr.mxu0 0.0
  %3187 = vmatpush1.msra.mxu0 0.0
  %3188 = vmatprep.subr.mxu0 0.0
  %3189 = vmatpush1.msra.mxu0 0.0
  %3190 = vmatprep.subr.mxu0 0.0
  %3191 = vmatpush1.msra.mxu0 0.0
  %3192 = vmatprep.subr.mxu0 0.0
  %3193 = vmatpush1.msra.mxu0 0.0
  %3194 = vmatprep.subr.mxu0 0.0
  %3195 = vmatpush1.msra.mxu0 0.0
  %3196 = vmatprep.subr.mxu0 0.0
  %3197 = vmatpush1.msra.mxu0 0.0
  %3198 = vmatprep.subr.mxu0 0.0
  %3199 = vmatpush1.msra.mxu0 0.0
  %3200 = vmatprep.mubr.f32.mxu0 0.0
  %3201 = vmatmul.mubr.f32.gmra.mrb[0].mxu0 %v3134
  %v3202 = vpop.f32.mrb[0].mxu0
  %v3203 = vadd.f32 0.0, %v3202
  %v3204 = vpop.f32.mrb[0].mxu0
  %3205 = vdwg.mxu0
  %v3207 = vsel %vm353, %v2715, 0
  %3209 = vmatprep.subr.mxu0 0.0
  %3210 = vmatpush1.msra.mxu0 %v2719
  %3211 = vmatprep.subr.mxu0 0.0
  %3212 = vmatpush1.msra.mxu0 0.0
  %3213 = vmatprep.subr.mxu0 0.0
  %3214 = vmatpush1.msra.mxu0 0.0
  %3215 = vmatprep.subr.mxu0 0.0
  %3216 = vmatpush1.msra.mxu0 0.0
  %3217 = vmatprep.subr.mxu0 0.0
  %3218 = vmatpush1.msra.mxu0 0.0
  %3219 = vmatprep.subr.mxu0 0.0
  %3220 = vmatpush1.msra.mxu0 0.0
  %3221 = vmatprep.subr.mxu0 0.0
  %3222 = vmatpush1.msra.mxu0 0.0
  %3223 = vmatprep.subr.mxu0 0.0
  %3224 = vmatpush1.msra.mxu0 0.0
  %3225 = vmatprep.subr.mxu0 0.0
  %3226 = vmatpush1.msra.mxu0 0.0
  %3227 = vmatprep.subr.mxu0 0.0
  %3228 = vmatpush1.msra.mxu0 0.0
  %3229 = vmatprep.subr.mxu0 0.0
  %3230 = vmatpush1.msra.mxu0 0.0
  %3231 = vmatprep.subr.mxu0 0.0
  %3232 = vmatpush1.msra.mxu0 0.0
  %3233 = vmatprep.subr.mxu0 0.0
  %3234 = vmatpush1.msra.mxu0 0.0
  %3235 = vmatprep.subr.mxu0 0.0
  %3236 = vmatpush1.msra.mxu0 0.0
  %3237 = vmatprep.subr.mxu0 0.0
  %3238 = vmatpush1.msra.mxu0 0.0
  %3239 = vmatprep.subr.mxu0 0.0
  %3240 = vmatpush1.msra.mxu0 0.0
  %3241 = vmatprep.subr.mxu0 0.0
  %3242 = vmatpush1.msra.mxu0 0.0
  %3243 = vmatprep.subr.mxu0 0.0
  %3244 = vmatpush1.msra.mxu0 0.0
  %3245 = vmatprep.subr.mxu0 0.0
  %3246 = vmatpush1.msra.mxu0 0.0
  %3247 = vmatprep.subr.mxu0 0.0
  %3248 = vmatpush1.msra.mxu0 0.0
  %3249 = vmatprep.subr.mxu0 0.0
  %3250 = vmatpush1.msra.mxu0 0.0
  %3251 = vmatprep.subr.mxu0 0.0
  %3252 = vmatpush1.msra.mxu0 0.0
  %3253 = vmatprep.subr.mxu0 0.0
  %3254 = vmatpush1.msra.mxu0 0.0
  %3255 = vmatprep.subr.mxu0 0.0
  %3256 = vmatpush1.msra.mxu0 0.0
  %3257 = vmatprep.subr.mxu0 0.0
  %3258 = vmatpush1.msra.mxu0 0.0
  %3259 = vmatprep.subr.mxu0 0.0
  %3260 = vmatpush1.msra.mxu0 0.0
  %3261 = vmatprep.subr.mxu0 0.0
  %3262 = vmatpush1.msra.mxu0 0.0
  %3263 = vmatprep.subr.mxu0 0.0
  %3264 = vmatpush1.msra.mxu0 0.0
  %3265 = vmatprep.subr.mxu0 0.0
  %3266 = vmatpush1.msra.mxu0 0.0
  %3267 = vmatprep.subr.mxu0 0.0
  %3268 = vmatpush1.msra.mxu0 0.0
  %3269 = vmatprep.subr.mxu0 0.0
  %3270 = vmatpush1.msra.mxu0 0.0
  %3271 = vmatprep.subr.mxu0 0.0
  %3272 = vmatpush1.msra.mxu0 0.0
  %3273 = vmatprep.mubr.f32.mxu0 0.0
  %3274 = vmatmul.mubr.f32.gmra.mrb[0].mxu0 %v3207
  %v3275 = vpop.f32.mrb[0].mxu0
  %v3276 = vadd.f32 %v3203, %v3275
  %v3277 = vpop.f32.mrb[0].mxu0
  %3278 = vdwg.mxu0
  %s3279 = scalar_lea.vmem %s2, 448
  %v3280 = vld [vmem:[%s3279] sm:$0xff]
  %v3281 = vld [vmem:[%s3279 + $0x8] sm:$0xff]
  %v3282 = vld [vmem:[%s3279 + $0x10] sm:$0xff]
  %v3283 = vld [vmem:[%s3279 + $0x18] sm:$0xff]
  %s3284 = scalar_lea.vmem %s3, 14
  %v3285 = vld [vmem:[%s3284] sm:$0x1]
  %v3287 = vlaneseq
  %v3288 = vshrl.u32 %v3287, 7
  %v3289 = vsub.s32 0, %v3288
  %v3290 = vrot.slane %v3285, %v3289
  %3292 = vmatprep.subr.mxu0 0.0
  %3293 = vmatpush1.msra.mxu0 %v3280
  %3294 = vmatprep.subr.mxu0 0.0
  %3295 = vmatpush1.msra.mxu0 %v3281
  %3296 = vmatprep.subr.mxu0 0.0
  %3297 = vmatpush1.msra.mxu0 %v3282
  %3298 = vmatprep.subr.mxu0 0.0
  %3299 = vmatpush1.msra.mxu0 %v3283
  %3300 = vmatprep.subr.mxu0 0.0
  %3301 = vmatpush1.msra.mxu0 0.0
  %3302 = vmatprep.subr.mxu0 0.0
  %3303 = vmatpush1.msra.mxu0 0.0
  %3304 = vmatprep.subr.mxu0 0.0
  %3305 = vmatpush1.msra.mxu0 0.0
  %3306 = vmatprep.subr.mxu0 0.0
  %3307 = vmatpush1.msra.mxu0 0.0
  %3308 = vmatprep.subr.mxu0 0.0
  %3309 = vmatpush1.msra.mxu0 0.0
  %3310 = vmatprep.subr.mxu0 0.0
  %3311 = vmatpush1.msra.mxu0 0.0
  %3312 = vmatprep.subr.mxu0 0.0
  %3313 = vmatpush1.msra.mxu0 0.0
  %3314 = vmatprep.subr.mxu0 0.0
  %3315 = vmatpush1.msra.mxu0 0.0
  %3316 = vmatprep.subr.mxu0 0.0
  %3317 = vmatpush1.msra.mxu0 0.0
  %3318 = vmatprep.subr.mxu0 0.0
  %3319 = vmatpush1.msra.mxu0 0.0
  %3320 = vmatprep.subr.mxu0 0.0
  %3321 = vmatpush1.msra.mxu0 0.0
  %3322 = vmatprep.subr.mxu0 0.0
  %3323 = vmatpush1.msra.mxu0 0.0
  %3324 = vmatprep.subr.mxu0 0.0
  %3325 = vmatpush1.msra.mxu0 0.0
  %3326 = vmatprep.subr.mxu0 0.0
  %3327 = vmatpush1.msra.mxu0 0.0
  %3328 = vmatprep.subr.mxu0 0.0
  %3329 = vmatpush1.msra.mxu0 0.0
  %3330 = vmatprep.subr.mxu0 0.0
  %3331 = vmatpush1.msra.mxu0 0.0
  %3332 = vmatprep.subr.mxu0 0.0
  %3333 = vmatpush1.msra.mxu0 0.0
  %3334 = vmatprep.subr.mxu0 0.0
  %3335 = vmatpush1.msra.mxu0 0.0
  %3336 = vmatprep.subr.mxu0 0.0
  %3337 = vmatpush1.msra.mxu0 0.0
  %3338 = vmatprep.subr.mxu0 0.0
  %3339 = vmatpush1.msra.mxu0 0.0
  %3340 = vmatprep.subr.mxu0 0.0
  %3341 = vmatpush1.msra.mxu0 0.0
  %3342 = vmatprep.subr.mxu0 0.0
  %3343 = vmatpush1.msra.mxu0 0.0
  %3344 = vmatprep.subr.mxu0 0.0
  %3345 = vmatpush1.msra.mxu0 0.0
  %3346 = vmatprep.subr.mxu0 0.0
  %3347 = vmatpush1.msra.mxu0 0.0
  %3348 = vmatprep.subr.mxu0 0.0
  %3349 = vmatpush1.msra.mxu0 0.0
  %3350 = vmatprep.subr.mxu0 0.0
  %3351 = vmatpush1.msra.mxu0 0.0
  %3352 = vmatprep.subr.mxu0 0.0
  %3353 = vmatpush1.msra.mxu0 0.0
  %3354 = vmatprep.subr.mxu0 0.0
  %3355 = vmatpush1.msra.mxu0 0.0
  %3356 = vmatprep.mubr.f32.mxu0 0.0
  %3357 = vmatmul.mubr.f32.gmra.mrb[0].mxu0 %v2318
  %v3358 = vpop.f32.mrb[0].mxu0
  %v3359 = vadd.f32 %v3290, %v3358
  %v3360 = vpop.f32.mrb[0].mxu0
  %3361 = vdwg.mxu0
  %s3362 = scalar_lea.vmem %s2, 576
  %v3363 = vld [vmem:[%s3362] sm:$0xff]
  %v3364 = vld [vmem:[%s3362 + $0x8] sm:$0xff]
  %v3365 = vld [vmem:[%s3362 + $0x10] sm:$0xff]
  %v3366 = vld [vmem:[%s3362 + $0x18] sm:$0xff]
  %s3367 = scalar_lea.vmem %s3, 18
  %v3368 = vld [vmem:[%s3367] sm:$0x1]
  %v3370 = vlaneseq
  %v3371 = vshrl.u32 %v3370, 7
  %v3372 = vsub.s32 0, %v3371
  %v3373 = vrot.slane %v3368, %v3372
  %3375 = vmatprep.subr.mxu0 0.0
  %3376 = vmatpush1.msra.mxu0 %v3363
  %3377 = vmatprep.subr.mxu0 0.0
  %3378 = vmatpush1.msra.mxu0 %v3364
  %3379 = vmatprep.subr.mxu0 0.0
  %3380 = vmatpush1.msra.mxu0 %v3365
  %3381 = vmatprep.subr.mxu0 0.0
  %3382 = vmatpush1.msra.mxu0 %v3366
  %3383 = vmatprep.subr.mxu0 0.0
  %3384 = vmatpush1.msra.mxu0 0.0
  %3385 = vmatprep.subr.mxu0 0.0
  %3386 = vmatpush1.msra.mxu0 0.0
  %3387 = vmatprep.subr.mxu0 0.0
  %3388 = vmatpush1.msra.mxu0 0.0
  %3389 = vmatprep.subr.mxu0 0.0
  %3390 = vmatpush1.msra.mxu0 0.0
  %3391 = vmatprep.subr.mxu0 0.0
  %3392 = vmatpush1.msra.mxu0 0.0
  %3393 = vmatprep.subr.mxu0 0.0
  %3394 = vmatpush1.msra.mxu0 0.0
  %3395 = vmatprep.subr.mxu0 0.0
  %3396 = vmatpush1.msra.mxu0 0.0
  %3397 = vmatprep.subr.mxu0 0.0
  %3398 = vmatpush1.msra.mxu0 0.0
  %3399 = vmatprep.subr.mxu0 0.0
  %3400 = vmatpush1.msra.mxu0 0.0
  %3401 = vmatprep.subr.mxu0 0.0
  %3402 = vmatpush1.msra.mxu0 0.0
  %3403 = vmatprep.subr.mxu0 0.0
  %3404 = vmatpush1.msra.mxu0 0.0
  %3405 = vmatprep.subr.mxu0 0.0
  %3406 = vmatpush1.msra.mxu0 0.0
  %3407 = vmatprep.subr.mxu0 0.0
  %3408 = vmatpush1.msra.mxu0 0.0
  %3409 = vmatprep.subr.mxu0 0.0
  %3410 = vmatpush1.msra.mxu0 0.0
  %3411 = vmatprep.subr.mxu0 0.0
  %3412 = vmatpush1.msra.mxu0 0.0
  %3413 = vmatprep.subr.mxu0 0.0
  %3414 = vmatpush1.msra.mxu0 0.0
  %3415 = vmatprep.subr.mxu0 0.0
  %3416 = vmatpush1.msra.mxu0 0.0
  %3417 = vmatprep.subr.mxu0 0.0
  %3418 = vmatpush1.msra.mxu0 0.0
  %3419 = vmatprep.subr.mxu0 0.0
  %3420 = vmatpush1.msra.mxu0 0.0
  %3421 = vmatprep.subr.mxu0 0.0
  %3422 = vmatpush1.msra.mxu0 0.0
  %3423 = vmatprep.subr.mxu0 0.0
  %3424 = vmatpush1.msra.mxu0 0.0
  %3425 = vmatprep.subr.mxu0 0.0
  %3426 = vmatpush1.msra.mxu0 0.0
  %3427 = vmatprep.subr.mxu0 0.0
  %3428 = vmatpush1.msra.mxu0 0.0
  %3429 = vmatprep.subr.mxu0 0.0
  %3430 = vmatpush1.msra.mxu0 0.0
  %3431 = vmatprep.subr.mxu0 0.0
  %3432 = vmatpush1.msra.mxu0 0.0
  %3433 = vmatprep.subr.mxu0 0.0
  %3434 = vmatpush1.msra.mxu0 0.0
  %3435 = vmatprep.subr.mxu0 0.0
  %3436 = vmatpush1.msra.mxu0 0.0
  %3437 = vmatprep.subr.mxu0 0.0
  %3438 = vmatpush1.msra.mxu0 0.0
  %3439 = vmatprep.mubr.f32.mxu0 0.0
  %3440 = vmatmul.mubr.f32.gmra.mrb[0].mxu0 %v2318
  %v3441 = vpop.f32.mrb[0].mxu0
  %v3442 = vadd.f32 %v3373, %v3441
  %v3443 = vpop.f32.mrb[0].mxu0
  %3444 = vdwg.mxu0
  %s3445 = scalar_lea.vmem %s2, 704
  %v3446 = vld [vmem:[%s3445] sm:$0xff]
  %v3447 = vld [vmem:[%s3445 + $0x8] sm:$0xff]
  %v3448 = vld [vmem:[%s3445 + $0x10] sm:$0xff]
  %v3449 = vld [vmem:[%s3445 + $0x18] sm:$0xff]
  %s3450 = scalar_lea.vmem %s3, 22
  %v3451 = vld [vmem:[%s3450] sm:$0x1]
  %v3453 = vlaneseq
  %v3454 = vshrl.u32 %v3453, 7
  %v3455 = vsub.s32 0, %v3454
  %v3456 = vrot.slane %v3451, %v3455
  %3458 = vmatprep.subr.mxu0 0.0
  %3459 = vmatpush1.msra.mxu0 %v3446
  %3460 = vmatprep.subr.mxu0 0.0
  %3461 = vmatpush1.msra.mxu0 %v3447
  %3462 = vmatprep.subr.mxu0 0.0
  %3463 = vmatpush1.msra.mxu0 %v3448
  %3464 = vmatprep.subr.mxu0 0.0
  %3465 = vmatpush1.msra.mxu0 %v3449
  %3466 = vmatprep.subr.mxu0 0.0
  %3467 = vmatpush1.msra.mxu0 0.0
  %3468 = vmatprep.subr.mxu0 0.0
  %3469 = vmatpush1.msra.mxu0 0.0
  %3470 = vmatprep.subr.mxu0 0.0
  %3471 = vmatpush1.msra.mxu0 0.0
  %3472 = vmatprep.subr.mxu0 0.0
  %3473 = vmatpush1.msra.mxu0 0.0
  %3474 = vmatprep.subr.mxu0 0.0
  %3475 = vmatpush1.msra.mxu0 0.0
  %3476 = vmatprep.subr.mxu0 0.0
  %3477 = vmatpush1.msra.mxu0 0.0
  %3478 = vmatprep.subr.mxu0 0.0
  %3479 = vmatpush1.msra.mxu0 0.0
  %3480 = vmatprep.subr.mxu0 0.0
  %3481 = vmatpush1.msra.mxu0 0.0
  %3482 = vmatprep.subr.mxu0 0.0
  %3483 = vmatpush1.msra.mxu0 0.0
  %3484 = vmatprep.subr.mxu0 0.0
  %3485 = vmatpush1.msra.mxu0 0.0
  %3486 = vmatprep.subr.mxu0 0.0
  %3487 = vmatpush1.msra.mxu0 0.0
  %3488 = vmatprep.subr.mxu0 0.0
  %3489 = vmatpush1.msra.mxu0 0.0
  %3490 = vmatprep.subr.mxu0 0.0
  %3491 = vmatpush1.msra.mxu0 0.0
  %3492 = vmatprep.subr.mxu0 0.0
  %3493 = vmatpush1.msra.mxu0 0.0
  %3494 = vmatprep.subr.mxu0 0.0
  %3495 = vmatpush1.msra.mxu0 0.0
  %3496 = vmatprep.subr.mxu0 0.0
  %3497 = vmatpush1.msra.mxu0 0.0
  %3498 = vmatprep.subr.mxu0 0.0
  %3499 = vmatpush1.msra.mxu0 0.0
  %3500 = vmatprep.subr.mxu0 0.0
  %3501 = vmatpush1.msra.mxu0 0.0
  %3502 = vmatprep.subr.mxu0 0.0
  %3503 = vmatpush1.msra.mxu0 0.0
  %3504 = vmatprep.subr.mxu0 0.0
  %3505 = vmatpush1.msra.mxu0 0.0
  %3506 = vmatprep.subr.mxu0 0.0
  %3507 = vmatpush1.msra.mxu0 0.0
  %3508 = vmatprep.subr.mxu0 0.0
  %3509 = vmatpush1.msra.mxu0 0.0
  %3510 = vmatprep.subr.mxu0 0.0
  %3511 = vmatpush1.msra.mxu0 0.0
  %3512 = vmatprep.subr.mxu0 0.0
  %3513 = vmatpush1.msra.mxu0 0.0
  %3514 = vmatprep.subr.mxu0 0.0
  %3515 = vmatpush1.msra.mxu0 0.0
  %3516 = vmatprep.subr.mxu0 0.0
  %3517 = vmatpush1.msra.mxu0 0.0
  %3518 = vmatprep.subr.mxu0 0.0
  %3519 = vmatpush1.msra.mxu0 0.0
  %3520 = vmatprep.subr.mxu0 0.0
  %3521 = vmatpush1.msra.mxu0 0.0
  %3522 = vmatprep.mubr.f32.mxu0 0.0
  %3523 = vmatmul.mubr.f32.gmra.mrb[0].mxu0 %v2318
  %v3524 = vpop.f32.mrb[0].mxu0
  %v3525 = vadd.f32 %v3456, %v3524
  %v3526 = vpop.f32.mrb[0].mxu0
  %3527 = vdwg.mxu0
  %v3529 = vsel %vm353, %v3359, 0
  %v3532 = vsel %vm353, %v3442, 0
  %3534 = vmatprep.subr.mxu0 0.0
  %3535 = vmatpush1.xpose.msra.mxu0 %v3532
  %3536 = vmatprep.subr.mxu0 0.0
  %3537 = vmatpush1.xpose.msra.mxu0 0.0
  %3538 = vmatprep.subr.mxu0 0.0
  %3539 = vmatpush1.xpose.msra.mxu0 0.0
  %3540 = vmatprep.subr.mxu0 0.0
  %3541 = vmatpush1.xpose.msra.mxu0 0.0
  %3542 = vmatprep.subr.mxu0 0.0
  %3543 = vmatpush1.xpose.msra.mxu0 0.0
  %3544 = vmatprep.subr.mxu0 0.0
  %3545 = vmatpush1.xpose.msra.mxu0 0.0
  %3546 = vmatprep.subr.mxu0 0.0
  %3547 = vmatpush1.xpose.msra.mxu0 0.0
  %3548 = vmatprep.subr.mxu0 0.0
  %3549 = vmatpush1.xpose.msra.mxu0 0.0
  %3550 = vmatprep.subr.mxu0 0.0
  %3551 = vmatpush1.xpose.msra.mxu0 0.0
  %3552 = vmatprep.subr.mxu0 0.0
  %3553 = vmatpush1.xpose.msra.mxu0 0.0
  %3554 = vmatprep.subr.mxu0 0.0
  %3555 = vmatpush1.xpose.msra.mxu0 0.0
  %3556 = vmatprep.subr.mxu0 0.0
  %3557 = vmatpush1.xpose.msra.mxu0 0.0
  %3558 = vmatprep.subr.mxu0 0.0
  %3559 = vmatpush1.xpose.msra.mxu0 0.0
  %3560 = vmatprep.subr.mxu0 0.0
  %3561 = vmatpush1.xpose.msra.mxu0 0.0
  %3562 = vmatprep.subr.mxu0 0.0
  %3563 = vmatpush1.xpose.msra.mxu0 0.0
  %3564 = vmatprep.subr.mxu0 0.0
  %3565 = vmatpush1.xpose.msra.mxu0 0.0
  %3566 = vmatprep.subr.mxu0 0.0
  %3567 = vmatpush1.xpose.msra.mxu0 0.0
  %3568 = vmatprep.subr.mxu0 0.0
  %3569 = vmatpush1.xpose.msra.mxu0 0.0
  %3570 = vmatprep.subr.mxu0 0.0
  %3571 = vmatpush1.xpose.msra.mxu0 0.0
  %3572 = vmatprep.subr.mxu0 0.0
  %3573 = vmatpush1.xpose.msra.mxu0 0.0
  %3574 = vmatprep.subr.mxu0 0.0
  %3575 = vmatpush1.xpose.msra.mxu0 0.0
  %3576 = vmatprep.subr.mxu0 0.0
  %3577 = vmatpush1.xpose.msra.mxu0 0.0
  %3578 = vmatprep.subr.mxu0 0.0
  %3579 = vmatpush1.xpose.msra.mxu0 0.0
  %3580 = vmatprep.subr.mxu0 0.0
  %3581 = vmatpush1.xpose.msra.mxu0 0.0
  %3582 = vmatprep.subr.mxu0 0.0
  %3583 = vmatpush1.xpose.msra.mxu0 0.0
  %3584 = vmatprep.subr.mxu0 0.0
  %3585 = vmatpush1.xpose.msra.mxu0 0.0
  %3586 = vmatprep.subr.mxu0 0.0
  %3587 = vmatpush1.xpose.msra.mxu0 0.0
  %3588 = vmatprep.subr.mxu0 0.0
  %3589 = vmatpush1.xpose.msra.mxu0 0.0
  %3590 = vmatprep.subr.mxu0 0.0
  %3591 = vmatpush1.xpose.msra.mxu0 0.0
  %3592 = vmatprep.subr.mxu0 0.0
  %3593 = vmatpush1.xpose.msra.mxu0 0.0
  %3594 = vmatprep.subr.mxu0 0.0
  %3595 = vmatpush1.xpose.msra.mxu0 0.0
  %3596 = vmatprep.subr.mxu0 0.0
  %3597 = vmatpush1.xpose.msra.mxu0 0.0
  %3598 = vmatprep.mubr.f32.mxu0 0.0
  %3599 = vmatmul.mubr.f32.gmra.mrb[0].mxu0 %v3529
  %v3600 = vpop.f32.mrb[0].mxu0
  %v3601 = vadd.f32 0.0, %v3600
  %v3602 = vpop.f32.mrb[0].mxu0
  %3603 = vdwg.mxu0
  %v3604 = vmul.f32 %v3601, 0.35355338
  %v3605 = vadd.f32 %v3604, %v434
  %v3606 = vsel %vm353, %v3605, -inf
  %3607 = vmax.xlane.f32.xlu0 %v3606
  %v3608 = vpop.xlane.xlu0 %3607
  %v3609 = vsub.f32 %v3605, %v3608
  %v3610 = vmul.f32 %v3609, 1.442695
  %v3611 = vpow.pop %v3610
  %v3612 = vsel %vm353, %v3611, 0.0
  %3613 = vadd.xlane.f32.xlu0 %v3612
  %v3614 = vpop.xlane.xlu0 %3613
  %v3615 = vrcp.pop %v3614
  %v3616 = vmul.f32 %v3611, %v3615
  %v3618 = vsel %vm353, %v3616, 0
  %3620 = vmatprep.subr.mxu0 0.0
  %3621 = vmatpush1.msra.mxu0 %v3525
  %3622 = vmatprep.subr.mxu0 0.0
  %3623 = vmatpush1.msra.mxu0 0.0
  %3624 = vmatprep.subr.mxu0 0.0
  %3625 = vmatpush1.msra.mxu0 0.0
  %3626 = vmatprep.subr.mxu0 0.0
  %3627 = vmatpush1.msra.mxu0 0.0
  %3628 = vmatprep.subr.mxu0 0.0
  %3629 = vmatpush1.msra.mxu0 0.0
  %3630 = vmatprep.subr.mxu0 0.0
  %3631 = vmatpush1.msra.mxu0 0.0
  %3632 = vmatprep.subr.mxu0 0.0
  %3633 = vmatpush1.msra.mxu0 0.0
  %3634 = vmatprep.subr.mxu0 0.0
  %3635 = vmatpush1.msra.mxu0 0.0
  %3636 = vmatprep.subr.mxu0 0.0
  %3637 = vmatpush1.msra.mxu0 0.0
  %3638 = vmatprep.subr.mxu0 0.0
  %3639 = vmatpush1.msra.mxu0 0.0
  %3640 = vmatprep.subr.mxu0 0.0
  %3641 = vmatpush1.msra.mxu0 0.0
  %3642 = vmatprep.subr.mxu0 0.0
  %3643 = vmatpush1.msra.mxu0 0.0
  %3644 = vmatprep.subr.mxu0 0.0
  %3645 = vmatpush1.msra.mxu0 0.0
  %3646 = vmatprep.subr.mxu0 0.0
  %3647 = vmatpush1.msra.mxu0 0.0
  %3648 = vmatprep.subr.mxu0 0.0
  %3649 = vmatpush1.msra.mxu0 0.0
  %3650 = vmatprep.subr.mxu0 0.0
  %3651 = vmatpush1.msra.mxu0 0.0
  %3652 = vmatprep.subr.mxu0 0.0
  %3653 = vmatpush1.msra.mxu0 0.0
  %3654 = vmatprep.subr.mxu0 0.0
  %3655 = vmatpush1.msra.mxu0 0.0
  %3656 = vmatprep.subr.mxu0 0.0
  %3657 = vmatpush1.msra.mxu0 0.0
  %3658 = vmatprep.subr.mxu0 0.0
  %3659 = vmatpush1.msra.mxu0 0.0
  %3660 = vmatprep.subr.mxu0 0.0
  %3661 = vmatpush1.msra.mxu0 0.0
  %3662 = vmatprep.subr.mxu0 0.0
  %3663 = vmatpush1.msra.mxu0 0.0
  %3664 = vmatprep.subr.mxu0 0.0
  %3665 = vmatpush1.msra.mxu0 0.0
  %3666 = vmatprep.subr.mxu0 0.0
  %3667 = vmatpush1.msra.mxu0 0.0
  %3668 = vmatprep.subr.mxu0 0.0
  %3669 = vmatpush1.msra.mxu0 0.0
  %3670 = vmatprep.subr.mxu0 0.0
  %3671 = vmatpush1.msra.mxu0 0.0
  %3672 = vmatprep.subr.mxu0 0.0
  %3673 = vmatpush1.msra.mxu0 0.0
  %3674 = vmatprep.subr.mxu0 0.0
  %3675 = vmatpush1.msra.mxu0 0.0
  %3676 = vmatprep.subr.mxu0 0.0
  %3677 = vmatpush1.msra.mxu0 0.0
  %3678 = vmatprep.subr.mxu0 0.0
  %3679 = vmatpush1.msra.mxu0 0.0
  %3680 = vmatprep.subr.mxu0 0.0
  %3681 = vmatpush1.msra.mxu0 0.0
  %3682 = vmatprep.subr.mxu0 0.0
  %3683 = vmatpush1.msra.mxu0 0.0
  %3684 = vmatprep.mubr.f32.mxu0 0.0
  %3685 = vmatmul.mubr.f32.gmra.mrb[0].mxu0 %v3618
  %v3686 = vpop.f32.mrb[0].mxu0
  %v3687 = vadd.f32 0.0, %v3686
  %v3688 = vpop.f32.mrb[0].mxu0
  %3689 = vdwg.mxu0
  %s3690 = scalar_lea.vmem %s4, 48
  %v3691 = vld [vmem:[%s3690] sm:$0xff]
  %v3693 = vsel %vm353, %v3687, 0
  %3695 = vmatprep.subr.mxu0 0.0
  %3696 = vmatpush1.msra.mxu0 %v3691
  %3697 = vmatprep.subr.mxu0 0.0
  %3698 = vmatpush1.msra.mxu0 0.0
  %3699 = vmatprep.subr.mxu0 0.0
  %3700 = vmatpush1.msra.mxu0 0.0
  %3701 = vmatprep.subr.mxu0 0.0
  %3702 = vmatpush1.msra.mxu0 0.0
  %3703 = vmatprep.subr.mxu0 0.0
  %3704 = vmatpush1.msra.mxu0 0.0
  %3705 = vmatprep.subr.mxu0 0.0
  %3706 = vmatpush1.msra.mxu0 0.0
  %3707 = vmatprep.subr.mxu0 0.0
  %3708 = vmatpush1.msra.mxu0 0.0
  %3709 = vmatprep.subr.mxu0 0.0
  %3710 = vmatpush1.msra.mxu0 0.0
  %3711 = vmatprep.subr.mxu0 0.0
  %3712 = vmatpush1.msra.mxu0 0.0
  %3713 = vmatprep.subr.mxu0 0.0
  %3714 = vmatpush1.msra.mxu0 0.0
  %3715 = vmatprep.subr.mxu0 0.0
  %3716 = vmatpush1.msra.mxu0 0.0
  %3717 = vmatprep.subr.mxu0 0.0
  %3718 = vmatpush1.msra.mxu0 0.0
  %3719 = vmatprep.subr.mxu0 0.0
  %3720 = vmatpush1.msra.mxu0 0.0
  %3721 = vmatprep.subr.mxu0 0.0
  %3722 = vmatpush1.msra.mxu0 0.0
  %3723 = vmatprep.subr.mxu0 0.0
  %3724 = vmatpush1.msra.mxu0 0.0
  %3725 = vmatprep.subr.mxu0 0.0
  %3726 = vmatpush1.msra.mxu0 0.0
  %3727 = vmatprep.subr.mxu0 0.0
  %3728 = vmatpush1.msra.mxu0 0.0
  %3729 = vmatprep.subr.mxu0 0.0
  %3730 = vmatpush1.msra.mxu0 0.0
  %3731 = vmatprep.subr.mxu0 0.0
  %3732 = vmatpush1.msra.mxu0 0.0
  %3733 = vmatprep.subr.mxu0 0.0
  %3734 = vmatpush1.msra.mxu0 0.0
  %3735 = vmatprep.subr.mxu0 0.0
  %3736 = vmatpush1.msra.mxu0 0.0
  %3737 = vmatprep.subr.mxu0 0.0
  %3738 = vmatpush1.msra.mxu0 0.0
  %3739 = vmatprep.subr.mxu0 0.0
  %3740 = vmatpush1.msra.mxu0 0.0
  %3741 = vmatprep.subr.mxu0 0.0
  %3742 = vmatpush1.msra.mxu0 0.0
  %3743 = vmatprep.subr.mxu0 0.0
  %3744 = vmatpush1.msra.mxu0 0.0
  %3745 = vmatprep.subr.mxu0 0.0
  %3746 = vmatpush1.msra.mxu0 0.0
  %3747 = vmatprep.subr.mxu0 0.0
  %3748 = vmatpush1.msra.mxu0 0.0
  %3749 = vmatprep.subr.mxu0 0.0
  %3750 = vmatpush1.msra.mxu0 0.0
  %3751 = vmatprep.subr.mxu0 0.0
  %3752 = vmatpush1.msra.mxu0 0.0
  %3753 = vmatprep.subr.mxu0 0.0
  %3754 = vmatpush1.msra.mxu0 0.0
  %3755 = vmatprep.subr.mxu0 0.0
  %3756 = vmatpush1.msra.mxu0 0.0
  %3757 = vmatprep.subr.mxu0 0.0
  %3758 = vmatpush1.msra.mxu0 0.0
  %3759 = vmatprep.mubr.f32.mxu0 0.0
  %3760 = vmatmul.mubr.f32.gmra.mrb[0].mxu0 %v3693
  %v3761 = vpop.f32.mrb[0].mxu0
  %v3762 = vadd.f32 0.0, %v3761
  %v3763 = vpop.f32.mrb[0].mxu0
  %3764 = vdwg.mxu0
  %v3765 = vadd.f32 %v3276, %v3762
  %s3766 = scalar_lea.vmem %s2, 480
  %v3767 = vld [vmem:[%s3766] sm:$0xff]
  %v3768 = vld [vmem:[%s3766 + $0x8] sm:$0xff]
  %v3769 = vld [vmem:[%s3766 + $0x10] sm:$0xff]
  %v3770 = vld [vmem:[%s3766 + $0x18] sm:$0xff]
  %s3771 = scalar_lea.vmem %s3, 15
  %v3772 = vld [vmem:[%s3771] sm:$0x1]
  %v3774 = vlaneseq
  %v3775 = vshrl.u32 %v3774, 7
  %v3776 = vsub.s32 0, %v3775
  %v3777 = vrot.slane %v3772, %v3776
  %3779 = vmatprep.subr.mxu0 0.0
  %3780 = vmatpush1.msra.mxu0 %v3767
  %3781 = vmatprep.subr.mxu0 0.0
  %3782 = vmatpush1.msra.mxu0 %v3768
  %3783 = vmatprep.subr.mxu0 0.0
  %3784 = vmatpush1.msra.mxu0 %v3769
  %3785 = vmatprep.subr.mxu0 0.0
  %3786 = vmatpush1.msra.mxu0 %v3770
  %3787 = vmatprep.subr.mxu0 0.0
  %3788 = vmatpush1.msra.mxu0 0.0
  %3789 = vmatprep.subr.mxu0 0.0
  %3790 = vmatpush1.msra.mxu0 0.0
  %3791 = vmatprep.subr.mxu0 0.0
  %3792 = vmatpush1.msra.mxu0 0.0
  %3793 = vmatprep.subr.mxu0 0.0
  %3794 = vmatpush1.msra.mxu0 0.0
  %3795 = vmatprep.subr.mxu0 0.0
  %3796 = vmatpush1.msra.mxu0 0.0
  %3797 = vmatprep.subr.mxu0 0.0
  %3798 = vmatpush1.msra.mxu0 0.0
  %3799 = vmatprep.subr.mxu0 0.0
  %3800 = vmatpush1.msra.mxu0 0.0
  %3801 = vmatprep.subr.mxu0 0.0
  %3802 = vmatpush1.msra.mxu0 0.0
  %3803 = vmatprep.subr.mxu0 0.0
  %3804 = vmatpush1.msra.mxu0 0.0
  %3805 = vmatprep.subr.mxu0 0.0
  %3806 = vmatpush1.msra.mxu0 0.0
  %3807 = vmatprep.subr.mxu0 0.0
  %3808 = vmatpush1.msra.mxu0 0.0
  %3809 = vmatprep.subr.mxu0 0.0
  %3810 = vmatpush1.msra.mxu0 0.0
  %3811 = vmatprep.subr.mxu0 0.0
  %3812 = vmatpush1.msra.mxu0 0.0
  %3813 = vmatprep.subr.mxu0 0.0
  %3814 = vmatpush1.msra.mxu0 0.0
  %3815 = vmatprep.subr.mxu0 0.0
  %3816 = vmatpush1.msra.mxu0 0.0
  %3817 = vmatprep.subr.mxu0 0.0
  %3818 = vmatpush1.msra.mxu0 0.0
  %3819 = vmatprep.subr.mxu0 0.0
  %3820 = vmatpush1.msra.mxu0 0.0
  %3821 = vmatprep.subr.mxu0 0.0
  %3822 = vmatpush1.msra.mxu0 0.0
  %3823 = vmatprep.subr.mxu0 0.0
  %3824 = vmatpush1.msra.mxu0 0.0
  %3825 = vmatprep.subr.mxu0 0.0
  %3826 = vmatpush1.msra.mxu0 0.0
  %3827 = vmatprep.subr.mxu0 0.0
  %3828 = vmatpush1.msra.mxu0 0.0
  %3829 = vmatprep.subr.mxu0 0.0
  %3830 = vmatpush1.msra.mxu0 0.0
  %3831 = vmatprep.subr.mxu0 0.0
  %3832 = vmatpush1.msra.mxu0 0.0
  %3833 = vmatprep.subr.mxu0 0.0
  %3834 = vmatpush1.msra.mxu0 0.0
  %3835 = vmatprep.subr.mxu0 0.0
  %3836 = vmatpush1.msra.mxu0 0.0
  %3837 = vmatprep.subr.mxu0 0.0
  %3838 = vmatpush1.msra.mxu0 0.0
  %3839 = vmatprep.subr.mxu0 0.0
  %3840 = vmatpush1.msra.mxu0 0.0
  %3841 = vmatprep.subr.mxu0 0.0
  %3842 = vmatpush1.msra.mxu0 0.0
  %3843 = vmatprep.mubr.f32.mxu0 0.0
  %3844 = vmatmul.mubr.f32.gmra.mrb[0].mxu0 %v2318
  %v3845 = vpop.f32.mrb[0].mxu0
  %v3846 = vadd.f32 %v3777, %v3845
  %v3847 = vpop.f32.mrb[0].mxu0
  %3848 = vdwg.mxu0
  %s3849 = scalar_lea.vmem %s2, 608
  %v3850 = vld [vmem:[%s3849] sm:$0xff]
  %v3851 = vld [vmem:[%s3849 + $0x8] sm:$0xff]
  %v3852 = vld [vmem:[%s3849 + $0x10] sm:$0xff]
  %v3853 = vld [vmem:[%s3849 + $0x18] sm:$0xff]
  %s3854 = scalar_lea.vmem %s3, 19
  %v3855 = vld [vmem:[%s3854] sm:$0x1]
  %v3857 = vlaneseq
  %v3858 = vshrl.u32 %v3857, 7
  %v3859 = vsub.s32 0, %v3858
  %v3860 = vrot.slane %v3855, %v3859
  %3862 = vmatprep.subr.mxu0 0.0
  %3863 = vmatpush1.msra.mxu0 %v3850
  %3864 = vmatprep.subr.mxu0 0.0
  %3865 = vmatpush1.msra.mxu0 %v3851
  %3866 = vmatprep.subr.mxu0 0.0
  %3867 = vmatpush1.msra.mxu0 %v3852
  %3868 = vmatprep.subr.mxu0 0.0
  %3869 = vmatpush1.msra.mxu0 %v3853
  %3870 = vmatprep.subr.mxu0 0.0
  %3871 = vmatpush1.msra.mxu0 0.0
  %3872 = vmatprep.subr.mxu0 0.0
  %3873 = vmatpush1.msra.mxu0 0.0
  %3874 = vmatprep.subr.mxu0 0.0
  %3875 = vmatpush1.msra.mxu0 0.0
  %3876 = vmatprep.subr.mxu0 0.0
  %3877 = vmatpush1.msra.mxu0 0.0
  %3878 = vmatprep.subr.mxu0 0.0
  %3879 = vmatpush1.msra.mxu0 0.0
  %3880 = vmatprep.subr.mxu0 0.0
  %3881 = vmatpush1.msra.mxu0 0.0
  %3882 = vmatprep.subr.mxu0 0.0
  %3883 = vmatpush1.msra.mxu0 0.0
  %3884 = vmatprep.subr.mxu0 0.0
  %3885 = vmatpush1.msra.mxu0 0.0
  %3886 = vmatprep.subr.mxu0 0.0
  %3887 = vmatpush1.msra.mxu0 0.0
  %3888 = vmatprep.subr.mxu0 0.0
  %3889 = vmatpush1.msra.mxu0 0.0
  %3890 = vmatprep.subr.mxu0 0.0
  %3891 = vmatpush1.msra.mxu0 0.0
  %3892 = vmatprep.subr.mxu0 0.0
  %3893 = vmatpush1.msra.mxu0 0.0
  %3894 = vmatprep.subr.mxu0 0.0
  %3895 = vmatpush1.msra.mxu0 0.0
  %3896 = vmatprep.subr.mxu0 0.0
  %3897 = vmatpush1.msra.mxu0 0.0
  %3898 = vmatprep.subr.mxu0 0.0
  %3899 = vmatpush1.msra.mxu0 0.0
  %3900 = vmatprep.subr.mxu0 0.0
  %3901 = vmatpush1.msra.mxu0 0.0
  %3902 = vmatprep.subr.mxu0 0.0
  %3903 = vmatpush1.msra.mxu0 0.0
  %3904 = vmatprep.subr.mxu0 0.0
  %3905 = vmatpush1.msra.mxu0 0.0
  %3906 = vmatprep.subr.mxu0 0.0
  %3907 = vmatpush1.msra.mxu0 0.0
  %3908 = vmatprep.subr.mxu0 0.0
  %3909 = vmatpush1.msra.mxu0 0.0
  %3910 = vmatprep.subr.mxu0 0.0
  %3911 = vmatpush1.msra.mxu0 0.0
  %3912 = vmatprep.subr.mxu0 0.0
  %3913 = vmatpush1.msra.mxu0 0.0
  %3914 = vmatprep.subr.mxu0 0.0
  %3915 = vmatpush1.msra.mxu0 0.0
  %3916 = vmatprep.subr.mxu0 0.0
  %3917 = vmatpush1.msra.mxu0 0.0
  %3918 = vmatprep.subr.mxu0 0.0
  %3919 = vmatpush1.msra.mxu0 0.0
  %3920 = vmatprep.subr.mxu0 0.0
  %3921 = vmatpush1.msra.mxu0 0.0
  %3922 = vmatprep.subr.mxu0 0.0
  %3923 = vmatpush1.msra.mxu0 0.0
  %3924 = vmatprep.subr.mxu0 0.0
  %3925 = vmatpush1.msra.mxu0 0.0
  %3926 = vmatprep.mubr.f32.mxu0 0.0
  %3927 = vmatmul.mubr.f32.gmra.mrb[0].mxu0 %v2318
  %v3928 = vpop.f32.mrb[0].mxu0
  %v3929 = vadd.f32 %v3860, %v3928
  %v3930 = vpop.f32.mrb[0].mxu0
  %3931 = vdwg.mxu0
  %s3932 = scalar_lea.vmem %s2, 736
  %v3933 = vld [vmem:[%s3932] sm:$0xff]
  %v3934 = vld [vmem:[%s3932 + $0x8] sm:$0xff]
  %v3935 = vld [vmem:[%s3932 + $0x10] sm:$0xff]
  %v3936 = vld [vmem:[%s3932 + $0x18] sm:$0xff]
  %s3937 = scalar_lea.vmem %s3, 23
  %v3938 = vld [vmem:[%s3937] sm:$0x1]
  %v3940 = vlaneseq
  %v3941 = vshrl.u32 %v3940, 7
  %v3942 = vsub.s32 0, %v3941
  %v3943 = vrot.slane %v3938, %v3942
  %3945 = vmatprep.subr.mxu0 0.0
  %3946 = vmatpush1.msra.mxu0 %v3933
  %3947 = vmatprep.subr.mxu0 0.0
  %3948 = vmatpush1.msra.mxu0 %v3934
  %3949 = vmatprep.subr.mxu0 0.0
  %3950 = vmatpush1.msra.mxu0 %v3935
  %3951 = vmatprep.subr.mxu0 0.0
  %3952 = vmatpush1.msra.mxu0 %v3936
  %3953 = vmatprep.subr.mxu0 0.0
  %3954 = vmatpush1.msra.mxu0 0.0
  %3955 = vmatprep.subr.mxu0 0.0
  %3956 = vmatpush1.msra.mxu0 0.0
  %3957 = vmatprep.subr.mxu0 0.0
  %3958 = vmatpush1.msra.mxu0 0.0
  %3959 = vmatprep.subr.mxu0 0.0
  %3960 = vmatpush1.msra.mxu0 0.0
  %3961 = vmatprep.subr.mxu0 0.0
  %3962 = vmatpush1.msra.mxu0 0.0
  %3963 = vmatprep.subr.mxu0 0.0
  %3964 = vmatpush1.msra.mxu0 0.0
  %3965 = vmatprep.subr.mxu0 0.0
  %3966 = vmatpush1.msra.mxu0 0.0
  %3967 = vmatprep.subr.mxu0 0.0
  %3968 = vmatpush1.msra.mxu0 0.0
  %3969 = vmatprep.subr.mxu0 0.0
  %3970 = vmatpush1.msra.mxu0 0.0
  %3971 = vmatprep.subr.mxu0 0.0
  %3972 = vmatpush1.msra.mxu0 0.0
  %3973 = vmatprep.subr.mxu0 0.0
  %3974 = vmatpush1.msra.mxu0 0.0
  %3975 = vmatprep.subr.mxu0 0.0
  %3976 = vmatpush1.msra.mxu0 0.0
  %3977 = vmatprep.subr.mxu0 0.0
  %3978 = vmatpush1.msra.mxu0 0.0
  %3979 = vmatprep.subr.mxu0 0.0
  %3980 = vmatpush1.msra.mxu0 0.0
  %3981 = vmatprep.subr.mxu0 0.0
  %3982 = vmatpush1.msra.mxu0 0.0
  %3983 = vmatprep.subr.mxu0 0.0
  %3984 = vmatpush1.msra.mxu0 0.0
  %3985 = vmatprep.subr.mxu0 0.0
  %3986 = vmatpush1.msra.mxu0 0.0
  %3987 = vmatprep.subr.mxu0 0.0
  %3988 = vmatpush1.msra.mxu0 0.0
  %3989 = vmatprep.subr.mxu0 0.0
  %3990 = vmatpush1.msra.mxu0 0.0
  %3991 = vmatprep.subr.mxu0 0.0
  %3992 = vmatpush1.msra.mxu0 0.0
  %3993 = vmatprep.subr.mxu0 0.0
  %3994 = vmatpush1.msra.mxu0 0.0
  %3995 = vmatprep.subr.mxu0 0.0
  %3996 = vmatpush1.msra.mxu0 0.0
  %3997 = vmatprep.subr.mxu0 0.0
  %3998 = vmatpush1.msra.mxu0 0.0
  %3999 = vmatprep.subr.mxu0 0.0
  %4000 = vmatpush1.msra.mxu0 0.0
  %4001 = vmatprep.subr.mxu0 0.0
  %4002 = vmatpush1.msra.mxu0 0.0
  %4003 = vmatprep.subr.mxu0 0.0
  %4004 = vmatpush1.msra.mxu0 0.0
  %4005 = vmatprep.subr.mxu0 0.0
  %4006 = vmatpush1.msra.mxu0 0.0
  %4007 = vmatprep.subr.mxu0 0.0
  %4008 = vmatpush1.msra.mxu0 0.0
  %4009 = vmatprep.mubr.f32.mxu0 0.0
  %4010 = vmatmul.mubr.f32.gmra.mrb[0].mxu0 %v2318
  %v4011 = vpop.f32.mrb[0].mxu0
  %v4012 = vadd.f32 %v3943, %v4011
  %v4013 = vpop.f32.mrb[0].mxu0
  %4014 = vdwg.mxu0
  %v4016 = vsel %vm353, %v3846, 0
  %v4019 = vsel %vm353, %v3929, 0
  %4021 = vmatprep.subr.mxu0 0.0
  %4022 = vmatpush1.xpose.msra.mxu0 %v4019
  %4023 = vmatprep.subr.mxu0 0.0
  %4024 = vmatpush1.xpose.msra.mxu0 0.0
  %4025 = vmatprep.subr.mxu0 0.0
  %4026 = vmatpush1.xpose.msra.mxu0 0.0
  %4027 = vmatprep.subr.mxu0 0.0
  %4028 = vmatpush1.xpose.msra.mxu0 0.0
  %4029 = vmatprep.subr.mxu0 0.0
  %4030 = vmatpush1.xpose.msra.mxu0 0.0
  %4031 = vmatprep.subr.mxu0 0.0
  %4032 = vmatpush1.xpose.msra.mxu0 0.0
  %4033 = vmatprep.subr.mxu0 0.0
  %4034 = vmatpush1.xpose.msra.mxu0 0.0
  %4035 = vmatprep.subr.mxu0 0.0
  %4036 = vmatpush1.xpose.msra.mxu0 0.0
  %4037 = vmatprep.subr.mxu0 0.0
  %4038 = vmatpush1.xpose.msra.mxu0 0.0
  %4039 = vmatprep.subr.mxu0 0.0
  %4040 = vmatpush1.xpose.msra.mxu0 0.0
  %4041 = vmatprep.subr.mxu0 0.0
  %4042 = vmatpush1.xpose.msra.mxu0 0.0
  %4043 = vmatprep.subr.mxu0 0.0
  %4044 = vmatpush1.xpose.msra.mxu0 0.0
  %4045 = vmatprep.subr.mxu0 0.0
  %4046 = vmatpush1.xpose.msra.mxu0 0.0
  %4047 = vmatprep.subr.mxu0 0.0
  %4048 = vmatpush1.xpose.msra.mxu0 0.0
  %4049 = vmatprep.subr.mxu0 0.0
  %4050 = vmatpush1.xpose.msra.mxu0 0.0
  %4051 = vmatprep.subr.mxu0 0.0
  %4052 = vmatpush1.xpose.msra.mxu0 0.0
  %4053 = vmatprep.subr.mxu0 0.0
  %4054 = vmatpush1.xpose.msra.mxu0 0.0
  %4055 = vmatprep.subr.mxu0 0.0
  %4056 = vmatpush1.xpose.msra.mxu0 0.0
  %4057 = vmatprep.subr.mxu0 0.0
  %4058 = vmatpush1.xpose.msra.mxu0 0.0
  %4059 = vmatprep.subr.mxu0 0.0
  %4060 = vmatpush1.xpose.msra.mxu0 0.0
  %4061 = vmatprep.subr.mxu0 0.0
  %4062 = vmatpush1.xpose.msra.mxu0 0.0
  %4063 = vmatprep.subr.mxu0 0.0
  %4064 = vmatpush1.xpose.msra.mxu0 0.0
  %4065 = vmatprep.subr.mxu0 0.0
  %4066 = vmatpush1.xpose.msra.mxu0 0.0
  %4067 = vmatprep.subr.mxu0 0.0
  %4068 = vmatpush1.xpose.msra.mxu0 0.0
  %4069 = vmatprep.subr.mxu0 0.0
  %4070 = vmatpush1.xpose.msra.mxu0 0.0
  %4071 = vmatprep.subr.mxu0 0.0
  %4072 = vmatpush1.xpose.msra.mxu0 0.0
  %4073 = vmatprep.subr.mxu0 0.0
  %4074 = vmatpush1.xpose.msra.mxu0 0.0
  %4075 = vmatprep.subr.mxu0 0.0
  %4076 = vmatpush1.xpose.msra.mxu0 0.0
  %4077 = vmatprep.subr.mxu0 0.0
  %4078 = vmatpush1.xpose.msra.mxu0 0.0
  %4079 = vmatprep.subr.mxu0 0.0
  %4080 = vmatpush1.xpose.msra.mxu0 0.0
  %4081 = vmatprep.subr.mxu0 0.0
  %4082 = vmatpush1.xpose.msra.mxu0 0.0
  %4083 = vmatprep.subr.mxu0 0.0
  %4084 = vmatpush1.xpose.msra.mxu0 0.0
  %4085 = vmatprep.mubr.f32.mxu0 0.0
  %4086 = vmatmul.mubr.f32.gmra.mrb[0].mxu0 %v4016
  %v4087 = vpop.f32.mrb[0].mxu0
  %v4088 = vadd.f32 0.0, %v4087
  %v4089 = vpop.f32.mrb[0].mxu0
  %4090 = vdwg.mxu0
  %v4091 = vmul.f32 %v4088, 0.35355338
  %v4092 = vadd.f32 %v4091, %v434
  %v4093 = vsel %vm353, %v4092, -inf
  %4094 = vmax.xlane.f32.xlu0 %v4093
  %v4095 = vpop.xlane.xlu0 %4094
  %v4096 = vsub.f32 %v4092, %v4095
  %v4097 = vmul.f32 %v4096, 1.442695
  %v4098 = vpow.pop %v4097
  %v4099 = vsel %vm353, %v4098, 0.0
  %4100 = vadd.xlane.f32.xlu0 %v4099
  %v4101 = vpop.xlane.xlu0 %4100
  %v4102 = vrcp.pop %v4101
  %v4103 = vmul.f32 %v4098, %v4102
  %v4105 = vsel %vm353, %v4103, 0
  %4107 = vmatprep.subr.mxu0 0.0
  %4108 = vmatpush1.msra.mxu0 %v4012
  %4109 = vmatprep.subr.mxu0 0.0
  %4110 = vmatpush1.msra.mxu0 0.0
  %4111 = vmatprep.subr.mxu0 0.0
  %4112 = vmatpush1.msra.mxu0 0.0
  %4113 = vmatprep.subr.mxu0 0.0
  %4114 = vmatpush1.msra.mxu0 0.0
  %4115 = vmatprep.subr.mxu0 0.0
  %4116 = vmatpush1.msra.mxu0 0.0
  %4117 = vmatprep.subr.mxu0 0.0
  %4118 = vmatpush1.msra.mxu0 0.0
  %4119 = vmatprep.subr.mxu0 0.0
  %4120 = vmatpush1.msra.mxu0 0.0
  %4121 = vmatprep.subr.mxu0 0.0
  %4122 = vmatpush1.msra.mxu0 0.0
  %4123 = vmatprep.subr.mxu0 0.0
  %4124 = vmatpush1.msra.mxu0 0.0
  %4125 = vmatprep.subr.mxu0 0.0
  %4126 = vmatpush1.msra.mxu0 0.0
  %4127 = vmatprep.subr.mxu0 0.0
  %4128 = vmatpush1.msra.mxu0 0.0
  %4129 = vmatprep.subr.mxu0 0.0
  %4130 = vmatpush1.msra.mxu0 0.0
  %4131 = vmatprep.subr.mxu0 0.0
  %4132 = vmatpush1.msra.mxu0 0.0
  %4133 = vmatprep.subr.mxu0 0.0
  %4134 = vmatpush1.msra.mxu0 0.0
  %4135 = vmatprep.subr.mxu0 0.0
  %4136 = vmatpush1.msra.mxu0 0.0
  %4137 = vmatprep.subr.mxu0 0.0
  %4138 = vmatpush1.msra.mxu0 0.0
  %4139 = vmatprep.subr.mxu0 0.0
  %4140 = vmatpush1.msra.mxu0 0.0
  %4141 = vmatprep.subr.mxu0 0.0
  %4142 = vmatpush1.msra.mxu0 0.0
  %4143 = vmatprep.subr.mxu0 0.0
  %4144 = vmatpush1.msra.mxu0 0.0
  %4145 = vmatprep.subr.mxu0 0.0
  %4146 = vmatpush1.msra.mxu0 0.0
  %4147 = vmatprep.subr.mxu0 0.0
  %4148 = vmatpush1.msra.mxu0 0.0
  %4149 = vmatprep.subr.mxu0 0.0
  %4150 = vmatpush1.msra.mxu0 0.0
  %4151 = vmatprep.subr.mxu0 0.0
  %4152 = vmatpush1.msra.mxu0 0.0
  %4153 = vmatprep.subr.mxu0 0.0
  %4154 = vmatpush1.msra.mxu0 0.0
  %4155 = vmatprep.subr.mxu0 0.0
  %4156 = vmatpush1.msra.mxu0 0.0
  %4157 = vmatprep.subr.mxu0 0.0
  %4158 = vmatpush1.msra.mxu0 0.0
  %4159 = vmatprep.subr.mxu0 0.0
  %4160 = vmatpush1.msra.mxu0 0.0
  %4161 = vmatprep.subr.mxu0 0.0
  %4162 = vmatpush1.msra.mxu0 0.0
  %4163 = vmatprep.subr.mxu0 0.0
  %4164 = vmatpush1.msra.mxu0 0.0
  %4165 = vmatprep.subr.mxu0 0.0
  %4166 = vmatpush1.msra.mxu0 0.0
  %4167 = vmatprep.subr.mxu0 0.0
  %4168 = vmatpush1.msra.mxu0 0.0
  %4169 = vmatprep.subr.mxu0 0.0
  %4170 = vmatpush1.msra.mxu0 0.0
  %4171 = vmatprep.mubr.f32.mxu0 0.0
  %4172 = vmatmul.mubr.f32.gmra.mrb[0].mxu0 %v4105
  %v4173 = vpop.f32.mrb[0].mxu0
  %v4174 = vadd.f32 0.0, %v4173
  %v4175 = vpop.f32.mrb[0].mxu0
  %4176 = vdwg.mxu0
  %s4177 = scalar_lea.vmem %s4, 56
  %v4178 = vld [vmem:[%s4177] sm:$0xff]
  %v4180 = vsel %vm353, %v4174, 0
  %4182 = vmatprep.subr.mxu0 0.0
  %4183 = vmatpush1.msra.mxu0 %v4178
  %4184 = vmatprep.subr.mxu0 0.0
  %4185 = vmatpush1.msra.mxu0 0.0
  %4186 = vmatprep.subr.mxu0 0.0
  %4187 = vmatpush1.msra.mxu0 0.0
  %4188 = vmatprep.subr.mxu0 0.0
  %4189 = vmatpush1.msra.mxu0 0.0
  %4190 = vmatprep.subr.mxu0 0.0
  %4191 = vmatpush1.msra.mxu0 0.0
  %4192 = vmatprep.subr.mxu0 0.0
  %4193 = vmatpush1.msra.mxu0 0.0
  %4194 = vmatprep.subr.mxu0 0.0
  %4195 = vmatpush1.msra.mxu0 0.0
  %4196 = vmatprep.subr.mxu0 0.0
  %4197 = vmatpush1.msra.mxu0 0.0
  %4198 = vmatprep.subr.mxu0 0.0
  %4199 = vmatpush1.msra.mxu0 0.0
  %4200 = vmatprep.subr.mxu0 0.0
  %4201 = vmatpush1.msra.mxu0 0.0
  %4202 = vmatprep.subr.mxu0 0.0
  %4203 = vmatpush1.msra.mxu0 0.0
  %4204 = vmatprep.subr.mxu0 0.0
  %4205 = vmatpush1.msra.mxu0 0.0
  %4206 = vmatprep.subr.mxu0 0.0
  %4207 = vmatpush1.msra.mxu0 0.0
  %4208 = vmatprep.subr.mxu0 0.0
  %4209 = vmatpush1.msra.mxu0 0.0
  %4210 = vmatprep.subr.mxu0 0.0
  %4211 = vmatpush1.msra.mxu0 0.0
  %4212 = vmatprep.subr.mxu0 0.0
  %4213 = vmatpush1.msra.mxu0 0.0
  %4214 = vmatprep.subr.mxu0 0.0
  %4215 = vmatpush1.msra.mxu0 0.0
  %4216 = vmatprep.subr.mxu0 0.0
  %4217 = vmatpush1.msra.mxu0 0.0
  %4218 = vmatprep.subr.mxu0 0.0
  %4219 = vmatpush1.msra.mxu0 0.0
  %4220 = vmatprep.subr.mxu0 0.0
  %4221 = vmatpush1.msra.mxu0 0.0
  %4222 = vmatprep.subr.mxu0 0.0
  %4223 = vmatpush1.msra.mxu0 0.0
  %4224 = vmatprep.subr.mxu0 0.0
  %4225 = vmatpush1.msra.mxu0 0.0
  %4226 = vmatprep.subr.mxu0 0.0
  %4227 = vmatpush1.msra.mxu0 0.0
  %4228 = vmatprep.subr.mxu0 0.0
  %4229 = vmatpush1.msra.mxu0 0.0
  %4230 = vmatprep.subr.mxu0 0.0
  %4231 = vmatpush1.msra.mxu0 0.0
  %4232 = vmatprep.subr.mxu0 0.0
  %4233 = vmatpush1.msra.mxu0 0.0
  %4234 = vmatprep.subr.mxu0 0.0
  %4235 = vmatpush1.msra.mxu0 0.0
  %4236 = vmatprep.subr.mxu0 0.0
  %4237 = vmatpush1.msra.mxu0 0.0
  %4238 = vmatprep.subr.mxu0 0.0
  %4239 = vmatpush1.msra.mxu0 0.0
  %4240 = vmatprep.subr.mxu0 0.0
  %4241 = vmatpush1.msra.mxu0 0.0
  %4242 = vmatprep.subr.mxu0 0.0
  %4243 = vmatpush1.msra.mxu0 0.0
  %4244 = vmatprep.subr.mxu0 0.0
  %4245 = vmatpush1.msra.mxu0 0.0
  %4246 = vmatprep.mubr.f32.mxu0 0.0
  %4247 = vmatmul.mubr.f32.gmra.mrb[0].mxu0 %v4180
  %v4248 = vpop.f32.mrb[0].mxu0
  %v4249 = vadd.f32 0.0, %v4248
  %v4250 = vpop.f32.mrb[0].mxu0
  %4251 = vdwg.mxu0
  %v4252 = vadd.f32 %v3765, %v4249
  %s4253 = scalar_lea.vmem %s5, 1
  %v4254 = vld [vmem:[%s4253] sm:$0x1]
  %v4256 = vlaneseq
  %v4257 = vshrl.u32 %v4256, 7
  %v4258 = vsub.s32 0, %v4257
  %v4259 = vrot.slane %v4254, %v4258
  %v4261 = vadd.f32 %v4252, %v4259
  %v4262 = vadd.f32 %v4261, %v2303
  %s4263 = scalar_lea.vmem %s6, 1
  %v4264 = vld [vmem:[%s4263] sm:$0x1]
  %s4265 = scalar_lea.vmem %s7, 1
  %v4266 = vld [vmem:[%s4265] sm:$0x1]
  %v4267 = vsel %vm74, %v4262, 0.0
  %4268 = vadd.xlane.f32.xlu0 %v4267
  %v4269 = vpop.xlane.xlu0 %4268
  %v4270 = vmul.f32 %v4269, %v78
  %v4271 = vsub.f32 %v4262, %v4270
  %v4272 = vmul.f32 %v4271, %v4271
  %v4273 = vsel %vm74, %v4272, 0.0
  %4274 = vadd.xlane.f32.xlu0 %v4273
  %v4275 = vpop.xlane.xlu0 %4274
  %v4276 = vmul.f32 %v4275, %v78
  %v4277 = vadd.f32 %v4276, 1e-12
  %v4278 = vrsqrt.pop %v4277
  %v4279 = vmul.f32 %v4271, %v4278
  %v4281 = vlaneseq
  %v4282 = vshrl.u32 %v4281, 7
  %v4283 = vsub.s32 0, %v4282
  %v4284 = vrot.slane %v4264, %v4283
  %v4286 = vmul.f32 %v4279, %v4284
  %v4288 = vlaneseq
  %v4289 = vshrl.u32 %v4288, 7
  %v4290 = vsub.s32 0, %v4289
  %v4291 = vrot.slane %v4266, %v4290
  %v4293 = vadd.f32 %v4286, %v4291
  %s4294 = scalar_lea.vmem %s8, 32
  %v4295 = vld [vmem:[%s4294] sm:$0xff]
  %v4296 = vld [vmem:[%s4294 + $0x8] sm:$0xff]
  %v4297 = vld [vmem:[%s4294 + $0x10] sm:$0xff]
  %v4298 = vld [vmem:[%s4294 + $0x18] sm:$0xff]
  %s4299 = scalar_lea.vmem %s9, 1
  %v4300 = vld [vmem:[%s4299] sm:$0x1]
  %v4302 = vlaneseq
  %v4303 = vshrl.u32 %v4302, 7
  %v4304 = vsub.s32 0, %v4303
  %v4305 = vrot.slane %v4300, %v4304
  %v4308 = vsel %vm74, %v4293, 0
  %4310 = vmatprep.subr.mxu0 0.0
  %4311 = vmatpush1.msra.mxu0 %v4295
  %4312 = vmatprep.subr.mxu0 0.0
  %4313 = vmatpush1.msra.mxu0 %v4296
  %4314 = vmatprep.subr.mxu0 0.0
  %4315 = vmatpush1.msra.mxu0 %v4297
  %4316 = vmatprep.subr.mxu0 0.0
  %4317 = vmatpush1.msra.mxu0 %v4298
  %4318 = vmatprep.subr.mxu0 0.0
  %4319 = vmatpush1.msra.mxu0 0.0
  %4320 = vmatprep.subr.mxu0 0.0
  %4321 = vmatpush1.msra.mxu0 0.0
  %4322 = vmatprep.subr.mxu0 0.0
  %4323 = vmatpush1.msra.mxu0 0.0
  %4324 = vmatprep.subr.mxu0 0.0
  %4325 = vmatpush1.msra.mxu0 0.0
  %4326 = vmatprep.subr.mxu0 0.0
  %4327 = vmatpush1.msra.mxu0 0.0
  %4328 = vmatprep.subr.mxu0 0.0
  %4329 = vmatpush1.msra.mxu0 0.0
  %4330 = vmatprep.subr.mxu0 0.0
  %4331 = vmatpush1.msra.mxu0 0.0
  %4332 = vmatprep.subr.mxu0 0.0
  %4333 = vmatpush1.msra.mxu0 0.0
  %4334 = vmatprep.subr.mxu0 0.0
  %4335 = vmatpush1.msra.mxu0 0.0
  %4336 = vmatprep.subr.mxu0 0.0
  %4337 = vmatpush1.msra.mxu0 0.0
  %4338 = vmatprep.subr.mxu0 0.0
  %4339 = vmatpush1.msra.mxu0 0.0
  %4340 = vmatprep.subr.mxu0 0.0
  %4341 = vmatpush1.msra.mxu0 0.0
  %4342 = vmatprep.subr.mxu0 0.0
  %4343 = vmatpush1.msra.mxu0 0.0
  %4344 = vmatprep.subr.mxu0 0.0
  %4345 = vmatpush1.msra.mxu0 0.0
  %4346 = vmatprep.subr.mxu0 0.0
  %4347 = vmatpush1.msra.mxu0 0.0
  %4348 = vmatprep.subr.mxu0 0.0
  %4349 = vmatpush1.msra.mxu0 0.0
  %4350 = vmatprep.subr.mxu0 0.0
  %4351 = vmatpush1.msra.mxu0 0.0
  %4352 = vmatprep.subr.mxu0 0.0
  %4353 = vmatpush1.msra.mxu0 0.0
  %4354 = vmatprep.subr.mxu0 0.0
  %4355 = vmatpush1.msra.mxu0 0.0
  %4356 = vmatprep.subr.mxu0 0.0
  %4357 = vmatpush1.msra.mxu0 0.0
  %4358 = vmatprep.subr.mxu0 0.0
  %4359 = vmatpush1.msra.mxu0 0.0
  %4360 = vmatprep.subr.mxu0 0.0
  %4361 = vmatpush1.msra.mxu0 0.0
  %4362 = vmatprep.subr.mxu0 0.0
  %4363 = vmatpush1.msra.mxu0 0.0
  %4364 = vmatprep.subr.mxu0 0.0
  %4365 = vmatpush1.msra.mxu0 0.0
  %4366 = vmatprep.subr.mxu0 0.0
  %4367 = vmatpush1.msra.mxu0 0.0
  %4368 = vmatprep.subr.mxu0 0.0
  %4369 = vmatpush1.msra.mxu0 0.0
  %4370 = vmatprep.subr.mxu0 0.0
  %4371 = vmatpush1.msra.mxu0 0.0
  %4372 = vmatprep.subr.mxu0 0.0
  %4373 = vmatpush1.msra.mxu0 0.0
  %4374 = vmatprep.mubr.f32.mxu0 0.0
  %4375 = vmatmul.mubr.f32.gmra.mrb[0].mxu0 %v4308
  %v4376 = vpop.f32.mrb[0].mxu0
  %v4377 = vadd.f32 %v4305, %v4376
  %v4378 = vpop.f32.mrb[0].mxu0
  %4379 = vdwg.mxu0
  %v4380 = vmul.f32 %v4377, 0.5
  %v4381 = vmul.f32 %v4377, 0.044715
  %v4382 = vmul.f32 %v4381, %v4377
  %v4383 = vmul.f32 %v4382, %v4377
  %v4384 = vadd.f32 %v4377, %v4383
  %v4385 = vmul.f32 %v4384, 0.7978846
  %v4386 = vtanh.pop %v4385
  %v4387 = vadd.f32 %v4386, 1.0
  %v4388 = vmul.f32 %v4380, %v4387
  %s4389 = scalar_lea.vmem %s10, 64
  %v4390 = vld [vmem:[%s4389] sm:$0xff]
  %v4391 = vld [vmem:[%s4389 + $0x8] sm:$0xff]
  %v4392 = vld [vmem:[%s4389 + $0x10] sm:$0xff]
  %v4393 = vld [vmem:[%s4389 + $0x18] sm:$0xff]
  %v4394 = vld [vmem:[%s4389 + $0x20] sm:$0xff]
  %v4395 = vld [vmem:[%s4389 + $0x28] sm:$0xff]
  %v4396 = vld [vmem:[%s4389 + $0x30] sm:$0xff]
  %v4397 = vld [vmem:[%s4389 + $0x38] sm:$0xff]
  %s4398 = scalar_lea.vmem %s11, 1
  %v4399 = vld [vmem:[%s4398] sm:$0x1]
  %v4401 = vlaneseq
  %v4402 = vshrl.u32 %v4401, 7
  %v4403 = vsub.s32 0, %v4402
  %v4404 = vrot.slane %v4399, %v4403
  %v4407 = vsel %vm2200, %v4388, 0
  %4409 = vmatprep.subr.mxu0 0.0
  %4410 = vmatpush1.msra.mxu0 %v4390
  %4411 = vmatprep.subr.mxu0 0.0
  %4412 = vmatpush1.msra.mxu0 %v4391
  %4413 = vmatprep.subr.mxu0 0.0
  %4414 = vmatpush1.msra.mxu0 %v4392
  %4415 = vmatprep.subr.mxu0 0.0
  %4416 = vmatpush1.msra.mxu0 %v4393
  %4417 = vmatprep.subr.mxu0 0.0
  %4418 = vmatpush1.msra.mxu0 %v4394
  %4419 = vmatprep.subr.mxu0 0.0
  %4420 = vmatpush1.msra.mxu0 %v4395
  %4421 = vmatprep.subr.mxu0 0.0
  %4422 = vmatpush1.msra.mxu0 %v4396
  %4423 = vmatprep.subr.mxu0 0.0
  %4424 = vmatpush1.msra.mxu0 %v4397
  %4425 = vmatprep.subr.mxu0 0.0
  %4426 = vmatpush1.msra.mxu0 0.0
  %4427 = vmatprep.subr.mxu0 0.0
  %4428 = vmatpush1.msra.mxu0 0.0
  %4429 = vmatprep.subr.mxu0 0.0
  %4430 = vmatpush1.msra.mxu0 0.0
  %4431 = vmatprep.subr.mxu0 0.0
  %4432 = vmatpush1.msra.mxu0 0.0
  %4433 = vmatprep.subr.mxu0 0.0
  %4434 = vmatpush1.msra.mxu0 0.0
  %4435 = vmatprep.subr.mxu0 0.0
  %4436 = vmatpush1.msra.mxu0 0.0
  %4437 = vmatprep.subr.mxu0 0.0
  %4438 = vmatpush1.msra.mxu0 0.0
  %4439 = vmatprep.subr.mxu0 0.0
  %4440 = vmatpush1.msra.mxu0 0.0
  %4441 = vmatprep.subr.mxu0 0.0
  %4442 = vmatpush1.msra.mxu0 0.0
  %4443 = vmatprep.subr.mxu0 0.0
  %4444 = vmatpush1.msra.mxu0 0.0
  %4445 = vmatprep.subr.mxu0 0.0
  %4446 = vmatpush1.msra.mxu0 0.0
  %4447 = vmatprep.subr.mxu0 0.0
  %4448 = vmatpush1.msra.mxu0 0.0
  %4449 = vmatprep.subr.mxu0 0.0
  %4450 = vmatpush1.msra.mxu0 0.0
  %4451 = vmatprep.subr.mxu0 0.0
  %4452 = vmatpush1.msra.mxu0 0.0
  %4453 = vmatprep.subr.mxu0 0.0
  %4454 = vmatpush1.msra.mxu0 0.0
  %4455 = vmatprep.subr.mxu0 0.0
  %4456 = vmatpush1.msra.mxu0 0.0
  %4457 = vmatprep.subr.mxu0 0.0
  %4458 = vmatpush1.msra.mxu0 0.0
  %4459 = vmatprep.subr.mxu0 0.0
  %4460 = vmatpush1.msra.mxu0 0.0
  %4461 = vmatprep.subr.mxu0 0.0
  %4462 = vmatpush1.msra.mxu0 0.0
  %4463 = vmatprep.subr.mxu0 0.0
  %4464 = vmatpush1.msra.mxu0 0.0
  %4465 = vmatprep.subr.mxu0 0.0
  %4466 = vmatpush1.msra.mxu0 0.0
  %4467 = vmatprep.subr.mxu0 0.0
  %4468 = vmatpush1.msra.mxu0 0.0
  %4469 = vmatprep.subr.mxu0 0.0
  %4470 = vmatpush1.msra.mxu0 0.0
  %4471 = vmatprep.subr.mxu0 0.0
  %4472 = vmatpush1.msra.mxu0 0.0
  %4473 = vmatprep.mubr.f32.mxu0 0.0
  %4474 = vmatmul.mubr.f32.gmra.mrb[0].mxu0 %v4407
  %v4475 = vpop.f32.mrb[0].mxu0
  %v4476 = vadd.f32 %v4404, %v4475
  %v4477 = vpop.f32.mrb[0].mxu0
  %4478 = vdwg.mxu0
  %v4479 = vadd.f32 %v4476, %v4293
  %s4480 = scalar_lea.vmem %s12, 1
  %v4481 = vld [vmem:[%s4480] sm:$0x1]
  %s4482 = scalar_lea.vmem %s13, 1
  %v4483 = vld [vmem:[%s4482] sm:$0x1]
  %v4484 = vsel %vm74, %v4479, 0.0
  %4485 = vadd.xlane.f32.xlu0 %v4484
  %v4486 = vpop.xlane.xlu0 %4485
  %v4487 = vmul.f32 %v4486, %v78
  %v4488 = vsub.f32 %v4479, %v4487
  %v4489 = vmul.f32 %v4488, %v4488
  %v4490 = vsel %vm74, %v4489, 0.0
  %4491 = vadd.xlane.f32.xlu0 %v4490
  %v4492 = vpop.xlane.xlu0 %4491
  %v4493 = vmul.f32 %v4492, %v78
  %v4494 = vadd.f32 %v4493, 1e-12
  %v4495 = vrsqrt.pop %v4494
  %v4496 = vmul.f32 %v4488, %v4495
  %v4498 = vlaneseq
  %v4499 = vshrl.u32 %v4498, 7
  %v4500 = vsub.s32 0, %v4499
  %v4501 = vrot.slane %v4481, %v4500
  %v4503 = vmul.f32 %v4496, %v4501
  %v4505 = vlaneseq
  %v4506 = vshrl.u32 %v4505, 7
  %v4507 = vsub.s32 0, %v4506
  %v4508 = vrot.slane %v4483, %v4507
  %v4510 = vadd.f32 %v4503, %v4508
  %v4511 = vld [vmem:[%s16] sm:$0xff]
  %v4512 = vld [vmem:[%s16 + $0x8] sm:$0xff]
  %v4513 = vld [vmem:[%s16 + $0x10] sm:$0xff]
  %v4514 = vld [vmem:[%s16 + $0x18] sm:$0xff]
  %v4515 = vld [vmem:[%s17] sm:$0x1]
  %v4517 = vsel %vm74, %v4510, 0
  %4519 = vmatprep.subr.mxu0 0.0
  %4520 = vmatpush1.msra.mxu0 %v4511
  %4521 = vmatprep.subr.mxu0 0.0
  %4522 = vmatpush1.msra.mxu0 %v4512
  %4523 = vmatprep.subr.mxu0 0.0
  %4524 = vmatpush1.msra.mxu0 %v4513
  %4525 = vmatprep.subr.mxu0 0.0
  %4526 = vmatpush1.msra.mxu0 %v4514
  %4527 = vmatprep.subr.mxu0 0.0
  %4528 = vmatpush1.msra.mxu0 0.0
  %4529 = vmatprep.subr.mxu0 0.0
  %4530 = vmatpush1.msra.mxu0 0.0
  %4531 = vmatprep.subr.mxu0 0.0
  %4532 = vmatpush1.msra.mxu0 0.0
  %4533 = vmatprep.subr.mxu0 0.0
  %4534 = vmatpush1.msra.mxu0 0.0
  %4535 = vmatprep.subr.mxu0 0.0
  %4536 = vmatpush1.msra.mxu0 0.0
  %4537 = vmatprep.subr.mxu0 0.0
  %4538 = vmatpush1.msra.mxu0 0.0
  %4539 = vmatprep.subr.mxu0 0.0
  %4540 = vmatpush1.msra.mxu0 0.0
  %4541 = vmatprep.subr.mxu0 0.0
  %4542 = vmatpush1.msra.mxu0 0.0
  %4543 = vmatprep.subr.mxu0 0.0
  %4544 = vmatpush1.msra.mxu0 0.0
  %4545 = vmatprep.subr.mxu0 0.0
  %4546 = vmatpush1.msra.mxu0 0.0
  %4547 = vmatprep.subr.mxu0 0.0
  %4548 = vmatpush1.msra.mxu0 0.0
  %4549 = vmatprep.subr.mxu0 0.0
  %4550 = vmatpush1.msra.mxu0 0.0
  %4551 = vmatprep.subr.mxu0 0.0
  %4552 = vmatpush1.msra.mxu0 0.0
  %4553 = vmatprep.subr.mxu0 0.0
  %4554 = vmatpush1.msra.mxu0 0.0
  %4555 = vmatprep.subr.mxu0 0.0
  %4556 = vmatpush1.msra.mxu0 0.0
  %4557 = vmatprep.subr.mxu0 0.0
  %4558 = vmatpush1.msra.mxu0 0.0
  %4559 = vmatprep.subr.mxu0 0.0
  %4560 = vmatpush1.msra.mxu0 0.0
  %4561 = vmatprep.subr.mxu0 0.0
  %4562 = vmatpush1.msra.mxu0 0.0
  %4563 = vmatprep.subr.mxu0 0.0
  %4564 = vmatpush1.msra.mxu0 0.0
  %4565 = vmatprep.subr.mxu0 0.0
  %4566 = vmatpush1.msra.mxu0 0.0
  %4567 = vmatprep.subr.mxu0 0.0
  %4568 = vmatpush1.msra.mxu0 0.0
  %4569 = vmatprep.subr.mxu0 0.0
  %4570 = vmatpush1.msra.mxu0 0.0
  %4571 = vmatprep.subr.mxu0 0.0
  %4572 = vmatpush1.msra.mxu0 0.0
  %4573 = vmatprep.subr.mxu0 0.0
  %4574 = vmatpush1.msra.mxu0 0.0
  %4575 = vmatprep.subr.mxu0 0.0
  %4576 = vmatpush1.msra.mxu0 0.0
  %4577 = vmatprep.subr.mxu0 0.0
  %4578 = vmatpush1.msra.mxu0 0.0
  %4579 = vmatprep.subr.mxu0 0.0
  %4580 = vmatpush1.msra.mxu0 0.0
  %4581 = vmatprep.subr.mxu0 0.0
  %4582 = vmatpush1.msra.mxu0 0.0
  %4583 = vmatprep.mubr.f32.mxu0 0.0
  %4584 = vmatmul.mubr.f32.gmra.mrb[0].mxu0 %v4517
  %v4585 = vpop.f32.mrb[0].mxu0
  %v4586 = vadd.f32 %v4515, %v4585
  %v4587 = vpop.f32.mrb[0].mxu0
  %4588 = vdwg.mxu0
  %v4589 = vtanh.pop %v4586
  %v4590 = vld [vmem:[%s18] sm:$0x1]
  %v4591 = vmul.f32 %v4589, %v4590
  %vm4592 = vcmask 253952
  %v4593 = vsel %vm4592, %v4591, 0.0
  %4594 = vadd.xlane.f32.xlu0 %v4593
  %v4595 = vpop.xlane.xlu0 %4594
  %v4596 = vld [vmem:[#allocation2] sm:$0x1]
  %v4597 = vadd.f32 %v4595, %v4596
  %vm4598 = vcmp.eq.s32.totalorder %v71, 0
  %4600 = vset.pattern.permute.xlu0 0
  %4601 = vperm.xlu0 %4600, %v4597
  %v4602 = vpop.permute.xlu0 %4601
  %v4604 = vsel %vm4598, %v4602, 0.0
  %v4605 = vsel %vm74, %v68, 0.0
  %4606 = vadd.xlane.f32.xlu0 %v4605
  %v4607 = vpop.xlane.xlu0 %4606
  %v4608 = vmul.f32 %v4607, %v78
  %v4609 = vsub.f32 %v68, %v4608
  %v4610 = vmul.f32 %v4609, %v4609
  %v4611 = vsel %vm74, %v4610, 0.0
  %4612 = vadd.xlane.f32.xlu0 %v4611
  %v4613 = vpop.xlane.xlu0 %4612
  %v4614 = vmul.f32 %v4613, %v78
  %v4615 = vadd.f32 %v4614, 1e-12
  %v4616 = vrsqrt.pop %v4615
  %v4617 = vmul.f32 %v4609, %v4616
  %v4618 = vmul.f32 %v4617, %v93
  %v4619 = vadd.f32 %v4618, %v100
  %v4621 = vsel %vm74, %v4619, 0
  %4623 = vmatprep.subr.mxu0 0.0
  %4624 = vmatpush1.msra.mxu0 %v103
  %4625 = vmatprep.subr.mxu0 0.0
  %4626 = vmatpush1.msra.mxu0 %v104
  %4627 = vmatprep.subr.mxu0 0.0
  %4628 = vmatpush1.msra.mxu0 %v105
  %4629 = vmatprep.subr.mxu0 0.0
  %4630 = vmatpush1.msra.mxu0 %v106
  %4631 = vmatprep.subr.mxu0 0.0
  %4632 = vmatpush1.msra.mxu0 0.0
  %4633 = vmatprep.subr.mxu0 0.0
  %4634 = vmatpush1.msra.mxu0 0.0
  %4635 = vmatprep.subr.mxu0 0.0
  %4636 = vmatpush1.msra.mxu0 0.0
  %4637 = vmatprep.subr.mxu0 0.0
  %4638 = vmatpush1.msra.mxu0 0.0
  %4639 = vmatprep.subr.mxu0 0.0
  %4640 = vmatpush1.msra.mxu0 0.0
  %4641 = vmatprep.subr.mxu0 0.0
  %4642 = vmatpush1.msra.mxu0 0.0
  %4643 = vmatprep.subr.mxu0 0.0
  %4644 = vmatpush1.msra.mxu0 0.0
  %4645 = vmatprep.subr.mxu0 0.0
  %4646 = vmatpush1.msra.mxu0 0.0
  %4647 = vmatprep.subr.mxu0 0.0
  %4648 = vmatpush1.msra.mxu0 0.0
  %4649 = vmatprep.subr.mxu0 0.0
  %4650 = vmatpush1.msra.mxu0 0.0
  %4651 = vmatprep.subr.mxu0 0.0
  %4652 = vmatpush1.msra.mxu0 0.0
  %4653 = vmatprep.subr.mxu0 0.0
  %4654 = vmatpush1.msra.mxu0 0.0
  %4655 = vmatprep.subr.mxu0 0.0
  %4656 = vmatpush1.msra.mxu0 0.0
  %4657 = vmatprep.subr.mxu0 0.0
  %4658 = vmatpush1.msra.mxu0 0.0
  %4659 = vmatprep.subr.mxu0 0.0
  %4660 = vmatpush1.msra.mxu0 0.0
  %4661 = vmatprep.subr.mxu0 0.0
  %4662 = vmatpush1.msra.mxu0 0.0
  %4663 = vmatprep.subr.mxu0 0.0
  %4664 = vmatpush1.msra.mxu0 0.0
  %4665 = vmatprep.subr.mxu0 0.0
  %4666 = vmatpush1.msra.mxu0 0.0
  %4667 = vmatprep.subr.mxu0 0.0
  %4668 = vmatpush1.msra.mxu0 0.0
  %4669 = vmatprep.subr.mxu0 0.0
  %4670 = vmatpush1.msra.mxu0 0.0
  %4671 = vmatprep.subr.mxu0 0.0
  %4672 = vmatpush1.msra.mxu0 0.0
  %4673 = vmatprep.subr.mxu0 0.0
  %4674 = vmatpush1.msra.mxu0 0.0
  %4675 = vmatprep.subr.mxu0 0.0
  %4676 = vmatpush1.msra.mxu0 0.0
  %4677 = vmatprep.subr.mxu0 0.0
  %4678 = vmatpush1.msra.mxu0 0.0
  %4679 = vmatprep.subr.mxu0 0.0
  %4680 = vmatpush1.msra.mxu0 0.0
  %4681 = vmatprep.subr.mxu0 0.0
  %4682 = vmatpush1.msra.mxu0 0.0
  %4683 = vmatprep.subr.mxu0 0.0
  %4684 = vmatpush1.msra.mxu0 0.0
  %4685 = vmatprep.subr.mxu0 0.0
  %4686 = vmatpush1.msra.mxu0 0.0
  %4687 = vmatprep.mubr.f32.mxu0 0.0
  %4688 = vmatmul.mubr.f32.gmra.mrb[0].mxu0 %v4621
  %v4689 = vpop.f32.mrb[0].mxu0
  %v4690 = vadd.f32 %v112, %v4689
  %v4691 = vpop.f32.mrb[0].mxu0
  %4692 = vdwg.mxu0
  %4693 = vmatprep.subr.mxu0 0.0
  %4694 = vmatpush1.msra.mxu0 %v188
  %4695 = vmatprep.subr.mxu0 0.0
  %4696 = vmatpush1.msra.mxu0 %v189
  %4697 = vmatprep.subr.mxu0 0.0
  %4698 = vmatpush1.msra.mxu0 %v190
  %4699 = vmatprep.subr.mxu0 0.0
  %4700 = vmatpush1.msra.mxu0 %v191
  %4701 = vmatprep.subr.mxu0 0.0
  %4702 = vmatpush1.msra.mxu0 0.0
  %4703 = vmatprep.subr.mxu0 0.0
  %4704 = vmatpush1.msra.mxu0 0.0
  %4705 = vmatprep.subr.mxu0 0.0
  %4706 = vmatpush1.msra.mxu0 0.0
  %4707 = vmatprep.subr.mxu0 0.0
  %4708 = vmatpush1.msra.mxu0 0.0
  %4709 = vmatprep.subr.mxu0 0.0
  %4710 = vmatpush1.msra.mxu0 0.0
  %4711 = vmatprep.subr.mxu0 0.0
  %4712 = vmatpush1.msra.mxu0 0.0
  %4713 = vmatprep.subr.mxu0 0.0
  %4714 = vmatpush1.msra.mxu0 0.0
  %4715 = vmatprep.subr.mxu0 0.0
  %4716 = vmatpush1.msra.mxu0 0.0
  %4717 = vmatprep.subr.mxu0 0.0
  %4718 = vmatpush1.msra.mxu0 0.0
  %4719 = vmatprep.subr.mxu0 0.0
  %4720 = vmatpush1.msra.mxu0 0.0
  %4721 = vmatprep.subr.mxu0 0.0
  %4722 = vmatpush1.msra.mxu0 0.0
  %4723 = vmatprep.subr.mxu0 0.0
  %4724 = vmatpush1.msra.mxu0 0.0
  %4725 = vmatprep.subr.mxu0 0.0
  %4726 = vmatpush1.msra.mxu0 0.0
  %4727 = vmatprep.subr.mxu0 0.0
  %4728 = vmatpush1.msra.mxu0 0.0
  %4729 = vmatprep.subr.mxu0 0.0
  %4730 = vmatpush1.msra.mxu0 0.0
  %4731 = vmatprep.subr.mxu0 0.0
  %4732 = vmatpush1.msra.mxu0 0.0
  %4733 = vmatprep.subr.mxu0 0.0
  %4734 = vmatpush1.msra.mxu0 0.0
  %4735 = vmatprep.subr.mxu0 0.0
  %4736 = vmatpush1.msra.mxu0 0.0
  %4737 = vmatprep.subr.mxu0 0.0
  %4738 = vmatpush1.msra.mxu0 0.0
  %4739 = vmatprep.subr.mxu0 0.0
  %4740 = vmatpush1.msra.mxu0 0.0
  %4741 = vmatprep.subr.mxu0 0.0
  %4742 = vmatpush1.msra.mxu0 0.0
  %4743 = vmatprep.subr.mxu0 0.0
  %4744 = vmatpush1.msra.mxu0 0.0
  %4745 = vmatprep.subr.mxu0 0.0
  %4746 = vmatpush1.msra.mxu0 0.0
  %4747 = vmatprep.subr.mxu0 0.0
  %4748 = vmatpush1.msra.mxu0 0.0
  %4749 = vmatprep.subr.mxu0 0.0
  %4750 = vmatpush1.msra.mxu0 0.0
  %4751 = vmatprep.subr.mxu0 0.0
  %4752 = vmatpush1.msra.mxu0 0.0
  %4753 = vmatprep.subr.mxu0 0.0
  %4754 = vmatpush1.msra.mxu0 0.0
  %4755 = vmatprep.subr.mxu0 0.0
  %4756 = vmatpush1.msra.mxu0 0.0
  %4757 = vmatprep.mubr.f32.mxu0 0.0
  %4758 = vmatmul.mubr.f32.gmra.mrb[0].mxu0 %v4621
  %v4759 = vpop.f32.mrb[0].mxu0
  %v4760 = vadd.f32 %v198, %v4759
  %v4761 = vpop.f32.mrb[0].mxu0
  %4762 = vdwg.mxu0
  %4763 = vmatprep.subr.mxu0 0.0
  %4764 = vmatpush1.msra.mxu0 %v271
  %4765 = vmatprep.subr.mxu0 0.0
  %4766 = vmatpush1.msra.mxu0 %v272
  %4767 = vmatprep.subr.mxu0 0.0
  %4768 = vmatpush1.msra.mxu0 %v273
  %4769 = vmatprep.subr.mxu0 0.0
  %4770 = vmatpush1.msra.mxu0 %v274
  %4771 = vmatprep.subr.mxu0 0.0
  %4772 = vmatpush1.msra.mxu0 0.0
  %4773 = vmatprep.subr.mxu0 0.0
  %4774 = vmatpush1.msra.mxu0 0.0
  %4775 = vmatprep.subr.mxu0 0.0
  %4776 = vmatpush1.msra.mxu0 0.0
  %4777 = vmatprep.subr.mxu0 0.0
  %4778 = vmatpush1.msra.mxu0 0.0
  %4779 = vmatprep.subr.mxu0 0.0
  %4780 = vmatpush1.msra.mxu0 0.0
  %4781 = vmatprep.subr.mxu0 0.0
  %4782 = vmatpush1.msra.mxu0 0.0
  %4783 = vmatprep.subr.mxu0 0.0
  %4784 = vmatpush1.msra.mxu0 0.0
  %4785 = vmatprep.subr.mxu0 0.0
  %4786 = vmatpush1.msra.mxu0 0.0
  %4787 = vmatprep.subr.mxu0 0.0
  %4788 = vmatpush1.msra.mxu0 0.0
  %4789 = vmatprep.subr.mxu0 0.0
  %4790 = vmatpush1.msra.mxu0 0.0
  %4791 = vmatprep.subr.mxu0 0.0
  %4792 = vmatpush1.msra.mxu0 0.0
  %4793 = vmatprep.subr.mxu0 0.0
  %4794 = vmatpush1.msra.mxu0 0.0
  %4795 = vmatprep.subr.mxu0 0.0
  %4796 = vmatpush1.msra.mxu0 0.0
  %4797 = vmatprep.subr.mxu0 0.0
  %4798 = vmatpush1.msra.mxu0 0.0
  %4799 = vmatprep.subr.mxu0 0.0
  %4800 = vmatpush1.msra.mxu0 0.0
  %4801 = vmatprep.subr.mxu0 0.0
  %4802 = vmatpush1.msra.mxu0 0.0
  %4803 = vmatprep.subr.mxu0 0.0
  %4804 = vmatpush1.msra.mxu0 0.0
  %4805 = vmatprep.subr.mxu0 0.0
  %4806 = vmatpush1.msra.mxu0 0.0
  %4807 = vmatprep.subr.mxu0 0.0
  %4808 = vmatpush1.msra.mxu0 0.0
  %4809 = vmatprep.subr.mxu0 0.0
  %4810 = vmatpush1.msra.mxu0 0.0
  %4811 = vmatprep.subr.mxu0 0.0
  %4812 = vmatpush1.msra.mxu0 0.0
  %4813 = vmatprep.subr.mxu0 0.0
  %4814 = vmatpush1.msra.mxu0 0.0
  %4815 = vmatprep.subr.mxu0 0.0
  %4816 = vmatpush1.msra.mxu0 0.0
  %4817 = vmatprep.subr.mxu0 0.0
  %4818 = vmatpush1.msra.mxu0 0.0
  %4819 = vmatprep.subr.mxu0 0.0
  %4820 = vmatpush1.msra.mxu0 0.0
  %4821 = vmatprep.subr.mxu0 0.0
  %4822 = vmatpush1.msra.mxu0 0.0
  %4823 = vmatprep.subr.mxu0 0.0
  %4824 = vmatpush1.msra.mxu0 0.0
  %4825 = vmatprep.subr.mxu0 0.0
  %4826 = vmatpush1.msra.mxu0 0.0
  %4827 = vmatprep.mubr.f32.mxu0 0.0
  %4828 = vmatmul.mubr.f32.gmra.mrb[0].mxu0 %v4621
  %v4829 = vpop.f32.mrb[0].mxu0
  %v4830 = vadd.f32 %v281, %v4829
  %v4831 = vpop.f32.mrb[0].mxu0
  %4832 = vdwg.mxu0
  %v4834 = vsel %vm353, %v4690, 0
  %v4837 = vsel %vm353, %v4760, 0
  %4839 = vmatprep.subr.mxu0 0.0
  %4840 = vmatpush1.xpose.msra.mxu0 %v4837
  %4841 = vmatprep.subr.mxu0 0.0
  %4842 = vmatpush1.xpose.msra.mxu0 0.0
  %4843 = vmatprep.subr.mxu0 0.0
  %4844 = vmatpush1.xpose.msra.mxu0 0.0
  %4845 = vmatprep.subr.mxu0 0.0
  %4846 = vmatpush1.xpose.msra.mxu0 0.0
  %4847 = vmatprep.subr.mxu0 0.0
  %4848 = vmatpush1.xpose.msra.mxu0 0.0
  %4849 = vmatprep.subr.mxu0 0.0
  %4850 = vmatpush1.xpose.msra.mxu0 0.0
  %4851 = vmatprep.subr.mxu0 0.0
  %4852 = vmatpush1.xpose.msra.mxu0 0.0
  %4853 = vmatprep.subr.mxu0 0.0
  %4854 = vmatpush1.xpose.msra.mxu0 0.0
  %4855 = vmatprep.subr.mxu0 0.0
  %4856 = vmatpush1.xpose.msra.mxu0 0.0
  %4857 = vmatprep.subr.mxu0 0.0
  %4858 = vmatpush1.xpose.msra.mxu0 0.0
  %4859 = vmatprep.subr.mxu0 0.0
  %4860 = vmatpush1.xpose.msra.mxu0 0.0
  %4861 = vmatprep.subr.mxu0 0.0
  %4862 = vmatpush1.xpose.msra.mxu0 0.0
  %4863 = vmatprep.subr.mxu0 0.0
  %4864 = vmatpush1.xpose.msra.mxu0 0.0
  %4865 = vmatprep.subr.mxu0 0.0
  %4866 = vmatpush1.xpose.msra.mxu0 0.0
  %4867 = vmatprep.subr.mxu0 0.0
  %4868 = vmatpush1.xpose.msra.mxu0 0.0
  %4869 = vmatprep.subr.mxu0 0.0
  %4870 = vmatpush1.xpose.msra.mxu0 0.0
  %4871 = vmatprep.subr.mxu0 0.0
  %4872 = vmatpush1.xpose.msra.mxu0 0.0
  %4873 = vmatprep.subr.mxu0 0.0
  %4874 = vmatpush1.xpose.msra.mxu0 0.0
  %4875 = vmatprep.subr.mxu0 0.0
  %4876 = vmatpush1.xpose.msra.mxu0 0.0
  %4877 = vmatprep.subr.mxu0 0.0
  %4878 = vmatpush1.xpose.msra.mxu0 0.0
  %4879 = vmatprep.subr.mxu0 0.0
  %4880 = vmatpush1.xpose.msra.mxu0 0.0
  %4881 = vmatprep.subr.mxu0 0.0
  %4882 = vmatpush1.xpose.msra.mxu0 0.0
  %4883 = vmatprep.subr.mxu0 0.0
  %4884 = vmatpush1.xpose.msra.mxu0 0.0
  %4885 = vmatprep.subr.mxu0 0.0
  %4886 = vmatpush1.xpose.msra.mxu0 0.0
  %4887 = vmatprep.subr.mxu0 0.0
  %4888 = vmatpush1.xpose.msra.mxu0 0.0
  %4889 = vmatprep.subr.mxu0 0.0
  %4890 = vmatpush1.xpose.msra.mxu0 0.0
  %4891 = vmatprep.subr.mxu0 0.0
  %4892 = vmatpush1.xpose.msra.mxu0 0.0
  %4893 = vmatprep.subr.mxu0 0.0
  %4894 = vmatpush1.xpose.msra.mxu0 0.0
  %4895 = vmatprep.subr.mxu0 0.0
  %4896 = vmatpush1.xpose.msra.mxu0 0.0
  %4897 = vmatprep.subr.mxu0 0.0
  %4898 = vmatpush1.xpose.msra.mxu0 0.0
  %4899 = vmatprep.subr.mxu0 0.0
  %4900 = vmatpush1.xpose.msra.mxu0 0.0
  %4901 = vmatprep.subr.mxu0 0.0
  %4902 = vmatpush1.xpose.msra.mxu0 0.0
  %4903 = vmatprep.mubr.f32.mxu0 0.0
  %4904 = vmatmul.mubr.f32.gmra.mrb[0].mxu0 %v4834
  %v4905 = vpop.f32.mrb[0].mxu0
  %v4906 = vadd.f32 0.0, %v4905
  %v4907 = vpop.f32.mrb[0].mxu0
  %4908 = vdwg.mxu0
  %v4909 = vmul.f32 %v4906, 0.35355338
  %v4910 = vlaneseq
  %v4911 = vshrl.u32 %v4910, 7
  %v4912 = vsub.s32 1, %v4911
  %v4913 = vrot.slane %v69, %v4912
  %v4914 = vadd.f32 %v4909, %v4913
  %v4915 = vsel %vm353, %v4914, -inf
  %4916 = vmax.xlane.f32.xlu0 %v4915
  %v4917 = vpop.xlane.xlu0 %4916
  %v4918 = vsub.f32 %v4914, %v4917
  %v4919 = vmul.f32 %v4918, 1.442695
  %v4920 = vpow.pop %v4919
  %v4921 = vsel %vm353, %v4920, 0.0
  %4922 = vadd.xlane.f32.xlu0 %v4921
  %v4923 = vpop.xlane.xlu0 %4922
  %v4924 = vrcp.pop %v4923
  %v4925 = vmul.f32 %v4920, %v4924
  %v4927 = vsel %vm353, %v4925, 0
  %4929 = vmatprep.subr.mxu0 0.0
  %4930 = vmatpush1.msra.mxu0 %v4830
  %4931 = vmatprep.subr.mxu0 0.0
  %4932 = vmatpush1.msra.mxu0 0.0
  %4933 = vmatprep.subr.mxu0 0.0
  %4934 = vmatpush1.msra.mxu0 0.0
  %4935 = vmatprep.subr.mxu0 0.0
  %4936 = vmatpush1.msra.mxu0 0.0
  %4937 = vmatprep.subr.mxu0 0.0
  %4938 = vmatpush1.msra.mxu0 0.0
  %4939 = vmatprep.subr.mxu0 0.0
  %4940 = vmatpush1.msra.mxu0 0.0
  %4941 = vmatprep.subr.mxu0 0.0
  %4942 = vmatpush1.msra.mxu0 0.0
  %4943 = vmatprep.subr.mxu0 0.0
  %4944 = vmatpush1.msra.mxu0 0.0
  %4945 = vmatprep.subr.mxu0 0.0
  %4946 = vmatpush1.msra.mxu0 0.0
  %4947 = vmatprep.subr.mxu0 0.0
  %4948 = vmatpush1.msra.mxu0 0.0
  %4949 = vmatprep.subr.mxu0 0.0
  %4950 = vmatpush1.msra.mxu0 0.0
  %4951 = vmatprep.subr.mxu0 0.0
  %4952 = vmatpush1.msra.mxu0 0.0
  %4953 = vmatprep.subr.mxu0 0.0
  %4954 = vmatpush1.msra.mxu0 0.0
  %4955 = vmatprep.subr.mxu0 0.0
  %4956 = vmatpush1.msra.mxu0 0.0
  %4957 = vmatprep.subr.mxu0 0.0
  %4958 = vmatpush1.msra.mxu0 0.0
  %4959 = vmatprep.subr.mxu0 0.0
  %4960 = vmatpush1.msra.mxu0 0.0
  %4961 = vmatprep.subr.mxu0 0.0
  %4962 = vmatpush1.msra.mxu0 0.0
  %4963 = vmatprep.subr.mxu0 0.0
  %4964 = vmatpush1.msra.mxu0 0.0
  %4965 = vmatprep.subr.mxu0 0.0
  %4966 = vmatpush1.msra.mxu0 0.0
  %4967 = vmatprep.subr.mxu0 0.0
  %4968 = vmatpush1.msra.mxu0 0.0
  %4969 = vmatprep.subr.mxu0 0.0
  %4970 = vmatpush1.msra.mxu0 0.0
  %4971 = vmatprep.subr.mxu0 0.0
  %4972 = vmatpush1.msra.mxu0 0.0
  %4973 = vmatprep.subr.mxu0 0.0
  %4974 = vmatpush1.msra.mxu0 0.0
  %4975 = vmatprep.subr.mxu0 0.0
  %4976 = vmatpush1.msra.mxu0 0.0
  %4977 = vmatprep.subr.mxu0 0.0
  %4978 = vmatpush1.msra.mxu0 0.0
  %4979 = vmatprep.subr.mxu0 0.0
  %4980 = vmatpush1.msra.mxu0 0.0
  %4981 = vmatprep.subr.mxu0 0.0
  %4982 = vmatpush1.msra.mxu0 0.0
  %4983 = vmatprep.subr.mxu0 0.0
  %4984 = vmatpush1.msra.mxu0 0.0
  %4985 = vmatprep.subr.mxu0 0.0
  %4986 = vmatpush1.msra.mxu0 0.0
  %4987 = vmatprep.subr.mxu0 0.0
  %4988 = vmatpush1.msra.mxu0 0.0
  %4989 = vmatprep.subr.mxu0 0.0
  %4990 = vmatpush1.msra.mxu0 0.0
  %4991 = vmatprep.subr.mxu0 0.0
  %4992 = vmatpush1.msra.mxu0 0.0
  %4993 = vmatprep.mubr.f32.mxu0 0.0
  %4994 = vmatmul.mubr.f32.gmra.mrb[0].mxu0 %v4927
  %v4995 = vpop.f32.mrb[0].mxu0
  %v4996 = vadd.f32 0.0, %v4995
  %v4997 = vpop.f32.mrb[0].mxu0
  %4998 = vdwg.mxu0
  %4999 = vmatprep.subr.mxu0 0.0
  %5000 = vmatpush1.msra.mxu0 %v522
  %5001 = vmatprep.subr.mxu0 0.0
  %5002 = vmatpush1.msra.mxu0 %v523
  %5003 = vmatprep.subr.mxu0 0.0
  %5004 = vmatpush1.msra.mxu0 %v524
  %5005 = vmatprep.subr.mxu0 0.0
  %5006 = vmatpush1.msra.mxu0 %v525
  %5007 = vmatprep.subr.mxu0 0.0
  %5008 = vmatpush1.msra.mxu0 0.0
  %5009 = vmatprep.subr.mxu0 0.0
  %5010 = vmatpush1.msra.mxu0 0.0
  %5011 = vmatprep.subr.mxu0 0.0
  %5012 = vmatpush1.msra.mxu0 0.0
  %5013 = vmatprep.subr.mxu0 0.0
  %5014 = vmatpush1.msra.mxu0 0.0
  %5015 = vmatprep.subr.mxu0 0.0
  %5016 = vmatpush1.msra.mxu0 0.0
  %5017 = vmatprep.subr.mxu0 0.0
  %5018 = vmatpush1.msra.mxu0 0.0
  %5019 = vmatprep.subr.mxu0 0.0
  %5020 = vmatpush1.msra.mxu0 0.0
  %5021 = vmatprep.subr.mxu0 0.0
  %5022 = vmatpush1.msra.mxu0 0.0
  %5023 = vmatprep.subr.mxu0 0.0
  %5024 = vmatpush1.msra.mxu0 0.0
  %5025 = vmatprep.subr.mxu0 0.0
  %5026 = vmatpush1.msra.mxu0 0.0
  %5027 = vmatprep.subr.mxu0 0.0
  %5028 = vmatpush1.msra.mxu0 0.0
  %5029 = vmatprep.subr.mxu0 0.0
  %5030 = vmatpush1.msra.mxu0 0.0
  %5031 = vmatprep.subr.mxu0 0.0
  %5032 = vmatpush1.msra.mxu0 0.0
  %5033 = vmatprep.subr.mxu0 0.0
  %5034 = vmatpush1.msra.mxu0 0.0
  %5035 = vmatprep.subr.mxu0 0.0
  %5036 = vmatpush1.msra.mxu0 0.0
  %5037 = vmatprep.subr.mxu0 0.0
  %5038 = vmatpush1.msra.mxu0 0.0
  %5039 = vmatprep.subr.mxu0 0.0
  %5040 = vmatpush1.msra.mxu0 0.0
  %5041 = vmatprep.subr.mxu0 0.0
  %5042 = vmatpush1.msra.mxu0 0.0
  %5043 = vmatprep.subr.mxu0 0.0
  %5044 = vmatpush1.msra.mxu0 0.0
  %5045 = vmatprep.subr.mxu0 0.0
  %5046 = vmatpush1.msra.mxu0 0.0
  %5047 = vmatprep.subr.mxu0 0.0
  %5048 = vmatpush1.msra.mxu0 0.0
  %5049 = vmatprep.subr.mxu0 0.0
  %5050 = vmatpush1.msra.mxu0 0.0
  %5051 = vmatprep.subr.mxu0 0.0
  %5052 = vmatpush1.msra.mxu0 0.0
  %5053 = vmatprep.subr.mxu0 0.0
  %5054 = vmatpush1.msra.mxu0 0.0
  %5055 = vmatprep.subr.mxu0 0.0
  %5056 = vmatpush1.msra.mxu0 0.0
  %5057 = vmatprep.subr.mxu0 0.0
  %5058 = vmatpush1.msra.mxu0 0.0
  %5059 = vmatprep.subr.mxu0 0.0
  %5060 = vmatpush1.msra.mxu0 0.0
  %5061 = vmatprep.subr.mxu0 0.0
  %5062 = vmatpush1.msra.mxu0 0.0
  %5063 = vmatprep.mubr.f32.mxu0 0.0
  %5064 = vmatmul.mubr.f32.gmra.mrb[0].mxu0 %v4621
  %v5065 = vpop.f32.mrb[0].mxu0
  %v5066 = vadd.f32 %v532, %v5065
  %v5067 = vpop.f32.mrb[0].mxu0
  %5068 = vdwg.mxu0
  %5069 = vmatprep.subr.mxu0 0.0
  %5070 = vmatpush1.msra.mxu0 %v605
  %5071 = vmatprep.subr.mxu0 0.0
  %5072 = vmatpush1.msra.mxu0 %v606
  %5073 = vmatprep.subr.mxu0 0.0
  %5074 = vmatpush1.msra.mxu0 %v607
  %5075 = vmatprep.subr.mxu0 0.0
  %5076 = vmatpush1.msra.mxu0 %v608
  %5077 = vmatprep.subr.mxu0 0.0
  %5078 = vmatpush1.msra.mxu0 0.0
  %5079 = vmatprep.subr.mxu0 0.0
  %5080 = vmatpush1.msra.mxu0 0.0
  %5081 = vmatprep.subr.mxu0 0.0
  %5082 = vmatpush1.msra.mxu0 0.0
  %5083 = vmatprep.subr.mxu0 0.0
  %5084 = vmatpush1.msra.mxu0 0.0
  %5085 = vmatprep.subr.mxu0 0.0
  %5086 = vmatpush1.msra.mxu0 0.0
  %5087 = vmatprep.subr.mxu0 0.0
  %5088 = vmatpush1.msra.mxu0 0.0
  %5089 = vmatprep.subr.mxu0 0.0
  %5090 = vmatpush1.msra.mxu0 0.0
  %5091 = vmatprep.subr.mxu0 0.0
  %5092 = vmatpush1.msra.mxu0 0.0
  %5093 = vmatprep.subr.mxu0 0.0
  %5094 = vmatpush1.msra.mxu0 0.0
  %5095 = vmatprep.subr.mxu0 0.0
  %5096 = vmatpush1.msra.mxu0 0.0
  %5097 = vmatprep.subr.mxu0 0.0
  %5098 = vmatpush1.msra.mxu0 0.0
  %5099 = vmatprep.subr.mxu0 0.0
  %5100 = vmatpush1.msra.mxu0 0.0
  %5101 = vmatprep.subr.mxu0 0.0
  %5102 = vmatpush1.msra.mxu0 0.0
  %5103 = vmatprep.subr.mxu0 0.0
  %5104 = vmatpush1.msra.mxu0 0.0
  %5105 = vmatprep.subr.mxu0 0.0
  %5106 = vmatpush1.msra.mxu0 0.0
  %5107 = vmatprep.subr.mxu0 0.0
  %5108 = vmatpush1.msra.mxu0 0.0
  %5109 = vmatprep.subr.mxu0 0.0
  %5110 = vmatpush1.msra.mxu0 0.0
  %5111 = vmatprep.subr.mxu0 0.0
  %5112 = vmatpush1.msra.mxu0 0.0
  %5113 = vmatprep.subr.mxu0 0.0
  %5114 = vmatpush1.msra.mxu0 0.0
  %5115 = vmatprep.subr.mxu0 0.0
  %5116 = vmatpush1.msra.mxu0 0.0
  %5117 = vmatprep.subr.mxu0 0.0
  %5118 = vmatpush1.msra.mxu0 0.0
  %5119 = vmatprep.subr.mxu0 0.0
  %5120 = vmatpush1.msra.mxu0 0.0
  %5121 = vmatprep.subr.mxu0 0.0
  %5122 = vmatpush1.msra.mxu0 0.0
  %5123 = vmatprep.subr.mxu0 0.0
  %5124 = vmatpush1.msra.mxu0 0.0
  %5125 = vmatprep.subr.mxu0 0.0
  %5126 = vmatpush1.msra.mxu0 0.0
  %5127 = vmatprep.subr.mxu0 0.0
  %5128 = vmatpush1.msra.mxu0 0.0
  %5129 = vmatprep.subr.mxu0 0.0
  %5130 = vmatpush1.msra.mxu0 0.0
  %5131 = vmatprep.subr.mxu0 0.0
  %5132 = vmatpush1.msra.mxu0 0.0
  %5133 = vmatprep.mubr.f32.mxu0 0.0
  %5134 = vmatmul.mubr.f32.gmra.mrb[0].mxu0 %v4621
  %v5135 = vpop.f32.mrb[0].mxu0
  %v5136 = vadd.f32 %v615, %v5135
  %v5137 = vpop.f32.mrb[0].mxu0
  %5138 = vdwg.mxu0
  %5139 = vmatprep.subr.mxu0 0.0
  %5140 = vmatpush1.msra.mxu0 %v688
  %5141 = vmatprep.subr.mxu0 0.0
  %5142 = vmatpush1.msra.mxu0 %v689
  %5143 = vmatprep.subr.mxu0 0.0
  %5144 = vmatpush1.msra.mxu0 %v690
  %5145 = vmatprep.subr.mxu0 0.0
  %5146 = vmatpush1.msra.mxu0 %v691
  %5147 = vmatprep.subr.mxu0 0.0
  %5148 = vmatpush1.msra.mxu0 0.0
  %5149 = vmatprep.subr.mxu0 0.0
  %5150 = vmatpush1.msra.mxu0 0.0
  %5151 = vmatprep.subr.mxu0 0.0
  %5152 = vmatpush1.msra.mxu0 0.0
  %5153 = vmatprep.subr.mxu0 0.0
  %5154 = vmatpush1.msra.mxu0 0.0
  %5155 = vmatprep.subr.mxu0 0.0
  %5156 = vmatpush1.msra.mxu0 0.0
  %5157 = vmatprep.subr.mxu0 0.0
  %5158 = vmatpush1.msra.mxu0 0.0
  %5159 = vmatprep.subr.mxu0 0.0
  %5160 = vmatpush1.msra.mxu0 0.0
  %5161 = vmatprep.subr.mxu0 0.0
  %5162 = vmatpush1.msra.mxu0 0.0
  %5163 = vmatprep.subr.mxu0 0.0
  %5164 = vmatpush1.msra.mxu0 0.0
  %5165 = vmatprep.subr.mxu0 0.0
  %5166 = vmatpush1.msra.mxu0 0.0
  %5167 = vmatprep.subr.mxu0 0.0
  %5168 = vmatpush1.msra.mxu0 0.0
  %5169 = vmatprep.subr.mxu0 0.0
  %5170 = vmatpush1.msra.mxu0 0.0
  %5171 = vmatprep.subr.mxu0 0.0
  %5172 = vmatpush1.msra.mxu0 0.0
  %5173 = vmatprep.subr.mxu0 0.0
  %5174 = vmatpush1.msra.mxu0 0.0
  %5175 = vmatprep.subr.mxu0 0.0
  %5176 = vmatpush1.msra.mxu0 0.0
  %5177 = vmatprep.subr.mxu0 0.0
  %5178 = vmatpush1.msra.mxu0 0.0
  %5179 = vmatprep.subr.mxu0 0.0
  %5180 = vmatpush1.msra.mxu0 0.0
  %5181 = vmatprep.subr.mxu0 0.0
  %5182 = vmatpush1.msra.mxu0 0.0
  %5183 = vmatprep.subr.mxu0 0.0
  %5184 = vmatpush1.msra.mxu0 0.0
  %5185 = vmatprep.subr.mxu0 0.0
  %5186 = vmatpush1.msra.mxu0 0.0
  %5187 = vmatprep.subr.mxu0 0.0
  %5188 = vmatpush1.msra.mxu0 0.0
  %5189 = vmatprep.subr.mxu0 0.0
  %5190 = vmatpush1.msra.mxu0 0.0
  %5191 = vmatprep.subr.mxu0 0.0
  %5192 = vmatpush1.msra.mxu0 0.0
  %5193 = vmatprep.subr.mxu0 0.0
  %5194 = vmatpush1.msra.mxu0 0.0
  %5195 = vmatprep.subr.mxu0 0.0
  %5196 = vmatpush1.msra.mxu0 0.0
  %5197 = vmatprep.subr.mxu0 0.0
  %5198 = vmatpush1.msra.mxu0 0.0
  %5199 = vmatprep.subr.mxu0 0.0
  %5200 = vmatpush1.msra.mxu0 0.0
  %5201 = vmatprep.subr.mxu0 0.0
  %5202 = vmatpush1.msra.mxu0 0.0
  %5203 = vmatprep.mubr.f32.mxu0 0.0
  %5204 = vmatmul.mubr.f32.gmra.mrb[0].mxu0 %v4621
  %v5205 = vpop.f32.mrb[0].mxu0
  %v5206 = vadd.f32 %v698, %v5205
  %v5207 = vpop.f32.mrb[0].mxu0
  %5208 = vdwg.mxu0
  %v5210 = vsel %vm353, %v5066, 0
  %v5213 = vsel %vm353, %v5136, 0
  %5215 = vmatprep.subr.mxu0 0.0
  %5216 = vmatpush1.xpose.msra.mxu0 %v5213
  %5217 = vmatprep.subr.mxu0 0.0
  %5218 = vmatpush1.xpose.msra.mxu0 0.0
  %5219 = vmatprep.subr.mxu0 0.0
  %5220 = vmatpush1.xpose.msra.mxu0 0.0
  %5221 = vmatprep.subr.mxu0 0.0
  %5222 = vmatpush1.xpose.msra.mxu0 0.0
  %5223 = vmatprep.subr.mxu0 0.0
  %5224 = vmatpush1.xpose.msra.mxu0 0.0
  %5225 = vmatprep.subr.mxu0 0.0
  %5226 = vmatpush1.xpose.msra.mxu0 0.0
  %5227 = vmatprep.subr.mxu0 0.0
  %5228 = vmatpush1.xpose.msra.mxu0 0.0
  %5229 = vmatprep.subr.mxu0 0.0
  %5230 = vmatpush1.xpose.msra.mxu0 0.0
  %5231 = vmatprep.subr.mxu0 0.0
  %5232 = vmatpush1.xpose.msra.mxu0 0.0
  %5233 = vmatprep.subr.mxu0 0.0
  %5234 = vmatpush1.xpose.msra.mxu0 0.0
  %5235 = vmatprep.subr.mxu0 0.0
  %5236 = vmatpush1.xpose.msra.mxu0 0.0
  %5237 = vmatprep.subr.mxu0 0.0
  %5238 = vmatpush1.xpose.msra.mxu0 0.0
  %5239 = vmatprep.subr.mxu0 0.0
  %5240 = vmatpush1.xpose.msra.mxu0 0.0
  %5241 = vmatprep.subr.mxu0 0.0
  %5242 = vmatpush1.xpose.msra.mxu0 0.0
  %5243 = vmatprep.subr.mxu0 0.0
  %5244 = vmatpush1.xpose.msra.mxu0 0.0
  %5245 = vmatprep.subr.mxu0 0.0
  %5246 = vmatpush1.xpose.msra.mxu0 0.0
  %5247 = vmatprep.subr.mxu0 0.0
  %5248 = vmatpush1.xpose.msra.mxu0 0.0
  %5249 = vmatprep.subr.mxu0 0.0
  %5250 = vmatpush1.xpose.msra.mxu0 0.0
  %5251 = vmatprep.subr.mxu0 0.0
  %5252 = vmatpush1.xpose.msra.mxu0 0.0
  %5253 = vmatprep.subr.mxu0 0.0
  %5254 = vmatpush1.xpose.msra.mxu0 0.0
  %5255 = vmatprep.subr.mxu0 0.0
  %5256 = vmatpush1.xpose.msra.mxu0 0.0
  %5257 = vmatprep.subr.mxu0 0.0
  %5258 = vmatpush1.xpose.msra.mxu0 0.0
  %5259 = vmatprep.subr.mxu0 0.0
  %5260 = vmatpush1.xpose.msra.mxu0 0.0
  %5261 = vmatprep.subr.mxu0 0.0
  %5262 = vmatpush1.xpose.msra.mxu0 0.0
  %5263 = vmatprep.subr.mxu0 0.0
  %5264 = vmatpush1.xpose.msra.mxu0 0.0
  %5265 = vmatprep.subr.mxu0 0.0
  %5266 = vmatpush1.xpose.msra.mxu0 0.0
  %5267 = vmatprep.subr.mxu0 0.0
  %5268 = vmatpush1.xpose.msra.mxu0 0.0
  %5269 = vmatprep.subr.mxu0 0.0
  %5270 = vmatpush1.xpose.msra.mxu0 0.0
  %5271 = vmatprep.subr.mxu0 0.0
  %5272 = vmatpush1.xpose.msra.mxu0 0.0
  %5273 = vmatprep.subr.mxu0 0.0
  %5274 = vmatpush1.xpose.msra.mxu0 0.0
  %5275 = vmatprep.subr.mxu0 0.0
  %5276 = vmatpush1.xpose.msra.mxu0 0.0
  %5277 = vmatprep.subr.mxu0 0.0
  %5278 = vmatpush1.xpose.msra.mxu0 0.0
  %5279 = vmatprep.mubr.f32.mxu0 0.0
  %5280 = vmatmul.mubr.f32.gmra.mrb[0].mxu0 %v5210
  %v5281 = vpop.f32.mrb[0].mxu0
  %v5282 = vadd.f32 0.0, %v5281
  %v5283 = vpop.f32.mrb[0].mxu0
  %5284 = vdwg.mxu0
  %v5285 = vmul.f32 %v5282, 0.35355338
  %v5286 = vadd.f32 %v5285, %v4913
  %v5287 = vsel %vm353, %v5286, -inf
  %5288 = vmax.xlane.f32.xlu0 %v5287
  %v5289 = vpop.xlane.xlu0 %5288
  %v5290 = vsub.f32 %v5286, %v5289
  %v5291 = vmul.f32 %v5290, 1.442695
  %v5292 = vpow.pop %v5291
  %v5293 = vsel %vm353, %v5292, 0.0
  %5294 = vadd.xlane.f32.xlu0 %v5293
  %v5295 = vpop.xlane.xlu0 %5294
  %v5296 = vrcp.pop %v5295
  %v5297 = vmul.f32 %v5292, %v5296
  %v5299 = vsel %vm353, %v5297, 0
  %5301 = vmatprep.subr.mxu0 0.0
  %5302 = vmatpush1.msra.mxu0 %v5206
  %5303 = vmatprep.subr.mxu0 0.0
  %5304 = vmatpush1.msra.mxu0 0.0
  %5305 = vmatprep.subr.mxu0 0.0
  %5306 = vmatpush1.msra.mxu0 0.0
  %5307 = vmatprep.subr.mxu0 0.0
  %5308 = vmatpush1.msra.mxu0 0.0
  %5309 = vmatprep.subr.mxu0 0.0
  %5310 = vmatpush1.msra.mxu0 0.0
  %5311 = vmatprep.subr.mxu0 0.0
  %5312 = vmatpush1.msra.mxu0 0.0
  %5313 = vmatprep.subr.mxu0 0.0
  %5314 = vmatpush1.msra.mxu0 0.0
  %5315 = vmatprep.subr.mxu0 0.0
  %5316 = vmatpush1.msra.mxu0 0.0
  %5317 = vmatprep.subr.mxu0 0.0
  %5318 = vmatpush1.msra.mxu0 0.0
  %5319 = vmatprep.subr.mxu0 0.0
  %5320 = vmatpush1.msra.mxu0 0.0
  %5321 = vmatprep.subr.mxu0 0.0
  %5322 = vmatpush1.msra.mxu0 0.0
  %5323 = vmatprep.subr.mxu0 0.0
  %5324 = vmatpush1.msra.mxu0 0.0
  %5325 = vmatprep.subr.mxu0 0.0
  %5326 = vmatpush1.msra.mxu0 0.0
  %5327 = vmatprep.subr.mxu0 0.0
  %5328 = vmatpush1.msra.mxu0 0.0
  %5329 = vmatprep.subr.mxu0 0.0
  %5330 = vmatpush1.msra.mxu0 0.0
  %5331 = vmatprep.subr.mxu0 0.0
  %5332 = vmatpush1.msra.mxu0 0.0
  %5333 = vmatprep.subr.mxu0 0.0
  %5334 = vmatpush1.msra.mxu0 0.0
  %5335 = vmatprep.subr.mxu0 0.0
  %5336 = vmatpush1.msra.mxu0 0.0
  %5337 = vmatprep.subr.mxu0 0.0
  %5338 = vmatpush1.msra.mxu0 0.0
  %5339 = vmatprep.subr.mxu0 0.0
  %5340 = vmatpush1.msra.mxu0 0.0
  %5341 = vmatprep.subr.mxu0 0.0
  %5342 = vmatpush1.msra.mxu0 0.0
  %5343 = vmatprep.subr.mxu0 0.0
  %5344 = vmatpush1.msra.mxu0 0.0
  %5345 = vmatprep.subr.mxu0 0.0
  %5346 = vmatpush1.msra.mxu0 0.0
  %5347 = vmatprep.subr.mxu0 0.0
  %5348 = vmatpush1.msra.mxu0 0.0
  %5349 = vmatprep.subr.mxu0 0.0
  %5350 = vmatpush1.msra.mxu0 0.0
  %5351 = vmatprep.subr.mxu0 0.0
  %5352 = vmatpush1.msra.mxu0 0.0
  %5353 = vmatprep.subr.mxu0 0.0
  %5354 = vmatpush1.msra.mxu0 0.0
  %5355 = vmatprep.subr.mxu0 0.0
  %5356 = vmatpush1.msra.mxu0 0.0
  %5357 = vmatprep.subr.mxu0 0.0
  %5358 = vmatpush1.msra.mxu0 0.0
  %5359 = vmatprep.subr.mxu0 0.0
  %5360 = vmatpush1.msra.mxu0 0.0
  %5361 = vmatprep.subr.mxu0 0.0
  %5362 = vmatpush1.msra.mxu0 0.0
  %5363 = vmatprep.subr.mxu0 0.0
  %5364 = vmatpush1.msra.mxu0 0.0
  %5365 = vmatprep.mubr.f32.mxu0 0.0
  %5366 = vmatmul.mubr.f32.gmra.mrb[0].mxu0 %v5299
  %v5367 = vpop.f32.mrb[0].mxu0
  %v5368 = vadd.f32 0.0, %v5367
  %v5369 = vpop.f32.mrb[0].mxu0
  %5370 = vdwg.mxu0
  %v5372 = vsel %vm353, %v5368, 0
  %5374 = vmatprep.subr.mxu0 0.0
  %5375 = vmatpush1.msra.mxu0 %v933
  %5376 = vmatprep.subr.mxu0 0.0
  %5377 = vmatpush1.msra.mxu0 0.0
  %5378 = vmatprep.subr.mxu0 0.0
  %5379 = vmatpush1.msra.mxu0 0.0
  %5380 = vmatprep.subr.mxu0 0.0
  %5381 = vmatpush1.msra.mxu0 0.0
  %5382 = vmatprep.subr.mxu0 0.0
  %5383 = vmatpush1.msra.mxu0 0.0
  %5384 = vmatprep.subr.mxu0 0.0
  %5385 = vmatpush1.msra.mxu0 0.0
  %5386 = vmatprep.subr.mxu0 0.0
  %5387 = vmatpush1.msra.mxu0 0.0
  %5388 = vmatprep.subr.mxu0 0.0
  %5389 = vmatpush1.msra.mxu0 0.0
  %5390 = vmatprep.subr.mxu0 0.0
  %5391 = vmatpush1.msra.mxu0 0.0
  %5392 = vmatprep.subr.mxu0 0.0
  %5393 = vmatpush1.msra.mxu0 0.0
  %5394 = vmatprep.subr.mxu0 0.0
  %5395 = vmatpush1.msra.mxu0 0.0
  %5396 = vmatprep.subr.mxu0 0.0
  %5397 = vmatpush1.msra.mxu0 0.0
  %5398 = vmatprep.subr.mxu0 0.0
  %5399 = vmatpush1.msra.mxu0 0.0
  %5400 = vmatprep.subr.mxu0 0.0
  %5401 = vmatpush1.msra.mxu0 0.0
  %5402 = vmatprep.subr.mxu0 0.0
  %5403 = vmatpush1.msra.mxu0 0.0
  %5404 = vmatprep.subr.mxu0 0.0
  %5405 = vmatpush1.msra.mxu0 0.0
  %5406 = vmatprep.subr.mxu0 0.0
  %5407 = vmatpush1.msra.mxu0 0.0
  %5408 = vmatprep.subr.mxu0 0.0
  %5409 = vmatpush1.msra.mxu0 0.0
  %5410 = vmatprep.subr.mxu0 0.0
  %5411 = vmatpush1.msra.mxu0 0.0
  %5412 = vmatprep.subr.mxu0 0.0
  %5413 = vmatpush1.msra.mxu0 0.0
  %5414 = vmatprep.subr.mxu0 0.0
  %5415 = vmatpush1.msra.mxu0 0.0
  %5416 = vmatprep.subr.mxu0 0.0
  %5417 = vmatpush1.msra.mxu0 0.0
  %5418 = vmatprep.subr.mxu0 0.0
  %5419 = vmatpush1.msra.mxu0 0.0
  %5420 = vmatprep.subr.mxu0 0.0
  %5421 = vmatpush1.msra.mxu0 0.0
  %5422 = vmatprep.subr.mxu0 0.0
  %5423 = vmatpush1.msra.mxu0 0.0
  %5424 = vmatprep.subr.mxu0 0.0
  %5425 = vmatpush1.msra.mxu0 0.0
  %5426 = vmatprep.subr.mxu0 0.0
  %5427 = vmatpush1.msra.mxu0 0.0
  %5428 = vmatprep.subr.mxu0 0.0
  %5429 = vmatpush1.msra.mxu0 0.0
  %5430 = vmatprep.subr.mxu0 0.0
  %5431 = vmatpush1.msra.mxu0 0.0
  %5432 = vmatprep.subr.mxu0 0.0
  %5433 = vmatpush1.msra.mxu0 0.0
  %5434 = vmatprep.subr.mxu0 0.0
  %5435 = vmatpush1.msra.mxu0 0.0
  %5436 = vmatprep.subr.mxu0 0.0
  %5437 = vmatpush1.msra.mxu0 0.0
  %5438 = vmatprep.mubr.f32.mxu0 0.0
  %5439 = vmatmul.mubr.f32.gmra.mrb[0].mxu0 %v5372
  %v5440 = vpop.f32.mrb[0].mxu0
  %v5441 = vadd.f32 0.0, %v5440
  %v5442 = vpop.f32.mrb[0].mxu0
  %5443 = vdwg.mxu0
  %v5445 = vsel %vm353, %v4996, 0
  %5447 = vmatprep.subr.mxu0 0.0
  %5448 = vmatpush1.msra.mxu0 %v520
  %5449 = vmatprep.subr.mxu0 0.0
  %5450 = vmatpush1.msra.mxu0 0.0
  %5451 = vmatprep.subr.mxu0 0.0
  %5452 = vmatpush1.msra.mxu0 0.0
  %5453 = vmatprep.subr.mxu0 0.0
  %5454 = vmatpush1.msra.mxu0 0.0
  %5455 = vmatprep.subr.mxu0 0.0
  %5456 = vmatpush1.msra.mxu0 0.0
  %5457 = vmatprep.subr.mxu0 0.0
  %5458 = vmatpush1.msra.mxu0 0.0
  %5459 = vmatprep.subr.mxu0 0.0
  %5460 = vmatpush1.msra.mxu0 0.0
  %5461 = vmatprep.subr.mxu0 0.0
  %5462 = vmatpush1.msra.mxu0 0.0
  %5463 = vmatprep.subr.mxu0 0.0
  %5464 = vmatpush1.msra.mxu0 0.0
  %5465 = vmatprep.subr.mxu0 0.0
  %5466 = vmatpush1.msra.mxu0 0.0
  %5467 = vmatprep.subr.mxu0 0.0
  %5468 = vmatpush1.msra.mxu0 0.0
  %5469 = vmatprep.subr.mxu0 0.0
  %5470 = vmatpush1.msra.mxu0 0.0
  %5471 = vmatprep.subr.mxu0 0.0
  %5472 = vmatpush1.msra.mxu0 0.0
  %5473 = vmatprep.subr.mxu0 0.0
  %5474 = vmatpush1.msra.mxu0 0.0
  %5475 = vmatprep.subr.mxu0 0.0
  %5476 = vmatpush1.msra.mxu0 0.0
  %5477 = vmatprep.subr.mxu0 0.0
  %5478 = vmatpush1.msra.mxu0 0.0
  %5479 = vmatprep.subr.mxu0 0.0
  %5480 = vmatpush1.msra.mxu0 0.0
  %5481 = vmatprep.subr.mxu0 0.0
  %5482 = vmatpush1.msra.mxu0 0.0
  %5483 = vmatprep.subr.mxu0 0.0
  %5484 = vmatpush1.msra.mxu0 0.0
  %5485 = vmatprep.subr.mxu0 0.0
  %5486 = vmatpush1.msra.mxu0 0.0
  %5487 = vmatprep.subr.mxu0 0.0
  %5488 = vmatpush1.msra.mxu0 0.0
  %5489 = vmatprep.subr.mxu0 0.0
  %5490 = vmatpush1.msra.mxu0 0.0
  %5491 = vmatprep.subr.mxu0 0.0
  %5492 = vmatpush1.msra.mxu0 0.0
  %5493 = vmatprep.subr.mxu0 0.0
  %5494 = vmatpush1.msra.mxu0 0.0
  %5495 = vmatprep.subr.mxu0 0.0
  %5496 = vmatpush1.msra.mxu0 0.0
  %5497 = vmatprep.subr.mxu0 0.0
  %5498 = vmatpush1.msra.mxu0 0.0
  %5499 = vmatprep.subr.mxu0 0.0
  %5500 = vmatpush1.msra.mxu0 0.0
  %5501 = vmatprep.subr.mxu0 0.0
  %5502 = vmatpush1.msra.mxu0 0.0
  %5503 = vmatprep.subr.mxu0 0.0
  %5504 = vmatpush1.msra.mxu0 0.0
  %5505 = vmatprep.subr.mxu0 0.0
  %5506 = vmatpush1.msra.mxu0 0.0
  %5507 = vmatprep.subr.mxu0 0.0
  %5508 = vmatpush1.msra.mxu0 0.0
  %5509 = vmatprep.subr.mxu0 0.0
  %5510 = vmatpush1.msra.mxu0 0.0
  %5511 = vmatprep.mubr.f32.mxu0 0.0
  %5512 = vmatmul.mubr.f32.gmra.mrb[0].mxu0 %v5445
  %v5513 = vpop.f32.mrb[0].mxu0
  %v5514 = vadd.f32 %v5441, %v5513
  %v5515 = vpop.f32.mrb[0].mxu0
  %5516 = vdwg.mxu0
  %5517 = vmatprep.subr.mxu0 0.0
  %5518 = vmatpush1.msra.mxu0 %v1081
  %5519 = vmatprep.subr.mxu0 0.0
  %5520 = vmatpush1.msra.mxu0 %v1082
  %5521 = vmatprep.subr.mxu0 0.0
  %5522 = vmatpush1.msra.mxu0 %v1083
  %5523 = vmatprep.subr.mxu0 0.0
  %5524 = vmatpush1.msra.mxu0 %v1084
  %5525 = vmatprep.subr.mxu0 0.0
  %5526 = vmatpush1.msra.mxu0 0.0
  %5527 = vmatprep.subr.mxu0 0.0
  %5528 = vmatpush1.msra.mxu0 0.0
  %5529 = vmatprep.subr.mxu0 0.0
  %5530 = vmatpush1.msra.mxu0 0.0
  %5531 = vmatprep.subr.mxu0 0.0
  %5532 = vmatpush1.msra.mxu0 0.0
  %5533 = vmatprep.subr.mxu0 0.0
  %5534 = vmatpush1.msra.mxu0 0.0
  %5535 = vmatprep.subr.mxu0 0.0
  %5536 = vmatpush1.msra.mxu0 0.0
  %5537 = vmatprep.subr.mxu0 0.0
  %5538 = vmatpush1.msra.mxu0 0.0
  %5539 = vmatprep.subr.mxu0 0.0
  %5540 = vmatpush1.msra.mxu0 0.0
  %5541 = vmatprep.subr.mxu0 0.0
  %5542 = vmatpush1.msra.mxu0 0.0
  %5543 = vmatprep.subr.mxu0 0.0
  %5544 = vmatpush1.msra.mxu0 0.0
  %5545 = vmatprep.subr.mxu0 0.0
  %5546 = vmatpush1.msra.mxu0 0.0
  %5547 = vmatprep.subr.mxu0 0.0
  %5548 = vmatpush1.msra.mxu0 0.0
  %5549 = vmatprep.subr.mxu0 0.0
  %5550 = vmatpush1.msra.mxu0 0.0
  %5551 = vmatprep.subr.mxu0 0.0
  %5552 = vmatpush1.msra.mxu0 0.0
  %5553 = vmatprep.subr.mxu0 0.0
  %5554 = vmatpush1.msra.mxu0 0.0
  %5555 = vmatprep.subr.mxu0 0.0
  %5556 = vmatpush1.msra.mxu0 0.0
  %5557 = vmatprep.subr.mxu0 0.0
  %5558 = vmatpush1.msra.mxu0 0.0
  %5559 = vmatprep.subr.mxu0 0.0
  %5560 = vmatpush1.msra.mxu0 0.0
  %5561 = vmatprep.subr.mxu0 0.0
  %5562 = vmatpush1.msra.mxu0 0.0
  %5563 = vmatprep.subr.mxu0 0.0
  %5564 = vmatpush1.msra.mxu0 0.0
  %5565 = vmatprep.subr.mxu0 0.0
  %5566 = vmatpush1.msra.mxu0 0.0
  %5567 = vmatprep.subr.mxu0 0.0
  %5568 = vmatpush1.msra.mxu0 0.0
  %5569 = vmatprep.subr.mxu0 0.0
  %5570 = vmatpush1.msra.mxu0 0.0
  %5571 = vmatprep.subr.mxu0 0.0
  %5572 = vmatpush1.msra.mxu0 0.0
  %5573 = vmatprep.subr.mxu0 0.0
  %5574 = vmatpush1.msra.mxu0 0.0
  %5575 = vmatprep.subr.mxu0 0.0
  %5576 = vmatpush1.msra.mxu0 0.0
  %5577 = vmatprep.subr.mxu0 0.0
  %5578 = vmatpush1.msra.mxu0 0.0
  %5579 = vmatprep.subr.mxu0 0.0
  %5580 = vmatpush1.msra.mxu0 0.0
  %5581 = vmatprep.mubr.f32.mxu0 0.0
  %5582 = vmatmul.mubr.f32.gmra.mrb[0].mxu0 %v4621
  %v5583 = vpop.f32.mrb[0].mxu0
  %v5584 = vadd.f32 %v1091, %v5583
  %v5585 = vpop.f32.mrb[0].mxu0
  %5586 = vdwg.mxu0
  %5587 = vmatprep.subr.mxu0 0.0
  %5588 = vmatpush1.msra.mxu0 %v1164
  %5589 = vmatprep.subr.mxu0 0.0
  %5590 = vmatpush1.msra.mxu0 %v1165
  %5591 = vmatprep.subr.mxu0 0.0
  %5592 = vmatpush1.msra.mxu0 %v1166
  %5593 = vmatprep.subr.mxu0 0.0
  %5594 = vmatpush1.msra.mxu0 %v1167
  %5595 = vmatprep.subr.mxu0 0.0
  %5596 = vmatpush1.msra.mxu0 0.0
  %5597 = vmatprep.subr.mxu0 0.0
  %5598 = vmatpush1.msra.mxu0 0.0
  %5599 = vmatprep.subr.mxu0 0.0
  %5600 = vmatpush1.msra.mxu0 0.0
  %5601 = vmatprep.subr.mxu0 0.0
  %5602 = vmatpush1.msra.mxu0 0.0
  %5603 = vmatprep.subr.mxu0 0.0
  %5604 = vmatpush1.msra.mxu0 0.0
  %5605 = vmatprep.subr.mxu0 0.0
  %5606 = vmatpush1.msra.mxu0 0.0
  %5607 = vmatprep.subr.mxu0 0.0
  %5608 = vmatpush1.msra.mxu0 0.0
  %5609 = vmatprep.subr.mxu0 0.0
  %5610 = vmatpush1.msra.mxu0 0.0
  %5611 = vmatprep.subr.mxu0 0.0
  %5612 = vmatpush1.msra.mxu0 0.0
  %5613 = vmatprep.subr.mxu0 0.0
  %5614 = vmatpush1.msra.mxu0 0.0
  %5615 = vmatprep.subr.mxu0 0.0
  %5616 = vmatpush1.msra.mxu0 0.0
  %5617 = vmatprep.subr.mxu0 0.0
  %5618 = vmatpush1.msra.mxu0 0.0
  %5619 = vmatprep.subr.mxu0 0.0
  %5620 = vmatpush1.msra.mxu0 0.0
  %5621 = vmatprep.subr.mxu0 0.0
  %5622 = vmatpush1.msra.mxu0 0.0
  %5623 = vmatprep.subr.mxu0 0.0
  %5624 = vmatpush1.msra.mxu0 0.0
  %5625 = vmatprep.subr.mxu0 0.0
  %5626 = vmatpush1.msra.mxu0 0.0
  %5627 = vmatprep.subr.mxu0 0.0
  %5628 = vmatpush1.msra.mxu0 0.0
  %5629 = vmatprep.subr.mxu0 0.0
  %5630 = vmatpush1.msra.mxu0 0.0
  %5631 = vmatprep.subr.mxu0 0.0
  %5632 = vmatpush1.msra.mxu0 0.0
  %5633 = vmatprep.subr.mxu0 0.0
  %5634 = vmatpush1.msra.mxu0 0.0
  %5635 = vmatprep.subr.mxu0 0.0
  %5636 = vmatpush1.msra.mxu0 0.0
  %5637 = vmatprep.subr.mxu0 0.0
  %5638 = vmatpush1.msra.mxu0 0.0
  %5639 = vmatprep.subr.mxu0 0.0
  %5640 = vmatpush1.msra.mxu0 0.0
  %5641 = vmatprep.subr.mxu0 0.0
  %5642 = vmatpush1.msra.mxu0 0.0
  %5643 = vmatprep.subr.mxu0 0.0
  %5644 = vmatpush1.msra.mxu0 0.0
  %5645 = vmatprep.subr.mxu0 0.0
  %5646 = vmatpush1.msra.mxu0 0.0
  %5647 = vmatprep.subr.mxu0 0.0
  %5648 = vmatpush1.msra.mxu0 0.0
  %5649 = vmatprep.subr.mxu0 0.0
  %5650 = vmatpush1.msra.mxu0 0.0
  %5651 = vmatprep.mubr.f32.mxu0 0.0
  %5652 = vmatmul.mubr.f32.gmra.mrb[0].mxu0 %v4621
  %v5653 = vpop.f32.mrb[0].mxu0
  %v5654 = vadd.f32 %v1174, %v5653
  %v5655 = vpop.f32.mrb[0].mxu0
  %5656 = vdwg.mxu0
  %5657 = vmatprep.subr.mxu0 0.0
  %5658 = vmatpush1.msra.mxu0 %v1247
  %5659 = vmatprep.subr.mxu0 0.0
  %5660 = vmatpush1.msra.mxu0 %v1248
  %5661 = vmatprep.subr.mxu0 0.0
  %5662 = vmatpush1.msra.mxu0 %v1249
  %5663 = vmatprep.subr.mxu0 0.0
  %5664 = vmatpush1.msra.mxu0 %v1250
  %5665 = vmatprep.subr.mxu0 0.0
  %5666 = vmatpush1.msra.mxu0 0.0
  %5667 = vmatprep.subr.mxu0 0.0
  %5668 = vmatpush1.msra.mxu0 0.0
  %5669 = vmatprep.subr.mxu0 0.0
  %5670 = vmatpush1.msra.mxu0 0.0
  %5671 = vmatprep.subr.mxu0 0.0
  %5672 = vmatpush1.msra.mxu0 0.0
  %5673 = vmatprep.subr.mxu0 0.0
  %5674 = vmatpush1.msra.mxu0 0.0
  %5675 = vmatprep.subr.mxu0 0.0
  %5676 = vmatpush1.msra.mxu0 0.0
  %5677 = vmatprep.subr.mxu0 0.0
  %5678 = vmatpush1.msra.mxu0 0.0
  %5679 = vmatprep.subr.mxu0 0.0
  %5680 = vmatpush1.msra.mxu0 0.0
  %5681 = vmatprep.subr.mxu0 0.0
  %5682 = vmatpush1.msra.mxu0 0.0
  %5683 = vmatprep.subr.mxu0 0.0
  %5684 = vmatpush1.msra.mxu0 0.0
  %5685 = vmatprep.subr.mxu0 0.0
  %5686 = vmatpush1.msra.mxu0 0.0
  %5687 = vmatprep.subr.mxu0 0.0
  %5688 = vmatpush1.msra.mxu0 0.0
  %5689 = vmatprep.subr.mxu0 0.0
  %5690 = vmatpush1.msra.mxu0 0.0
  %5691 = vmatprep.subr.mxu0 0.0
  %5692 = vmatpush1.msra.mxu0 0.0
  %5693 = vmatprep.subr.mxu0 0.0
  %5694 = vmatpush1.msra.mxu0 0.0
  %5695 = vmatprep.subr.mxu0 0.0
  %5696 = vmatpush1.msra.mxu0 0.0
  %5697 = vmatprep.subr.mxu0 0.0
  %5698 = vmatpush1.msra.mxu0 0.0
  %5699 = vmatprep.subr.mxu0 0.0
  %5700 = vmatpush1.msra.mxu0 0.0
  %5701 = vmatprep.subr.mxu0 0.0
  %5702 = vmatpush1.msra.mxu0 0.0
  %5703 = vmatprep.subr.mxu0 0.0
  %5704 = vmatpush1.msra.mxu0 0.0
  %5705 = vmatprep.subr.mxu0 0.0
  %5706 = vmatpush1.msra.mxu0 0.0
  %5707 = vmatprep.subr.mxu0 0.0
  %5708 = vmatpush1.msra.mxu0 0.0
  %5709 = vmatprep.subr.mxu0 0.0
  %5710 = vmatpush1.msra.mxu0 0.0
  %5711 = vmatprep.subr.mxu0 0.0
  %5712 = vmatpush1.msra.mxu0 0.0
  %5713 = vmatprep.subr.mxu0 0.0
  %5714 = vmatpush1.msra.mxu0 0.0
  %5715 = vmatprep.subr.mxu0 0.0
  %5716 = vmatpush1.msra.mxu0 0.0
  %5717 = vmatprep.subr.mxu0 0.0
  %5718 = vmatpush1.msra.mxu0 0.0
  %5719 = vmatprep.subr.mxu0 0.0
  %5720 = vmatpush1.msra.mxu0 0.0
  %5721 = vmatprep.mubr.f32.mxu0 0.0
  %5722 = vmatmul.mubr.f32.gmra.mrb[0].mxu0 %v4621
  %v5723 = vpop.f32.mrb[0].mxu0
  %v5724 = vadd.f32 %v1257, %v5723
  %v5725 = vpop.f32.mrb[0].mxu0
  %5726 = vdwg.mxu0
  %v5728 = vsel %vm353, %v5584, 0
  %v5731 = vsel %vm353, %v5654, 0
  %5733 = vmatprep.subr.mxu0 0.0
  %5734 = vmatpush1.xpose.msra.mxu0 %v5731
  %5735 = vmatprep.subr.mxu0 0.0
  %5736 = vmatpush1.xpose.msra.mxu0 0.0
  %5737 = vmatprep.subr.mxu0 0.0
  %5738 = vmatpush1.xpose.msra.mxu0 0.0
  %5739 = vmatprep.subr.mxu0 0.0
  %5740 = vmatpush1.xpose.msra.mxu0 0.0
  %5741 = vmatprep.subr.mxu0 0.0
  %5742 = vmatpush1.xpose.msra.mxu0 0.0
  %5743 = vmatprep.subr.mxu0 0.0
  %5744 = vmatpush1.xpose.msra.mxu0 0.0
  %5745 = vmatprep.subr.mxu0 0.0
  %5746 = vmatpush1.xpose.msra.mxu0 0.0
  %5747 = vmatprep.subr.mxu0 0.0
  %5748 = vmatpush1.xpose.msra.mxu0 0.0
  %5749 = vmatprep.subr.mxu0 0.0
  %5750 = vmatpush1.xpose.msra.mxu0 0.0
  %5751 = vmatprep.subr.mxu0 0.0
  %5752 = vmatpush1.xpose.msra.mxu0 0.0
  %5753 = vmatprep.subr.mxu0 0.0
  %5754 = vmatpush1.xpose.msra.mxu0 0.0
  %5755 = vmatprep.subr.mxu0 0.0
  %5756 = vmatpush1.xpose.msra.mxu0 0.0
  %5757 = vmatprep.subr.mxu0 0.0
  %5758 = vmatpush1.xpose.msra.mxu0 0.0
  %5759 = vmatprep.subr.mxu0 0.0
  %5760 = vmatpush1.xpose.msra.mxu0 0.0
  %5761 = vmatprep.subr.mxu0 0.0
  %5762 = vmatpush1.xpose.msra.mxu0 0.0
  %5763 = vmatprep.subr.mxu0 0.0
  %5764 = vmatpush1.xpose.msra.mxu0 0.0
  %5765 = vmatprep.subr.mxu0 0.0
  %5766 = vmatpush1.xpose.msra.mxu0 0.0
  %5767 = vmatprep.subr.mxu0 0.0
  %5768 = vmatpush1.xpose.msra.mxu0 0.0
  %5769 = vmatprep.subr.mxu0 0.0
  %5770 = vmatpush1.xpose.msra.mxu0 0.0
  %5771 = vmatprep.subr.mxu0 0.0
  %5772 = vmatpush1.xpose.msra.mxu0 0.0
  %5773 = vmatprep.subr.mxu0 0.0
  %5774 = vmatpush1.xpose.msra.mxu0 0.0
  %5775 = vmatprep.subr.mxu0 0.0
  %5776 = vmatpush1.xpose.msra.mxu0 0.0
  %5777 = vmatprep.subr.mxu0 0.0
  %5778 = vmatpush1.xpose.msra.mxu0 0.0
  %5779 = vmatprep.subr.mxu0 0.0
  %5780 = vmatpush1.xpose.msra.mxu0 0.0
  %5781 = vmatprep.subr.mxu0 0.0
  %5782 = vmatpush1.xpose.msra.mxu0 0.0
  %5783 = vmatprep.subr.mxu0 0.0
  %5784 = vmatpush1.xpose.msra.mxu0 0.0
  %5785 = vmatprep.subr.mxu0 0.0
  %5786 = vmatpush1.xpose.msra.mxu0 0.0
  %5787 = vmatprep.subr.mxu0 0.0
  %5788 = vmatpush1.xpose.msra.mxu0 0.0
  %5789 = vmatprep.subr.mxu0 0.0
  %5790 = vmatpush1.xpose.msra.mxu0 0.0
  %5791 = vmatprep.subr.mxu0 0.0
  %5792 = vmatpush1.xpose.msra.mxu0 0.0
  %5793 = vmatprep.subr.mxu0 0.0
  %5794 = vmatpush1.xpose.msra.mxu0 0.0
  %5795 = vmatprep.subr.mxu0 0.0
  %5796 = vmatpush1.xpose.msra.mxu0 0.0
  %5797 = vmatprep.mubr.f32.mxu0 0.0
  %5798 = vmatmul.mubr.f32.gmra.mrb[0].mxu0 %v5728
  %v5799 = vpop.f32.mrb[0].mxu0
  %v5800 = vadd.f32 0.0, %v5799
  %v5801 = vpop.f32.mrb[0].mxu0
  %5802 = vdwg.mxu0
  %v5803 = vmul.f32 %v5800, 0.35355338
  %v5804 = vadd.f32 %v5803, %v4913
  %v5805 = vsel %vm353, %v5804, -inf
  %5806 = vmax.xlane.f32.xlu0 %v5805
  %v5807 = vpop.xlane.xlu0 %5806
  %v5808 = vsub.f32 %v5804, %v5807
  %v5809 = vmul.f32 %v5808, 1.442695
  %v5810 = vpow.pop %v5809
  %v5811 = vsel %vm353, %v5810, 0.0
  %5812 = vadd.xlane.f32.xlu0 %v5811
  %v5813 = vpop.xlane.xlu0 %5812
  %v5814 = vrcp.pop %v5813
  %v5815 = vmul.f32 %v5810, %v5814
  %v5817 = vsel %vm353, %v5815, 0
  %5819 = vmatprep.subr.mxu0 0.0
  %5820 = vmatpush1.msra.mxu0 %v5724
  %5821 = vmatprep.subr.mxu0 0.0
  %5822 = vmatpush1.msra.mxu0 0.0
  %5823 = vmatprep.subr.mxu0 0.0
  %5824 = vmatpush1.msra.mxu0 0.0
  %5825 = vmatprep.subr.mxu0 0.0
  %5826 = vmatpush1.msra.mxu0 0.0
  %5827 = vmatprep.subr.mxu0 0.0
  %5828 = vmatpush1.msra.mxu0 0.0
  %5829 = vmatprep.subr.mxu0 0.0
  %5830 = vmatpush1.msra.mxu0 0.0
  %5831 = vmatprep.subr.mxu0 0.0
  %5832 = vmatpush1.msra.mxu0 0.0
  %5833 = vmatprep.subr.mxu0 0.0
  %5834 = vmatpush1.msra.mxu0 0.0
  %5835 = vmatprep.subr.mxu0 0.0
  %5836 = vmatpush1.msra.mxu0 0.0
  %5837 = vmatprep.subr.mxu0 0.0
  %5838 = vmatpush1.msra.mxu0 0.0
  %5839 = vmatprep.subr.mxu0 0.0
  %5840 = vmatpush1.msra.mxu0 0.0
  %5841 = vmatprep.subr.mxu0 0.0
  %5842 = vmatpush1.msra.mxu0 0.0
  %5843 = vmatprep.subr.mxu0 0.0
  %5844 = vmatpush1.msra.mxu0 0.0
  %5845 = vmatprep.subr.mxu0 0.0
  %5846 = vmatpush1.msra.mxu0 0.0
  %5847 = vmatprep.subr.mxu0 0.0
  %5848 = vmatpush1.msra.mxu0 0.0
  %5849 = vmatprep.subr.mxu0 0.0
  %5850 = vmatpush1.msra.mxu0 0.0
  %5851 = vmatprep.subr.mxu0 0.0
  %5852 = vmatpush1.msra.mxu0 0.0
  %5853 = vmatprep.subr.mxu0 0.0
  %5854 = vmatpush1.msra.mxu0 0.0
  %5855 = vmatprep.subr.mxu0 0.0
  %5856 = vmatpush1.msra.mxu0 0.0
  %5857 = vmatprep.subr.mxu0 0.0
  %5858 = vmatpush1.msra.mxu0 0.0
  %5859 = vmatprep.subr.mxu0 0.0
  %5860 = vmatpush1.msra.mxu0 0.0
  %5861 = vmatprep.subr.mxu0 0.0
  %5862 = vmatpush1.msra.mxu0 0.0
  %5863 = vmatprep.subr.mxu0 0.0
  %5864 = vmatpush1.msra.mxu0 0.0
  %5865 = vmatprep.subr.mxu0 0.0
  %5866 = vmatpush1.msra.mxu0 0.0
  %5867 = vmatprep.subr.mxu0 0.0
  %5868 = vmatpush1.msra.mxu0 0.0
  %5869 = vmatprep.subr.mxu0 0.0
  %5870 = vmatpush1.msra.mxu0 0.0
  %5871 = vmatprep.subr.mxu0 0.0
  %5872 = vmatpush1.msra.mxu0 0.0
  %5873 = vmatprep.subr.mxu0 0.0
  %5874 = vmatpush1.msra.mxu0 0.0
  %5875 = vmatprep.subr.mxu0 0.0
  %5876 = vmatpush1.msra.mxu0 0.0
  %5877 = vmatprep.subr.mxu0 0.0
  %5878 = vmatpush1.msra.mxu0 0.0
  %5879 = vmatprep.subr.mxu0 0.0
  %5880 = vmatpush1.msra.mxu0 0.0
  %5881 = vmatprep.subr.mxu0 0.0
  %5882 = vmatpush1.msra.mxu0 0.0
  %5883 = vmatprep.mubr.f32.mxu0 0.0
  %5884 = vmatmul.mubr.f32.gmra.mrb[0].mxu0 %v5817
  %v5885 = vpop.f32.mrb[0].mxu0
  %v5886 = vadd.f32 0.0, %v5885
  %v5887 = vpop.f32.mrb[0].mxu0
  %5888 = vdwg.mxu0
  %v5890 = vsel %vm353, %v5886, 0
  %5892 = vmatprep.subr.mxu0 0.0
  %5893 = vmatpush1.msra.mxu0 %v1492
  %5894 = vmatprep.subr.mxu0 0.0
  %5895 = vmatpush1.msra.mxu0 0.0
  %5896 = vmatprep.subr.mxu0 0.0
  %5897 = vmatpush1.msra.mxu0 0.0
  %5898 = vmatprep.subr.mxu0 0.0
  %5899 = vmatpush1.msra.mxu0 0.0
  %5900 = vmatprep.subr.mxu0 0.0
  %5901 = vmatpush1.msra.mxu0 0.0
  %5902 = vmatprep.subr.mxu0 0.0
  %5903 = vmatpush1.msra.mxu0 0.0
  %5904 = vmatprep.subr.mxu0 0.0
  %5905 = vmatpush1.msra.mxu0 0.0
  %5906 = vmatprep.subr.mxu0 0.0
  %5907 = vmatpush1.msra.mxu0 0.0
  %5908 = vmatprep.subr.mxu0 0.0
  %5909 = vmatpush1.msra.mxu0 0.0
  %5910 = vmatprep.subr.mxu0 0.0
  %5911 = vmatpush1.msra.mxu0 0.0
  %5912 = vmatprep.subr.mxu0 0.0
  %5913 = vmatpush1.msra.mxu0 0.0
  %5914 = vmatprep.subr.mxu0 0.0
  %5915 = vmatpush1.msra.mxu0 0.0
  %5916 = vmatprep.subr.mxu0 0.0
  %5917 = vmatpush1.msra.mxu0 0.0
  %5918 = vmatprep.subr.mxu0 0.0
  %5919 = vmatpush1.msra.mxu0 0.0
  %5920 = vmatprep.subr.mxu0 0.0
  %5921 = vmatpush1.msra.mxu0 0.0
  %5922 = vmatprep.subr.mxu0 0.0
  %5923 = vmatpush1.msra.mxu0 0.0
  %5924 = vmatprep.subr.mxu0 0.0
  %5925 = vmatpush1.msra.mxu0 0.0
  %5926 = vmatprep.subr.mxu0 0.0
  %5927 = vmatpush1.msra.mxu0 0.0
  %5928 = vmatprep.subr.mxu0 0.0
  %5929 = vmatpush1.msra.mxu0 0.0
  %5930 = vmatprep.subr.mxu0 0.0
  %5931 = vmatpush1.msra.mxu0 0.0
  %5932 = vmatprep.subr.mxu0 0.0
  %5933 = vmatpush1.msra.mxu0 0.0
  %5934 = vmatprep.subr.mxu0 0.0
  %5935 = vmatpush1.msra.mxu0 0.0
  %5936 = vmatprep.subr.mxu0 0.0
  %5937 = vmatpush1.msra.mxu0 0.0
  %5938 = vmatprep.subr.mxu0 0.0
  %5939 = vmatpush1.msra.mxu0 0.0
  %5940 = vmatprep.subr.mxu0 0.0
  %5941 = vmatpush1.msra.mxu0 0.0
  %5942 = vmatprep.subr.mxu0 0.0
  %5943 = vmatpush1.msra.mxu0 0.0
  %5944 = vmatprep.subr.mxu0 0.0
  %5945 = vmatpush1.msra.mxu0 0.0
  %5946 = vmatprep.subr.mxu0 0.0
  %5947 = vmatpush1.msra.mxu0 0.0
  %5948 = vmatprep.subr.mxu0 0.0
  %5949 = vmatpush1.msra.mxu0 0.0
  %5950 = vmatprep.subr.mxu0 0.0
  %5951 = vmatpush1.msra.mxu0 0.0
  %5952 = vmatprep.subr.mxu0 0.0
  %5953 = vmatpush1.msra.mxu0 0.0
  %5954 = vmatprep.subr.mxu0 0.0
  %5955 = vmatpush1.msra.mxu0 0.0
  %5956 = vmatprep.mubr.f32.mxu0 0.0
  %5957 = vmatmul.mubr.f32.gmra.mrb[0].mxu0 %v5890
  %v5958 = vpop.f32.mrb[0].mxu0
  %v5959 = vadd.f32 0.0, %v5958
  %v5960 = vpop.f32.mrb[0].mxu0
  %5961 = vdwg.mxu0
  %v5962 = vadd.f32 %v5514, %v5959
  %5963 = vmatprep.subr.mxu0 0.0
  %5964 = vmatpush1.msra.mxu0 %v1568
  %5965 = vmatprep.subr.mxu0 0.0
  %5966 = vmatpush1.msra.mxu0 %v1569
  %5967 = vmatprep.subr.mxu0 0.0
  %5968 = vmatpush1.msra.mxu0 %v1570
  %5969 = vmatprep.subr.mxu0 0.0
  %5970 = vmatpush1.msra.mxu0 %v1571
  %5971 = vmatprep.subr.mxu0 0.0
  %5972 = vmatpush1.msra.mxu0 0.0
  %5973 = vmatprep.subr.mxu0 0.0
  %5974 = vmatpush1.msra.mxu0 0.0
  %5975 = vmatprep.subr.mxu0 0.0
  %5976 = vmatpush1.msra.mxu0 0.0
  %5977 = vmatprep.subr.mxu0 0.0
  %5978 = vmatpush1.msra.mxu0 0.0
  %5979 = vmatprep.subr.mxu0 0.0
  %5980 = vmatpush1.msra.mxu0 0.0
  %5981 = vmatprep.subr.mxu0 0.0
  %5982 = vmatpush1.msra.mxu0 0.0
  %5983 = vmatprep.subr.mxu0 0.0
  %5984 = vmatpush1.msra.mxu0 0.0
  %5985 = vmatprep.subr.mxu0 0.0
  %5986 = vmatpush1.msra.mxu0 0.0
  %5987 = vmatprep.subr.mxu0 0.0
  %5988 = vmatpush1.msra.mxu0 0.0
  %5989 = vmatprep.subr.mxu0 0.0
  %5990 = vmatpush1.msra.mxu0 0.0
  %5991 = vmatprep.subr.mxu0 0.0
  %5992 = vmatpush1.msra.mxu0 0.0
  %5993 = vmatprep.subr.mxu0 0.0
  %5994 = vmatpush1.msra.mxu0 0.0
  %5995 = vmatprep.subr.mxu0 0.0
  %5996 = vmatpush1.msra.mxu0 0.0
  %5997 = vmatprep.subr.mxu0 0.0
  %5998 = vmatpush1.msra.mxu0 0.0
  %5999 = vmatprep.subr.mxu0 0.0
  %6000 = vmatpush1.msra.mxu0 0.0
  %6001 = vmatprep.subr.mxu0 0.0
  %6002 = vmatpush1.msra.mxu0 0.0
  %6003 = vmatprep.subr.mxu0 0.0
  %6004 = vmatpush1.msra.mxu0 0.0
  %6005 = vmatprep.subr.mxu0 0.0
  %6006 = vmatpush1.msra.mxu0 0.0
  %6007 = vmatprep.subr.mxu0 0.0
  %6008 = vmatpush1.msra.mxu0 0.0
  %6009 = vmatprep.subr.mxu0 0.0
  %6010 = vmatpush1.msra.mxu0 0.0
  %6011 = vmatprep.subr.mxu0 0.0
  %6012 = vmatpush1.msra.mxu0 0.0
  %6013 = vmatprep.subr.mxu0 0.0
  %6014 = vmatpush1.msra.mxu0 0.0
  %6015 = vmatprep.subr.mxu0 0.0
  %6016 = vmatpush1.msra.mxu0 0.0
  %6017 = vmatprep.subr.mxu0 0.0
  %6018 = vmatpush1.msra.mxu0 0.0
  %6019 = vmatprep.subr.mxu0 0.0
  %6020 = vmatpush1.msra.mxu0 0.0
  %6021 = vmatprep.subr.mxu0 0.0
  %6022 = vmatpush1.msra.mxu0 0.0
  %6023 = vmatprep.subr.mxu0 0.0
  %6024 = vmatpush1.msra.mxu0 0.0
  %6025 = vmatprep.subr.mxu0 0.0
  %6026 = vmatpush1.msra.mxu0 0.0
  %6027 = vmatprep.mubr.f32.mxu0 0.0
  %6028 = vmatmul.mubr.f32.gmra.mrb[0].mxu0 %v4621
  %v6029 = vpop.f32.mrb[0].mxu0
  %v6030 = vadd.f32 %v1578, %v6029
  %v6031 = vpop.f32.mrb[0].mxu0
  %6032 = vdwg.mxu0
  %6033 = vmatprep.subr.mxu0 0.0
  %6034 = vmatpush1.msra.mxu0 %v1651
  %6035 = vmatprep.subr.mxu0 0.0
  %6036 = vmatpush1.msra.mxu0 %v1652
  %6037 = vmatprep.subr.mxu0 0.0
  %6038 = vmatpush1.msra.mxu0 %v1653
  %6039 = vmatprep.subr.mxu0 0.0
  %6040 = vmatpush1.msra.mxu0 %v1654
  %6041 = vmatprep.subr.mxu0 0.0
  %6042 = vmatpush1.msra.mxu0 0.0
  %6043 = vmatprep.subr.mxu0 0.0
  %6044 = vmatpush1.msra.mxu0 0.0
  %6045 = vmatprep.subr.mxu0 0.0
  %6046 = vmatpush1.msra.mxu0 0.0
  %6047 = vmatprep.subr.mxu0 0.0
  %6048 = vmatpush1.msra.mxu0 0.0
  %6049 = vmatprep.subr.mxu0 0.0
  %6050 = vmatpush1.msra.mxu0 0.0
  %6051 = vmatprep.subr.mxu0 0.0
  %6052 = vmatpush1.msra.mxu0 0.0
  %6053 = vmatprep.subr.mxu0 0.0
  %6054 = vmatpush1.msra.mxu0 0.0
  %6055 = vmatprep.subr.mxu0 0.0
  %6056 = vmatpush1.msra.mxu0 0.0
  %6057 = vmatprep.subr.mxu0 0.0
  %6058 = vmatpush1.msra.mxu0 0.0
  %6059 = vmatprep.subr.mxu0 0.0
  %6060 = vmatpush1.msra.mxu0 0.0
  %6061 = vmatprep.subr.mxu0 0.0
  %6062 = vmatpush1.msra.mxu0 0.0
  %6063 = vmatprep.subr.mxu0 0.0
  %6064 = vmatpush1.msra.mxu0 0.0
  %6065 = vmatprep.subr.mxu0 0.0
  %6066 = vmatpush1.msra.mxu0 0.0
  %6067 = vmatprep.subr.mxu0 0.0
  %6068 = vmatpush1.msra.mxu0 0.0
  %6069 = vmatprep.subr.mxu0 0.0
  %6070 = vmatpush1.msra.mxu0 0.0
  %6071 = vmatprep.subr.mxu0 0.0
  %6072 = vmatpush1.msra.mxu0 0.0
  %6073 = vmatprep.subr.mxu0 0.0
  %6074 = vmatpush1.msra.mxu0 0.0
  %6075 = vmatprep.subr.mxu0 0.0
  %6076 = vmatpush1.msra.mxu0 0.0
  %6077 = vmatprep.subr.mxu0 0.0
  %6078 = vmatpush1.msra.mxu0 0.0
  %6079 = vmatprep.subr.mxu0 0.0
  %6080 = vmatpush1.msra.mxu0 0.0
  %6081 = vmatprep.subr.mxu0 0.0
  %6082 = vmatpush1.msra.mxu0 0.0
  %6083 = vmatprep.subr.mxu0 0.0
  %6084 = vmatpush1.msra.mxu0 0.0
  %6085 = vmatprep.subr.mxu0 0.0
  %6086 = vmatpush1.msra.mxu0 0.0
  %6087 = vmatprep.subr.mxu0 0.0
  %6088 = vmatpush1.msra.mxu0 0.0
  %6089 = vmatprep.subr.mxu0 0.0
  %6090 = vmatpush1.msra.mxu0 0.0
  %6091 = vmatprep.subr.mxu0 0.0
  %6092 = vmatpush1.msra.mxu0 0.0
  %6093 = vmatprep.subr.mxu0 0.0
  %6094 = vmatpush1.msra.mxu0 0.0
  %6095 = vmatprep.subr.mxu0 0.0
  %6096 = vmatpush1.msra.mxu0 0.0
  %6097 = vmatprep.mubr.f32.mxu0 0.0
  %6098 = vmatmul.mubr.f32.gmra.mrb[0].mxu0 %v4621
  %v6099 = vpop.f32.mrb[0].mxu0
  %v6100 = vadd.f32 %v1661, %v6099
  %v6101 = vpop.f32.mrb[0].mxu0
  %6102 = vdwg.mxu0
  %6103 = vmatprep.subr.mxu0 0.0
  %6104 = vmatpush1.msra.mxu0 %v1734
  %6105 = vmatprep.subr.mxu0 0.0
  %6106 = vmatpush1.msra.mxu0 %v1735
  %6107 = vmatprep.subr.mxu0 0.0
  %6108 = vmatpush1.msra.mxu0 %v1736
  %6109 = vmatprep.subr.mxu0 0.0
  %6110 = vmatpush1.msra.mxu0 %v1737
  %6111 = vmatprep.subr.mxu0 0.0
  %6112 = vmatpush1.msra.mxu0 0.0
  %6113 = vmatprep.subr.mxu0 0.0
  %6114 = vmatpush1.msra.mxu0 0.0
  %6115 = vmatprep.subr.mxu0 0.0
  %6116 = vmatpush1.msra.mxu0 0.0
  %6117 = vmatprep.subr.mxu0 0.0
  %6118 = vmatpush1.msra.mxu0 0.0
  %6119 = vmatprep.subr.mxu0 0.0
  %6120 = vmatpush1.msra.mxu0 0.0
  %6121 = vmatprep.subr.mxu0 0.0
  %6122 = vmatpush1.msra.mxu0 0.0
  %6123 = vmatprep.subr.mxu0 0.0
  %6124 = vmatpush1.msra.mxu0 0.0
  %6125 = vmatprep.subr.mxu0 0.0
  %6126 = vmatpush1.msra.mxu0 0.0
  %6127 = vmatprep.subr.mxu0 0.0
  %6128 = vmatpush1.msra.mxu0 0.0
  %6129 = vmatprep.subr.mxu0 0.0
  %6130 = vmatpush1.msra.mxu0 0.0
  %6131 = vmatprep.subr.mxu0 0.0
  %6132 = vmatpush1.msra.mxu0 0.0
  %6133 = vmatprep.subr.mxu0 0.0
  %6134 = vmatpush1.msra.mxu0 0.0
  %6135 = vmatprep.subr.mxu0 0.0
  %6136 = vmatpush1.msra.mxu0 0.0
  %6137 = vmatprep.subr.mxu0 0.0
  %6138 = vmatpush1.msra.mxu0 0.0
  %6139 = vmatprep.subr.mxu0 0.0
  %6140 = vmatpush1.msra.mxu0 0.0
  %6141 = vmatprep.subr.mxu0 0.0
  %6142 = vmatpush1.msra.mxu0 0.0
  %6143 = vmatprep.subr.mxu0 0.0
  %6144 = vmatpush1.msra.mxu0 0.0
  %6145 = vmatprep.subr.mxu0 0.0
  %6146 = vmatpush1.msra.mxu0 0.0
  %6147 = vmatprep.subr.mxu0 0.0
  %6148 = vmatpush1.msra.mxu0 0.0
  %6149 = vmatprep.subr.mxu0 0.0
  %6150 = vmatpush1.msra.mxu0 0.0
  %6151 = vmatprep.subr.mxu0 0.0
  %6152 = vmatpush1.msra.mxu0 0.0
  %6153 = vmatprep.subr.mxu0 0.0
  %6154 = vmatpush1.msra.mxu0 0.0
  %6155 = vmatprep.subr.mxu0 0.0
  %6156 = vmatpush1.msra.mxu0 0.0
  %6157 = vmatprep.subr.mxu0 0.0
  %6158 = vmatpush1.msra.mxu0 0.0
  %6159 = vmatprep.subr.mxu0 0.0
  %6160 = vmatpush1.msra.mxu0 0.0
  %6161 = vmatprep.subr.mxu0 0.0
  %6162 = vmatpush1.msra.mxu0 0.0
  %6163 = vmatprep.subr.mxu0 0.0
  %6164 = vmatpush1.msra.mxu0 0.0
  %6165 = vmatprep.subr.mxu0 0.0
  %6166 = vmatpush1.msra.mxu0 0.0
  %6167 = vmatprep.mubr.f32.mxu0 0.0
  %6168 = vmatmul.mubr.f32.gmra.mrb[0].mxu0 %v4621
  %v6169 = vpop.f32.mrb[0].mxu0
  %v6170 = vadd.f32 %v1744, %v6169
  %v6171 = vpop.f32.mrb[0].mxu0
  %6172 = vdwg.mxu0
  %v6174 = vsel %vm353, %v6030, 0
  %v6177 = vsel %vm353, %v6100, 0
  %6179 = vmatprep.subr.mxu0 0.0
  %6180 = vmatpush1.xpose.msra.mxu0 %v6177
  %6181 = vmatprep.subr.mxu0 0.0
  %6182 = vmatpush1.xpose.msra.mxu0 0.0
  %6183 = vmatprep.subr.mxu0 0.0
  %6184 = vmatpush1.xpose.msra.mxu0 0.0
  %6185 = vmatprep.subr.mxu0 0.0
  %6186 = vmatpush1.xpose.msra.mxu0 0.0
  %6187 = vmatprep.subr.mxu0 0.0
  %6188 = vmatpush1.xpose.msra.mxu0 0.0
  %6189 = vmatprep.subr.mxu0 0.0
  %6190 = vmatpush1.xpose.msra.mxu0 0.0
  %6191 = vmatprep.subr.mxu0 0.0
  %6192 = vmatpush1.xpose.msra.mxu0 0.0
  %6193 = vmatprep.subr.mxu0 0.0
  %6194 = vmatpush1.xpose.msra.mxu0 0.0
  %6195 = vmatprep.subr.mxu0 0.0
  %6196 = vmatpush1.xpose.msra.mxu0 0.0
  %6197 = vmatprep.subr.mxu0 0.0
  %6198 = vmatpush1.xpose.msra.mxu0 0.0
  %6199 = vmatprep.subr.mxu0 0.0
  %6200 = vmatpush1.xpose.msra.mxu0 0.0
  %6201 = vmatprep.subr.mxu0 0.0
  %6202 = vmatpush1.xpose.msra.mxu0 0.0
  %6203 = vmatprep.subr.mxu0 0.0
  %6204 = vmatpush1.xpose.msra.mxu0 0.0
  %6205 = vmatprep.subr.mxu0 0.0
  %6206 = vmatpush1.xpose.msra.mxu0 0.0
  %6207 = vmatprep.subr.mxu0 0.0
  %6208 = vmatpush1.xpose.msra.mxu0 0.0
  %6209 = vmatprep.subr.mxu0 0.0
  %6210 = vmatpush1.xpose.msra.mxu0 0.0
  %6211 = vmatprep.subr.mxu0 0.0
  %6212 = vmatpush1.xpose.msra.mxu0 0.0
  %6213 = vmatprep.subr.mxu0 0.0
  %6214 = vmatpush1.xpose.msra.mxu0 0.0
  %6215 = vmatprep.subr.mxu0 0.0
  %6216 = vmatpush1.xpose.msra.mxu0 0.0
  %6217 = vmatprep.subr.mxu0 0.0
  %6218 = vmatpush1.xpose.msra.mxu0 0.0
  %6219 = vmatprep.subr.mxu0 0.0
  %6220 = vmatpush1.xpose.msra.mxu0 0.0
  %6221 = vmatprep.subr.mxu0 0.0
  %6222 = vmatpush1.xpose.msra.mxu0 0.0
  %6223 = vmatprep.subr.mxu0 0.0
  %6224 = vmatpush1.xpose.msra.mxu0 0.0
  %6225 = vmatprep.subr.mxu0 0.0
  %6226 = vmatpush1.xpose.msra.mxu0 0.0
  %6227 = vmatprep.subr.mxu0 0.0
  %6228 = vmatpush1.xpose.msra.mxu0 0.0
  %6229 = vmatprep.subr.mxu0 0.0
  %6230 = vmatpush1.xpose.msra.mxu0 0.0
  %6231 = vmatprep.subr.mxu0 0.0
  %6232 = vmatpush1.xpose.msra.mxu0 0.0
  %6233 = vmatprep.subr.mxu0 0.0
  %6234 = vmatpush1.xpose.msra.mxu0 0.0
  %6235 = vmatprep.subr.mxu0 0.0
  %6236 = vmatpush1.xpose.msra.mxu0 0.0
  %6237 = vmatprep.subr.mxu0 0.0
  %6238 = vmatpush1.xpose.msra.mxu0 0.0
  %6239 = vmatprep.subr.mxu0 0.0
  %6240 = vmatpush1.xpose.msra.mxu0 0.0
  %6241 = vmatprep.subr.mxu0 0.0
  %6242 = vmatpush1.xpose.msra.mxu0 0.0
  %6243 = vmatprep.mubr.f32.mxu0 0.0
  %6244 = vmatmul.mubr.f32.gmra.mrb[0].mxu0 %v6174
  %v6245 = vpop.f32.mrb[0].mxu0
  %v6246 = vadd.f32 0.0, %v6245
  %v6247 = vpop.f32.mrb[0].mxu0
  %6248 = vdwg.mxu0
  %v6249 = vmul.f32 %v6246, 0.35355338
  %v6250 = vadd.f32 %v6249, %v4913
  %v6251 = vsel %vm353, %v6250, -inf
  %6252 = vmax.xlane.f32.xlu0 %v6251
  %v6253 = vpop.xlane.xlu0 %6252
  %v6254 = vsub.f32 %v6250, %v6253
  %v6255 = vmul.f32 %v6254, 1.442695
  %v6256 = vpow.pop %v6255
  %v6257 = vsel %vm353, %v6256, 0.0
  %6258 = vadd.xlane.f32.xlu0 %v6257
  %v6259 = vpop.xlane.xlu0 %6258
  %v6260 = vrcp.pop %v6259
  %v6261 = vmul.f32 %v6256, %v6260
  %v6263 = vsel %vm353, %v6261, 0
  %6265 = vmatprep.subr.mxu0 0.0
  %6266 = vmatpush1.msra.mxu0 %v6170
  %6267 = vmatprep.subr.mxu0 0.0
  %6268 = vmatpush1.msra.mxu0 0.0
  %6269 = vmatprep.subr.mxu0 0.0
  %6270 = vmatpush1.msra.mxu0 0.0
  %6271 = vmatprep.subr.mxu0 0.0
  %6272 = vmatpush1.msra.mxu0 0.0
  %6273 = vmatprep.subr.mxu0 0.0
  %6274 = vmatpush1.msra.mxu0 0.0
  %6275 = vmatprep.subr.mxu0 0.0
  %6276 = vmatpush1.msra.mxu0 0.0
  %6277 = vmatprep.subr.mxu0 0.0
  %6278 = vmatpush1.msra.mxu0 0.0
  %6279 = vmatprep.subr.mxu0 0.0
  %6280 = vmatpush1.msra.mxu0 0.0
  %6281 = vmatprep.subr.mxu0 0.0
  %6282 = vmatpush1.msra.mxu0 0.0
  %6283 = vmatprep.subr.mxu0 0.0
  %6284 = vmatpush1.msra.mxu0 0.0
  %6285 = vmatprep.subr.mxu0 0.0
  %6286 = vmatpush1.msra.mxu0 0.0
  %6287 = vmatprep.subr.mxu0 0.0
  %6288 = vmatpush1.msra.mxu0 0.0
  %6289 = vmatprep.subr.mxu0 0.0
  %6290 = vmatpush1.msra.mxu0 0.0
  %6291 = vmatprep.subr.mxu0 0.0
  %6292 = vmatpush1.msra.mxu0 0.0
  %6293 = vmatprep.subr.mxu0 0.0
  %6294 = vmatpush1.msra.mxu0 0.0
  %6295 = vmatprep.subr.mxu0 0.0
  %6296 = vmatpush1.msra.mxu0 0.0
  %6297 = vmatprep.subr.mxu0 0.0
  %6298 = vmatpush1.msra.mxu0 0.0
  %6299 = vmatprep.subr.mxu0 0.0
  %6300 = vmatpush1.msra.mxu0 0.0
  %6301 = vmatprep.subr.mxu0 0.0
  %6302 = vmatpush1.msra.mxu0 0.0
  %6303 = vmatprep.subr.mxu0 0.0
  %6304 = vmatpush1.msra.mxu0 0.0
  %6305 = vmatprep.subr.mxu0 0.0
  %6306 = vmatpush1.msra.mxu0 0.0
  %6307 = vmatprep.subr.mxu0 0.0
  %6308 = vmatpush1.msra.mxu0 0.0
  %6309 = vmatprep.subr.mxu0 0.0
  %6310 = vmatpush1.msra.mxu0 0.0
  %6311 = vmatprep.subr.mxu0 0.0
  %6312 = vmatpush1.msra.mxu0 0.0
  %6313 = vmatprep.subr.mxu0 0.0
  %6314 = vmatpush1.msra.mxu0 0.0
  %6315 = vmatprep.subr.mxu0 0.0
  %6316 = vmatpush1.msra.mxu0 0.0
  %6317 = vmatprep.subr.mxu0 0.0
  %6318 = vmatpush1.msra.mxu0 0.0
  %6319 = vmatprep.subr.mxu0 0.0
  %6320 = vmatpush1.msra.mxu0 0.0
  %6321 = vmatprep.subr.mxu0 0.0
  %6322 = vmatpush1.msra.mxu0 0.0
  %6323 = vmatprep.subr.mxu0 0.0
  %6324 = vmatpush1.msra.mxu0 0.0
  %6325 = vmatprep.subr.mxu0 0.0
  %6326 = vmatpush1.msra.mxu0 0.0
  %6327 = vmatprep.subr.mxu0 0.0
  %6328 = vmatpush1.msra.mxu0 0.0
  %6329 = vmatprep.mubr.f32.mxu0 0.0
  %6330 = vmatmul.mubr.f32.gmra.mrb[0].mxu0 %v6263
  %v6331 = vpop.f32.mrb[0].mxu0
  %v6332 = vadd.f32 0.0, %v6331
  %v6333 = vpop.f32.mrb[0].mxu0
  %6334 = vdwg.mxu0
  %v6336 = vsel %vm353, %v6332, 0
  %6338 = vmatprep.subr.mxu0 0.0
  %6339 = vmatpush1.msra.mxu0 %v1979
  %6340 = vmatprep.subr.mxu0 0.0
  %6341 = vmatpush1.msra.mxu0 0.0
  %6342 = vmatprep.subr.mxu0 0.0
  %6343 = vmatpush1.msra.mxu0 0.0
  %6344 = vmatprep.subr.mxu0 0.0
  %6345 = vmatpush1.msra.mxu0 0.0
  %6346 = vmatprep.subr.mxu0 0.0
  %6347 = vmatpush1.msra.mxu0 0.0
  %6348 = vmatprep.subr.mxu0 0.0
  %6349 = vmatpush1.msra.mxu0 0.0
  %6350 = vmatprep.subr.mxu0 0.0
  %6351 = vmatpush1.msra.mxu0 0.0
  %6352 = vmatprep.subr.mxu0 0.0
  %6353 = vmatpush1.msra.mxu0 0.0
  %6354 = vmatprep.subr.mxu0 0.0
  %6355 = vmatpush1.msra.mxu0 0.0
  %6356 = vmatprep.subr.mxu0 0.0
  %6357 = vmatpush1.msra.mxu0 0.0
  %6358 = vmatprep.subr.mxu0 0.0
  %6359 = vmatpush1.msra.mxu0 0.0
  %6360 = vmatprep.subr.mxu0 0.0
  %6361 = vmatpush1.msra.mxu0 0.0
  %6362 = vmatprep.subr.mxu0 0.0
  %6363 = vmatpush1.msra.mxu0 0.0
  %6364 = vmatprep.subr.mxu0 0.0
  %6365 = vmatpush1.msra.mxu0 0.0
  %6366 = vmatprep.subr.mxu0 0.0
  %6367 = vmatpush1.msra.mxu0 0.0
  %6368 = vmatprep.subr.mxu0 0.0
  %6369 = vmatpush1.msra.mxu0 0.0
  %6370 = vmatprep.subr.mxu0 0.0
  %6371 = vmatpush1.msra.mxu0 0.0
  %6372 = vmatprep.subr.mxu0 0.0
  %6373 = vmatpush1.msra.mxu0 0.0
  %6374 = vmatprep.subr.mxu0 0.0
  %6375 = vmatpush1.msra.mxu0 0.0
  %6376 = vmatprep.subr.mxu0 0.0
  %6377 = vmatpush1.msra.mxu0 0.0
  %6378 = vmatprep.subr.mxu0 0.0
  %6379 = vmatpush1.msra.mxu0 0.0
  %6380 = vmatprep.subr.mxu0 0.0
  %6381 = vmatpush1.msra.mxu0 0.0
  %6382 = vmatprep.subr.mxu0 0.0
  %6383 = vmatpush1.msra.mxu0 0.0
  %6384 = vmatprep.subr.mxu0 0.0
  %6385 = vmatpush1.msra.mxu0 0.0
  %6386 = vmatprep.subr.mxu0 0.0
  %6387 = vmatpush1.msra.mxu0 0.0
  %6388 = vmatprep.subr.mxu0 0.0
  %6389 = vmatpush1.msra.mxu0 0.0
  %6390 = vmatprep.subr.mxu0 0.0
  %6391 = vmatpush1.msra.mxu0 0.0
  %6392 = vmatprep.subr.mxu0 0.0
  %6393 = vmatpush1.msra.mxu0 0.0
  %6394 = vmatprep.subr.mxu0 0.0
  %6395 = vmatpush1.msra.mxu0 0.0
  %6396 = vmatprep.subr.mxu0 0.0
  %6397 = vmatpush1.msra.mxu0 0.0
  %6398 = vmatprep.subr.mxu0 0.0
  %6399 = vmatpush1.msra.mxu0 0.0
  %6400 = vmatprep.subr.mxu0 0.0
  %6401 = vmatpush1.msra.mxu0 0.0
  %6402 = vmatprep.mubr.f32.mxu0 0.0
  %6403 = vmatmul.mubr.f32.gmra.mrb[0].mxu0 %v6336
  %v6404 = vpop.f32.mrb[0].mxu0
  %v6405 = vadd.f32 0.0, %v6404
  %v6406 = vpop.f32.mrb[0].mxu0
  %6407 = vdwg.mxu0
  %v6408 = vadd.f32 %v5962, %v6405
  %v6409 = vadd.f32 %v6408, %v2059
  %v6410 = vadd.f32 %v6409, %v4619
  %v6411 = vsel %vm74, %v6410, 0.0
  %6412 = vadd.xlane.f32.xlu0 %v6411
  %v6413 = vpop.xlane.xlu0 %6412
  %v6414 = vmul.f32 %v6413, %v78
  %v6415 = vsub.f32 %v6410, %v6414
  %v6416 = vmul.f32 %v6415, %v6415
  %v6417 = vsel %vm74, %v6416, 0.0
  %6418 = vadd.xlane.f32.xlu0 %v6417
  %v6419 = vpop.xlane.xlu0 %6418
  %v6420 = vmul.f32 %v6419, %v78
  %v6421 = vadd.f32 %v6420, 1e-12
  %v6422 = vrsqrt.pop %v6421
  %v6423 = vmul.f32 %v6415, %v6422
  %v6424 = vmul.f32 %v6423, %v2082
  %v6425 = vadd.f32 %v6424, %v2089
  %v6427 = vsel %vm74, %v6425, 0
  %6429 = vmatprep.subr.mxu0 0.0
  %6430 = vmatpush1.msra.mxu0 %v2092
  %6431 = vmatprep.subr.mxu0 0.0
  %6432 = vmatpush1.msra.mxu0 %v2093
  %6433 = vmatprep.subr.mxu0 0.0
  %6434 = vmatpush1.msra.mxu0 %v2094
  %6435 = vmatprep.subr.mxu0 0.0
  %6436 = vmatpush1.msra.mxu0 %v2095
  %6437 = vmatprep.subr.mxu0 0.0
  %6438 = vmatpush1.msra.mxu0 0.0
  %6439 = vmatprep.subr.mxu0 0.0
  %6440 = vmatpush1.msra.mxu0 0.0
  %6441 = vmatprep.subr.mxu0 0.0
  %6442 = vmatpush1.msra.mxu0 0.0
  %6443 = vmatprep.subr.mxu0 0.0
  %6444 = vmatpush1.msra.mxu0 0.0
  %6445 = vmatprep.subr.mxu0 0.0
  %6446 = vmatpush1.msra.mxu0 0.0
  %6447 = vmatprep.subr.mxu0 0.0
  %6448 = vmatpush1.msra.mxu0 0.0
  %6449 = vmatprep.subr.mxu0 0.0
  %6450 = vmatpush1.msra.mxu0 0.0
  %6451 = vmatprep.subr.mxu0 0.0
  %6452 = vmatpush1.msra.mxu0 0.0
  %6453 = vmatprep.subr.mxu0 0.0
  %6454 = vmatpush1.msra.mxu0 0.0
  %6455 = vmatprep.subr.mxu0 0.0
  %6456 = vmatpush1.msra.mxu0 0.0
  %6457 = vmatprep.subr.mxu0 0.0
  %6458 = vmatpush1.msra.mxu0 0.0
  %6459 = vmatprep.subr.mxu0 0.0
  %6460 = vmatpush1.msra.mxu0 0.0
  %6461 = vmatprep.subr.mxu0 0.0
  %6462 = vmatpush1.msra.mxu0 0.0
  %6463 = vmatprep.subr.mxu0 0.0
  %6464 = vmatpush1.msra.mxu0 0.0
  %6465 = vmatprep.subr.mxu0 0.0
  %6466 = vmatpush1.msra.mxu0 0.0
  %6467 = vmatprep.subr.mxu0 0.0
  %6468 = vmatpush1.msra.mxu0 0.0
  %6469 = vmatprep.subr.mxu0 0.0
  %6470 = vmatpush1.msra.mxu0 0.0
  %6471 = vmatprep.subr.mxu0 0.0
  %6472 = vmatpush1.msra.mxu0 0.0
  %6473 = vmatprep.subr.mxu0 0.0
  %6474 = vmatpush1.msra.mxu0 0.0
  %6475 = vmatprep.subr.mxu0 0.0
  %6476 = vmatpush1.msra.mxu0 0.0
  %6477 = vmatprep.subr.mxu0 0.0
  %6478 = vmatpush1.msra.mxu0 0.0
  %6479 = vmatprep.subr.mxu0 0.0
  %6480 = vmatpush1.msra.mxu0 0.0
  %6481 = vmatprep.subr.mxu0 0.0
  %6482 = vmatpush1.msra.mxu0 0.0
  %6483 = vmatprep.subr.mxu0 0.0
  %6484 = vmatpush1.msra.mxu0 0.0
  %6485 = vmatprep.subr.mxu0 0.0
  %6486 = vmatpush1.msra.mxu0 0.0
  %6487 = vmatprep.subr.mxu0 0.0
  %6488 = vmatpush1.msra.mxu0 0.0
  %6489 = vmatprep.subr.mxu0 0.0
  %6490 = vmatpush1.msra.mxu0 0.0
  %6491 = vmatprep.subr.mxu0 0.0
  %6492 = vmatpush1.msra.mxu0 0.0
  %6493 = vmatprep.mubr.f32.mxu0 0.0
  %6494 = vmatmul.mubr.f32.gmra.mrb[0].mxu0 %v6427
  %v6495 = vpop.f32.mrb[0].mxu0
  %v6496 = vadd.f32 %v2101, %v6495
  %v6497 = vpop.f32.mrb[0].mxu0
  %6498 = vdwg.mxu0
  %v6499 = vmul.f32 %v6496, 0.5
  %v6500 = vmul.f32 %v6496, 0.044715
  %v6501 = vmul.f32 %v6500, %v6496
  %v6502 = vmul.f32 %v6501, %v6496
  %v6503 = vadd.f32 %v6496, %v6502
  %v6504 = vmul.f32 %v6503, 0.7978846
  %v6505 = vtanh.pop %v6504
  %v6506 = vadd.f32 %v6505, 1.0
  %v6507 = vmul.f32 %v6499, %v6506
  %v6509 = vsel %vm2200, %v6507, 0
  %6511 = vmatprep.subr.mxu0 0.0
  %6512 = vmatpush1.msra.mxu0 %v2185
  %6513 = vmatprep.subr.mxu0 0.0
  %6514 = vmatpush1.msra.mxu0 %v2186
  %6515 = vmatprep.subr.mxu0 0.0
  %6516 = vmatpush1.msra.mxu0 %v2187
  %6517 = vmatprep.subr.mxu0 0.0
  %6518 = vmatpush1.msra.mxu0 %v2188
  %6519 = vmatprep.subr.mxu0 0.0
  %6520 = vmatpush1.msra.mxu0 %v2189
  %6521 = vmatprep.subr.mxu0 0.0
  %6522 = vmatpush1.msra.mxu0 %v2190
  %6523 = vmatprep.subr.mxu0 0.0
  %6524 = vmatpush1.msra.mxu0 %v2191
  %6525 = vmatprep.subr.mxu0 0.0
  %6526 = vmatpush1.msra.mxu0 %v2192
  %6527 = vmatprep.subr.mxu0 0.0
  %6528 = vmatpush1.msra.mxu0 0.0
  %6529 = vmatprep.subr.mxu0 0.0
  %6530 = vmatpush1.msra.mxu0 0.0
  %6531 = vmatprep.subr.mxu0 0.0
  %6532 = vmatpush1.msra.mxu0 0.0
  %6533 = vmatprep.subr.mxu0 0.0
  %6534 = vmatpush1.msra.mxu0 0.0
  %6535 = vmatprep.subr.mxu0 0.0
  %6536 = vmatpush1.msra.mxu0 0.0
  %6537 = vmatprep.subr.mxu0 0.0
  %6538 = vmatpush1.msra.mxu0 0.0
  %6539 = vmatprep.subr.mxu0 0.0
  %6540 = vmatpush1.msra.mxu0 0.0
  %6541 = vmatprep.subr.mxu0 0.0
  %6542 = vmatpush1.msra.mxu0 0.0
  %6543 = vmatprep.subr.mxu0 0.0
  %6544 = vmatpush1.msra.mxu0 0.0
  %6545 = vmatprep.subr.mxu0 0.0
  %6546 = vmatpush1.msra.mxu0 0.0
  %6547 = vmatprep.subr.mxu0 0.0
  %6548 = vmatpush1.msra.mxu0 0.0
  %6549 = vmatprep.subr.mxu0 0.0
  %6550 = vmatpush1.msra.mxu0 0.0
  %6551 = vmatprep.subr.mxu0 0.0
  %6552 = vmatpush1.msra.mxu0 0.0
  %6553 = vmatprep.subr.mxu0 0.0
  %6554 = vmatpush1.msra.mxu0 0.0
  %6555 = vmatprep.subr.mxu0 0.0
  %6556 = vmatpush1.msra.mxu0 0.0
  %6557 = vmatprep.subr.mxu0 0.0
  %6558 = vmatpush1.msra.mxu0 0.0
  %6559 = vmatprep.subr.mxu0 0.0
  %6560 = vmatpush1.msra.mxu0 0.0
  %6561 = vmatprep.subr.mxu0 0.0
  %6562 = vmatpush1.msra.mxu0 0.0
  %6563 = vmatprep.subr.mxu0 0.0
  %6564 = vmatpush1.msra.mxu0 0.0
  %6565 = vmatprep.subr.mxu0 0.0
  %6566 = vmatpush1.msra.mxu0 0.0
  %6567 = vmatprep.subr.mxu0 0.0
  %6568 = vmatpush1.msra.mxu0 0.0
  %6569 = vmatprep.subr.mxu0 0.0
  %6570 = vmatpush1.msra.mxu0 0.0
  %6571 = vmatprep.subr.mxu0 0.0
  %6572 = vmatpush1.msra.mxu0 0.0
  %6573 = vmatprep.subr.mxu0 0.0
  %6574 = vmatpush1.msra.mxu0 0.0
  %6575 = vmatprep.mubr.f32.mxu0 0.0
  %6576 = vmatmul.mubr.f32.gmra.mrb[0].mxu0 %v6509
  %v6577 = vpop.f32.mrb[0].mxu0
  %v6578 = vadd.f32 %v2198, %v6577
  %v6579 = vpop.f32.mrb[0].mxu0
  %6580 = vdwg.mxu0
  %v6581 = vadd.f32 %v6578, %v6425
  %v6582 = vsel %vm74, %v6581, 0.0
  %6583 = vadd.xlane.f32.xlu0 %v6582
  %v6584 = vpop.xlane.xlu0 %6583
  %v6585 = vmul.f32 %v6584, %v78
  %v6586 = vsub.f32 %v6581, %v6585
  %v6587 = vmul.f32 %v6586, %v6586
  %v6588 = vsel %vm74, %v6587, 0.0
  %6589 = vadd.xlane.f32.xlu0 %v6588
  %v6590 = vpop.xlane.xlu0 %6589
  %v6591 = vmul.f32 %v6590, %v78
  %v6592 = vadd.f32 %v6591, 1e-12
  %v6593 = vrsqrt.pop %v6592
  %v6594 = vmul.f32 %v6586, %v6593
  %v6595 = vmul.f32 %v6594, %v2294
  %v6596 = vadd.f32 %v6595, %v2301
  %v6598 = vsel %vm74, %v6596, 0
  %6600 = vmatprep.subr.mxu0 0.0
  %6601 = vmatpush1.msra.mxu0 %v2305
  %6602 = vmatprep.subr.mxu0 0.0
  %6603 = vmatpush1.msra.mxu0 %v2306
  %6604 = vmatprep.subr.mxu0 0.0
  %6605 = vmatpush1.msra.mxu0 %v2307
  %6606 = vmatprep.subr.mxu0 0.0
  %6607 = vmatpush1.msra.mxu0 %v2308
  %6608 = vmatprep.subr.mxu0 0.0
  %6609 = vmatpush1.msra.mxu0 0.0
  %6610 = vmatprep.subr.mxu0 0.0
  %6611 = vmatpush1.msra.mxu0 0.0
  %6612 = vmatprep.subr.mxu0 0.0
  %6613 = vmatpush1.msra.mxu0 0.0
  %6614 = vmatprep.subr.mxu0 0.0
  %6615 = vmatpush1.msra.mxu0 0.0
  %6616 = vmatprep.subr.mxu0 0.0
  %6617 = vmatpush1.msra.mxu0 0.0
  %6618 = vmatprep.subr.mxu0 0.0
  %6619 = vmatpush1.msra.mxu0 0.0
  %6620 = vmatprep.subr.mxu0 0.0
  %6621 = vmatpush1.msra.mxu0 0.0
  %6622 = vmatprep.subr.mxu0 0.0
  %6623 = vmatpush1.msra.mxu0 0.0
  %6624 = vmatprep.subr.mxu0 0.0
  %6625 = vmatpush1.msra.mxu0 0.0
  %6626 = vmatprep.subr.mxu0 0.0
  %6627 = vmatpush1.msra.mxu0 0.0
  %6628 = vmatprep.subr.mxu0 0.0
  %6629 = vmatpush1.msra.mxu0 0.0
  %6630 = vmatprep.subr.mxu0 0.0
  %6631 = vmatpush1.msra.mxu0 0.0
  %6632 = vmatprep.subr.mxu0 0.0
  %6633 = vmatpush1.msra.mxu0 0.0
  %6634 = vmatprep.subr.mxu0 0.0
  %6635 = vmatpush1.msra.mxu0 0.0
  %6636 = vmatprep.subr.mxu0 0.0
  %6637 = vmatpush1.msra.mxu0 0.0
  %6638 = vmatprep.subr.mxu0 0.0
  %6639 = vmatpush1.msra.mxu0 0.0
  %6640 = vmatprep.subr.mxu0 0.0
  %6641 = vmatpush1.msra.mxu0 0.0
  %6642 = vmatprep.subr.mxu0 0.0
  %6643 = vmatpush1.msra.mxu0 0.0
  %6644 = vmatprep.subr.mxu0 0.0
  %6645 = vmatpush1.msra.mxu0 0.0
  %6646 = vmatprep.subr.mxu0 0.0
  %6647 = vmatpush1.msra.mxu0 0.0
  %6648 = vmatprep.subr.mxu0 0.0
  %6649 = vmatpush1.msra.mxu0 0.0
  %6650 = vmatprep.subr.mxu0 0.0
  %6651 = vmatpush1.msra.mxu0 0.0
  %6652 = vmatprep.subr.mxu0 0.0
  %6653 = vmatpush1.msra.mxu0 0.0
  %6654 = vmatprep.subr.mxu0 0.0
  %6655 = vmatpush1.msra.mxu0 0.0
  %6656 = vmatprep.subr.mxu0 0.0
  %6657 = vmatpush1.msra.mxu0 0.0
  %6658 = vmatprep.subr.mxu0 0.0
  %6659 = vmatpush1.msra.mxu0 0.0
  %6660 = vmatprep.subr.mxu0 0.0
  %6661 = vmatpush1.msra.mxu0 0.0
  %6662 = vmatprep.subr.mxu0 0.0
  %6663 = vmatpush1.msra.mxu0 0.0
  %6664 = vmatprep.mubr.f32.mxu0 0.0
  %6665 = vmatmul.mubr.f32.gmra.mrb[0].mxu0 %v6598
  %v6666 = vpop.f32.mrb[0].mxu0
  %v6667 = vadd.f32 %v2315, %v6666
  %v6668 = vpop.f32.mrb[0].mxu0
  %6669 = vdwg.mxu0
  %6670 = vmatprep.subr.mxu0 0.0
  %6671 = vmatpush1.msra.mxu0 %v2391
  %6672 = vmatprep.subr.mxu0 0.0
  %6673 = vmatpush1.msra.mxu0 %v2392
  %6674 = vmatprep.subr.mxu0 0.0
  %6675 = vmatpush1.msra.mxu0 %v2393
  %6676 = vmatprep.subr.mxu0 0.0
  %6677 = vmatpush1.msra.mxu0 %v2394
  %6678 = vmatprep.subr.mxu0 0.0
  %6679 = vmatpush1.msra.mxu0 0.0
  %6680 = vmatprep.subr.mxu0 0.0
  %6681 = vmatpush1.msra.mxu0 0.0
  %6682 = vmatprep.subr.mxu0 0.0
  %6683 = vmatpush1.msra.mxu0 0.0
  %6684 = vmatprep.subr.mxu0 0.0
  %6685 = vmatpush1.msra.mxu0 0.0
  %6686 = vmatprep.subr.mxu0 0.0
  %6687 = vmatpush1.msra.mxu0 0.0
  %6688 = vmatprep.subr.mxu0 0.0
  %6689 = vmatpush1.msra.mxu0 0.0
  %6690 = vmatprep.subr.mxu0 0.0
  %6691 = vmatpush1.msra.mxu0 0.0
  %6692 = vmatprep.subr.mxu0 0.0
  %6693 = vmatpush1.msra.mxu0 0.0
  %6694 = vmatprep.subr.mxu0 0.0
  %6695 = vmatpush1.msra.mxu0 0.0
  %6696 = vmatprep.subr.mxu0 0.0
  %6697 = vmatpush1.msra.mxu0 0.0
  %6698 = vmatprep.subr.mxu0 0.0
  %6699 = vmatpush1.msra.mxu0 0.0
  %6700 = vmatprep.subr.mxu0 0.0
  %6701 = vmatpush1.msra.mxu0 0.0
  %6702 = vmatprep.subr.mxu0 0.0
  %6703 = vmatpush1.msra.mxu0 0.0
  %6704 = vmatprep.subr.mxu0 0.0
  %6705 = vmatpush1.msra.mxu0 0.0
  %6706 = vmatprep.subr.mxu0 0.0
  %6707 = vmatpush1.msra.mxu0 0.0
  %6708 = vmatprep.subr.mxu0 0.0
  %6709 = vmatpush1.msra.mxu0 0.0
  %6710 = vmatprep.subr.mxu0 0.0
  %6711 = vmatpush1.msra.mxu0 0.0
  %6712 = vmatprep.subr.mxu0 0.0
  %6713 = vmatpush1.msra.mxu0 0.0
  %6714 = vmatprep.subr.mxu0 0.0
  %6715 = vmatpush1.msra.mxu0 0.0
  %6716 = vmatprep.subr.mxu0 0.0
  %6717 = vmatpush1.msra.mxu0 0.0
  %6718 = vmatprep.subr.mxu0 0.0
  %6719 = vmatpush1.msra.mxu0 0.0
  %6720 = vmatprep.subr.mxu0 0.0
  %6721 = vmatpush1.msra.mxu0 0.0
  %6722 = vmatprep.subr.mxu0 0.0
  %6723 = vmatpush1.msra.mxu0 0.0
  %6724 = vmatprep.subr.mxu0 0.0
  %6725 = vmatpush1.msra.mxu0 0.0
  %6726 = vmatprep.subr.mxu0 0.0
  %6727 = vmatpush1.msra.mxu0 0.0
  %6728 = vmatprep.subr.mxu0 0.0
  %6729 = vmatpush1.msra.mxu0 0.0
  %6730 = vmatprep.subr.mxu0 0.0
  %6731 = vmatpush1.msra.mxu0 0.0
  %6732 = vmatprep.subr.mxu0 0.0
  %6733 = vmatpush1.msra.mxu0 0.0
  %6734 = vmatprep.mubr.f32.mxu0 0.0
  %6735 = vmatmul.mubr.f32.gmra.mrb[0].mxu0 %v6598
  %v6736 = vpop.f32.mrb[0].mxu0
  %v6737 = vadd.f32 %v2401, %v6736
  %v6738 = vpop.f32.mrb[0].mxu0
  %6739 = vdwg.mxu0
  %6740 = vmatprep.subr.mxu0 0.0
  %6741 = vmatpush1.msra.mxu0 %v2474
  %6742 = vmatprep.subr.mxu0 0.0
  %6743 = vmatpush1.msra.mxu0 %v2475
  %6744 = vmatprep.subr.mxu0 0.0
  %6745 = vmatpush1.msra.mxu0 %v2476
  %6746 = vmatprep.subr.mxu0 0.0
  %6747 = vmatpush1.msra.mxu0 %v2477
  %6748 = vmatprep.subr.mxu0 0.0
  %6749 = vmatpush1.msra.mxu0 0.0
  %6750 = vmatprep.subr.mxu0 0.0
  %6751 = vmatpush1.msra.mxu0 0.0
  %6752 = vmatprep.subr.mxu0 0.0
  %6753 = vmatpush1.msra.mxu0 0.0
  %6754 = vmatprep.subr.mxu0 0.0
  %6755 = vmatpush1.msra.mxu0 0.0
  %6756 = vmatprep.subr.mxu0 0.0
  %6757 = vmatpush1.msra.mxu0 0.0
  %6758 = vmatprep.subr.mxu0 0.0
  %6759 = vmatpush1.msra.mxu0 0.0
  %6760 = vmatprep.subr.mxu0 0.0
  %6761 = vmatpush1.msra.mxu0 0.0
  %6762 = vmatprep.subr.mxu0 0.0
  %6763 = vmatpush1.msra.mxu0 0.0
  %6764 = vmatprep.subr.mxu0 0.0
  %6765 = vmatpush1.msra.mxu0 0.0
  %6766 = vmatprep.subr.mxu0 0.0
  %6767 = vmatpush1.msra.mxu0 0.0
  %6768 = vmatprep.subr.mxu0 0.0
  %6769 = vmatpush1.msra.mxu0 0.0
  %6770 = vmatprep.subr.mxu0 0.0
  %6771 = vmatpush1.msra.mxu0 0.0
  %6772 = vmatprep.subr.mxu0 0.0
  %6773 = vmatpush1.msra.mxu0 0.0
  %6774 = vmatprep.subr.mxu0 0.0
  %6775 = vmatpush1.msra.mxu0 0.0
  %6776 = vmatprep.subr.mxu0 0.0
  %6777 = vmatpush1.msra.mxu0 0.0
  %6778 = vmatprep.subr.mxu0 0.0
  %6779 = vmatpush1.msra.mxu0 0.0
  %6780 = vmatprep.subr.mxu0 0.0
  %6781 = vmatpush1.msra.mxu0 0.0
  %6782 = vmatprep.subr.mxu0 0.0
  %6783 = vmatpush1.msra.mxu0 0.0
  %6784 = vmatprep.subr.mxu0 0.0
  %6785 = vmatpush1.msra.mxu0 0.0
  %6786 = vmatprep.subr.mxu0 0.0
  %6787 = vmatpush1.msra.mxu0 0.0
  %6788 = vmatprep.subr.mxu0 0.0
  %6789 = vmatpush1.msra.mxu0 0.0
  %6790 = vmatprep.subr.mxu0 0.0
  %6791 = vmatpush1.msra.mxu0 0.0
  %6792 = vmatprep.subr.mxu0 0.0
  %6793 = vmatpush1.msra.mxu0 0.0
  %6794 = vmatprep.subr.mxu0 0.0
  %6795 = vmatpush1.msra.mxu0 0.0
  %6796 = vmatprep.subr.mxu0 0.0
  %6797 = vmatpush1.msra.mxu0 0.0
  %6798 = vmatprep.subr.mxu0 0.0
  %6799 = vmatpush1.msra.mxu0 0.0
  %6800 = vmatprep.subr.mxu0 0.0
  %6801 = vmatpush1.msra.mxu0 0.0
  %6802 = vmatprep.subr.mxu0 0.0
  %6803 = vmatpush1.msra.mxu0 0.0
  %6804 = vmatprep.mubr.f32.mxu0 0.0
  %6805 = vmatmul.mubr.f32.gmra.mrb[0].mxu0 %v6598
  %v6806 = vpop.f32.mrb[0].mxu0
  %v6807 = vadd.f32 %v2484, %v6806
  %v6808 = vpop.f32.mrb[0].mxu0
  %6809 = vdwg.mxu0
  %v6811 = vsel %vm353, %v6667, 0
  %v6814 = vsel %vm353, %v6737, 0
  %6816 = vmatprep.subr.mxu0 0.0
  %6817 = vmatpush1.xpose.msra.mxu0 %v6814
  %6818 = vmatprep.subr.mxu0 0.0
  %6819 = vmatpush1.xpose.msra.mxu0 0.0
  %6820 = vmatprep.subr.mxu0 0.0
  %6821 = vmatpush1.xpose.msra.mxu0 0.0
  %6822 = vmatprep.subr.mxu0 0.0
  %6823 = vmatpush1.xpose.msra.mxu0 0.0
  %6824 = vmatprep.subr.mxu0 0.0
  %6825 = vmatpush1.xpose.msra.mxu0 0.0
  %6826 = vmatprep.subr.mxu0 0.0
  %6827 = vmatpush1.xpose.msra.mxu0 0.0
  %6828 = vmatprep.subr.mxu0 0.0
  %6829 = vmatpush1.xpose.msra.mxu0 0.0
  %6830 = vmatprep.subr.mxu0 0.0
  %6831 = vmatpush1.xpose.msra.mxu0 0.0
  %6832 = vmatprep.subr.mxu0 0.0
  %6833 = vmatpush1.xpose.msra.mxu0 0.0
  %6834 = vmatprep.subr.mxu0 0.0
  %6835 = vmatpush1.xpose.msra.mxu0 0.0
  %6836 = vmatprep.subr.mxu0 0.0
  %6837 = vmatpush1.xpose.msra.mxu0 0.0
  %6838 = vmatprep.subr.mxu0 0.0
  %6839 = vmatpush1.xpose.msra.mxu0 0.0
  %6840 = vmatprep.subr.mxu0 0.0
  %6841 = vmatpush1.xpose.msra.mxu0 0.0
  %6842 = vmatprep.subr.mxu0 0.0
  %6843 = vmatpush1.xpose.msra.mxu0 0.0
  %6844 = vmatprep.subr.mxu0 0.0
  %6845 = vmatpush1.xpose.msra.mxu0 0.0
  %6846 = vmatprep.subr.mxu0 0.0
  %6847 = vmatpush1.xpose.msra.mxu0 0.0
  %6848 = vmatprep.subr.mxu0 0.0
  %6849 = vmatpush1.xpose.msra.mxu0 0.0
  %6850 = vmatprep.subr.mxu0 0.0
  %6851 = vmatpush1.xpose.msra.mxu0 0.0
  %6852 = vmatprep.subr.mxu0 0.0
  %6853 = vmatpush1.xpose.msra.mxu0 0.0
  %6854 = vmatprep.subr.mxu0 0.0
  %6855 = vmatpush1.xpose.msra.mxu0 0.0
  %6856 = vmatprep.subr.mxu0 0.0
  %6857 = vmatpush1.xpose.msra.mxu0 0.0
  %6858 = vmatprep.subr.mxu0 0.0
  %6859 = vmatpush1.xpose.msra.mxu0 0.0
  %6860 = vmatprep.subr.mxu0 0.0
  %6861 = vmatpush1.xpose.msra.mxu0 0.0
  %6862 = vmatprep.subr.mxu0 0.0
  %6863 = vmatpush1.xpose.msra.mxu0 0.0
  %6864 = vmatprep.subr.mxu0 0.0
  %6865 = vmatpush1.xpose.msra.mxu0 0.0
  %6866 = vmatprep.subr.mxu0 0.0
  %6867 = vmatpush1.xpose.msra.mxu0 0.0
  %6868 = vmatprep.subr.mxu0 0.0
  %6869 = vmatpush1.xpose.msra.mxu0 0.0
  %6870 = vmatprep.subr.mxu0 0.0
  %6871 = vmatpush1.xpose.msra.mxu0 0.0
  %6872 = vmatprep.subr.mxu0 0.0
  %6873 = vmatpush1.xpose.msra.mxu0 0.0
  %6874 = vmatprep.subr.mxu0 0.0
  %6875 = vmatpush1.xpose.msra.mxu0 0.0
  %6876 = vmatprep.subr.mxu0 0.0
  %6877 = vmatpush1.xpose.msra.mxu0 0.0
  %6878 = vmatprep.subr.mxu0 0.0
  %6879 = vmatpush1.xpose.msra.mxu0 0.0
  %6880 = vmatprep.mubr.f32.mxu0 0.0
  %6881 = vmatmul.mubr.f32.gmra.mrb[0].mxu0 %v6811
  %v6882 = vpop.f32.mrb[0].mxu0
  %v6883 = vadd.f32 0.0, %v6882
  %v6884 = vpop.f32.mrb[0].mxu0
  %6885 = vdwg.mxu0
  %v6886 = vmul.f32 %v6883, 0.35355338
  %v6887 = vadd.f32 %v6886, %v4913
  %v6888 = vsel %vm353, %v6887, -inf
  %6889 = vmax.xlane.f32.xlu0 %v6888
  %v6890 = vpop.xlane.xlu0 %6889
  %v6891 = vsub.f32 %v6887, %v6890
  %v6892 = vmul.f32 %v6891, 1.442695
  %v6893 = vpow.pop %v6892
  %v6894 = vsel %vm353, %v6893, 0.0
  %6895 = vadd.xlane.f32.xlu0 %v6894
  %v6896 = vpop.xlane.xlu0 %6895
  %v6897 = vrcp.pop %v6896
  %v6898 = vmul.f32 %v6893, %v6897
  %v6900 = vsel %vm353, %v6898, 0
  %6902 = vmatprep.subr.mxu0 0.0
  %6903 = vmatpush1.msra.mxu0 %v6807
  %6904 = vmatprep.subr.mxu0 0.0
  %6905 = vmatpush1.msra.mxu0 0.0
  %6906 = vmatprep.subr.mxu0 0.0
  %6907 = vmatpush1.msra.mxu0 0.0
  %6908 = vmatprep.subr.mxu0 0.0
  %6909 = vmatpush1.msra.mxu0 0.0
  %6910 = vmatprep.subr.mxu0 0.0
  %6911 = vmatpush1.msra.mxu0 0.0
  %6912 = vmatprep.subr.mxu0 0.0
  %6913 = vmatpush1.msra.mxu0 0.0
  %6914 = vmatprep.subr.mxu0 0.0
  %6915 = vmatpush1.msra.mxu0 0.0
  %6916 = vmatprep.subr.mxu0 0.0
  %6917 = vmatpush1.msra.mxu0 0.0
  %6918 = vmatprep.subr.mxu0 0.0
  %6919 = vmatpush1.msra.mxu0 0.0
  %6920 = vmatprep.subr.mxu0 0.0
  %6921 = vmatpush1.msra.mxu0 0.0
  %6922 = vmatprep.subr.mxu0 0.0
  %6923 = vmatpush1.msra.mxu0 0.0
  %6924 = vmatprep.subr.mxu0 0.0
  %6925 = vmatpush1.msra.mxu0 0.0
  %6926 = vmatprep.subr.mxu0 0.0
  %6927 = vmatpush1.msra.mxu0 0.0
  %6928 = vmatprep.subr.mxu0 0.0
  %6929 = vmatpush1.msra.mxu0 0.0
  %6930 = vmatprep.subr.mxu0 0.0
  %6931 = vmatpush1.msra.mxu0 0.0
  %6932 = vmatprep.subr.mxu0 0.0
  %6933 = vmatpush1.msra.mxu0 0.0
  %6934 = vmatprep.subr.mxu0 0.0
  %6935 = vmatpush1.msra.mxu0 0.0
  %6936 = vmatprep.subr.mxu0 0.0
  %6937 = vmatpush1.msra.mxu0 0.0
  %6938 = vmatprep.subr.mxu0 0.0
  %6939 = vmatpush1.msra.mxu0 0.0
  %6940 = vmatprep.subr.mxu0 0.0
  %6941 = vmatpush1.msra.mxu0 0.0
  %6942 = vmatprep.subr.mxu0 0.0
  %6943 = vmatpush1.msra.mxu0 0.0
  %6944 = vmatprep.subr.mxu0 0.0
  %6945 = vmatpush1.msra.mxu0 0.0
  %6946 = vmatprep.subr.mxu0 0.0
  %6947 = vmatpush1.msra.mxu0 0.0
  %6948 = vmatprep.subr.mxu0 0.0
  %6949 = vmatpush1.msra.mxu0 0.0
  %6950 = vmatprep.subr.mxu0 0.0
  %6951 = vmatpush1.msra.mxu0 0.0
  %6952 = vmatprep.subr.mxu0 0.0
  %6953 = vmatpush1.msra.mxu0 0.0
  %6954 = vmatprep.subr.mxu0 0.0
  %6955 = vmatpush1.msra.mxu0 0.0
  %6956 = vmatprep.subr.mxu0 0.0
  %6957 = vmatpush1.msra.mxu0 0.0
  %6958 = vmatprep.subr.mxu0 0.0
  %6959 = vmatpush1.msra.mxu0 0.0
  %6960 = vmatprep.subr.mxu0 0.0
  %6961 = vmatpush1.msra.mxu0 0.0
  %6962 = vmatprep.subr.mxu0 0.0
  %6963 = vmatpush1.msra.mxu0 0.0
  %6964 = vmatprep.subr.mxu0 0.0
  %6965 = vmatpush1.msra.mxu0 0.0
  %6966 = vmatprep.mubr.f32.mxu0 0.0
  %6967 = vmatmul.mubr.f32.gmra.mrb[0].mxu0 %v6900
  %v6968 = vpop.f32.mrb[0].mxu0
  %v6969 = vadd.f32 0.0, %v6968
  %v6970 = vpop.f32.mrb[0].mxu0
  %6971 = vdwg.mxu0
  %6972 = vmatprep.subr.mxu0 0.0
  %6973 = vmatpush1.msra.mxu0 %v2721
  %6974 = vmatprep.subr.mxu0 0.0
  %6975 = vmatpush1.msra.mxu0 %v2722
  %6976 = vmatprep.subr.mxu0 0.0
  %6977 = vmatpush1.msra.mxu0 %v2723
  %6978 = vmatprep.subr.mxu0 0.0
  %6979 = vmatpush1.msra.mxu0 %v2724
  %6980 = vmatprep.subr.mxu0 0.0
  %6981 = vmatpush1.msra.mxu0 0.0
  %6982 = vmatprep.subr.mxu0 0.0
  %6983 = vmatpush1.msra.mxu0 0.0
  %6984 = vmatprep.subr.mxu0 0.0
  %6985 = vmatpush1.msra.mxu0 0.0
  %6986 = vmatprep.subr.mxu0 0.0
  %6987 = vmatpush1.msra.mxu0 0.0
  %6988 = vmatprep.subr.mxu0 0.0
  %6989 = vmatpush1.msra.mxu0 0.0
  %6990 = vmatprep.subr.mxu0 0.0
  %6991 = vmatpush1.msra.mxu0 0.0
  %6992 = vmatprep.subr.mxu0 0.0
  %6993 = vmatpush1.msra.mxu0 0.0
  %6994 = vmatprep.subr.mxu0 0.0
  %6995 = vmatpush1.msra.mxu0 0.0
  %6996 = vmatprep.subr.mxu0 0.0
  %6997 = vmatpush1.msra.mxu0 0.0
  %6998 = vmatprep.subr.mxu0 0.0
  %6999 = vmatpush1.msra.mxu0 0.0
  %7000 = vmatprep.subr.mxu0 0.0
  %7001 = vmatpush1.msra.mxu0 0.0
  %7002 = vmatprep.subr.mxu0 0.0
  %7003 = vmatpush1.msra.mxu0 0.0
  %7004 = vmatprep.subr.mxu0 0.0
  %7005 = vmatpush1.msra.mxu0 0.0
  %7006 = vmatprep.subr.mxu0 0.0
  %7007 = vmatpush1.msra.mxu0 0.0
  %7008 = vmatprep.subr.mxu0 0.0
  %7009 = vmatpush1.msra.mxu0 0.0
  %7010 = vmatprep.subr.mxu0 0.0
  %7011 = vmatpush1.msra.mxu0 0.0
  %7012 = vmatprep.subr.mxu0 0.0
  %7013 = vmatpush1.msra.mxu0 0.0
  %7014 = vmatprep.subr.mxu0 0.0
  %7015 = vmatpush1.msra.mxu0 0.0
  %7016 = vmatprep.subr.mxu0 0.0
  %7017 = vmatpush1.msra.mxu0 0.0
  %7018 = vmatprep.subr.mxu0 0.0
  %7019 = vmatpush1.msra.mxu0 0.0
  %7020 = vmatprep.subr.mxu0 0.0
  %7021 = vmatpush1.msra.mxu0 0.0
  %7022 = vmatprep.subr.mxu0 0.0
  %7023 = vmatpush1.msra.mxu0 0.0
  %7024 = vmatprep.subr.mxu0 0.0
  %7025 = vmatpush1.msra.mxu0 0.0
  %7026 = vmatprep.subr.mxu0 0.0
  %7027 = vmatpush1.msra.mxu0 0.0
  %7028 = vmatprep.subr.mxu0 0.0
  %7029 = vmatpush1.msra.mxu0 0.0
  %7030 = vmatprep.subr.mxu0 0.0
  %7031 = vmatpush1.msra.mxu0 0.0
  %7032 = vmatprep.subr.mxu0 0.0
  %7033 = vmatpush1.msra.mxu0 0.0
  %7034 = vmatprep.subr.mxu0 0.0
  %7035 = vmatpush1.msra.mxu0 0.0
  %7036 = vmatprep.mubr.f32.mxu0 0.0
  %7037 = vmatmul.mubr.f32.gmra.mrb[0].mxu0 %v6598
  %v7038 = vpop.f32.mrb[0].mxu0
  %v7039 = vadd.f32 %v2731, %v7038
  %v7040 = vpop.f32.mrb[0].mxu0
  %7041 = vdwg.mxu0
  %7042 = vmatprep.subr.mxu0 0.0
  %7043 = vmatpush1.msra.mxu0 %v2804
  %7044 = vmatprep.subr.mxu0 0.0
  %7045 = vmatpush1.msra.mxu0 %v2805
  %7046 = vmatprep.subr.mxu0 0.0
  %7047 = vmatpush1.msra.mxu0 %v2806
  %7048 = vmatprep.subr.mxu0 0.0
  %7049 = vmatpush1.msra.mxu0 %v2807
  %7050 = vmatprep.subr.mxu0 0.0
  %7051 = vmatpush1.msra.mxu0 0.0
  %7052 = vmatprep.subr.mxu0 0.0
  %7053 = vmatpush1.msra.mxu0 0.0
  %7054 = vmatprep.subr.mxu0 0.0
  %7055 = vmatpush1.msra.mxu0 0.0
  %7056 = vmatprep.subr.mxu0 0.0
  %7057 = vmatpush1.msra.mxu0 0.0
  %7058 = vmatprep.subr.mxu0 0.0
  %7059 = vmatpush1.msra.mxu0 0.0
  %7060 = vmatprep.subr.mxu0 0.0
  %7061 = vmatpush1.msra.mxu0 0.0
  %7062 = vmatprep.subr.mxu0 0.0
  %7063 = vmatpush1.msra.mxu0 0.0
  %7064 = vmatprep.subr.mxu0 0.0
  %7065 = vmatpush1.msra.mxu0 0.0
  %7066 = vmatprep.subr.mxu0 0.0
  %7067 = vmatpush1.msra.mxu0 0.0
  %7068 = vmatprep.subr.mxu0 0.0
  %7069 = vmatpush1.msra.mxu0 0.0
  %7070 = vmatprep.subr.mxu0 0.0
  %7071 = vmatpush1.msra.mxu0 0.0
  %7072 = vmatprep.subr.mxu0 0.0
  %7073 = vmatpush1.msra.mxu0 0.0
  %7074 = vmatprep.subr.mxu0 0.0
  %7075 = vmatpush1.msra.mxu0 0.0
  %7076 = vmatprep.subr.mxu0 0.0
  %7077 = vmatpush1.msra.mxu0 0.0
  %7078 = vmatprep.subr.mxu0 0.0
  %7079 = vmatpush1.msra.mxu0 0.0
  %7080 = vmatprep.subr.mxu0 0.0
  %7081 = vmatpush1.msra.mxu0 0.0
  %7082 = vmatprep.subr.mxu0 0.0
  %7083 = vmatpush1.msra.mxu0 0.0
  %7084 = vmatprep.subr.mxu0 0.0
  %7085 = vmatpush1.msra.mxu0 0.0
  %7086 = vmatprep.subr.mxu0 0.0
  %7087 = vmatpush1.msra.mxu0 0.0
  %7088 = vmatprep.subr.mxu0 0.0
  %7089 = vmatpush1.msra.mxu0 0.0
  %7090 = vmatprep.subr.mxu0 0.0
  %7091 = vmatpush1.msra.mxu0 0.0
  %7092 = vmatprep.subr.mxu0 0.0
  %7093 = vmatpush1.msra.mxu0 0.0
  %7094 = vmatprep.subr.mxu0 0.0
  %7095 = vmatpush1.msra.mxu0 0.0
  %7096 = vmatprep.subr.mxu0 0.0
  %7097 = vmatpush1.msra.mxu0 0.0
  %7098 = vmatprep.subr.mxu0 0.0
  %7099 = vmatpush1.msra.mxu0 0.0
  %7100 = vmatprep.subr.mxu0 0.0
  %7101 = vmatpush1.msra.mxu0 0.0
  %7102 = vmatprep.subr.mxu0 0.0
  %7103 = vmatpush1.msra.mxu0 0.0
  %7104 = vmatprep.subr.mxu0 0.0
  %7105 = vmatpush1.msra.mxu0 0.0
  %7106 = vmatprep.mubr.f32.mxu0 0.0
  %7107 = vmatmul.mubr.f32.gmra.mrb[0].mxu0 %v6598
  %v7108 = vpop.f32.mrb[0].mxu0
  %v7109 = vadd.f32 %v2814, %v7108
  %v7110 = vpop.f32.mrb[0].mxu0
  %7111 = vdwg.mxu0
  %7112 = vmatprep.subr.mxu0 0.0
  %7113 = vmatpush1.msra.mxu0 %v2887
  %7114 = vmatprep.subr.mxu0 0.0
  %7115 = vmatpush1.msra.mxu0 %v2888
  %7116 = vmatprep.subr.mxu0 0.0
  %7117 = vmatpush1.msra.mxu0 %v2889
  %7118 = vmatprep.subr.mxu0 0.0
  %7119 = vmatpush1.msra.mxu0 %v2890
  %7120 = vmatprep.subr.mxu0 0.0
  %7121 = vmatpush1.msra.mxu0 0.0
  %7122 = vmatprep.subr.mxu0 0.0
  %7123 = vmatpush1.msra.mxu0 0.0
  %7124 = vmatprep.subr.mxu0 0.0
  %7125 = vmatpush1.msra.mxu0 0.0
  %7126 = vmatprep.subr.mxu0 0.0
  %7127 = vmatpush1.msra.mxu0 0.0
  %7128 = vmatprep.subr.mxu0 0.0
  %7129 = vmatpush1.msra.mxu0 0.0
  %7130 = vmatprep.subr.mxu0 0.0
  %7131 = vmatpush1.msra.mxu0 0.0
  %7132 = vmatprep.subr.mxu0 0.0
  %7133 = vmatpush1.msra.mxu0 0.0
  %7134 = vmatprep.subr.mxu0 0.0
  %7135 = vmatpush1.msra.mxu0 0.0
  %7136 = vmatprep.subr.mxu0 0.0
  %7137 = vmatpush1.msra.mxu0 0.0
  %7138 = vmatprep.subr.mxu0 0.0
  %7139 = vmatpush1.msra.mxu0 0.0
  %7140 = vmatprep.subr.mxu0 0.0
  %7141 = vmatpush1.msra.mxu0 0.0
  %7142 = vmatprep.subr.mxu0 0.0
  %7143 = vmatpush1.msra.mxu0 0.0
  %7144 = vmatprep.subr.mxu0 0.0
  %7145 = vmatpush1.msra.mxu0 0.0
  %7146 = vmatprep.subr.mxu0 0.0
  %7147 = vmatpush1.msra.mxu0 0.0
  %7148 = vmatprep.subr.mxu0 0.0
  %7149 = vmatpush1.msra.mxu0 0.0
  %7150 = vmatprep.subr.mxu0 0.0
  %7151 = vmatpush1.msra.mxu0 0.0
  %7152 = vmatprep.subr.mxu0 0.0
  %7153 = vmatpush1.msra.mxu0 0.0
  %7154 = vmatprep.subr.mxu0 0.0
  %7155 = vmatpush1.msra.mxu0 0.0
  %7156 = vmatprep.subr.mxu0 0.0
  %7157 = vmatpush1.msra.mxu0 0.0
  %7158 = vmatprep.subr.mxu0 0.0
  %7159 = vmatpush1.msra.mxu0 0.0
  %7160 = vmatprep.subr.mxu0 0.0
  %7161 = vmatpush1.msra.mxu0 0.0
  %7162 = vmatprep.subr.mxu0 0.0
  %7163 = vmatpush1.msra.mxu0 0.0
  %7164 = vmatprep.subr.mxu0 0.0
  %7165 = vmatpush1.msra.mxu0 0.0
  %7166 = vmatprep.subr.mxu0 0.0
  %7167 = vmatpush1.msra.mxu0 0.0
  %7168 = vmatprep.subr.mxu0 0.0
  %7169 = vmatpush1.msra.mxu0 0.0
  %7170 = vmatprep.subr.mxu0 0.0
  %7171 = vmatpush1.msra.mxu0 0.0
  %7172 = vmatprep.subr.mxu0 0.0
  %7173 = vmatpush1.msra.mxu0 0.0
  %7174 = vmatprep.subr.mxu0 0.0
  %7175 = vmatpush1.msra.mxu0 0.0
  %7176 = vmatprep.mubr.f32.mxu0 0.0
  %7177 = vmatmul.mubr.f32.gmra.mrb[0].mxu0 %v6598
  %v7178 = vpop.f32.mrb[0].mxu0
  %v7179 = vadd.f32 %v2897, %v7178
  %v7180 = vpop.f32.mrb[0].mxu0
  %7181 = vdwg.mxu0
  %v7183 = vsel %vm353, %v7039, 0
  %v7186 = vsel %vm353, %v7109, 0
  %7188 = vmatprep.subr.mxu0 0.0
  %7189 = vmatpush1.xpose.msra.mxu0 %v7186
  %7190 = vmatprep.subr.mxu0 0.0
  %7191 = vmatpush1.xpose.msra.mxu0 0.0
  %7192 = vmatprep.subr.mxu0 0.0
  %7193 = vmatpush1.xpose.msra.mxu0 0.0
  %7194 = vmatprep.subr.mxu0 0.0
  %7195 = vmatpush1.xpose.msra.mxu0 0.0
  %7196 = vmatprep.subr.mxu0 0.0
  %7197 = vmatpush1.xpose.msra.mxu0 0.0
  %7198 = vmatprep.subr.mxu0 0.0
  %7199 = vmatpush1.xpose.msra.mxu0 0.0
  %7200 = vmatprep.subr.mxu0 0.0
  %7201 = vmatpush1.xpose.msra.mxu0 0.0
  %7202 = vmatprep.subr.mxu0 0.0
  %7203 = vmatpush1.xpose.msra.mxu0 0.0
  %7204 = vmatprep.subr.mxu0 0.0
  %7205 = vmatpush1.xpose.msra.mxu0 0.0
  %7206 = vmatprep.subr.mxu0 0.0
  %7207 = vmatpush1.xpose.msra.mxu0 0.0
  %7208 = vmatprep.subr.mxu0 0.0
  %7209 = vmatpush1.xpose.msra.mxu0 0.0
  %7210 = vmatprep.subr.mxu0 0.0
  %7211 = vmatpush1.xpose.msra.mxu0 0.0
  %7212 = vmatprep.subr.mxu0 0.0
  %7213 = vmatpush1.xpose.msra.mxu0 0.0
  %7214 = vmatprep.subr.mxu0 0.0
  %7215 = vmatpush1.xpose.msra.mxu0 0.0
  %7216 = vmatprep.subr.mxu0 0.0
  %7217 = vmatpush1.xpose.msra.mxu0 0.0
  %7218 = vmatprep.subr.mxu0 0.0
  %7219 = vmatpush1.xpose.msra.mxu0 0.0
  %7220 = vmatprep.subr.mxu0 0.0
  %7221 = vmatpush1.xpose.msra.mxu0 0.0
  %7222 = vmatprep.subr.mxu0 0.0
  %7223 = vmatpush1.xpose.msra.mxu0 0.0
  %7224 = vmatprep.subr.mxu0 0.0
  %7225 = vmatpush1.xpose.msra.mxu0 0.0
  %7226 = vmatprep.subr.mxu0 0.0
  %7227 = vmatpush1.xpose.msra.mxu0 0.0
  %7228 = vmatprep.subr.mxu0 0.0
  %7229 = vmatpush1.xpose.msra.mxu0 0.0
  %7230 = vmatprep.subr.mxu0 0.0
  %7231 = vmatpush1.xpose.msra.mxu0 0.0
  %7232 = vmatprep.subr.mxu0 0.0
  %7233 = vmatpush1.xpose.msra.mxu0 0.0
  %7234 = vmatprep.subr.mxu0 0.0
  %7235 = vmatpush1.xpose.msra.mxu0 0.0
  %7236 = vmatprep.subr.mxu0 0.0
  %7237 = vmatpush1.xpose.msra.mxu0 0.0
  %7238 = vmatprep.subr.mxu0 0.0
  %7239 = vmatpush1.xpose.msra.mxu0 0.0
  %7240 = vmatprep.subr.mxu0 0.0
  %7241 = vmatpush1.xpose.msra.mxu0 0.0
  %7242 = vmatprep.subr.mxu0 0.0
  %7243 = vmatpush1.xpose.msra.mxu0 0.0
  %7244 = vmatprep.subr.mxu0 0.0
  %7245 = vmatpush1.xpose.msra.mxu0 0.0
  %7246 = vmatprep.subr.mxu0 0.0
  %7247 = vmatpush1.xpose.msra.mxu0 0.0
  %7248 = vmatprep.subr.mxu0 0.0
  %7249 = vmatpush1.xpose.msra.mxu0 0.0
  %7250 = vmatprep.subr.mxu0 0.0
  %7251 = vmatpush1.xpose.msra.mxu0 0.0
  %7252 = vmatprep.mubr.f32.mxu0 0.0
  %7253 = vmatmul.mubr.f32.gmra.mrb[0].mxu0 %v7183
  %v7254 = vpop.f32.mrb[0].mxu0
  %v7255 = vadd.f32 0.0, %v7254
  %v7256 = vpop.f32.mrb[0].mxu0
  %7257 = vdwg.mxu0
  %v7258 = vmul.f32 %v7255, 0.35355338
  %v7259 = vadd.f32 %v7258, %v4913
  %v7260 = vsel %vm353, %v7259, -inf
  %7261 = vmax.xlane.f32.xlu0 %v7260
  %v7262 = vpop.xlane.xlu0 %7261
  %v7263 = vsub.f32 %v7259, %v7262
  %v7264 = vmul.f32 %v7263, 1.442695
  %v7265 = vpow.pop %v7264
  %v7266 = vsel %vm353, %v7265, 0.0
  %7267 = vadd.xlane.f32.xlu0 %v7266
  %v7268 = vpop.xlane.xlu0 %7267
  %v7269 = vrcp.pop %v7268
  %v7270 = vmul.f32 %v7265, %v7269
  %v7272 = vsel %vm353, %v7270, 0
  %7274 = vmatprep.subr.mxu0 0.0
  %7275 = vmatpush1.msra.mxu0 %v7179
  %7276 = vmatprep.subr.mxu0 0.0
  %7277 = vmatpush1.msra.mxu0 0.0
  %7278 = vmatprep.subr.mxu0 0.0
  %7279 = vmatpush1.msra.mxu0 0.0
  %7280 = vmatprep.subr.mxu0 0.0
  %7281 = vmatpush1.msra.mxu0 0.0
  %7282 = vmatprep.subr.mxu0 0.0
  %7283 = vmatpush1.msra.mxu0 0.0
  %7284 = vmatprep.subr.mxu0 0.0
  %7285 = vmatpush1.msra.mxu0 0.0
  %7286 = vmatprep.subr.mxu0 0.0
  %7287 = vmatpush1.msra.mxu0 0.0
  %7288 = vmatprep.subr.mxu0 0.0
  %7289 = vmatpush1.msra.mxu0 0.0
  %7290 = vmatprep.subr.mxu0 0.0
  %7291 = vmatpush1.msra.mxu0 0.0
  %7292 = vmatprep.subr.mxu0 0.0
  %7293 = vmatpush1.msra.mxu0 0.0
  %7294 = vmatprep.subr.mxu0 0.0
  %7295 = vmatpush1.msra.mxu0 0.0
  %7296 = vmatprep.subr.mxu0 0.0
  %7297 = vmatpush1.msra.mxu0 0.0
  %7298 = vmatprep.subr.mxu0 0.0
  %7299 = vmatpush1.msra.mxu0 0.0
  %7300 = vmatprep.subr.mxu0 0.0
  %7301 = vmatpush1.msra.mxu0 0.0
  %7302 = vmatprep.subr.mxu0 0.0
  %7303 = vmatpush1.msra.mxu0 0.0
  %7304 = vmatprep.subr.mxu0 0.0
  %7305 = vmatpush1.msra.mxu0 0.0
  %7306 = vmatprep.subr.mxu0 0.0
  %7307 = vmatpush1.msra.mxu0 0.0
  %7308 = vmatprep.subr.mxu0 0.0
  %7309 = vmatpush1.msra.mxu0 0.0
  %7310 = vmatprep.subr.mxu0 0.0
  %7311 = vmatpush1.msra.mxu0 0.0
  %7312 = vmatprep.subr.mxu0 0.0
  %7313 = vmatpush1.msra.mxu0 0.0
  %7314 = vmatprep.subr.mxu0 0.0
  %7315 = vmatpush1.msra.mxu0 0.0
  %7316 = vmatprep.subr.mxu0 0.0
  %7317 = vmatpush1.msra.mxu0 0.0
  %7318 = vmatprep.subr.mxu0 0.0
  %7319 = vmatpush1.msra.mxu0 0.0
  %7320 = vmatprep.subr.mxu0 0.0
  %7321 = vmatpush1.msra.mxu0 0.0
  %7322 = vmatprep.subr.mxu0 0.0
  %7323 = vmatpush1.msra.mxu0 0.0
  %7324 = vmatprep.subr.mxu0 0.0
  %7325 = vmatpush1.msra.mxu0 0.0
  %7326 = vmatprep.subr.mxu0 0.0
  %7327 = vmatpush1.msra.mxu0 0.0
  %7328 = vmatprep.subr.mxu0 0.0
  %7329 = vmatpush1.msra.mxu0 0.0
  %7330 = vmatprep.subr.mxu0 0.0
  %7331 = vmatpush1.msra.mxu0 0.0
  %7332 = vmatprep.subr.mxu0 0.0
  %7333 = vmatpush1.msra.mxu0 0.0
  %7334 = vmatprep.subr.mxu0 0.0
  %7335 = vmatpush1.msra.mxu0 0.0
  %7336 = vmatprep.subr.mxu0 0.0
  %7337 = vmatpush1.msra.mxu0 0.0
  %7338 = vmatprep.mubr.f32.mxu0 0.0
  %7339 = vmatmul.mubr.f32.gmra.mrb[0].mxu0 %v7272
  %v7340 = vpop.f32.mrb[0].mxu0
  %v7341 = vadd.f32 0.0, %v7340
  %v7342 = vpop.f32.mrb[0].mxu0
  %7343 = vdwg.mxu0
  %v7345 = vsel %vm353, %v7341, 0
  %7347 = vmatprep.subr.mxu0 0.0
  %7348 = vmatpush1.msra.mxu0 %v3132
  %7349 = vmatprep.subr.mxu0 0.0
  %7350 = vmatpush1.msra.mxu0 0.0
  %7351 = vmatprep.subr.mxu0 0.0
  %7352 = vmatpush1.msra.mxu0 0.0
  %7353 = vmatprep.subr.mxu0 0.0
  %7354 = vmatpush1.msra.mxu0 0.0
  %7355 = vmatprep.subr.mxu0 0.0
  %7356 = vmatpush1.msra.mxu0 0.0
  %7357 = vmatprep.subr.mxu0 0.0
  %7358 = vmatpush1.msra.mxu0 0.0
  %7359 = vmatprep.subr.mxu0 0.0
  %7360 = vmatpush1.msra.mxu0 0.0
  %7361 = vmatprep.subr.mxu0 0.0
  %7362 = vmatpush1.msra.mxu0 0.0
  %7363 = vmatprep.subr.mxu0 0.0
  %7364 = vmatpush1.msra.mxu0 0.0
  %7365 = vmatprep.subr.mxu0 0.0
  %7366 = vmatpush1.msra.mxu0 0.0
  %7367 = vmatprep.subr.mxu0 0.0
  %7368 = vmatpush1.msra.mxu0 0.0
  %7369 = vmatprep.subr.mxu0 0.0
  %7370 = vmatpush1.msra.mxu0 0.0
  %7371 = vmatprep.subr.mxu0 0.0
  %7372 = vmatpush1.msra.mxu0 0.0
  %7373 = vmatprep.subr.mxu0 0.0
  %7374 = vmatpush1.msra.mxu0 0.0
  %7375 = vmatprep.subr.mxu0 0.0
  %7376 = vmatpush1.msra.mxu0 0.0
  %7377 = vmatprep.subr.mxu0 0.0
  %7378 = vmatpush1.msra.mxu0 0.0
  %7379 = vmatprep.subr.mxu0 0.0
  %7380 = vmatpush1.msra.mxu0 0.0
  %7381 = vmatprep.subr.mxu0 0.0
  %7382 = vmatpush1.msra.mxu0 0.0
  %7383 = vmatprep.subr.mxu0 0.0
  %7384 = vmatpush1.msra.mxu0 0.0
  %7385 = vmatprep.subr.mxu0 0.0
  %7386 = vmatpush1.msra.mxu0 0.0
  %7387 = vmatprep.subr.mxu0 0.0
  %7388 = vmatpush1.msra.mxu0 0.0
  %7389 = vmatprep.subr.mxu0 0.0
  %7390 = vmatpush1.msra.mxu0 0.0
  %7391 = vmatprep.subr.mxu0 0.0
  %7392 = vmatpush1.msra.mxu0 0.0
  %7393 = vmatprep.subr.mxu0 0.0
  %7394 = vmatpush1.msra.mxu0 0.0
  %7395 = vmatprep.subr.mxu0 0.0
  %7396 = vmatpush1.msra.mxu0 0.0
  %7397 = vmatprep.subr.mxu0 0.0
  %7398 = vmatpush1.msra.mxu0 0.0
  %7399 = vmatprep.subr.mxu0 0.0
  %7400 = vmatpush1.msra.mxu0 0.0
  %7401 = vmatprep.subr.mxu0 0.0
  %7402 = vmatpush1.msra.mxu0 0.0
  %7403 = vmatprep.subr.mxu0 0.0
  %7404 = vmatpush1.msra.mxu0 0.0
  %7405 = vmatprep.subr.mxu0 0.0
  %7406 = vmatpush1.msra.mxu0 0.0
  %7407 = vmatprep.subr.mxu0 0.0
  %7408 = vmatpush1.msra.mxu0 0.0
  %7409 = vmatprep.subr.mxu0 0.0
  %7410 = vmatpush1.msra.mxu0 0.0
  %7411 = vmatprep.mubr.f32.mxu0 0.0
  %7412 = vmatmul.mubr.f32.gmra.mrb[0].mxu0 %v7345
  %v7413 = vpop.f32.mrb[0].mxu0
  %v7414 = vadd.f32 0.0, %v7413
  %v7415 = vpop.f32.mrb[0].mxu0
  %7416 = vdwg.mxu0
  %v7418 = vsel %vm353, %v6969, 0
  %7420 = vmatprep.subr.mxu0 0.0
  %7421 = vmatpush1.msra.mxu0 %v2719
  %7422 = vmatprep.subr.mxu0 0.0
  %7423 = vmatpush1.msra.mxu0 0.0
  %7424 = vmatprep.subr.mxu0 0.0
  %7425 = vmatpush1.msra.mxu0 0.0
  %7426 = vmatprep.subr.mxu0 0.0
  %7427 = vmatpush1.msra.mxu0 0.0
  %7428 = vmatprep.subr.mxu0 0.0
  %7429 = vmatpush1.msra.mxu0 0.0
  %7430 = vmatprep.subr.mxu0 0.0
  %7431 = vmatpush1.msra.mxu0 0.0
  %7432 = vmatprep.subr.mxu0 0.0
  %7433 = vmatpush1.msra.mxu0 0.0
  %7434 = vmatprep.subr.mxu0 0.0
  %7435 = vmatpush1.msra.mxu0 0.0
  %7436 = vmatprep.subr.mxu0 0.0
  %7437 = vmatpush1.msra.mxu0 0.0
  %7438 = vmatprep.subr.mxu0 0.0
  %7439 = vmatpush1.msra.mxu0 0.0
  %7440 = vmatprep.subr.mxu0 0.0
  %7441 = vmatpush1.msra.mxu0 0.0
  %7442 = vmatprep.subr.mxu0 0.0
  %7443 = vmatpush1.msra.mxu0 0.0
  %7444 = vmatprep.subr.mxu0 0.0
  %7445 = vmatpush1.msra.mxu0 0.0
  %7446 = vmatprep.subr.mxu0 0.0
  %7447 = vmatpush1.msra.mxu0 0.0
  %7448 = vmatprep.subr.mxu0 0.0
  %7449 = vmatpush1.msra.mxu0 0.0
  %7450 = vmatprep.subr.mxu0 0.0
  %7451 = vmatpush1.msra.mxu0 0.0
  %7452 = vmatprep.subr.mxu0 0.0
  %7453 = vmatpush1.msra.mxu0 0.0
  %7454 = vmatprep.subr.mxu0 0.0
  %7455 = vmatpush1.msra.mxu0 0.0
  %7456 = vmatprep.subr.mxu0 0.0
  %7457 = vmatpush1.msra.mxu0 0.0
  %7458 = vmatprep.subr.mxu0 0.0
  %7459 = vmatpush1.msra.mxu0 0.0
  %7460 = vmatprep.subr.mxu0 0.0
  %7461 = vmatpush1.msra.mxu0 0.0
  %7462 = vmatprep.subr.mxu0 0.0
  %7463 = vmatpush1.msra.mxu0 0.0
  %7464 = vmatprep.subr.mxu0 0.0
  %7465 = vmatpush1.msra.mxu0 0.0
  %7466 = vmatprep.subr.mxu0 0.0
  %7467 = vmatpush1.msra.mxu0 0.0
  %7468 = vmatprep.subr.mxu0 0.0
  %7469 = vmatpush1.msra.mxu0 0.0
  %7470 = vmatprep.subr.mxu0 0.0
  %7471 = vmatpush1.msra.mxu0 0.0
  %7472 = vmatprep.subr.mxu0 0.0
  %7473 = vmatpush1.msra.mxu0 0.0
  %7474 = vmatprep.subr.mxu0 0.0
  %7475 = vmatpush1.msra.mxu0 0.0
  %7476 = vmatprep.subr.mxu0 0.0
  %7477 = vmatpush1.msra.mxu0 0.0
  %7478 = vmatprep.subr.mxu0 0.0
  %7479 = vmatpush1.msra.mxu0 0.0
  %7480 = vmatprep.subr.mxu0 0.0
  %7481 = vmatpush1.msra.mxu0 0.0
  %7482 = vmatprep.subr.mxu0 0.0
  %7483 = vmatpush1.msra.mxu0 0.0
  %7484 = vmatprep.mubr.f32.mxu0 0.0
  %7485 = vmatmul.mubr.f32.gmra.mrb[0].mxu0 %v7418
  %v7486 = vpop.f32.mrb[0].mxu0
  %v7487 = vadd.f32 %v7414, %v7486
  %v7488 = vpop.f32.mrb[0].mxu0
  %7489 = vdwg.mxu0
  %7490 = vmatprep.subr.mxu0 0.0
  %7491 = vmatpush1.msra.mxu0 %v3280
  %7492 = vmatprep.subr.mxu0 0.0
  %7493 = vmatpush1.msra.mxu0 %v3281
  %7494 = vmatprep.subr.mxu0 0.0
  %7495 = vmatpush1.msra.mxu0 %v3282
  %7496 = vmatprep.subr.mxu0 0.0
  %7497 = vmatpush1.msra.mxu0 %v3283
  %7498 = vmatprep.subr.mxu0 0.0
  %7499 = vmatpush1.msra.mxu0 0.0
  %7500 = vmatprep.subr.mxu0 0.0
  %7501 = vmatpush1.msra.mxu0 0.0
  %7502 = vmatprep.subr.mxu0 0.0
  %7503 = vmatpush1.msra.mxu0 0.0
  %7504 = vmatprep.subr.mxu0 0.0
  %7505 = vmatpush1.msra.mxu0 0.0
  %7506 = vmatprep.subr.mxu0 0.0
  %7507 = vmatpush1.msra.mxu0 0.0
  %7508 = vmatprep.subr.mxu0 0.0
  %7509 = vmatpush1.msra.mxu0 0.0
  %7510 = vmatprep.subr.mxu0 0.0
  %7511 = vmatpush1.msra.mxu0 0.0
  %7512 = vmatprep.subr.mxu0 0.0
  %7513 = vmatpush1.msra.mxu0 0.0
  %7514 = vmatprep.subr.mxu0 0.0
  %7515 = vmatpush1.msra.mxu0 0.0
  %7516 = vmatprep.subr.mxu0 0.0
  %7517 = vmatpush1.msra.mxu0 0.0
  %7518 = vmatprep.subr.mxu0 0.0
  %7519 = vmatpush1.msra.mxu0 0.0
  %7520 = vmatprep.subr.mxu0 0.0
  %7521 = vmatpush1.msra.mxu0 0.0
  %7522 = vmatprep.subr.mxu0 0.0
  %7523 = vmatpush1.msra.mxu0 0.0
  %7524 = vmatprep.subr.mxu0 0.0
  %7525 = vmatpush1.msra.mxu0 0.0
  %7526 = vmatprep.subr.mxu0 0.0
  %7527 = vmatpush1.msra.mxu0 0.0
  %7528 = vmatprep.subr.mxu0 0.0
  %7529 = vmatpush1.msra.mxu0 0.0
  %7530 = vmatprep.subr.mxu0 0.0
  %7531 = vmatpush1.msra.mxu0 0.0
  %7532 = vmatprep.subr.mxu0 0.0
  %7533 = vmatpush1.msra.mxu0 0.0
  %7534 = vmatprep.subr.mxu0 0.0
  %7535 = vmatpush1.msra.mxu0 0.0
  %7536 = vmatprep.subr.mxu0 0.0
  %7537 = vmatpush1.msra.mxu0 0.0
  %7538 = vmatprep.subr.mxu0 0.0
  %7539 = vmatpush1.msra.mxu0 0.0
  %7540 = vmatprep.subr.mxu0 0.0
  %7541 = vmatpush1.msra.mxu0 0.0
  %7542 = vmatprep.subr.mxu0 0.0
  %7543 = vmatpush1.msra.mxu0 0.0
  %7544 = vmatprep.subr.mxu0 0.0
  %7545 = vmatpush1.msra.mxu0 0.0
  %7546 = vmatprep.subr.mxu0 0.0
  %7547 = vmatpush1.msra.mxu0 0.0
  %7548 = vmatprep.subr.mxu0 0.0
  %7549 = vmatpush1.msra.mxu0 0.0
  %7550 = vmatprep.subr.mxu0 0.0
  %7551 = vmatpush1.msra.mxu0 0.0
  %7552 = vmatprep.subr.mxu0 0.0
  %7553 = vmatpush1.msra.mxu0 0.0
  %7554 = vmatprep.mubr.f32.mxu0 0.0
  %7555 = vmatmul.mubr.f32.gmra.mrb[0].mxu0 %v6598
  %v7556 = vpop.f32.mrb[0].mxu0
  %v7557 = vadd.f32 %v3290, %v7556
  %v7558 = vpop.f32.mrb[0].mxu0
  %7559 = vdwg.mxu0
  %7560 = vmatprep.subr.mxu0 0.0
  %7561 = vmatpush1.msra.mxu0 %v3363
  %7562 = vmatprep.subr.mxu0 0.0
  %7563 = vmatpush1.msra.mxu0 %v3364
  %7564 = vmatprep.subr.mxu0 0.0
  %7565 = vmatpush1.msra.mxu0 %v3365
  %7566 = vmatprep.subr.mxu0 0.0
  %7567 = vmatpush1.msra.mxu0 %v3366
  %7568 = vmatprep.subr.mxu0 0.0
  %7569 = vmatpush1.msra.mxu0 0.0
  %7570 = vmatprep.subr.mxu0 0.0
  %7571 = vmatpush1.msra.mxu0 0.0
  %7572 = vmatprep.subr.mxu0 0.0
  %7573 = vmatpush1.msra.mxu0 0.0
  %7574 = vmatprep.subr.mxu0 0.0
  %7575 = vmatpush1.msra.mxu0 0.0
  %7576 = vmatprep.subr.mxu0 0.0
  %7577 = vmatpush1.msra.mxu0 0.0
  %7578 = vmatprep.subr.mxu0 0.0
  %7579 = vmatpush1.msra.mxu0 0.0
  %7580 = vmatprep.subr.mxu0 0.0
  %7581 = vmatpush1.msra.mxu0 0.0
  %7582 = vmatprep.subr.mxu0 0.0
  %7583 = vmatpush1.msra.mxu0 0.0
  %7584 = vmatprep.subr.mxu0 0.0
  %7585 = vmatpush1.msra.mxu0 0.0
  %7586 = vmatprep.subr.mxu0 0.0
  %7587 = vmatpush1.msra.mxu0 0.0
  %7588 = vmatprep.subr.mxu0 0.0
  %7589 = vmatpush1.msra.mxu0 0.0
  %7590 = vmatprep.subr.mxu0 0.0
  %7591 = vmatpush1.msra.mxu0 0.0
  %7592 = vmatprep.subr.mxu0 0.0
  %7593 = vmatpush1.msra.mxu0 0.0
  %7594 = vmatprep.subr.mxu0 0.0
  %7595 = vmatpush1.msra.mxu0 0.0
  %7596 = vmatprep.subr.mxu0 0.0
  %7597 = vmatpush1.msra.mxu0 0.0
  %7598 = vmatprep.subr.mxu0 0.0
  %7599 = vmatpush1.msra.mxu0 0.0
  %7600 = vmatprep.subr.mxu0 0.0
  %7601 = vmatpush1.msra.mxu0 0.0
  %7602 = vmatprep.subr.mxu0 0.0
  %7603 = vmatpush1.msra.mxu0 0.0
  %7604 = vmatprep.subr.mxu0 0.0
  %7605 = vmatpush1.msra.mxu0 0.0
  %7606 = vmatprep.subr.mxu0 0.0
  %7607 = vmatpush1.msra.mxu0 0.0
  %7608 = vmatprep.subr.mxu0 0.0
  %7609 = vmatpush1.msra.mxu0 0.0
  %7610 = vmatprep.subr.mxu0 0.0
  %7611 = vmatpush1.msra.mxu0 0.0
  %7612 = vmatprep.subr.mxu0 0.0
  %7613 = vmatpush1.msra.mxu0 0.0
  %7614 = vmatprep.subr.mxu0 0.0
  %7615 = vmatpush1.msra.mxu0 0.0
  %7616 = vmatprep.subr.mxu0 0.0
  %7617 = vmatpush1.msra.mxu0 0.0
  %7618 = vmatprep.subr.mxu0 0.0
  %7619 = vmatpush1.msra.mxu0 0.0
  %7620 = vmatprep.subr.mxu0 0.0
  %7621 = vmatpush1.msra.mxu0 0.0
  %7622 = vmatprep.subr.mxu0 0.0
  %7623 = vmatpush1.msra.mxu0 0.0
  %7624 = vmatprep.mubr.f32.mxu0 0.0
  %7625 = vmatmul.mubr.f32.gmra.mrb[0].mxu0 %v6598
  %v7626 = vpop.f32.mrb[0].mxu0
  %v7627 = vadd.f32 %v3373, %v7626
  %v7628 = vpop.f32.mrb[0].mxu0
  %7629 = vdwg.mxu0
  %7630 = vmatprep.subr.mxu0 0.0
  %7631 = vmatpush1.msra.mxu0 %v3446
  %7632 = vmatprep.subr.mxu0 0.0
  %7633 = vmatpush1.msra.mxu0 %v3447
  %7634 = vmatprep.subr.mxu0 0.0
  %7635 = vmatpush1.msra.mxu0 %v3448
  %7636 = vmatprep.subr.mxu0 0.0
  %7637 = vmatpush1.msra.mxu0 %v3449
  %7638 = vmatprep.subr.mxu0 0.0
  %7639 = vmatpush1.msra.mxu0 0.0
  %7640 = vmatprep.subr.mxu0 0.0
  %7641 = vmatpush1.msra.mxu0 0.0
  %7642 = vmatprep.subr.mxu0 0.0
  %7643 = vmatpush1.msra.mxu0 0.0
  %7644 = vmatprep.subr.mxu0 0.0
  %7645 = vmatpush1.msra.mxu0 0.0
  %7646 = vmatprep.subr.mxu0 0.0
  %7647 = vmatpush1.msra.mxu0 0.0
  %7648 = vmatprep.subr.mxu0 0.0
  %7649 = vmatpush1.msra.mxu0 0.0
  %7650 = vmatprep.subr.mxu0 0.0
  %7651 = vmatpush1.msra.mxu0 0.0
  %7652 = vmatprep.subr.mxu0 0.0
  %7653 = vmatpush1.msra.mxu0 0.0
  %7654 = vmatprep.subr.mxu0 0.0
  %7655 = vmatpush1.msra.mxu0 0.0
  %7656 = vmatprep.subr.mxu0 0.0
  %7657 = vmatpush1.msra.mxu0 0.0
  %7658 = vmatprep.subr.mxu0 0.0
  %7659 = vmatpush1.msra.mxu0 0.0
  %7660 = vmatprep.subr.mxu0 0.0
  %7661 = vmatpush1.msra.mxu0 0.0
  %7662 = vmatprep.subr.mxu0 0.0
  %7663 = vmatpush1.msra.mxu0 0.0
  %7664 = vmatprep.subr.mxu0 0.0
  %7665 = vmatpush1.msra.mxu0 0.0
  %7666 = vmatprep.subr.mxu0 0.0
  %7667 = vmatpush1.msra.mxu0 0.0
  %7668 = vmatprep.subr.mxu0 0.0
  %7669 = vmatpush1.msra.mxu0 0.0
  %7670 = vmatprep.subr.mxu0 0.0
  %7671 = vmatpush1.msra.mxu0 0.0
  %7672 = vmatprep.subr.mxu0 0.0
  %7673 = vmatpush1.msra.mxu0 0.0
  %7674 = vmatprep.subr.mxu0 0.0
  %7675 = vmatpush1.msra.mxu0 0.0
  %7676 = vmatprep.subr.mxu0 0.0
  %7677 = vmatpush1.msra.mxu0 0.0
  %7678 = vmatprep.subr.mxu0 0.0
  %7679 = vmatpush1.msra.mxu0 0.0
  %7680 = vmatprep.subr.mxu0 0.0
  %7681 = vmatpush1.msra.mxu0 0.0
  %7682 = vmatprep.subr.mxu0 0.0
  %7683 = vmatpush1.msra.mxu0 0.0
  %7684 = vmatprep.subr.mxu0 0.0
  %7685 = vmatpush1.msra.mxu0 0.0
  %7686 = vmatprep.subr.mxu0 0.0
  %7687 = vmatpush1.msra.mxu0 0.0
  %7688 = vmatprep.subr.mxu0 0.0
  %7689 = vmatpush1.msra.mxu0 0.0
  %7690 = vmatprep.subr.mxu0 0.0
  %7691 = vmatpush1.msra.mxu0 0.0
  %7692 = vmatprep.subr.mxu0 0.0
  %7693 = vmatpush1.msra.mxu0 0.0
  %7694 = vmatprep.mubr.f32.mxu0 0.0
  %7695 = vmatmul.mubr.f32.gmra.mrb[0].mxu0 %v6598
  %v7696 = vpop.f32.mrb[0].mxu0
  %v7697 = vadd.f32 %v3456, %v7696
  %v7698 = vpop.f32.mrb[0].mxu0
  %7699 = vdwg.mxu0
  %v7701 = vsel %vm353, %v7557, 0
  %v7704 = vsel %vm353, %v7627, 0
  %7706 = vmatprep.subr.mxu0 0.0
  %7707 = vmatpush1.xpose.msra.mxu0 %v7704
  %7708 = vmatprep.subr.mxu0 0.0
  %7709 = vmatpush1.xpose.msra.mxu0 0.0
  %7710 = vmatprep.subr.mxu0 0.0
  %7711 = vmatpush1.xpose.msra.mxu0 0.0
  %7712 = vmatprep.subr.mxu0 0.0
  %7713 = vmatpush1.xpose.msra.mxu0 0.0
  %7714 = vmatprep.subr.mxu0 0.0
  %7715 = vmatpush1.xpose.msra.mxu0 0.0
  %7716 = vmatprep.subr.mxu0 0.0
  %7717 = vmatpush1.xpose.msra.mxu0 0.0
  %7718 = vmatprep.subr.mxu0 0.0
  %7719 = vmatpush1.xpose.msra.mxu0 0.0
  %7720 = vmatprep.subr.mxu0 0.0
  %7721 = vmatpush1.xpose.msra.mxu0 0.0
  %7722 = vmatprep.subr.mxu0 0.0
  %7723 = vmatpush1.xpose.msra.mxu0 0.0
  %7724 = vmatprep.subr.mxu0 0.0
  %7725 = vmatpush1.xpose.msra.mxu0 0.0
  %7726 = vmatprep.subr.mxu0 0.0
  %7727 = vmatpush1.xpose.msra.mxu0 0.0
  %7728 = vmatprep.subr.mxu0 0.0
  %7729 = vmatpush1.xpose.msra.mxu0 0.0
  %7730 = vmatprep.subr.mxu0 0.0
  %7731 = vmatpush1.xpose.msra.mxu0 0.0
  %7732 = vmatprep.subr.mxu0 0.0
  %7733 = vmatpush1.xpose.msra.mxu0 0.0
  %7734 = vmatprep.subr.mxu0 0.0
  %7735 = vmatpush1.xpose.msra.mxu0 0.0
  %7736 = vmatprep.subr.mxu0 0.0
  %7737 = vmatpush1.xpose.msra.mxu0 0.0
  %7738 = vmatprep.subr.mxu0 0.0
  %7739 = vmatpush1.xpose.msra.mxu0 0.0
  %7740 = vmatprep.subr.mxu0 0.0
  %7741 = vmatpush1.xpose.msra.mxu0 0.0
  %7742 = vmatprep.subr.mxu0 0.0
  %7743 = vmatpush1.xpose.msra.mxu0 0.0
  %7744 = vmatprep.subr.mxu0 0.0
  %7745 = vmatpush1.xpose.msra.mxu0 0.0
  %7746 = vmatprep.subr.mxu0 0.0
  %7747 = vmatpush1.xpose.msra.mxu0 0.0
  %7748 = vmatprep.subr.mxu0 0.0
  %7749 = vmatpush1.xpose.msra.mxu0 0.0
  %7750 = vmatprep.subr.mxu0 0.0
  %7751 = vmatpush1.xpose.msra.mxu0 0.0
  %7752 = vmatprep.subr.mxu0 0.0
  %7753 = vmatpush1.xpose.msra.mxu0 0.0
  %7754 = vmatprep.subr.mxu0 0.0
  %7755 = vmatpush1.xpose.msra.mxu0 0.0
  %7756 = vmatprep.subr.mxu0 0.0
  %7757 = vmatpush1.xpose.msra.mxu0 0.0
  %7758 = vmatprep.subr.mxu0 0.0
  %7759 = vmatpush1.xpose.msra.mxu0 0.0
  %7760 = vmatprep.subr.mxu0 0.0
  %7761 = vmatpush1.xpose.msra.mxu0 0.0
  %7762 = vmatprep.subr.mxu0 0.0
  %7763 = vmatpush1.xpose.msra.mxu0 0.0
  %7764 = vmatprep.subr.mxu0 0.0
  %7765 = vmatpush1.xpose.msra.mxu0 0.0
  %7766 = vmatprep.subr.mxu0 0.0
  %7767 = vmatpush1.xpose.msra.mxu0 0.0
  %7768 = vmatprep.subr.mxu0 0.0
  %7769 = vmatpush1.xpose.msra.mxu0 0.0
  %7770 = vmatprep.mubr.f32.mxu0 0.0
  %7771 = vmatmul.mubr.f32.gmra.mrb[0].mxu0 %v7701
  %v7772 = vpop.f32.mrb[0].mxu0
  %v7773 = vadd.f32 0.0, %v7772
  %v7774 = vpop.f32.mrb[0].mxu0
  %7775 = vdwg.mxu0
  %v7776 = vmul.f32 %v7773, 0.35355338
  %v7777 = vadd.f32 %v7776, %v4913
  %v7778 = vsel %vm353, %v7777, -inf
  %7779 = vmax.xlane.f32.xlu0 %v7778
  %v7780 = vpop.xlane.xlu0 %7779
  %v7781 = vsub.f32 %v7777, %v7780
  %v7782 = vmul.f32 %v7781, 1.442695
  %v7783 = vpow.pop %v7782
  %v7784 = vsel %vm353, %v7783, 0.0
  %7785 = vadd.xlane.f32.xlu0 %v7784
  %v7786 = vpop.xlane.xlu0 %7785
  %v7787 = vrcp.pop %v7786
  %v7788 = vmul.f32 %v7783, %v7787
  %v7790 = vsel %vm353, %v7788, 0
  %7792 = vmatprep.subr.mxu0 0.0
  %7793 = vmatpush1.msra.mxu0 %v7697
  %7794 = vmatprep.subr.mxu0 0.0
  %7795 = vmatpush1.msra.mxu0 0.0
  %7796 = vmatprep.subr.mxu0 0.0
  %7797 = vmatpush1.msra.mxu0 0.0
  %7798 = vmatprep.subr.mxu0 0.0
  %7799 = vmatpush1.msra.mxu0 0.0
  %7800 = vmatprep.subr.mxu0 0.0
  %7801 = vmatpush1.msra.mxu0 0.0
  %7802 = vmatprep.subr.mxu0 0.0
  %7803 = vmatpush1.msra.mxu0 0.0
  %7804 = vmatprep.subr.mxu0 0.0
  %7805 = vmatpush1.msra.mxu0 0.0
  %7806 = vmatprep.subr.mxu0 0.0
  %7807 = vmatpush1.msra.mxu0 0.0
  %7808 = vmatprep.subr.mxu0 0.0
  %7809 = vmatpush1.msra.mxu0 0.0
  %7810 = vmatprep.subr.mxu0 0.0
  %7811 = vmatpush1.msra.mxu0 0.0
  %7812 = vmatprep.subr.mxu0 0.0
  %7813 = vmatpush1.msra.mxu0 0.0
  %7814 = vmatprep.subr.mxu0 0.0
  %7815 = vmatpush1.msra.mxu0 0.0
  %7816 = vmatprep.subr.mxu0 0.0
  %7817 = vmatpush1.msra.mxu0 0.0
  %7818 = vmatprep.subr.mxu0 0.0
  %7819 = vmatpush1.msra.mxu0 0.0
  %7820 = vmatprep.subr.mxu0 0.0
  %7821 = vmatpush1.msra.mxu0 0.0
  %7822 = vmatprep.subr.mxu0 0.0
  %7823 = vmatpush1.msra.mxu0 0.0
  %7824 = vmatprep.subr.mxu0 0.0
  %7825 = vmatpush1.msra.mxu0 0.0
  %7826 = vmatprep.subr.mxu0 0.0
  %7827 = vmatpush1.msra.mxu0 0.0
  %7828 = vmatprep.subr.mxu0 0.0
  %7829 = vmatpush1.msra.mxu0 0.0
  %7830 = vmatprep.subr.mxu0 0.0
  %7831 = vmatpush1.msra.mxu0 0.0
  %7832 = vmatprep.subr.mxu0 0.0
  %7833 = vmatpush1.msra.mxu0 0.0
  %7834 = vmatprep.subr.mxu0 0.0
  %7835 = vmatpush1.msra.mxu0 0.0
  %7836 = vmatprep.subr.mxu0 0.0
  %7837 = vmatpush1.msra.mxu0 0.0
  %7838 = vmatprep.subr.mxu0 0.0
  %7839 = vmatpush1.msra.mxu0 0.0
  %7840 = vmatprep.subr.mxu0 0.0
  %7841 = vmatpush1.msra.mxu0 0.0
  %7842 = vmatprep.subr.mxu0 0.0
  %7843 = vmatpush1.msra.mxu0 0.0
  %7844 = vmatprep.subr.mxu0 0.0
  %7845 = vmatpush1.msra.mxu0 0.0
  %7846 = vmatprep.subr.mxu0 0.0
  %7847 = vmatpush1.msra.mxu0 0.0
  %7848 = vmatprep.subr.mxu0 0.0
  %7849 = vmatpush1.msra.mxu0 0.0
  %7850 = vmatprep.subr.mxu0 0.0
  %7851 = vmatpush1.msra.mxu0 0.0
  %7852 = vmatprep.subr.mxu0 0.0
  %7853 = vmatpush1.msra.mxu0 0.0
  %7854 = vmatprep.subr.mxu0 0.0
  %7855 = vmatpush1.msra.mxu0 0.0
  %7856 = vmatprep.mubr.f32.mxu0 0.0
  %7857 = vmatmul.mubr.f32.gmra.mrb[0].mxu0 %v7790
  %v7858 = vpop.f32.mrb[0].mxu0
  %v7859 = vadd.f32 0.0, %v7858
  %v7860 = vpop.f32.mrb[0].mxu0
  %7861 = vdwg.mxu0
  %v7863 = vsel %vm353, %v7859, 0
  %7865 = vmatprep.subr.mxu0 0.0
  %7866 = vmatpush1.msra.mxu0 %v3691
  %7867 = vmatprep.subr.mxu0 0.0
  %7868 = vmatpush1.msra.mxu0 0.0
  %7869 = vmatprep.subr.mxu0 0.0
  %7870 = vmatpush1.msra.mxu0 0.0
  %7871 = vmatprep.subr.mxu0 0.0
  %7872 = vmatpush1.msra.mxu0 0.0
  %7873 = vmatprep.subr.mxu0 0.0
  %7874 = vmatpush1.msra.mxu0 0.0
  %7875 = vmatprep.subr.mxu0 0.0
  %7876 = vmatpush1.msra.mxu0 0.0
  %7877 = vmatprep.subr.mxu0 0.0
  %7878 = vmatpush1.msra.mxu0 0.0
  %7879 = vmatprep.subr.mxu0 0.0
  %7880 = vmatpush1.msra.mxu0 0.0
  %7881 = vmatprep.subr.mxu0 0.0
  %7882 = vmatpush1.msra.mxu0 0.0
  %7883 = vmatprep.subr.mxu0 0.0
  %7884 = vmatpush1.msra.mxu0 0.0
  %7885 = vmatprep.subr.mxu0 0.0
  %7886 = vmatpush1.msra.mxu0 0.0
  %7887 = vmatprep.subr.mxu0 0.0
  %7888 = vmatpush1.msra.mxu0 0.0
  %7889 = vmatprep.subr.mxu0 0.0
  %7890 = vmatpush1.msra.mxu0 0.0
  %7891 = vmatprep.subr.mxu0 0.0
  %7892 = vmatpush1.msra.mxu0 0.0
  %7893 = vmatprep.subr.mxu0 0.0
  %7894 = vmatpush1.msra.mxu0 0.0
  %7895 = vmatprep.subr.mxu0 0.0
  %7896 = vmatpush1.msra.mxu0 0.0
  %7897 = vmatprep.subr.mxu0 0.0
  %7898 = vmatpush1.msra.mxu0 0.0
  %7899 = vmatprep.subr.mxu0 0.0
  %7900 = vmatpush1.msra.mxu0 0.0
  %7901 = vmatprep.subr.mxu0 0.0
  %7902 = vmatpush1.msra.mxu0 0.0
  %7903 = vmatprep.subr.mxu0 0.0
  %7904 = vmatpush1.msra.mxu0 0.0
  %7905 = vmatprep.subr.mxu0 0.0
  %7906 = vmatpush1.msra.mxu0 0.0
  %7907 = vmatprep.subr.mxu0 0.0
  %7908 = vmatpush1.msra.mxu0 0.0
  %7909 = vmatprep.subr.mxu0 0.0
  %7910 = vmatpush1.msra.mxu0 0.0
  %7911 = vmatprep.subr.mxu0 0.0
  %7912 = vmatpush1.msra.mxu0 0.0
  %7913 = vmatprep.subr.mxu0 0.0
  %7914 = vmatpush1.msra.mxu0 0.0
  %7915 = vmatprep.subr.mxu0 0.0
  %7916 = vmatpush1.msra.mxu0 0.0
  %7917 = vmatprep.subr.mxu0 0.0
  %7918 = vmatpush1.msra.mxu0 0.0
  %7919 = vmatprep.subr.mxu0 0.0
  %7920 = vmatpush1.msra.mxu0 0.0
  %7921 = vmatprep.subr.mxu0 0.0
  %7922 = vmatpush1.msra.mxu0 0.0
  %7923 = vmatprep.subr.mxu0 0.0
  %7924 = vmatpush1.msra.mxu0 0.0
  %7925 = vmatprep.subr.mxu0 0.0
  %7926 = vmatpush1.msra.mxu0 0.0
  %7927 = vmatprep.subr.mxu0 0.0
  %7928 = vmatpush1.msra.mxu0 0.0
  %7929 = vmatprep.mubr.f32.mxu0 0.0
  %7930 = vmatmul.mubr.f32.gmra.mrb[0].mxu0 %v7863
  %v7931 = vpop.f32.mrb[0].mxu0
  %v7932 = vadd.f32 0.0, %v7931
  %v7933 = vpop.f32.mrb[0].mxu0
  %7934 = vdwg.mxu0
  %v7935 = vadd.f32 %v7487, %v7932
  %7936 = vmatprep.subr.mxu0 0.0
  %7937 = vmatpush1.msra.mxu0 %v3767
  %7938 = vmatprep.subr.mxu0 0.0
  %7939 = vmatpush1.msra.mxu0 %v3768
  %7940 = vmatprep.subr.mxu0 0.0
  %7941 = vmatpush1.msra.mxu0 %v3769
  %7942 = vmatprep.subr.mxu0 0.0
  %7943 = vmatpush1.msra.mxu0 %v3770
  %7944 = vmatprep.subr.mxu0 0.0
  %7945 = vmatpush1.msra.mxu0 0.0
  %7946 = vmatprep.subr.mxu0 0.0
  %7947 = vmatpush1.msra.mxu0 0.0
  %7948 = vmatprep.subr.mxu0 0.0
  %7949 = vmatpush1.msra.mxu0 0.0
  %7950 = vmatprep.subr.mxu0 0.0
  %7951 = vmatpush1.msra.mxu0 0.0
  %7952 = vmatprep.subr.mxu0 0.0
  %7953 = vmatpush1.msra.mxu0 0.0
  %7954 = vmatprep.subr.mxu0 0.0
  %7955 = vmatpush1.msra.mxu0 0.0
  %7956 = vmatprep.subr.mxu0 0.0
  %7957 = vmatpush1.msra.mxu0 0.0
  %7958 = vmatprep.subr.mxu0 0.0
  %7959 = vmatpush1.msra.mxu0 0.0
  %7960 = vmatprep.subr.mxu0 0.0
  %7961 = vmatpush1.msra.mxu0 0.0
  %7962 = vmatprep.subr.mxu0 0.0
  %7963 = vmatpush1.msra.mxu0 0.0
  %7964 = vmatprep.subr.mxu0 0.0
  %7965 = vmatpush1.msra.mxu0 0.0
  %7966 = vmatprep.subr.mxu0 0.0
  %7967 = vmatpush1.msra.mxu0 0.0
  %7968 = vmatprep.subr.mxu0 0.0
  %7969 = vmatpush1.msra.mxu0 0.0
  %7970 = vmatprep.subr.mxu0 0.0
  %7971 = vmatpush1.msra.mxu0 0.0
  %7972 = vmatprep.subr.mxu0 0.0
  %7973 = vmatpush1.msra.mxu0 0.0
  %7974 = vmatprep.subr.mxu0 0.0
  %7975 = vmatpush1.msra.mxu0 0.0
  %7976 = vmatprep.subr.mxu0 0.0
  %7977 = vmatpush1.msra.mxu0 0.0
  %7978 = vmatprep.subr.mxu0 0.0
  %7979 = vmatpush1.msra.mxu0 0.0
  %7980 = vmatprep.subr.mxu0 0.0
  %7981 = vmatpush1.msra.mxu0 0.0
  %7982 = vmatprep.subr.mxu0 0.0
  %7983 = vmatpush1.msra.mxu0 0.0
  %7984 = vmatprep.subr.mxu0 0.0
  %7985 = vmatpush1.msra.mxu0 0.0
  %7986 = vmatprep.subr.mxu0 0.0
  %7987 = vmatpush1.msra.mxu0 0.0
  %7988 = vmatprep.subr.mxu0 0.0
  %7989 = vmatpush1.msra.mxu0 0.0
  %7990 = vmatprep.subr.mxu0 0.0
  %7991 = vmatpush1.msra.mxu0 0.0
  %7992 = vmatprep.subr.mxu0 0.0
  %7993 = vmatpush1.msra.mxu0 0.0
  %7994 = vmatprep.subr.mxu0 0.0
  %7995 = vmatpush1.msra.mxu0 0.0
  %7996 = vmatprep.subr.mxu0 0.0
  %7997 = vmatpush1.msra.mxu0 0.0
  %7998 = vmatprep.subr.mxu0 0.0
  %7999 = vmatpush1.msra.mxu0 0.0
  %8000 = vmatprep.mubr.f32.mxu0 0.0
  %8001 = vmatmul.mubr.f32.gmra.mrb[0].mxu0 %v6598
  %v8002 = vpop.f32.mrb[0].mxu0
  %v8003 = vadd.f32 %v3777, %v8002
  %v8004 = vpop.f32.mrb[0].mxu0
  %8005 = vdwg.mxu0
  %8006 = vmatprep.subr.mxu0 0.0
  %8007 = vmatpush1.msra.mxu0 %v3850
  %8008 = vmatprep.subr.mxu0 0.0
  %8009 = vmatpush1.msra.mxu0 %v3851
  %8010 = vmatprep.subr.mxu0 0.0
  %8011 = vmatpush1.msra.mxu0 %v3852
  %8012 = vmatprep.subr.mxu0 0.0
  %8013 = vmatpush1.msra.mxu0 %v3853
  %8014 = vmatprep.subr.mxu0 0.0
  %8015 = vmatpush1.msra.mxu0 0.0
  %8016 = vmatprep.subr.mxu0 0.0
  %8017 = vmatpush1.msra.mxu0 0.0
  %8018 = vmatprep.subr.mxu0 0.0
  %8019 = vmatpush1.msra.mxu0 0.0
  %8020 = vmatprep.subr.mxu0 0.0
  %8021 = vmatpush1.msra.mxu0 0.0
  %8022 = vmatprep.subr.mxu0 0.0
  %8023 = vmatpush1.msra.mxu0 0.0
  %8024 = vmatprep.subr.mxu0 0.0
  %8025 = vmatpush1.msra.mxu0 0.0
  %8026 = vmatprep.subr.mxu0 0.0
  %8027 = vmatpush1.msra.mxu0 0.0
  %8028 = vmatprep.subr.mxu0 0.0
  %8029 = vmatpush1.msra.mxu0 0.0
  %8030 = vmatprep.subr.mxu0 0.0
  %8031 = vmatpush1.msra.mxu0 0.0
  %8032 = vmatprep.subr.mxu0 0.0
  %8033 = vmatpush1.msra.mxu0 0.0
  %8034 = vmatprep.subr.mxu0 0.0
  %8035 = vmatpush1.msra.mxu0 0.0
  %8036 = vmatprep.subr.mxu0 0.0
  %8037 = vmatpush1.msra.mxu0 0.0
  %8038 = vmatprep.subr.mxu0 0.0
  %8039 = vmatpush1.msra.mxu0 0.0
  %8040 = vmatprep.subr.mxu0 0.0
  %8041 = vmatpush1.msra.mxu0 0.0
  %8042 = vmatprep.subr.mxu0 0.0
  %8043 = vmatpush1.msra.mxu0 0.0
  %8044 = vmatprep.subr.mxu0 0.0
  %8045 = vmatpush1.msra.mxu0 0.0
  %8046 = vmatprep.subr.mxu0 0.0
  %8047 = vmatpush1.msra.mxu0 0.0
  %8048 = vmatprep.subr.mxu0 0.0
  %8049 = vmatpush1.msra.mxu0 0.0
  %8050 = vmatprep.subr.mxu0 0.0
  %8051 = vmatpush1.msra.mxu0 0.0
  %8052 = vmatprep.subr.mxu0 0.0
  %8053 = vmatpush1.msra.mxu0 0.0
  %8054 = vmatprep.subr.mxu0 0.0
  %8055 = vmatpush1.msra.mxu0 0.0
  %8056 = vmatprep.subr.mxu0 0.0
  %8057 = vmatpush1.msra.mxu0 0.0
  %8058 = vmatprep.subr.mxu0 0.0
  %8059 = vmatpush1.msra.mxu0 0.0
  %8060 = vmatprep.subr.mxu0 0.0
  %8061 = vmatpush1.msra.mxu0 0.0
  %8062 = vmatprep.subr.mxu0 0.0
  %8063 = vmatpush1.msra.mxu0 0.0
  %8064 = vmatprep.subr.mxu0 0.0
  %8065 = vmatpush1.msra.mxu0 0.0
  %8066 = vmatprep.subr.mxu0 0.0
  %8067 = vmatpush1.msra.mxu0 0.0
  %8068 = vmatprep.subr.mxu0 0.0
  %8069 = vmatpush1.msra.mxu0 0.0
  %8070 = vmatprep.mubr.f32.mxu0 0.0
  %8071 = vmatmul.mubr.f32.gmra.mrb[0].mxu0 %v6598
  %v8072 = vpop.f32.mrb[0].mxu0
  %v8073 = vadd.f32 %v3860, %v8072
  %v8074 = vpop.f32.mrb[0].mxu0
  %8075 = vdwg.mxu0
  %8076 = vmatprep.subr.mxu0 0.0
  %8077 = vmatpush1.msra.mxu0 %v3933
  %8078 = vmatprep.subr.mxu0 0.0
  %8079 = vmatpush1.msra.mxu0 %v3934
  %8080 = vmatprep.subr.mxu0 0.0
  %8081 = vmatpush1.msra.mxu0 %v3935
  %8082 = vmatprep.subr.mxu0 0.0
  %8083 = vmatpush1.msra.mxu0 %v3936
  %8084 = vmatprep.subr.mxu0 0.0
  %8085 = vmatpush1.msra.mxu0 0.0
  %8086 = vmatprep.subr.mxu0 0.0
  %8087 = vmatpush1.msra.mxu0 0.0
  %8088 = vmatprep.subr.mxu0 0.0
  %8089 = vmatpush1.msra.mxu0 0.0
  %8090 = vmatprep.subr.mxu0 0.0
  %8091 = vmatpush1.msra.mxu0 0.0
  %8092 = vmatprep.subr.mxu0 0.0
  %8093 = vmatpush1.msra.mxu0 0.0
  %8094 = vmatprep.subr.mxu0 0.0
  %8095 = vmatpush1.msra.mxu0 0.0
  %8096 = vmatprep.subr.mxu0 0.0
  %8097 = vmatpush1.msra.mxu0 0.0
  %8098 = vmatprep.subr.mxu0 0.0
  %8099 = vmatpush1.msra.mxu0 0.0
  %8100 = vmatprep.subr.mxu0 0.0
  %8101 = vmatpush1.msra.mxu0 0.0
  %8102 = vmatprep.subr.mxu0 0.0
  %8103 = vmatpush1.msra.mxu0 0.0
  %8104 = vmatprep.subr.mxu0 0.0
  %8105 = vmatpush1.msra.mxu0 0.0
  %8106 = vmatprep.subr.mxu0 0.0
  %8107 = vmatpush1.msra.mxu0 0.0
  %8108 = vmatprep.subr.mxu0 0.0
  %8109 = vmatpush1.msra.mxu0 0.0
  %8110 = vmatprep.subr.mxu0 0.0
  %8111 = vmatpush1.msra.mxu0 0.0
  %8112 = vmatprep.subr.mxu0 0.0
  %8113 = vmatpush1.msra.mxu0 0.0
  %8114 = vmatprep.subr.mxu0 0.0
  %8115 = vmatpush1.msra.mxu0 0.0
  %8116 = vmatprep.subr.mxu0 0.0
  %8117 = vmatpush1.msra.mxu0 0.0
  %8118 = vmatprep.subr.mxu0 0.0
  %8119 = vmatpush1.msra.mxu0 0.0
  %8120 = vmatprep.subr.mxu0 0.0
  %8121 = vmatpush1.msra.mxu0 0.0
  %8122 = vmatprep.subr.mxu0 0.0
  %8123 = vmatpush1.msra.mxu0 0.0
  %8124 = vmatprep.subr.mxu0 0.0
  %8125 = vmatpush1.msra.mxu0 0.0
  %8126 = vmatprep.subr.mxu0 0.0
  %8127 = vmatpush1.msra.mxu0 0.0
  %8128 = vmatprep.subr.mxu0 0.0
  %8129 = vmatpush1.msra.mxu0 0.0
  %8130 = vmatprep.subr.mxu0 0.0
  %8131 = vmatpush1.msra.mxu0 0.0
  %8132 = vmatprep.subr.mxu0 0.0
  %8133 = vmatpush1.msra.mxu0 0.0
  %8134 = vmatprep.subr.mxu0 0.0
  %8135 = vmatpush1.msra.mxu0 0.0
  %8136 = vmatprep.subr.mxu0 0.0
  %8137 = vmatpush1.msra.mxu0 0.0
  %8138 = vmatprep.subr.mxu0 0.0
  %8139 = vmatpush1.msra.mxu0 0.0
  %8140 = vmatprep.mubr.f32.mxu0 0.0
  %8141 = vmatmul.mubr.f32.gmra.mrb[0].mxu0 %v6598
  %v8142 = vpop.f32.mrb[0].mxu0
  %v8143 = vadd.f32 %v3943, %v8142
  %v8144 = vpop.f32.mrb[0].mxu0
  %8145 = vdwg.mxu0
  %v8147 = vsel %vm353, %v8003, 0
  %v8150 = vsel %vm353, %v8073, 0
  %8152 = vmatprep.subr.mxu0 0.0
  %8153 = vmatpush1.xpose.msra.mxu0 %v8150
  %8154 = vmatprep.subr.mxu0 0.0
  %8155 = vmatpush1.xpose.msra.mxu0 0.0
  %8156 = vmatprep.subr.mxu0 0.0
  %8157 = vmatpush1.xpose.msra.mxu0 0.0
  %8158 = vmatprep.subr.mxu0 0.0
  %8159 = vmatpush1.xpose.msra.mxu0 0.0
  %8160 = vmatprep.subr.mxu0 0.0
  %8161 = vmatpush1.xpose.msra.mxu0 0.0
  %8162 = vmatprep.subr.mxu0 0.0
  %8163 = vmatpush1.xpose.msra.mxu0 0.0
  %8164 = vmatprep.subr.mxu0 0.0
  %8165 = vmatpush1.xpose.msra.mxu0 0.0
  %8166 = vmatprep.subr.mxu0 0.0
  %8167 = vmatpush1.xpose.msra.mxu0 0.0
  %8168 = vmatprep.subr.mxu0 0.0
  %8169 = vmatpush1.xpose.msra.mxu0 0.0
  %8170 = vmatprep.subr.mxu0 0.0
  %8171 = vmatpush1.xpose.msra.mxu0 0.0
  %8172 = vmatprep.subr.mxu0 0.0
  %8173 = vmatpush1.xpose.msra.mxu0 0.0
  %8174 = vmatprep.subr.mxu0 0.0
  %8175 = vmatpush1.xpose.msra.mxu0 0.0
  %8176 = vmatprep.subr.mxu0 0.0
  %8177 = vmatpush1.xpose.msra.mxu0 0.0
  %8178 = vmatprep.subr.mxu0 0.0
  %8179 = vmatpush1.xpose.msra.mxu0 0.0
  %8180 = vmatprep.subr.mxu0 0.0
  %8181 = vmatpush1.xpose.msra.mxu0 0.0
  %8182 = vmatprep.subr.mxu0 0.0
  %8183 = vmatpush1.xpose.msra.mxu0 0.0
  %8184 = vmatprep.subr.mxu0 0.0
  %8185 = vmatpush1.xpose.msra.mxu0 0.0
  %8186 = vmatprep.subr.mxu0 0.0
  %8187 = vmatpush1.xpose.msra.mxu0 0.0
  %8188 = vmatprep.subr.mxu0 0.0
  %8189 = vmatpush1.xpose.msra.mxu0 0.0
  %8190 = vmatprep.subr.mxu0 0.0
  %8191 = vmatpush1.xpose.msra.mxu0 0.0
  %8192 = vmatprep.subr.mxu0 0.0
  %8193 = vmatpush1.xpose.msra.mxu0 0.0
  %8194 = vmatprep.subr.mxu0 0.0
  %8195 = vmatpush1.xpose.msra.mxu0 0.0
  %8196 = vmatprep.subr.mxu0 0.0
  %8197 = vmatpush1.xpose.msra.mxu0 0.0
  %8198 = vmatprep.subr.mxu0 0.0
  %8199 = vmatpush1.xpose.msra.mxu0 0.0
  %8200 = vmatprep.subr.mxu0 0.0
  %8201 = vmatpush1.xpose.msra.mxu0 0.0
  %8202 = vmatprep.subr.mxu0 0.0
  %8203 = vmatpush1.xpose.msra.mxu0 0.0
  %8204 = vmatprep.subr.mxu0 0.0
  %8205 = vmatpush1.xpose.msra.mxu0 0.0
  %8206 = vmatprep.subr.mxu0 0.0
  %8207 = vmatpush1.xpose.msra.mxu0 0.0
  %8208 = vmatprep.subr.mxu0 0.0
  %8209 = vmatpush1.xpose.msra.mxu0 0.0
  %8210 = vmatprep.subr.mxu0 0.0
  %8211 = vmatpush1.xpose.msra.mxu0 0.0
  %8212 = vmatprep.subr.mxu0 0.0
  %8213 = vmatpush1.xpose.msra.mxu0 0.0
  %8214 = vmatprep.subr.mxu0 0.0
  %8215 = vmatpush1.xpose.msra.mxu0 0.0
  %8216 = vmatprep.mubr.f32.mxu0 0.0
  %8217 = vmatmul.mubr.f32.gmra.mrb[0].mxu0 %v8147
  %v8218 = vpop.f32.mrb[0].mxu0
  %v8219 = vadd.f32 0.0, %v8218
  %v8220 = vpop.f32.mrb[0].mxu0
  %8221 = vdwg.mxu0
  %v8222 = vmul.f32 %v8219, 0.35355338
  %v8223 = vadd.f32 %v8222, %v4913
  %v8224 = vsel %vm353, %v8223, -inf
  %8225 = vmax.xlane.f32.xlu0 %v8224
  %v8226 = vpop.xlane.xlu0 %8225
  %v8227 = vsub.f32 %v8223, %v8226
  %v8228 = vmul.f32 %v8227, 1.442695
  %v8229 = vpow.pop %v8228
  %v8230 = vsel %vm353, %v8229, 0.0
  %8231 = vadd.xlane.f32.xlu0 %v8230
  %v8232 = vpop.xlane.xlu0 %8231
  %v8233 = vrcp.pop %v8232
  %v8234 = vmul.f32 %v8229, %v8233
  %v8236 = vsel %vm353, %v8234, 0
  %8238 = vmatprep.subr.mxu0 0.0
  %8239 = vmatpush1.msra.mxu0 %v8143
  %8240 = vmatprep.subr.mxu0 0.0
  %8241 = vmatpush1.msra.mxu0 0.0
  %8242 = vmatprep.subr.mxu0 0.0
  %8243 = vmatpush1.msra.mxu0 0.0
  %8244 = vmatprep.subr.mxu0 0.0
  %8245 = vmatpush1.msra.mxu0 0.0
  %8246 = vmatprep.subr.mxu0 0.0
  %8247 = vmatpush1.msra.mxu0 0.0
  %8248 = vmatprep.subr.mxu0 0.0
  %8249 = vmatpush1.msra.mxu0 0.0
  %8250 = vmatprep.subr.mxu0 0.0
  %8251 = vmatpush1.msra.mxu0 0.0
  %8252 = vmatprep.subr.mxu0 0.0
  %8253 = vmatpush1.msra.mxu0 0.0
  %8254 = vmatprep.subr.mxu0 0.0
  %8255 = vmatpush1.msra.mxu0 0.0
  %8256 = vmatprep.subr.mxu0 0.0
  %8257 = vmatpush1.msra.mxu0 0.0
  %8258 = vmatprep.subr.mxu0 0.0
  %8259 = vmatpush1.msra.mxu0 0.0
  %8260 = vmatprep.subr.mxu0 0.0
  %8261 = vmatpush1.msra.mxu0 0.0
  %8262 = vmatprep.subr.mxu0 0.0
  %8263 = vmatpush1.msra.mxu0 0.0
  %8264 = vmatprep.subr.mxu0 0.0
  %8265 = vmatpush1.msra.mxu0 0.0
  %8266 = vmatprep.subr.mxu0 0.0
  %8267 = vmatpush1.msra.mxu0 0.0
  %8268 = vmatprep.subr.mxu0 0.0
  %8269 = vmatpush1.msra.mxu0 0.0
  %8270 = vmatprep.subr.mxu0 0.0
  %8271 = vmatpush1.msra.mxu0 0.0
  %8272 = vmatprep.subr.mxu0 0.0
  %8273 = vmatpush1.msra.mxu0 0.0
  %8274 = vmatprep.subr.mxu0 0.0
  %8275 = vmatpush1.msra.mxu0 0.0
  %8276 = vmatprep.subr.mxu0 0.0
  %8277 = vmatpush1.msra.mxu0 0.0
  %8278 = vmatprep.subr.mxu0 0.0
  %8279 = vmatpush1.msra.mxu0 0.0
  %8280 = vmatprep.subr.mxu0 0.0
  %8281 = vmatpush1.msra.mxu0 0.0
  %8282 = vmatprep.subr.mxu0 0.0
  %8283 = vmatpush1.msra.mxu0 0.0
  %8284 = vmatprep.subr.mxu0 0.0
  %8285 = vmatpush1.msra.mxu0 0.0
  %8286 = vmatprep.subr.mxu0 0.0
  %8287 = vmatpush1.msra.mxu0 0.0
  %8288 = vmatprep.subr.mxu0 0.0
  %8289 = vmatpush1.msra.mxu0 0.0
  %8290 = vmatprep.subr.mxu0 0.0
  %8291 = vmatpush1.msra.mxu0 0.0
  %8292 = vmatprep.subr.mxu0 0.0
  %8293 = vmatpush1.msra.mxu0 0.0
  %8294 = vmatprep.subr.mxu0 0.0
  %8295 = vmatpush1.msra.mxu0 0.0
  %8296 = vmatprep.subr.mxu0 0.0
  %8297 = vmatpush1.msra.mxu0 0.0
  %8298 = vmatprep.subr.mxu0 0.0
  %8299 = vmatpush1.msra.mxu0 0.0
  %8300 = vmatprep.subr.mxu0 0.0
  %8301 = vmatpush1.msra.mxu0 0.0
  %8302 = vmatprep.mubr.f32.mxu0 0.0
  %8303 = vmatmul.mubr.f32.gmra.mrb[0].mxu0 %v8236
  %v8304 = vpop.f32.mrb[0].mxu0
  %v8305 = vadd.f32 0.0, %v8304
  %v8306 = vpop.f32.mrb[0].mxu0
  %8307 = vdwg.mxu0
  %v8309 = vsel %vm353, %v8305, 0
  %8311 = vmatprep.subr.mxu0 0.0
  %8312 = vmatpush1.msra.mxu0 %v4178
  %8313 = vmatprep.subr.mxu0 0.0
  %8314 = vmatpush1.msra.mxu0 0.0
  %8315 = vmatprep.subr.mxu0 0.0
  %8316 = vmatpush1.msra.mxu0 0.0
  %8317 = vmatprep.subr.mxu0 0.0
  %8318 = vmatpush1.msra.mxu0 0.0
  %8319 = vmatprep.subr.mxu0 0.0
  %8320 = vmatpush1.msra.mxu0 0.0
  %8321 = vmatprep.subr.mxu0 0.0
  %8322 = vmatpush1.msra.mxu0 0.0
  %8323 = vmatprep.subr.mxu0 0.0
  %8324 = vmatpush1.msra.mxu0 0.0
  %8325 = vmatprep.subr.mxu0 0.0
  %8326 = vmatpush1.msra.mxu0 0.0
  %8327 = vmatprep.subr.mxu0 0.0
  %8328 = vmatpush1.msra.mxu0 0.0
  %8329 = vmatprep.subr.mxu0 0.0
  %8330 = vmatpush1.msra.mxu0 0.0
  %8331 = vmatprep.subr.mxu0 0.0
  %8332 = vmatpush1.msra.mxu0 0.0
  %8333 = vmatprep.subr.mxu0 0.0
  %8334 = vmatpush1.msra.mxu0 0.0
  %8335 = vmatprep.subr.mxu0 0.0
  %8336 = vmatpush1.msra.mxu0 0.0
  %8337 = vmatprep.subr.mxu0 0.0
  %8338 = vmatpush1.msra.mxu0 0.0
  %8339 = vmatprep.subr.mxu0 0.0
  %8340 = vmatpush1.msra.mxu0 0.0
  %8341 = vmatprep.subr.mxu0 0.0
  %8342 = vmatpush1.msra.mxu0 0.0
  %8343 = vmatprep.subr.mxu0 0.0
  %8344 = vmatpush1.msra.mxu0 0.0
  %8345 = vmatprep.subr.mxu0 0.0
  %8346 = vmatpush1.msra.mxu0 0.0
  %8347 = vmatprep.subr.mxu0 0.0
  %8348 = vmatpush1.msra.mxu0 0.0
  %8349 = vmatprep.subr.mxu0 0.0
  %8350 = vmatpush1.msra.mxu0 0.0
  %8351 = vmatprep.subr.mxu0 0.0
  %8352 = vmatpush1.msra.mxu0 0.0
  %8353 = vmatprep.subr.mxu0 0.0
  %8354 = vmatpush1.msra.mxu0 0.0
  %8355 = vmatprep.subr.mxu0 0.0
  %8356 = vmatpush1.msra.mxu0 0.0
  %8357 = vmatprep.subr.mxu0 0.0
  %8358 = vmatpush1.msra.mxu0 0.0
  %8359 = vmatprep.subr.mxu0 0.0
  %8360 = vmatpush1.msra.mxu0 0.0
  %8361 = vmatprep.subr.mxu0 0.0
  %8362 = vmatpush1.msra.mxu0 0.0
  %8363 = vmatprep.subr.mxu0 0.0
  %8364 = vmatpush1.msra.mxu0 0.0
  %8365 = vmatprep.subr.mxu0 0.0
  %8366 = vmatpush1.msra.mxu0 0.0
  %8367 = vmatprep.subr.mxu0 0.0
  %8368 = vmatpush1.msra.mxu0 0.0
  %8369 = vmatprep.subr.mxu0 0.0
  %8370 = vmatpush1.msra.mxu0 0.0
  %8371 = vmatprep.subr.mxu0 0.0
  %8372 = vmatpush1.msra.mxu0 0.0
  %8373 = vmatprep.subr.mxu0 0.0
  %8374 = vmatpush1.msra.mxu0 0.0
  %8375 = vmatprep.mubr.f32.mxu0 0.0
  %8376 = vmatmul.mubr.f32.gmra.mrb[0].mxu0 %v8309
  %v8377 = vpop.f32.mrb[0].mxu0
  %v8378 = vadd.f32 0.0, %v8377
  %v8379 = vpop.f32.mrb[0].mxu0
  %8380 = vdwg.mxu0
  %v8381 = vadd.f32 %v7935, %v8378
  %v8382 = vadd.f32 %v8381, %v4259
  %v8383 = vadd.f32 %v8382, %v6596
  %v8384 = vsel %vm74, %v8383, 0.0
  %8385 = vadd.xlane.f32.xlu0 %v8384
  %v8386 = vpop.xlane.xlu0 %8385
  %v8387 = vmul.f32 %v8386, %v78
  %v8388 = vsub.f32 %v8383, %v8387
  %v8389 = vmul.f32 %v8388, %v8388
  %v8390 = vsel %vm74, %v8389, 0.0
  %8391 = vadd.xlane.f32.xlu0 %v8390
  %v8392 = vpop.xlane.xlu0 %8391
  %v8393 = vmul.f32 %v8392, %v78
  %v8394 = vadd.f32 %v8393, 1e-12
  %v8395 = vrsqrt.pop %v8394
  %v8396 = vmul.f32 %v8388, %v8395
  %v8397 = vmul.f32 %v8396, %v4284
  %v8398 = vadd.f32 %v8397, %v4291
  %v8400 = vsel %vm74, %v8398, 0
  %8402 = vmatprep.subr.mxu0 0.0
  %8403 = vmatpush1.msra.mxu0 %v4295
  %8404 = vmatprep.subr.mxu0 0.0
  %8405 = vmatpush1.msra.mxu0 %v4296
  %8406 = vmatprep.subr.mxu0 0.0
  %8407 = vmatpush1.msra.mxu0 %v4297
  %8408 = vmatprep.subr.mxu0 0.0
  %8409 = vmatpush1.msra.mxu0 %v4298
  %8410 = vmatprep.subr.mxu0 0.0
  %8411 = vmatpush1.msra.mxu0 0.0
  %8412 = vmatprep.subr.mxu0 0.0
  %8413 = vmatpush1.msra.mxu0 0.0
  %8414 = vmatprep.subr.mxu0 0.0
  %8415 = vmatpush1.msra.mxu0 0.0
  %8416 = vmatprep.subr.mxu0 0.0
  %8417 = vmatpush1.msra.mxu0 0.0
  %8418 = vmatprep.subr.mxu0 0.0
  %8419 = vmatpush1.msra.mxu0 0.0
  %8420 = vmatprep.subr.mxu0 0.0
  %8421 = vmatpush1.msra.mxu0 0.0
  %8422 = vmatprep.subr.mxu0 0.0
  %8423 = vmatpush1.msra.mxu0 0.0
  %8424 = vmatprep.subr.mxu0 0.0
  %8425 = vmatpush1.msra.mxu0 0.0
  %8426 = vmatprep.subr.mxu0 0.0
  %8427 = vmatpush1.msra.mxu0 0.0
  %8428 = vmatprep.subr.mxu0 0.0
  %8429 = vmatpush1.msra.mxu0 0.0
  %8430 = vmatprep.subr.mxu0 0.0
  %8431 = vmatpush1.msra.mxu0 0.0
  %8432 = vmatprep.subr.mxu0 0.0
  %8433 = vmatpush1.msra.mxu0 0.0
  %8434 = vmatprep.subr.mxu0 0.0
  %8435 = vmatpush1.msra.mxu0 0.0
  %8436 = vmatprep.subr.mxu0 0.0
  %8437 = vmatpush1.msra.mxu0 0.0
  %8438 = vmatprep.subr.mxu0 0.0
  %8439 = vmatpush1.msra.mxu0 0.0
  %8440 = vmatprep.subr.mxu0 0.0
  %8441 = vmatpush1.msra.mxu0 0.0
  %8442 = vmatprep.subr.mxu0 0.0
  %8443 = vmatpush1.msra.mxu0 0.0
  %8444 = vmatprep.subr.mxu0 0.0
  %8445 = vmatpush1.msra.mxu0 0.0
  %8446 = vmatprep.subr.mxu0 0.0
  %8447 = vmatpush1.msra.mxu0 0.0
  %8448 = vmatprep.subr.mxu0 0.0
  %8449 = vmatpush1.msra.mxu0 0.0
  %8450 = vmatprep.subr.mxu0 0.0
  %8451 = vmatpush1.msra.mxu0 0.0
  %8452 = vmatprep.subr.mxu0 0.0
  %8453 = vmatpush1.msra.mxu0 0.0
  %8454 = vmatprep.subr.mxu0 0.0
  %8455 = vmatpush1.msra.mxu0 0.0
  %8456 = vmatprep.subr.mxu0 0.0
  %8457 = vmatpush1.msra.mxu0 0.0
  %8458 = vmatprep.subr.mxu0 0.0
  %8459 = vmatpush1.msra.mxu0 0.0
  %8460 = vmatprep.subr.mxu0 0.0
  %8461 = vmatpush1.msra.mxu0 0.0
  %8462 = vmatprep.subr.mxu0 0.0
  %8463 = vmatpush1.msra.mxu0 0.0
  %8464 = vmatprep.subr.mxu0 0.0
  %8465 = vmatpush1.msra.mxu0 0.0
  %8466 = vmatprep.mubr.f32.mxu0 0.0
  %8467 = vmatmul.mubr.f32.gmra.mrb[0].mxu0 %v8400
  %v8468 = vpop.f32.mrb[0].mxu0
  %v8469 = vadd.f32 %v4305, %v8468
  %v8470 = vpop.f32.mrb[0].mxu0
  %8471 = vdwg.mxu0
  %v8472 = vmul.f32 %v8469, 0.5
  %v8473 = vmul.f32 %v8469, 0.044715
  %v8474 = vmul.f32 %v8473, %v8469
  %v8475 = vmul.f32 %v8474, %v8469
  %v8476 = vadd.f32 %v8469, %v8475
  %v8477 = vmul.f32 %v8476, 0.7978846
  %v8478 = vtanh.pop %v8477
  %v8479 = vadd.f32 %v8478, 1.0
  %v8480 = vmul.f32 %v8472, %v8479
  %v8482 = vsel %vm2200, %v8480, 0
  %8484 = vmatprep.subr.mxu0 0.0
  %8485 = vmatpush1.msra.mxu0 %v4390
  %8486 = vmatprep.subr.mxu0 0.0
  %8487 = vmatpush1.msra.mxu0 %v4391
  %8488 = vmatprep.subr.mxu0 0.0
  %8489 = vmatpush1.msra.mxu0 %v4392
  %8490 = vmatprep.subr.mxu0 0.0
  %8491 = vmatpush1.msra.mxu0 %v4393
  %8492 = vmatprep.subr.mxu0 0.0
  %8493 = vmatpush1.msra.mxu0 %v4394
  %8494 = vmatprep.subr.mxu0 0.0
  %8495 = vmatpush1.msra.mxu0 %v4395
  %8496 = vmatprep.subr.mxu0 0.0
  %8497 = vmatpush1.msra.mxu0 %v4396
  %8498 = vmatprep.subr.mxu0 0.0
  %8499 = vmatpush1.msra.mxu0 %v4397
  %8500 = vmatprep.subr.mxu0 0.0
  %8501 = vmatpush1.msra.mxu0 0.0
  %8502 = vmatprep.subr.mxu0 0.0
  %8503 = vmatpush1.msra.mxu0 0.0
  %8504 = vmatprep.subr.mxu0 0.0
  %8505 = vmatpush1.msra.mxu0 0.0
  %8506 = vmatprep.subr.mxu0 0.0
  %8507 = vmatpush1.msra.mxu0 0.0
  %8508 = vmatprep.subr.mxu0 0.0
  %8509 = vmatpush1.msra.mxu0 0.0
  %8510 = vmatprep.subr.mxu0 0.0
  %8511 = vmatpush1.msra.mxu0 0.0
  %8512 = vmatprep.subr.mxu0 0.0
  %8513 = vmatpush1.msra.mxu0 0.0
  %8514 = vmatprep.subr.mxu0 0.0
  %8515 = vmatpush1.msra.mxu0 0.0
  %8516 = vmatprep.subr.mxu0 0.0
  %8517 = vmatpush1.msra.mxu0 0.0
  %8518 = vmatprep.subr.mxu0 0.0
  %8519 = vmatpush1.msra.mxu0 0.0
  %8520 = vmatprep.subr.mxu0 0.0
  %8521 = vmatpush1.msra.mxu0 0.0
  %8522 = vmatprep.subr.mxu0 0.0
  %8523 = vmatpush1.msra.mxu0 0.0
  %8524 = vmatprep.subr.mxu0 0.0
  %8525 = vmatpush1.msra.mxu0 0.0
  %8526 = vmatprep.subr.mxu0 0.0
  %8527 = vmatpush1.msra.mxu0 0.0
  %8528 = vmatprep.subr.mxu0 0.0
  %8529 = vmatpush1.msra.mxu0 0.0
  %8530 = vmatprep.subr.mxu0 0.0
  %8531 = vmatpush1.msra.mxu0 0.0
  %8532 = vmatprep.subr.mxu0 0.0
  %8533 = vmatpush1.msra.mxu0 0.0
  %8534 = vmatprep.subr.mxu0 0.0
  %8535 = vmatpush1.msra.mxu0 0.0
  %8536 = vmatprep.subr.mxu0 0.0
  %8537 = vmatpush1.msra.mxu0 0.0
  %8538 = vmatprep.subr.mxu0 0.0
  %8539 = vmatpush1.msra.mxu0 0.0
  %8540 = vmatprep.subr.mxu0 0.0
  %8541 = vmatpush1.msra.mxu0 0.0
  %8542 = vmatprep.subr.mxu0 0.0
  %8543 = vmatpush1.msra.mxu0 0.0
  %8544 = vmatprep.subr.mxu0 0.0
  %8545 = vmatpush1.msra.mxu0 0.0
  %8546 = vmatprep.subr.mxu0 0.0
  %8547 = vmatpush1.msra.mxu0 0.0
  %8548 = vmatprep.mubr.f32.mxu0 0.0
  %8549 = vmatmul.mubr.f32.gmra.mrb[0].mxu0 %v8482
  %v8550 = vpop.f32.mrb[0].mxu0
  %v8551 = vadd.f32 %v4404, %v8550
  %v8552 = vpop.f32.mrb[0].mxu0
  %8553 = vdwg.mxu0
  %v8554 = vadd.f32 %v8551, %v8398
  %v8555 = vsel %vm74, %v8554, 0.0
  %8556 = vadd.xlane.f32.xlu0 %v8555
  %v8557 = vpop.xlane.xlu0 %8556
  %v8558 = vmul.f32 %v8557, %v78
  %v8559 = vsub.f32 %v8554, %v8558
  %v8560 = vmul.f32 %v8559, %v8559
  %v8561 = vsel %vm74, %v8560, 0.0
  %8562 = vadd.xlane.f32.xlu0 %v8561
  %v8563 = vpop.xlane.xlu0 %8562
  %v8564 = vmul.f32 %v8563, %v78
  %v8565 = vadd.f32 %v8564, 1e-12
  %v8566 = vrsqrt.pop %v8565
  %v8567 = vmul.f32 %v8559, %v8566
  %v8568 = vmul.f32 %v8567, %v4501
  %v8569 = vadd.f32 %v8568, %v4508
  %v8571 = vsel %vm74, %v8569, 0
  %8573 = vmatprep.subr.mxu0 0.0
  %8574 = vmatpush1.msra.mxu0 %v4511
  %8575 = vmatprep.subr.mxu0 0.0
  %8576 = vmatpush1.msra.mxu0 %v4512
  %8577 = vmatprep.subr.mxu0 0.0
  %8578 = vmatpush1.msra.mxu0 %v4513
  %8579 = vmatprep.subr.mxu0 0.0
  %8580 = vmatpush1.msra.mxu0 %v4514
  %8581 = vmatprep.subr.mxu0 0.0
  %8582 = vmatpush1.msra.mxu0 0.0
  %8583 = vmatprep.subr.mxu0 0.0
  %8584 = vmatpush1.msra.mxu0 0.0
  %8585 = vmatprep.subr.mxu0 0.0
  %8586 = vmatpush1.msra.mxu0 0.0
  %8587 = vmatprep.subr.mxu0 0.0
  %8588 = vmatpush1.msra.mxu0 0.0
  %8589 = vmatprep.subr.mxu0 0.0
  %8590 = vmatpush1.msra.mxu0 0.0
  %8591 = vmatprep.subr.mxu0 0.0
  %8592 = vmatpush1.msra.mxu0 0.0
  %8593 = vmatprep.subr.mxu0 0.0
  %8594 = vmatpush1.msra.mxu0 0.0
  %8595 = vmatprep.subr.mxu0 0.0
  %8596 = vmatpush1.msra.mxu0 0.0
  %8597 = vmatprep.subr.mxu0 0.0
  %8598 = vmatpush1.msra.mxu0 0.0
  %8599 = vmatprep.subr.mxu0 0.0
  %8600 = vmatpush1.msra.mxu0 0.0
  %8601 = vmatprep.subr.mxu0 0.0
  %8602 = vmatpush1.msra.mxu0 0.0
  %8603 = vmatprep.subr.mxu0 0.0
  %8604 = vmatpush1.msra.mxu0 0.0
  %8605 = vmatprep.subr.mxu0 0.0
  %8606 = vmatpush1.msra.mxu0 0.0
  %8607 = vmatprep.subr.mxu0 0.0
  %8608 = vmatpush1.msra.mxu0 0.0
  %8609 = vmatprep.subr.mxu0 0.0
  %8610 = vmatpush1.msra.mxu0 0.0
  %8611 = vmatprep.subr.mxu0 0.0
  %8612 = vmatpush1.msra.mxu0 0.0
  %8613 = vmatprep.subr.mxu0 0.0
  %8614 = vmatpush1.msra.mxu0 0.0
  %8615 = vmatprep.subr.mxu0 0.0
  %8616 = vmatpush1.msra.mxu0 0.0
  %8617 = vmatprep.subr.mxu0 0.0
  %8618 = vmatpush1.msra.mxu0 0.0
  %8619 = vmatprep.subr.mxu0 0.0
  %8620 = vmatpush1.msra.mxu0 0.0
  %8621 = vmatprep.subr.mxu0 0.0
  %8622 = vmatpush1.msra.mxu0 0.0
  %8623 = vmatprep.subr.mxu0 0.0
  %8624 = vmatpush1.msra.mxu0 0.0
  %8625 = vmatprep.subr.mxu0 0.0
  %8626 = vmatpush1.msra.mxu0 0.0
  %8627 = vmatprep.subr.mxu0 0.0
  %8628 = vmatpush1.msra.mxu0 0.0
  %8629 = vmatprep.subr.mxu0 0.0
  %8630 = vmatpush1.msra.mxu0 0.0
  %8631 = vmatprep.subr.mxu0 0.0
  %8632 = vmatpush1.msra.mxu0 0.0
  %8633 = vmatprep.subr.mxu0 0.0
  %8634 = vmatpush1.msra.mxu0 0.0
  %8635 = vmatprep.subr.mxu0 0.0
  %8636 = vmatpush1.msra.mxu0 0.0
  %8637 = vmatprep.mubr.f32.mxu0 0.0
  %8638 = vmatmul.mubr.f32.gmra.mrb[0].mxu0 %v8571
  %v8639 = vpop.f32.mrb[0].mxu0
  %v8640 = vadd.f32 %v4515, %v8639
  %v8641 = vpop.f32.mrb[0].mxu0
  %8642 = vdwg.mxu0
  %v8643 = vtanh.pop %v8640
  %v8644 = vmul.f32 %v8643, %v4590
  %v8645 = vsel %vm4592, %v8644, 0.0
  %8646 = vadd.xlane.f32.xlu0 %v8645
  %v8647 = vpop.xlane.xlu0 %8646
  %v8648 = vadd.f32 %v8647, %v4596
  %vm8649 = vcmp.eq.s32.totalorder %v71, 1
  %8651 = vset.pattern.permute.xlu0 0
  %8652 = vperm.xlu0 %8651, %v8648
  %v8653 = vpop.permute.xlu0 %8652
  %v8655 = vsel %vm8649, %v8653, %v4604
  %8656 = vst [vmem:[%s20] sm:$0x1] %v8655
  // Predicated region
  $region82: #{legal_bert_regression.1} parent=0 // pred_check
    _
  $region83: #{legal_bert_regression.1} parent=0 // pred_check_branch
    %8658 = sbr.rel (0) target = $region85
  $region84: #{legal_bert_regression.1} parent=0 // pred_region
    _
  $region85: #{legal_bert_regression.1} parent=0 // pred_fallthru
    _
  // Predicated region
  $region86: #{legal_bert_regression.1} parent=0 // pred_check
    _
  $region87: #{legal_bert_regression.1} parent=0 // pred_check_branch
    %8660 = sbr.rel (0) target = $region89
  $region88: #{legal_bert_regression.1} parent=0 // pred_region
    _
  $region89: #{legal_bert_regression.1} parent=0 // pred_fallthru
    _

</llo_original>
